<compile_context>
chip_gen: v6e
topology: v6e:2x2x1
jax: 0.10.0
libtpu: 0.0.40
codegen_flags: <defaults>
</compile_context>

<pallas_src>
import jax
import jax.numpy as jnp
from jax.experimental import pallas as pl
from jax.experimental.pallas import tpu as pltpu

BN_EPS = 1e-5
LANE = 128
VMEM_LIMIT = 32 * 1024 * 1024   # explicit scoped-VMEM budget (safe on v5e/v6e/v7x)


def _round_up(x, m):
    return (x + m - 1) // m * m


# ------------------------------ Pallas kernels -------------------------------
def _conv_stats_kernel(x_ref, w_ref, y_ref, s_ref):
    """Pass 1: 3x3 conv (9 accumulated matmuls) + per-tile channel sum / sum-of-squares.

    x_ref: (1, tile_h+2, W+2, Cin)   halo row-tile of the spatially padded NHWC input
    w_ref: (3, 3, Cin, Coutp)        conv weights, Cout zero-padded to 128 lanes
    y_ref: (1, tile_h*W, Coutp)      pre-BN conv output rows for this tile
    s_ref: (1, 2, Coutp)             row 0 = sum, row 1 = sum of squares (this tile)
    """
    tile_h = x_ref.shape[1] - 2
    w_dim = x_ref.shape[2] - 2
    cin = w_ref.shape[2]
    coutp = w_ref.shape[3]

    x = x_ref[0]                                           # (tile_h+2, W+2, Cin)
    acc = jnp.zeros((tile_h * w_dim, coutp), jnp.float32)
    for dh in range(3):
        for dw in range(3):
            patch = x[dh:dh + tile_h, dw:dw + w_dim, :].reshape(tile_h * w_dim, cin)
            acc = acc + jnp.dot(patch, w_ref[dh, dw],
                                preferred_element_type=jnp.float32)

    y_ref[0] = acc
    s_ref[0] = jnp.concatenate(
        [jnp.sum(acc, axis=0, keepdims=True),
         jnp.sum(acc * acc, axis=0, keepdims=True)], axis=0)


def _bn_relu_kernel(y_ref, scale_ref, shift_ref, o_ref):
    """Pass 2: folded BatchNorm (per-channel FMA) + ReLU, tiled over rows."""
    o_ref[0] = jnp.maximum(y_ref[0] * scale_ref[...] + shift_ref[...], 0.0)


# --------------------------------- wrappers ----------------------------------
def _pick_tile_h(h, w, max_rows=1024):
    """Largest divisor of H whose row tile (tile_h * W rows) stays <= max_rows."""
    tile_h = 1
    for d in range(1, h + 1):
        if h % d == 0 and d * w <= max_rows:
            tile_h = d
    return tile_h
    # TODO(synk): for H not divisible by any tile_h with tile_h*W <= max_rows (huge W),
    # add W-tiling with a column halo as well.


def _build_halo_tiles(x_nhwc, tile_h):
    """(N,H,W,C) -> (N*H/tile_h, tile_h+2, W+2, C): padded row tiles with 1-row halo."""
    n, h, w, _ = x_nhwc.shape
    ht = h // tile_h
    xp = jnp.pad(x_nhwc, ((0, 0), (1, 1), (1, 1), (0, 0)))
    tiles = jnp.stack(
        [xp[:, t * tile_h:t * tile_h + tile_h + 2, :, :] for t in range(ht)], axis=1)
    return tiles.reshape(n * ht, tile_h + 2, w + 2, xp.shape[-1])


def _conv_bn_relu_layer(x_nhwc, w_hwio, gamma, beta, *, tile_h):
    """One Conv3x3(s1,p1) + BatchNorm(training stats) + ReLU layer, two Pallas passes."""
    n, h, w, cin = x_nhwc.shape
    cout = w_hwio.shape[-1]
    coutp = _round_up(cout, LANE)          # lane-dense output (no masked partial stores)
    ht = h // tile_h
    grid_g = n * ht
    tile_m = tile_h * w

    x_tiles = _build_halo_tiles(x_nhwc, tile_h)
    w_pad = jnp.zeros((3, 3, cin, coutp), jnp.float32).at[..., :cout].set(w_hwio)

    cparams = pltpu.CompilerParams(
        dimension_semantics=("parallel",), vmem_limit_bytes=VMEM_LIMIT)

    # Pass 1: conv + per-tile batch statistics (tiled over rows, auto-pipelined).
    y, stats = pl.pallas_call(
        _conv_stats_kernel,
        grid=(grid_g,),
        in_specs=[
            pl.BlockSpec((1, tile_h + 2, w + 2, cin), lambda g: (g, 0, 0, 0)),
            pl.BlockSpec((3, 3, cin, coutp), lambda g: (0, 0, 0, 0)),   # resident weight
        ],
        out_specs=[
            pl.BlockSpec((1, tile_m, coutp), lambda g: (g, 0, 0)),
            pl.BlockSpec((1, 2, coutp), lambda g: (g, 0, 0)),
        ],
        out_shape=[
            jax.ShapeDtypeStruct((grid_g, tile_m, coutp), jnp.float32),
            jax.ShapeDtypeStruct((grid_g, 2, coutp), jnp.float32),
        ],
        compiler_params=cparams,
    )(x_tiles, w_pad)

    # Tiny per-channel BN finalization in plain JAX.  The conv bias is never added:
    # under training-mode BN it cancels exactly (mean absorbs it, variance unchanged).
    count = jnp.float32(n * h * w)
    mean = jnp.sum(stats[:, 0, :], axis=0) / count
    var = jnp.maximum(jnp.sum(stats[:, 1, :], axis=0) / count - mean * mean, 0.0)
    g_pad = jnp.zeros((coutp,), jnp.float32).at[:cout].set(gamma)
    b_pad = jnp.zeros((coutp,), jnp.float32).at[:cout].set(beta)
    scale = g_pad * jax.lax.rsqrt(var + BN_EPS)
    shift = b_pad - mean * scale

    # Pass 2: y*scale + shift, ReLU; written in place over the conv-output buffer.
    out = pl.pallas_call(
        _bn_relu_kernel,
        grid=(grid_g,),
        in_specs=[
            pl.BlockSpec((1, tile_m, coutp), lambda g: (g, 0, 0)),
            pl.BlockSpec((1, coutp), lambda g: (0, 0)),
            pl.BlockSpec((1, coutp), lambda g: (0, 0)),
        ],
        out_specs=pl.BlockSpec((1, tile_m, coutp), lambda g: (g, 0, 0)),
        out_shape=jax.ShapeDtypeStruct((grid_g, tile_m, coutp), jnp.float32),
        input_output_aliases={0: 0},
        compiler_params=cparams,
    )(y, scale.reshape(1, coutp), shift.reshape(1, coutp))

    # (N*HT, tile_h*W, Coutp) -> (N, H, W, Coutp) is a pure reshape (no transpose).
    return out.reshape(n, h, w, coutp)[..., :cout]


def double_conv(x_nchw, params):
    """Pallas implementation of DoubleConv.forward.  x: NCHW float32."""
    x = jnp.transpose(x_nchw, (0, 2, 3, 1)).astype(jnp.float32)     # -> NHWC once
    for (wgt, _bias, gamma, beta) in params:                        # bias cancels in BN
        n, h, w, _ = x.shape
        x = _conv_bn_relu_layer(x, wgt, gamma, beta, tile_h=_pick_tile_h(h, w))
    return jnp.transpose(x, (0, 3, 1, 2))                           # -> NCHW once


# ---------------- pure-JAX reference (for correctness check) ----------------
def _reference(x_nchw, params):
    x = jnp.transpose(x_nchw, (0, 2, 3, 1)).astype(jnp.float32)
    for (w, b, g, beta) in params:
        y = jax.lax.conv_general_dilated(
            x, w, window_strides=(1, 1), padding=((1, 1), (1, 1)),
            dimension_numbers=("NHWC", "HWIO", "NHWC")) + b
        mean = jnp.mean(y, axis=(0, 1, 2), keepdims=True)
        var = jnp.mean((y - mean) ** 2, axis=(0, 1, 2), keepdims=True)
        y = (y - mean) * jax.lax.rsqrt(var + BN_EPS) * g + beta
        x = jnp.maximum(y, 0.0)
    return jnp.transpose(x, (0, 3, 1, 2))


def _init_params(key, in_channels, out_channels):
    """Deterministic synthetic params.  Conv: random; BN: PyTorch init (gamma=1, beta=0)."""
    k1, k2, k3, k4 = jax.random.split(key, 4)
    w1 = 0.1 * jax.random.normal(k1, (3, 3, in_channels, out_channels), jnp.float32)
    b1 = 0.1 * jax.random.normal(k2, (out_channels,), jnp.float32)
    g1 = jnp.ones((out_channels,), jnp.float32)
    beta1 = jnp.zeros((out_channels,), jnp.float32)
    w2 = 0.1 * jax.random.normal(k3, (3, 3, out_channels, out_channels), jnp.float32)
    b2 = 0.1 * jax.random.normal(k4, (out_channels,), jnp.float32)
    g2 = jnp.ones((out_channels,), jnp.float32)
    beta2 = jnp.zeros((out_channels,), jnp.float32)
    return [(w1, b1, g1, beta1), (w2, b2, g2, beta2)]


if __name__ == "__main__":
    # Small shapes consistent with DoubleConv(in_channels=4, out_channels=8).
    N, Cin, Cout, H, W = 2, 4, 8, 16, 16
    key = jax.random.PRNGKey(0)
    kx, kp = jax.random.split(key)
    x = jax.random.normal(kx, (N, Cin, H, W), jnp.float32)    # NCHW like PyTorch
    params = _init_params(kp, Cin, Cout)

    out = jax.block_until_ready(jax.jit(double_conv)(x, params))
    ref = jax.block_until_ready(_reference(x, params))

    assert out.shape == (N, Cout, H, W), out.shape
    max_err = float(jnp.max(jnp.abs(out - ref)))
    assert jnp.allclose(out, ref, atol=1e-4, rtol=1e-4), max_err
    # TODO(synk): BatchNorm2d running_mean/running_var buffer updates (stateful
    # training-mode side effect) are not modeled; only the forward output is.
    print("KERNEL_OK")
</pallas_src>

<mosaic_0001>
module attributes {stable_mosaic.version = 11 : i64} {
  func.func @_conv_stats_kernel(%arg0: i32, %arg1: memref<1x18x18x4xf32, #tpu.memory_space<vmem>>, %arg2: memref<3x3x4x128xf32, #tpu.memory_space<vmem>>, %arg3: memref<1x256x128xf32, #tpu.memory_space<vmem>>, %arg4: memref<1x2x128xf32, #tpu.memory_space<vmem>>) attributes {dimension_semantics = [#tpu.dimension_semantics<parallel>], iteration_bounds = array<i64: 2>, scalar_prefetch = 0 : i64, scratch_operands = 0 : i64, tpu.core_type = #tpu.core_type<tc>, window_params = [{transform_indices = @transform_0, window_bounds = array<i64: 1, 18, 18, 4>}, {pipeline_mode = #tpu.pipeline_mode<synchronous>, transform_indices = @transform_1, window_bounds = array<i64: 3, 3, 4, 128>}, {transform_indices = @transform_2, window_bounds = array<i64: 1, 256, 128>}, {transform_indices = @transform_3, window_bounds = array<i64: 1, 2, 128>}]} {
    %c0 = arith.constant 0 : index
    %c0_0 = arith.constant 0 : index
    %c0_1 = arith.constant 0 : index
    %c0_2 = arith.constant 0 : index
    %0 = vector.load %arg1[%c0, %c0_0, %c0_1, %c0_2] : memref<1x18x18x4xf32, #tpu.memory_space<vmem>>, vector<1x18x18x4xf32>
    %1 = vector.shape_cast %0 : vector<1x18x18x4xf32> to vector<18x18x4xf32>
    %cst = arith.constant 0.000000e+00 : f32
    %2 = vector.broadcast %cst : f32 to vector<256x128xf32>
    %3 = vector.extract_strided_slice %1 {offsets = [0, 0, 0], sizes = [16, 16, 4], strides = [1, 1, 1]} : vector<18x18x4xf32> to vector<16x16x4xf32>
    %4 = vector.shape_cast %3 : vector<16x16x4xf32> to vector<256x4xf32>
    %c0_3 = arith.constant 0 : index
    %c0_4 = arith.constant 0 : index
    %c0_5 = arith.constant 0 : index
    %c0_6 = arith.constant 0 : index
    %5 = vector.load %arg2[%c0_3, %c0_4, %c0_5, %c0_6] : memref<3x3x4x128xf32, #tpu.memory_space<vmem>>, vector<1x1x4x128xf32>
    %6 = vector.shape_cast %5 : vector<1x1x4x128xf32> to vector<4x128xf32>
    %cst_7 = arith.constant dense<0.000000e+00> : vector<256x128xf32>
    %7 = tpu.matmul %4, %6, %cst_7 {dimension_numbers = #tpu.dot_dimension_numbers<[1], [0], [0], [1], [0, 0, 1, 1], [], []>} : vector<256x4xf32>, vector<4x128xf32>, vector<256x128xf32> -> vector<256x128xf32>
    %8 = arith.addf %2, %7 : vector<256x128xf32>
    %9 = vector.extract_strided_slice %1 {offsets = [0, 1, 0], sizes = [16, 16, 4], strides = [1, 1, 1]} : vector<18x18x4xf32> to vector<16x16x4xf32>
    %10 = vector.shape_cast %9 : vector<16x16x4xf32> to vector<256x4xf32>
    %c0_8 = arith.constant 0 : index
    %c1 = arith.constant 1 : index
    %c0_9 = arith.constant 0 : index
    %c0_10 = arith.constant 0 : index
    %11 = vector.load %arg2[%c0_8, %c1, %c0_9, %c0_10] : memref<3x3x4x128xf32, #tpu.memory_space<vmem>>, vector<1x1x4x128xf32>
    %12 = vector.shape_cast %11 : vector<1x1x4x128xf32> to vector<4x128xf32>
    %cst_11 = arith.constant dense<0.000000e+00> : vector<256x128xf32>
    %13 = tpu.matmul %10, %12, %cst_11 {dimension_numbers = #tpu.dot_dimension_numbers<[1], [0], [0], [1], [0, 0, 1, 1], [], []>} : vector<256x4xf32>, vector<4x128xf32>, vector<256x128xf32> -> vector<256x128xf32>
    %14 = arith.addf %8, %13 : vector<256x128xf32>
    %15 = vector.extract_strided_slice %1 {offsets = [0, 2, 0], sizes = [16, 16, 4], strides = [1, 1, 1]} : vector<18x18x4xf32> to vector<16x16x4xf32>
    %16 = vector.shape_cast %15 : vector<16x16x4xf32> to vector<256x4xf32>
    %c0_12 = arith.constant 0 : index
    %c2 = arith.constant 2 : index
    %c0_13 = arith.constant 0 : index
    %c0_14 = arith.constant 0 : index
    %17 = vector.load %arg2[%c0_12, %c2, %c0_13, %c0_14] : memref<3x3x4x128xf32, #tpu.memory_space<vmem>>, vector<1x1x4x128xf32>
    %18 = vector.shape_cast %17 : vector<1x1x4x128xf32> to vector<4x128xf32>
    %cst_15 = arith.constant dense<0.000000e+00> : vector<256x128xf32>
    %19 = tpu.matmul %16, %18, %cst_15 {dimension_numbers = #tpu.dot_dimension_numbers<[1], [0], [0], [1], [0, 0, 1, 1], [], []>} : vector<256x4xf32>, vector<4x128xf32>, vector<256x128xf32> -> vector<256x128xf32>
    %20 = arith.addf %14, %19 : vector<256x128xf32>
    %21 = vector.extract_strided_slice %1 {offsets = [1, 0, 0], sizes = [16, 16, 4], strides = [1, 1, 1]} : vector<18x18x4xf32> to vector<16x16x4xf32>
    %22 = vector.shape_cast %21 : vector<16x16x4xf32> to vector<256x4xf32>
    %c1_16 = arith.constant 1 : index
    %c0_17 = arith.constant 0 : index
    %c0_18 = arith.constant 0 : index
    %c0_19 = arith.constant 0 : index
    %23 = vector.load %arg2[%c1_16, %c0_17, %c0_18, %c0_19] : memref<3x3x4x128xf32, #tpu.memory_space<vmem>>, vector<1x1x4x128xf32>
    %24 = vector.shape_cast %23 : vector<1x1x4x128xf32> to vector<4x128xf32>
    %cst_20 = arith.constant dense<0.000000e+00> : vector<256x128xf32>
    %25 = tpu.matmul %22, %24, %cst_20 {dimension_numbers = #tpu.dot_dimension_numbers<[1], [0], [0], [1], [0, 0, 1, 1], [], []>} : vector<256x4xf32>, vector<4x128xf32>, vector<256x128xf32> -> vector<256x128xf32>
    %26 = arith.addf %20, %25 : vector<256x128xf32>
    %27 = vector.extract_strided_slice %1 {offsets = [1, 1, 0], sizes = [16, 16, 4], strides = [1, 1, 1]} : vector<18x18x4xf32> to vector<16x16x4xf32>
    %28 = vector.shape_cast %27 : vector<16x16x4xf32> to vector<256x4xf32>
    %c1_21 = arith.constant 1 : index
    %c1_22 = arith.constant 1 : index
    %c0_23 = arith.constant 0 : index
    %c0_24 = arith.constant 0 : index
    %29 = vector.load %arg2[%c1_21, %c1_22, %c0_23, %c0_24] : memref<3x3x4x128xf32, #tpu.memory_space<vmem>>, vector<1x1x4x128xf32>
    %30 = vector.shape_cast %29 : vector<1x1x4x128xf32> to vector<4x128xf32>
    %cst_25 = arith.constant dense<0.000000e+00> : vector<256x128xf32>
    %31 = tpu.matmul %28, %30, %cst_25 {dimension_numbers = #tpu.dot_dimension_numbers<[1], [0], [0], [1], [0, 0, 1, 1], [], []>} : vector<256x4xf32>, vector<4x128xf32>, vector<256x128xf32> -> vector<256x128xf32>
    %32 = arith.addf %26, %31 : vector<256x128xf32>
    %33 = vector.extract_strided_slice %1 {offsets = [1, 2, 0], sizes = [16, 16, 4], strides = [1, 1, 1]} : vector<18x18x4xf32> to vector<16x16x4xf32>
    %34 = vector.shape_cast %33 : vector<16x16x4xf32> to vector<256x4xf32>
    %c1_26 = arith.constant 1 : index
    %c2_27 = arith.constant 2 : index
    %c0_28 = arith.constant 0 : index
    %c0_29 = arith.constant 0 : index
    %35 = vector.load %arg2[%c1_26, %c2_27, %c0_28, %c0_29] : memref<3x3x4x128xf32, #tpu.memory_space<vmem>>, vector<1x1x4x128xf32>
    %36 = vector.shape_cast %35 : vector<1x1x4x128xf32> to vector<4x128xf32>
    %cst_30 = arith.constant dense<0.000000e+00> : vector<256x128xf32>
    %37 = tpu.matmul %34, %36, %cst_30 {dimension_numbers = #tpu.dot_dimension_numbers<[1], [0], [0], [1], [0, 0, 1, 1], [], []>} : vector<256x4xf32>, vector<4x128xf32>, vector<256x128xf32> -> vector<256x128xf32>
    %38 = arith.addf %32, %37 : vector<256x128xf32>
    %39 = vector.extract_strided_slice %1 {offsets = [2, 0, 0], sizes = [16, 16, 4], strides = [1, 1, 1]} : vector<18x18x4xf32> to vector<16x16x4xf32>
    %40 = vector.shape_cast %39 : vector<16x16x4xf32> to vector<256x4xf32>
    %c2_31 = arith.constant 2 : index
    %c0_32 = arith.constant 0 : index
    %c0_33 = arith.constant 0 : index
    %c0_34 = arith.constant 0 : index
    %41 = vector.load %arg2[%c2_31, %c0_32, %c0_33, %c0_34] : memref<3x3x4x128xf32, #tpu.memory_space<vmem>>, vector<1x1x4x128xf32>
    %42 = vector.shape_cast %41 : vector<1x1x4x128xf32> to vector<4x128xf32>
    %cst_35 = arith.constant dense<0.000000e+00> : vector<256x128xf32>
    %43 = tpu.matmul %40, %42, %cst_35 {dimension_numbers = #tpu.dot_dimension_numbers<[1], [0], [0], [1], [0, 0, 1, 1], [], []>} : vector<256x4xf32>, vector<4x128xf32>, vector<256x128xf32> -> vector<256x128xf32>
    %44 = arith.addf %38, %43 : vector<256x128xf32>
    %45 = vector.extract_strided_slice %1 {offsets = [2, 1, 0], sizes = [16, 16, 4], strides = [1, 1, 1]} : vector<18x18x4xf32> to vector<16x16x4xf32>
    %46 = vector.shape_cast %45 : vector<16x16x4xf32> to vector<256x4xf32>
    %c2_36 = arith.constant 2 : index
    %c1_37 = arith.constant 1 : index
    %c0_38 = arith.constant 0 : index
    %c0_39 = arith.constant 0 : index
    %47 = vector.load %arg2[%c2_36, %c1_37, %c0_38, %c0_39] : memref<3x3x4x128xf32, #tpu.memory_space<vmem>>, vector<1x1x4x128xf32>
    %48 = vector.shape_cast %47 : vector<1x1x4x128xf32> to vector<4x128xf32>
    %cst_40 = arith.constant dense<0.000000e+00> : vector<256x128xf32>
    %49 = tpu.matmul %46, %48, %cst_40 {dimension_numbers = #tpu.dot_dimension_numbers<[1], [0], [0], [1], [0, 0, 1, 1], [], []>} : vector<256x4xf32>, vector<4x128xf32>, vector<256x128xf32> -> vector<256x128xf32>
    %50 = arith.addf %44, %49 : vector<256x128xf32>
    %51 = vector.extract_strided_slice %1 {offsets = [2, 2, 0], sizes = [16, 16, 4], strides = [1, 1, 1]} : vector<18x18x4xf32> to vector<16x16x4xf32>
    %52 = vector.shape_cast %51 : vector<16x16x4xf32> to vector<256x4xf32>
    %c2_41 = arith.constant 2 : index
    %c2_42 = arith.constant 2 : index
    %c0_43 = arith.constant 0 : index
    %c0_44 = arith.constant 0 : index
    %53 = vector.load %arg2[%c2_41, %c2_42, %c0_43, %c0_44] : memref<3x3x4x128xf32, #tpu.memory_space<vmem>>, vector<1x1x4x128xf32>
    %54 = vector.shape_cast %53 : vector<1x1x4x128xf32> to vector<4x128xf32>
    %cst_45 = arith.constant dense<0.000000e+00> : vector<256x128xf32>
    %55 = tpu.matmul %52, %54, %cst_45 {dimension_numbers = #tpu.dot_dimension_numbers<[1], [0], [0], [1], [0, 0, 1, 1], [], []>} : vector<256x4xf32>, vector<4x128xf32>, vector<256x128xf32> -> vector<256x128xf32>
    %56 = arith.addf %50, %55 : vector<256x128xf32>
    %c0_46 = arith.constant 0 : index
    %c0_47 = arith.constant 0 : index
    %c0_48 = arith.constant 0 : index
    %57 = vector.load %arg3[%c0_46, %c0_47, %c0_48] : memref<1x256x128xf32, #tpu.memory_space<vmem>>, vector<1x256x128xf32>
    %58 = vector.shape_cast %57 : vector<1x256x128xf32> to vector<256x128xf32>
    %59 = vector.shape_cast %56 : vector<256x128xf32> to vector<1x256x128xf32>
    tpu.vector_store %arg3[%c0_46, %c0_47, %c0_48], %59 {strides = array<i32>} : memref<1x256x128xf32, #tpu.memory_space<vmem>>, vector<1x256x128xf32>,
    %cst_49 = arith.constant dense<0.000000e+00> : vector<128xf32>
    %60 = vector.multi_reduction <add>, %56, %cst_49 [0] : vector<256x128xf32> to vector<128xf32>
    %61 = vector.shape_cast %60 : vector<128xf32> to vector<1x128xf32>
    %62 = arith.mulf %56, %56 : vector<256x128xf32>
    %cst_50 = arith.constant dense<0.000000e+00> : vector<128xf32>
    %63 = vector.multi_reduction <add>, %62, %cst_50 [0] : vector<256x128xf32> to vector<128xf32>
    %64 = vector.shape_cast %63 : vector<128xf32> to vector<1x128xf32>
    %65 = tpu.concatenate %61, %64 in 0 : vector<1x128xf32>, vector<1x128xf32> -> vector<2x128xf32>
    %c0_51 = arith.constant 0 : index
    %c0_52 = arith.constant 0 : index
    %c0_53 = arith.constant 0 : index
    %66 = vector.load %arg4[%c0_51, %c0_52, %c0_53] : memref<1x2x128xf32, #tpu.memory_space<vmem>>, vector<1x2x128xf32>
    %67 = vector.shape_cast %66 : vector<1x2x128xf32> to vector<2x128xf32>
    %68 = vector.shape_cast %65 : vector<2x128xf32> to vector<1x2x128xf32>
    tpu.vector_store %arg4[%c0_51, %c0_52, %c0_53], %68 {strides = array<i32>} : memref<1x2x128xf32, #tpu.memory_space<vmem>>, vector<1x2x128xf32>,
    return
  }
  func.func @transform_0(%arg0: i32) -> (i32, i32, i32, i32) {
    %c0_i32 = arith.constant 0 : i32
    %c0_i32_0 = arith.constant 0 : i32
    %c0_i32_1 = arith.constant 0 : i32
    %c0_i32_2 = arith.constant 0 : i32
    return %arg0, %c0_i32, %c0_i32_0, %c0_i32_1 : i32, i32, i32, i32
  }
  func.func @transform_1(%arg0: i32) -> (i32, i32, i32, i32) {
    %c0_i32 = arith.constant 0 : i32
    %c0_i32_0 = arith.constant 0 : i32
    %c0_i32_1 = arith.constant 0 : i32
    %c0_i32_2 = arith.constant 0 : i32
    %c0_i32_3 = arith.constant 0 : i32
    return %c0_i32, %c0_i32_0, %c0_i32_1, %c0_i32_2 : i32, i32, i32, i32
  }
  func.func @transform_2(%arg0: i32) -> (i32, i32, i32) {
    %c0_i32 = arith.constant 0 : i32
    %c0_i32_0 = arith.constant 0 : i32
    %c0_i32_1 = arith.constant 0 : i32
    return %arg0, %c0_i32, %c0_i32_0 : i32, i32, i32
  }
  func.func @transform_3(%arg0: i32) -> (i32, i32, i32) {
    %c0_i32 = arith.constant 0 : i32
    %c0_i32_0 = arith.constant 0 : i32
    %c0_i32_1 = arith.constant 0 : i32
    return %arg0, %c0_i32, %c0_i32_0 : i32, i32, i32
  }
}

module attributes {stable_mosaic.version = 11 : i64} {
  func.func @_bn_relu_kernel(%arg0: i32, %arg1: memref<1x256x128xf32, #tpu.memory_space<vmem>>, %arg2: memref<1x128xf32, #tpu.memory_space<vmem>>, %arg3: memref<1x128xf32, #tpu.memory_space<vmem>>, %arg4: memref<1x256x128xf32, #tpu.memory_space<vmem>>) attributes {dimension_semantics = [#tpu.dimension_semantics<parallel>], iteration_bounds = array<i64: 2>, scalar_prefetch = 0 : i64, scratch_operands = 0 : i64, tpu.core_type = #tpu.core_type<tc>, window_params = [{transform_indices = @transform_0, window_bounds = array<i64: 1, 256, 128>}, {pipeline_mode = #tpu.pipeline_mode<synchronous>, transform_indices = @transform_1, window_bounds = array<i64: 1, 128>}, {pipeline_mode = #tpu.pipeline_mode<synchronous>, transform_indices = @transform_2, window_bounds = array<i64: 1, 128>}, {transform_indices = @transform_3, window_bounds = array<i64: 1, 256, 128>}]} {
    %c0 = arith.constant 0 : index
    %c0_0 = arith.constant 0 : index
    %c0_1 = arith.constant 0 : index
    %0 = vector.load %arg1[%c0, %c0_0, %c0_1] : memref<1x256x128xf32, #tpu.memory_space<vmem>>, vector<1x256x128xf32>
    %1 = vector.shape_cast %0 : vector<1x256x128xf32> to vector<256x128xf32>
    %c0_2 = arith.constant 0 : index
    %c0_3 = arith.constant 0 : index
    %2 = vector.load %arg2[%c0_2, %c0_3] : memref<1x128xf32, #tpu.memory_space<vmem>>, vector<1x128xf32>
    %3 = vector.broadcast %2 : vector<1x128xf32> to vector<256x128xf32>
    %4 = arith.mulf %1, %3 : vector<256x128xf32>
    %c0_4 = arith.constant 0 : index
    %c0_5 = arith.constant 0 : index
    %5 = vector.load %arg3[%c0_4, %c0_5] : memref<1x128xf32, #tpu.memory_space<vmem>>, vector<1x128xf32>
    %6 = vector.broadcast %5 : vector<1x128xf32> to vector<256x128xf32>
    %7 = arith.addf %4, %6 : vector<256x128xf32>
    %cst = arith.constant 0.000000e+00 : f32
    %8 = vector.broadcast %cst : f32 to vector<256x128xf32>
    %9 = arith.maximumf %7, %8 : vector<256x128xf32>
    %c0_6 = arith.constant 0 : index
    %c0_7 = arith.constant 0 : index
    %c0_8 = arith.constant 0 : index
    %10 = vector.load %arg4[%c0_6, %c0_7, %c0_8] : memref<1x256x128xf32, #tpu.memory_space<vmem>>, vector<1x256x128xf32>
    %11 = vector.shape_cast %10 : vector<1x256x128xf32> to vector<256x128xf32>
    %12 = vector.shape_cast %9 : vector<256x128xf32> to vector<1x256x128xf32>
    tpu.vector_store %arg4[%c0_6, %c0_7, %c0_8], %12 {strides = array<i32>} : memref<1x256x128xf32, #tpu.memory_space<vmem>>, vector<1x256x128xf32>,
    return
  }
  func.func @transform_0(%arg0: i32) -> (i32, i32, i32) {
    %c0_i32 = arith.constant 0 : i32
    %c0_i32_0 = arith.constant 0 : i32
    %c0_i32_1 = arith.constant 0 : i32
    return %arg0, %c0_i32, %c0_i32_0 : i32, i32, i32
  }
  func.func @transform_1(%arg0: i32) -> (i32, i32) {
    %c0_i32 = arith.constant 0 : i32
    %c0_i32_0 = arith.constant 0 : i32
    %c0_i32_1 = arith.constant 0 : i32
    return %c0_i32, %c0_i32_0 : i32, i32
  }
  func.func @transform_2(%arg0: i32) -> (i32, i32) {
    %c0_i32 = arith.constant 0 : i32
    %c0_i32_0 = arith.constant 0 : i32
    %c0_i32_1 = arith.constant 0 : i32
    return %c0_i32, %c0_i32_0 : i32, i32
  }
  func.func @transform_3(%arg0: i32) -> (i32, i32, i32) {
    %c0_i32 = arith.constant 0 : i32
    %c0_i32_0 = arith.constant 0 : i32
    %c0_i32_1 = arith.constant 0 : i32
    return %arg0, %c0_i32, %c0_i32_0 : i32, i32, i32
  }
}

module attributes {stable_mosaic.version = 11 : i64} {
  func.func @_conv_stats_kernel(%arg0: i32, %arg1: memref<1x18x18x8xf32, #tpu.memory_space<vmem>>, %arg2: memref<3x3x8x128xf32, #tpu.memory_space<vmem>>, %arg3: memref<1x256x128xf32, #tpu.memory_space<vmem>>, %arg4: memref<1x2x128xf32, #tpu.memory_space<vmem>>) attributes {dimension_semantics = [#tpu.dimension_semantics<parallel>], iteration_bounds = array<i64: 2>, scalar_prefetch = 0 : i64, scratch_operands = 0 : i64, tpu.core_type = #tpu.core_type<tc>, window_params = [{transform_indices = @transform_0, window_bounds = array<i64: 1, 18, 18, 8>}, {pipeline_mode = #tpu.pipeline_mode<synchronous>, transform_indices = @transform_1, window_bounds = array<i64: 3, 3, 8, 128>}, {transform_indices = @transform_2, window_bounds = array<i64: 1, 256, 128>}, {transform_indices = @transform_3, window_bounds = array<i64: 1, 2, 128>}]} {
    %c0 = arith.constant 0 : index
    %c0_0 = arith.constant 0 : index
    %c0_1 = arith.constant 0 : index
    %c0_2 = arith.constant 0 : index
    %0 = vector.load %arg1[%c0, %c0_0, %c0_1, %c0_2] : memref<1x18x18x8xf32, #tpu.memory_space<vmem>>, vector<1x18x18x8xf32>
    %1 = vector.shape_cast %0 : vector<1x18x18x8xf32> to vector<18x18x8xf32>
    %cst = arith.constant 0.000000e+00 : f32
    %2 = vector.broadcast %cst : f32 to vector<256x128xf32>
    %3 = vector.extract_strided_slice %1 {offsets = [0, 0, 0], sizes = [16, 16, 8], strides = [1, 1, 1]} : vector<18x18x8xf32> to vector<16x16x8xf32>
    %4 = vector.shape_cast %3 : vector<16x16x8xf32> to vector<256x8xf32>
    %c0_3 = arith.constant 0 : index
    %c0_4 = arith.constant 0 : index
    %c0_5 = arith.constant 0 : index
    %c0_6 = arith.constant 0 : index
    %5 = vector.load %arg2[%c0_3, %c0_4, %c0_5, %c0_6] : memref<3x3x8x128xf32, #tpu.memory_space<vmem>>, vector<1x1x8x128xf32>
    %6 = vector.shape_cast %5 : vector<1x1x8x128xf32> to vector<8x128xf32>
    %cst_7 = arith.constant dense<0.000000e+00> : vector<256x128xf32>
    %7 = tpu.matmul %4, %6, %cst_7 {dimension_numbers = #tpu.dot_dimension_numbers<[1], [0], [0], [1], [0, 0, 1, 1], [], []>} : vector<256x8xf32>, vector<8x128xf32>, vector<256x128xf32> -> vector<256x128xf32>
    %8 = arith.addf %2, %7 : vector<256x128xf32>
    %9 = vector.extract_strided_slice %1 {offsets = [0, 1, 0], sizes = [16, 16, 8], strides = [1, 1, 1]} : vector<18x18x8xf32> to vector<16x16x8xf32>
    %10 = vector.shape_cast %9 : vector<16x16x8xf32> to vector<256x8xf32>
    %c0_8 = arith.constant 0 : index
    %c1 = arith.constant 1 : index
    %c0_9 = arith.constant 0 : index
    %c0_10 = arith.constant 0 : index
    %11 = vector.load %arg2[%c0_8, %c1, %c0_9, %c0_10] : memref<3x3x8x128xf32, #tpu.memory_space<vmem>>, vector<1x1x8x128xf32>
    %12 = vector.shape_cast %11 : vector<1x1x8x128xf32> to vector<8x128xf32>
    %cst_11 = arith.constant dense<0.000000e+00> : vector<256x128xf32>
    %13 = tpu.matmul %10, %12, %cst_11 {dimension_numbers = #tpu.dot_dimension_numbers<[1], [0], [0], [1], [0, 0, 1, 1], [], []>} : vector<256x8xf32>, vector<8x128xf32>, vector<256x128xf32> -> vector<256x128xf32>
    %14 = arith.addf %8, %13 : vector<256x128xf32>
    %15 = vector.extract_strided_slice %1 {offsets = [0, 2, 0], sizes = [16, 16, 8], strides = [1, 1, 1]} : vector<18x18x8xf32> to vector<16x16x8xf32>
    %16 = vector.shape_cast %15 : vector<16x16x8xf32> to vector<256x8xf32>
    %c0_12 = arith.constant 0 : index
    %c2 = arith.constant 2 : index
    %c0_13 = arith.constant 0 : index
    %c0_14 = arith.constant 0 : index
    %17 = vector.load %arg2[%c0_12, %c2, %c0_13, %c0_14] : memref<3x3x8x128xf32, #tpu.memory_space<vmem>>, vector<1x1x8x128xf32>
    %18 = vector.shape_cast %17 : vector<1x1x8x128xf32> to vector<8x128xf32>
    %cst_15 = arith.constant dense<0.000000e+00> : vector<256x128xf32>
    %19 = tpu.matmul %16, %18, %cst_15 {dimension_numbers = #tpu.dot_dimension_numbers<[1], [0], [0], [1], [0, 0, 1, 1], [], []>} : vector<256x8xf32>, vector<8x128xf32>, vector<256x128xf32> -> vector<256x128xf32>
    %20 = arith.addf %14, %19 : vector<256x128xf32>
    %21 = vector.extract_strided_slice %1 {offsets = [1, 0, 0], sizes = [16, 16, 8], strides = [1, 1, 1]} : vector<18x18x8xf32> to vector<16x16x8xf32>
    %22 = vector.shape_cast %21 : vector<16x16x8xf32> to vector<256x8xf32>
    %c1_16 = arith.constant 1 : index
    %c0_17 = arith.constant 0 : index
    %c0_18 = arith.constant 0 : index
    %c0_19 = arith.constant 0 : index
    %23 = vector.load %arg2[%c1_16, %c0_17, %c0_18, %c0_19] : memref<3x3x8x128xf32, #tpu.memory_space<vmem>>, vector<1x1x8x128xf32>
    %24 = vector.shape_cast %23 : vector<1x1x8x128xf32> to vector<8x128xf32>
    %cst_20 = arith.constant dense<0.000000e+00> : vector<256x128xf32>
    %25 = tpu.matmul %22, %24, %cst_20 {dimension_numbers = #tpu.dot_dimension_numbers<[1], [0], [0], [1], [0, 0, 1, 1], [], []>} : vector<256x8xf32>, vector<8x128xf32>, vector<256x128xf32> -> vector<256x128xf32>
    %26 = arith.addf %20, %25 : vector<256x128xf32>
    %27 = vector.extract_strided_slice %1 {offsets = [1, 1, 0], sizes = [16, 16, 8], strides = [1, 1, 1]} : vector<18x18x8xf32> to vector<16x16x8xf32>
    %28 = vector.shape_cast %27 : vector<16x16x8xf32> to vector<256x8xf32>
    %c1_21 = arith.constant 1 : index
    %c1_22 = arith.constant 1 : index
    %c0_23 = arith.constant 0 : index
    %c0_24 = arith.constant 0 : index
    %29 = vector.load %arg2[%c1_21, %c1_22, %c0_23, %c0_24] : memref<3x3x8x128xf32, #tpu.memory_space<vmem>>, vector<1x1x8x128xf32>
    %30 = vector.shape_cast %29 : vector<1x1x8x128xf32> to vector<8x128xf32>
    %cst_25 = arith.constant dense<0.000000e+00> : vector<256x128xf32>
    %31 = tpu.matmul %28, %30, %cst_25 {dimension_numbers = #tpu.dot_dimension_numbers<[1], [0], [0], [1], [0, 0, 1, 1], [], []>} : vector<256x8xf32>, vector<8x128xf32>, vector<256x128xf32> -> vector<256x128xf32>
    %32 = arith.addf %26, %31 : vector<256x128xf32>
    %33 = vector.extract_strided_slice %1 {offsets = [1, 2, 0], sizes = [16, 16, 8], strides = [1, 1, 1]} : vector<18x18x8xf32> to vector<16x16x8xf32>
    %34 = vector.shape_cast %33 : vector<16x16x8xf32> to vector<256x8xf32>
    %c1_26 = arith.constant 1 : index
    %c2_27 = arith.constant 2 : index
    %c0_28 = arith.constant 0 : index
    %c0_29 = arith.constant 0 : index
    %35 = vector.load %arg2[%c1_26, %c2_27, %c0_28, %c0_29] : memref<3x3x8x128xf32, #tpu.memory_space<vmem>>, vector<1x1x8x128xf32>
    %36 = vector.shape_cast %35 : vector<1x1x8x128xf32> to vector<8x128xf32>
    %cst_30 = arith.constant dense<0.000000e+00> : vector<256x128xf32>
    %37 = tpu.matmul %34, %36, %cst_30 {dimension_numbers = #tpu.dot_dimension_numbers<[1], [0], [0], [1], [0, 0, 1, 1], [], []>} : vector<256x8xf32>, vector<8x128xf32>, vector<256x128xf32> -> vector<256x128xf32>
    %38 = arith.addf %32, %37 : vector<256x128xf32>
    %39 = vector.extract_strided_slice %1 {offsets = [2, 0, 0], sizes = [16, 16, 8], strides = [1, 1, 1]} : vector<18x18x8xf32> to vector<16x16x8xf32>
    %40 = vector.shape_cast %39 : vector<16x16x8xf32> to vector<256x8xf32>
    %c2_31 = arith.constant 2 : index
    %c0_32 = arith.constant 0 : index
    %c0_33 = arith.constant 0 : index
    %c0_34 = arith.constant 0 : index
    %41 = vector.load %arg2[%c2_31, %c0_32, %c0_33, %c0_34] : memref<3x3x8x128xf32, #tpu.memory_space<vmem>>, vector<1x1x8x128xf32>
    %42 = vector.shape_cast %41 : vector<1x1x8x128xf32> to vector<8x128xf32>
    %cst_35 = arith.constant dense<0.000000e+00> : vector<256x128xf32>
    %43 = tpu.matmul %40, %42, %cst_35 {dimension_numbers = #tpu.dot_dimension_numbers<[1], [0], [0], [1], [0, 0, 1, 1], [], []>} : vector<256x8xf32>, vector<8x128xf32>, vector<256x128xf32> -> vector<256x128xf32>
    %44 = arith.addf %38, %43 : vector<256x128xf32>
    %45 = vector.extract_strided_slice %1 {offsets = [2, 1, 0], sizes = [16, 16, 8], strides = [1, 1, 1]} : vector<18x18x8xf32> to vector<16x16x8xf32>
    %46 = vector.shape_cast %45 : vector<16x16x8xf32> to vector<256x8xf32>
    %c2_36 = arith.constant 2 : index
    %c1_37 = arith.constant 1 : index
    %c0_38 = arith.constant 0 : index
    %c0_39 = arith.constant 0 : index
    %47 = vector.load %arg2[%c2_36, %c1_37, %c0_38, %c0_39] : memref<3x3x8x128xf32, #tpu.memory_space<vmem>>, vector<1x1x8x128xf32>
    %48 = vector.shape_cast %47 : vector<1x1x8x128xf32> to vector<8x128xf32>
    %cst_40 = arith.constant dense<0.000000e+00> : vector<256x128xf32>
    %49 = tpu.matmul %46, %48, %cst_40 {dimension_numbers = #tpu.dot_dimension_numbers<[1], [0], [0], [1], [0, 0, 1, 1], [], []>} : vector<256x8xf32>, vector<8x128xf32>, vector<256x128xf32> -> vector<256x128xf32>
    %50 = arith.addf %44, %49 : vector<256x128xf32>
    %51 = vector.extract_strided_slice %1 {offsets = [2, 2, 0], sizes = [16, 16, 8], strides = [1, 1, 1]} : vector<18x18x8xf32> to vector<16x16x8xf32>
    %52 = vector.shape_cast %51 : vector<16x16x8xf32> to vector<256x8xf32>
    %c2_41 = arith.constant 2 : index
    %c2_42 = arith.constant 2 : index
    %c0_43 = arith.constant 0 : index
    %c0_44 = arith.constant 0 : index
    %53 = vector.load %arg2[%c2_41, %c2_42, %c0_43, %c0_44] : memref<3x3x8x128xf32, #tpu.memory_space<vmem>>, vector<1x1x8x128xf32>
    %54 = vector.shape_cast %53 : vector<1x1x8x128xf32> to vector<8x128xf32>
    %cst_45 = arith.constant dense<0.000000e+00> : vector<256x128xf32>
    %55 = tpu.matmul %52, %54, %cst_45 {dimension_numbers = #tpu.dot_dimension_numbers<[1], [0], [0], [1], [0, 0, 1, 1], [], []>} : vector<256x8xf32>, vector<8x128xf32>, vector<256x128xf32> -> vector<256x128xf32>
    %56 = arith.addf %50, %55 : vector<256x128xf32>
    %c0_46 = arith.constant 0 : index
    %c0_47 = arith.constant 0 : index
    %c0_48 = arith.constant 0 : index
    %57 = vector.load %arg3[%c0_46, %c0_47, %c0_48] : memref<1x256x128xf32, #tpu.memory_space<vmem>>, vector<1x256x128xf32>
    %58 = vector.shape_cast %57 : vector<1x256x128xf32> to vector<256x128xf32>
    %59 = vector.shape_cast %56 : vector<256x128xf32> to vector<1x256x128xf32>
    tpu.vector_store %arg3[%c0_46, %c0_47, %c0_48], %59 {strides = array<i32>} : memref<1x256x128xf32, #tpu.memory_space<vmem>>, vector<1x256x128xf32>,
    %cst_49 = arith.constant dense<0.000000e+00> : vector<128xf32>
    %60 = vector.multi_reduction <add>, %56, %cst_49 [0] : vector<256x128xf32> to vector<128xf32>
    %61 = vector.shape_cast %60 : vector<128xf32> to vector<1x128xf32>
    %62 = arith.mulf %56, %56 : vector<256x128xf32>
    %cst_50 = arith.constant dense<0.000000e+00> : vector<128xf32>
    %63 = vector.multi_reduction <add>, %62, %cst_50 [0] : vector<256x128xf32> to vector<128xf32>
    %64 = vector.shape_cast %63 : vector<128xf32> to vector<1x128xf32>
    %65 = tpu.concatenate %61, %64 in 0 : vector<1x128xf32>, vector<1x128xf32> -> vector<2x128xf32>
    %c0_51 = arith.constant 0 : index
    %c0_52 = arith.constant 0 : index
    %c0_53 = arith.constant 0 : index
    %66 = vector.load %arg4[%c0_51, %c0_52, %c0_53] : memref<1x2x128xf32, #tpu.memory_space<vmem>>, vector<1x2x128xf32>
    %67 = vector.shape_cast %66 : vector<1x2x128xf32> to vector<2x128xf32>
    %68 = vector.shape_cast %65 : vector<2x128xf32> to vector<1x2x128xf32>
    tpu.vector_store %arg4[%c0_51, %c0_52, %c0_53], %68 {strides = array<i32>} : memref<1x2x128xf32, #tpu.memory_space<vmem>>, vector<1x2x128xf32>,
    return
  }
  func.func @transform_0(%arg0: i32) -> (i32, i32, i32, i32) {
    %c0_i32 = arith.constant 0 : i32
    %c0_i32_0 = arith.constant 0 : i32
    %c0_i32_1 = arith.constant 0 : i32
    %c0_i32_2 = arith.constant 0 : i32
    return %arg0, %c0_i32, %c0_i32_0, %c0_i32_1 : i32, i32, i32, i32
  }
  func.func @transform_1(%arg0: i32) -> (i32, i32, i32, i32) {
    %c0_i32 = arith.constant 0 : i32
    %c0_i32_0 = arith.constant 0 : i32
    %c0_i32_1 = arith.constant 0 : i32
    %c0_i32_2 = arith.constant 0 : i32
    %c0_i32_3 = arith.constant 0 : i32
    return %c0_i32, %c0_i32_0, %c0_i32_1, %c0_i32_2 : i32, i32, i32, i32
  }
  func.func @transform_2(%arg0: i32) -> (i32, i32, i32) {
    %c0_i32 = arith.constant 0 : i32
    %c0_i32_0 = arith.constant 0 : i32
    %c0_i32_1 = arith.constant 0 : i32
    return %arg0, %c0_i32, %c0_i32_0 : i32, i32, i32
  }
  func.func @transform_3(%arg0: i32) -> (i32, i32, i32) {
    %c0_i32 = arith.constant 0 : i32
    %c0_i32_0 = arith.constant 0 : i32
    %c0_i32_1 = arith.constant 0 : i32
    return %arg0, %c0_i32, %c0_i32_0 : i32, i32, i32
  }
}

</mosaic_0001>

<llo_original>
// kernel: double_conv.5
$region0: #{double_conv.5}
  #allocation0 [shape = 'u32[]', space=smem, size = 0x4, offset = 0x4, fixed_abs, tag = 'smem constant byte address 0x4 - core index']
  #allocation1 [shape = 'u32[144,128]{1,0:T(1,128)}', space=vmem, size = 0x12000, scoped, tag = 'internal scratch']
  %s0 = inlined_call_operand.vmem [shape: f32[2,256,128], index: 0, kind: input, shape index: {}, may-alias: {0,3}]
  %s1 = inlined_call_operand.vmem [shape: f32[1,128], index: 1, kind: input, shape index: {}]
  %s2 = inlined_call_operand.vmem [shape: f32[1,128], index: 2, kind: input, shape index: {}]
  %s3 = inlined_call_operand.vmem [shape: f32[2,256,128], index: 3, kind: output, shape index: {}, may-alias: {0,3}]
  %s4 = sld [smem:[#allocation0]]
  $region45: #{double_conv.5} parent=0
    _
  %s6 = ssub.s32 1, %s4
  %s7 = scalar_select 0, %s6, %s4
  loop: start=0, step=1, limit=4
  $region2: #{double_conv.5} parent=0 // loop_pre_header
    _
  $region3: #{double_conv.5} parent=0 // loop_header
    %s9 = sphi 0, %s13
    %p10 = scmp.ge.s32.totalorder %s9, 4
    %s19 = sphi 0, %s21
    %s22 = sphi 0, %s19
    %s23 = sphi 0, %s22
    %s39 = sphi 0, %s23
    %s43 = sphi 0, %s43
    %s45 = sphi 0, %s43
    %s46 = sphi 0, %s45
    %s60 = sphi 0, %s46
    %s64 = sphi 0, %s64
    %s66 = sphi 0, %s64
    %s67 = sphi 0, %s66
    %s81 = sphi 0, %s67
    %s87 = sphi 0, %s89
    %s90 = sphi 0, %s87
    %s91 = sphi 0, %s90
    %s107 = sphi 0, %s91
  $region4: #{double_conv.5} parent=0 // loop_header_branch
    %12 = sbr.rel (%p10) target = $region8
  $region5: #{double_conv.5} parent=0 // loop_body
    %s14 = ssub.s32 %s9, 1
    %s15 = ssub.s32 %s9, 2
    %s16 = sadd.s32 %s9, 1
    %s17 = ssub.s32 %s9, %s16
    %p18 = scmp.eq.s32.totalorder %s17, 0
    %s20 = sadd.s32 %s19, 1
    %s21 = scalar_select %p18, %s19, %s20
    %p24 = pneg %p18
    %p25 = scmp.eq.s32.totalorder %s9, 1
    %p26 = por %p24, %p25
    %p27 = scmp.ne.s32.totalorder %s19, %s22
    %p28 = scmp.eq.s32.totalorder %s9, 0
    %p29 = por %p27, %p28
    %p30 = scmp.ne.s32.totalorder %s19, %s22
    %p31 = scmp.eq.s32.totalorder %s14, 1
    %p32 = por %p30, %p31
    %p33 = scmp.ne.s32.totalorder %s22, %s23
    %p34 = scmp.eq.s32.totalorder %s14, 0
    %p35 = por %p33, %p34
    %p36 = scmp.ne.s32.totalorder %s22, %s23
    %p37 = scmp.eq.s32.totalorder %s15, 1
    %p38 = por %p36, %p37
    %p40 = scmp.ne.s32.totalorder %s23, %s39
    %p41 = scmp.eq.s32.totalorder %s15, 0
    %p42 = por %p40, %p41
    %s44 = sadd.s32 %s43, 1
    %p47 = scmp.eq.s32.totalorder %s9, 1
    %p48 = scmp.ne.s32.totalorder %s43, %s45
    %p49 = scmp.eq.s32.totalorder %s9, 0
    %p50 = por %p48, %p49
    %p51 = scmp.ne.s32.totalorder %s43, %s45
    %p52 = scmp.eq.s32.totalorder %s14, 1
    %p53 = por %p51, %p52
    %p54 = scmp.ne.s32.totalorder %s45, %s46
    %p55 = scmp.eq.s32.totalorder %s14, 0
    %p56 = por %p54, %p55
    %p57 = scmp.ne.s32.totalorder %s45, %s46
    %p58 = scmp.eq.s32.totalorder %s15, 1
    %p59 = por %p57, %p58
    %p61 = scmp.ne.s32.totalorder %s46, %s60
    %p62 = scmp.eq.s32.totalorder %s15, 0
    %p63 = por %p61, %p62
    %s65 = sadd.s32 %s64, 1
    %p68 = scmp.eq.s32.totalorder %s9, 1
    %p69 = scmp.ne.s32.totalorder %s64, %s66
    %p70 = scmp.eq.s32.totalorder %s9, 0
    %p71 = por %p69, %p70
    %p72 = scmp.ne.s32.totalorder %s64, %s66
    %p73 = scmp.eq.s32.totalorder %s14, 1
    %p74 = por %p72, %p73
    %p75 = scmp.ne.s32.totalorder %s66, %s67
    %p76 = scmp.eq.s32.totalorder %s14, 0
    %p77 = por %p75, %p76
    %p78 = scmp.ne.s32.totalorder %s66, %s67
    %p79 = scmp.eq.s32.totalorder %s15, 1
    %p80 = por %p78, %p79
    %p82 = scmp.ne.s32.totalorder %s67, %s81
    %p83 = scmp.eq.s32.totalorder %s15, 0
    %p84 = por %p82, %p83
    %s85 = ssub.s32 %s9, %s16
    %p86 = scmp.eq.s32.totalorder %s85, 0
    %s88 = sadd.s32 %s87, 1
    %s89 = scalar_select %p86, %s87, %s88
    %p92 = pneg %p86
    %p93 = scmp.eq.s32.totalorder %s9, 1
    %p94 = por %p92, %p93
    %p95 = scmp.ne.s32.totalorder %s87, %s90
    %p96 = scmp.eq.s32.totalorder %s9, 0
    %p97 = por %p95, %p96
    %p98 = scmp.ne.s32.totalorder %s87, %s90
    %p99 = scmp.eq.s32.totalorder %s14, 1
    %p100 = por %p98, %p99
    %p101 = scmp.ne.s32.totalorder %s90, %s91
    %p102 = scmp.eq.s32.totalorder %s14, 0
    %p103 = por %p101, %p102
    %p104 = scmp.ne.s32.totalorder %s90, %s91
    %p105 = scmp.eq.s32.totalorder %s15, 1
    %p106 = por %p104, %p105
    %p108 = scmp.ne.s32.totalorder %s91, %s107
    %p109 = scmp.eq.s32.totalorder %s15, 0
    %p110 = por %p108, %p109
    %p111 = scmp.le.s32.totalorder 1, %s9
    %p112 = scmp.lt.s32.totalorder %s9, 3
    %p113 = pnand %p111, %p112
    %p114 = pneg %p113
    // Predicated region
    $region9: #{double_conv.5} parent=5 // pred_check
      _
    $region10: #{double_conv.5} parent=5 // pred_check_branch
      %116 = sbr.rel (%p113) target = $region12
    $region11: #{double_conv.5} parent=5 // pred_region
      %s117 = ssub.s32 %s9, 1
      // Predicated region
      $region13: #{double_conv.5} parent=11 // pred_check
        %p118 = pneg %p56
      $region14: #{double_conv.5} parent=11 // pred_check_branch
        %120 = sbr.rel (%p118) target = $region16
      $region15: #{double_conv.5} parent=11 // pred_region
        _
      $region16: #{double_conv.5} parent=11 // pred_fallthru
        _
      // Predicated region
      $region17: #{double_conv.5} parent=11 // pred_check
        %p121 = pneg %p77
      $region18: #{double_conv.5} parent=11 // pred_check_branch
        %123 = sbr.rel (%p121) target = $region20
      $region19: #{double_conv.5} parent=11 // pred_region
        _
      $region20: #{double_conv.5} parent=11 // pred_fallthru
        _
    $region12: #{double_conv.5} parent=5 // pred_fallthru
      _
    %p124 = scmp.lt.s32.totalorder %s9, 2
    // Predicated region
    $region21: #{double_conv.5} parent=5 // pred_check
      %p125 = pneg %p124
    $region22: #{double_conv.5} parent=5 // pred_check_branch
      %127 = sbr.rel (%p125) target = $region24
    $region23: #{double_conv.5} parent=5 // pred_region
      // Predicated region
      $region25: #{double_conv.5} parent=23 // pred_check
        %p128 = pneg %p29
      $region26: #{double_conv.5} parent=23 // pred_check_branch
        %130 = sbr.rel (%p128) target = $region28
      $region27: #{double_conv.5} parent=23 // pred_region
        %p131 = scmp.lt.s32.totalorder %s9, 1
        %s132 = scalar_select %p131, %s9, 1
        %s133 = smul.addr %s132, 32
        %s134 = smul.addr %s133, 8
        %s135 = scalar_lea.vmem %s0, %s134
      $region28: #{double_conv.5} parent=23 // pred_fallthru
        _
    $region24: #{double_conv.5} parent=5 // pred_fallthru
      _
    %p136 = scmp.le.s32.totalorder 1, %s9
    %p137 = scmp.lt.s32.totalorder %s9, 3
    %p138 = pnand %p136, %p137
    %p139 = pneg %p138
    // Predicated region
    $region29: #{double_conv.5} parent=5 // pred_check
      _
    $region30: #{double_conv.5} parent=5 // pred_check_branch
      %141 = sbr.rel (%p138) target = $region32
    $region31: #{double_conv.5} parent=5 // pred_region
      %s142 = ssub.s32 %s9, 1
      %p143 = scmp.lt.s32.totalorder %s14, 1
      %s144 = scalar_select %p143, %s14, 1
      %s145 = smul.addr %s144, 32
      %s146 = smul.addr %s145, 8
      %s147 = scalar_lea.vmem %s0, %s146
      %p148 = pneg %p35
      %p149 = pneg %p32
      %p150 = pneg %p56
      %p151 = pneg %p53
      %p152 = pneg %p77
      %p153 = pneg %p74
      %p154 = pneg %p103
      %p155 = pneg %p100
      %p156 = scmp.lt.s32.totalorder %s14, 1
      %s157 = scalar_select %p156, %s14, 1
      %s158 = smul.addr %s157, 32
      %s159 = smul.addr %s158, 8
      %s160 = scalar_lea.vmem %s3, %s159
      %p161 = scmp.lt.s32.totalorder %s14, 1
      %s162 = scalar_select %p161, %s14, 1
      %s163 = smul.addr %s162, 32
      %s164 = smul.addr %s163, 8
      %s165 = scalar_lea.vmem %s0, %s164
      %p166 = scmp.lt.s32.totalorder %s14, 1
      %s167 = scalar_select %p166, %s14, 1
      %s168 = smul.addr %s167, 32
      %s169 = smul.addr %s168, 8
      %s170 = scalar_lea.vmem %s3, %s169
      %v171 = vld [vmem:[%s165] sm:$0xff]
      %v172 = vld [vmem:[%s165 + $0x8] sm:$0xff]
      %v173 = vld [vmem:[%s165 + $0x10] sm:$0xff]
      %v174 = vld [vmem:[%s165 + $0x18] sm:$0xff]
      %v175 = vld [vmem:[%s165 + $0x20] sm:$0xff]
      %v176 = vld [vmem:[%s165 + $0x28] sm:$0xff]
      %v177 = vld [vmem:[%s165 + $0x30] sm:$0xff]
      %v178 = vld [vmem:[%s165 + $0x38] sm:$0xff]
      %v179 = vld [vmem:[%s165 + $0x40] sm:$0xff]
      %v180 = vld [vmem:[%s165 + $0x48] sm:$0xff]
      %v181 = vld [vmem:[%s165 + $0x50] sm:$0xff]
      %v182 = vld [vmem:[%s165 + $0x58] sm:$0xff]
      %v183 = vld [vmem:[%s165 + $0x60] sm:$0xff]
      %v184 = vld [vmem:[%s165 + $0x68] sm:$0xff]
      %v185 = vld [vmem:[%s165 + $0x70] sm:$0xff]
      %v186 = vld [vmem:[%s165 + $0x78] sm:$0xff]
      %v187 = vld [vmem:[%s165 + $0x80] sm:$0xff]
      %v188 = vld [vmem:[%s165 + $0x88] sm:$0xff]
      %v189 = vld [vmem:[%s165 + $0x90] sm:$0xff]
      %v190 = vld [vmem:[%s165 + $0x98] sm:$0xff]
      %v191 = vld [vmem:[%s165 + $0xa0] sm:$0xff]
      %v192 = vld [vmem:[%s165 + $0xa8] sm:$0xff]
      %v193 = vld [vmem:[%s165 + $0xb0] sm:$0xff]
      %v194 = vld [vmem:[%s165 + $0xb8] sm:$0xff]
      %v195 = vld [vmem:[%s165 + $0xc0] sm:$0xff]
      %v196 = vld [vmem:[%s165 + $0xc8] sm:$0xff]
      %v197 = vld [vmem:[%s165 + $0xd0] sm:$0xff]
      %v198 = vld [vmem:[%s165 + $0xd8] sm:$0xff]
      %v199 = vld [vmem:[%s165 + $0xe0] sm:$0xff]
      %v200 = vld [vmem:[%s165 + $0xe8] sm:$0xff]
      %v201 = vld [vmem:[%s165 + $0xf0] sm:$0xff]
      %v202 = vld [vmem:[%s165 + $0xf8] sm:$0xff]
      %v203 = vld [vmem:[%s1] sm:$0x1]
      %v205 = vlaneseq
      %v206 = vshrl.u32 %v205, 7
      %v207 = vsub.s32 0, %v206
      %v208 = vrot.slane %v203, %v207
      %v210 = vmul.f32 %v171, %v208
      %v211 = vmul.f32 %v172, %v208
      %v212 = vmul.f32 %v173, %v208
      %v213 = vmul.f32 %v174, %v208
      %v214 = vmul.f32 %v175, %v208
      %v215 = vmul.f32 %v176, %v208
      %v216 = vmul.f32 %v177, %v208
      %v217 = vmul.f32 %v178, %v208
      %v218 = vmul.f32 %v179, %v208
      %v219 = vmul.f32 %v180, %v208
      %v220 = vmul.f32 %v181, %v208
      %v221 = vmul.f32 %v182, %v208
      %v222 = vmul.f32 %v183, %v208
      %v223 = vmul.f32 %v184, %v208
      %v224 = vmul.f32 %v185, %v208
      %v225 = vmul.f32 %v186, %v208
      %v226 = vmul.f32 %v187, %v208
      %v227 = vmul.f32 %v188, %v208
      %v228 = vmul.f32 %v189, %v208
      %v229 = vmul.f32 %v190, %v208
      %v230 = vmul.f32 %v191, %v208
      %v231 = vmul.f32 %v192, %v208
      %v232 = vmul.f32 %v193, %v208
      %v233 = vmul.f32 %v194, %v208
      %v234 = vmul.f32 %v195, %v208
      %v235 = vmul.f32 %v196, %v208
      %v236 = vmul.f32 %v197, %v208
      %v237 = vmul.f32 %v198, %v208
      %v238 = vmul.f32 %v199, %v208
      %v239 = vmul.f32 %v200, %v208
      %v240 = vmul.f32 %v201, %v208
      %v241 = vmul.f32 %v202, %v208
      %v242 = vld [vmem:[%s2] sm:$0x1]
      %v244 = vlaneseq
      %v245 = vshrl.u32 %v244, 7
      %v246 = vsub.s32 0, %v245
      %v247 = vrot.slane %v242, %v246
      %v249 = vadd.f32 %v210, %v247
      %v250 = vadd.f32 %v211, %v247
      %v251 = vadd.f32 %v212, %v247
      %v252 = vadd.f32 %v213, %v247
      %v253 = vadd.f32 %v214, %v247
      %v254 = vadd.f32 %v215, %v247
      %v255 = vadd.f32 %v216, %v247
      %v256 = vadd.f32 %v217, %v247
      %v257 = vadd.f32 %v218, %v247
      %v258 = vadd.f32 %v219, %v247
      %v259 = vadd.f32 %v220, %v247
      %v260 = vadd.f32 %v221, %v247
      %v261 = vadd.f32 %v222, %v247
      %v262 = vadd.f32 %v223, %v247
      %v263 = vadd.f32 %v224, %v247
      %v264 = vadd.f32 %v225, %v247
      %v265 = vadd.f32 %v226, %v247
      %v266 = vadd.f32 %v227, %v247
      %v267 = vadd.f32 %v228, %v247
      %v268 = vadd.f32 %v229, %v247
      %v269 = vadd.f32 %v230, %v247
      %v270 = vadd.f32 %v231, %v247
      %v271 = vadd.f32 %v232, %v247
      %v272 = vadd.f32 %v233, %v247
      %v273 = vadd.f32 %v234, %v247
      %v274 = vadd.f32 %v235, %v247
      %v275 = vadd.f32 %v236, %v247
      %v276 = vadd.f32 %v237, %v247
      %v277 = vadd.f32 %v238, %v247
      %v278 = vadd.f32 %v239, %v247
      %v279 = vadd.f32 %v240, %v247
      %v280 = vadd.f32 %v241, %v247
      %v281 = vmax.f32 %v249, 0.0
      %v282 = vmax.f32 %v250, 0.0
      %v283 = vmax.f32 %v251, 0.0
      %v284 = vmax.f32 %v252, 0.0
      %v285 = vmax.f32 %v253, 0.0
      %v286 = vmax.f32 %v254, 0.0
      %v287 = vmax.f32 %v255, 0.0
      %v288 = vmax.f32 %v256, 0.0
      %v289 = vmax.f32 %v257, 0.0
      %v290 = vmax.f32 %v258, 0.0
      %v291 = vmax.f32 %v259, 0.0
      %v292 = vmax.f32 %v260, 0.0
      %v293 = vmax.f32 %v261, 0.0
      %v294 = vmax.f32 %v262, 0.0
      %v295 = vmax.f32 %v263, 0.0
      %v296 = vmax.f32 %v264, 0.0
      %v297 = vmax.f32 %v265, 0.0
      %v298 = vmax.f32 %v266, 0.0
      %v299 = vmax.f32 %v267, 0.0
      %v300 = vmax.f32 %v268, 0.0
      %v301 = vmax.f32 %v269, 0.0
      %v302 = vmax.f32 %v270, 0.0
      %v303 = vmax.f32 %v271, 0.0
      %v304 = vmax.f32 %v272, 0.0
      %v305 = vmax.f32 %v273, 0.0
      %v306 = vmax.f32 %v274, 0.0
      %v307 = vmax.f32 %v275, 0.0
      %v308 = vmax.f32 %v276, 0.0
      %v309 = vmax.f32 %v277, 0.0
      %v310 = vmax.f32 %v278, 0.0
      %v311 = vmax.f32 %v279, 0.0
      %v312 = vmax.f32 %v280, 0.0
      %313 = vst [vmem:[%s170] sm:$0xff] %v281
      %314 = vst [vmem:[%s170 + $0x8] sm:$0xff] %v282
      %315 = vst [vmem:[%s170 + $0x10] sm:$0xff] %v283
      %316 = vst [vmem:[%s170 + $0x18] sm:$0xff] %v284
      %317 = vst [vmem:[%s170 + $0x20] sm:$0xff] %v285
      %318 = vst [vmem:[%s170 + $0x28] sm:$0xff] %v286
      %319 = vst [vmem:[%s170 + $0x30] sm:$0xff] %v287
      %320 = vst [vmem:[%s170 + $0x38] sm:$0xff] %v288
      %321 = vst [vmem:[%s170 + $0x40] sm:$0xff] %v289
      %322 = vst [vmem:[%s170 + $0x48] sm:$0xff] %v290
      %323 = vst [vmem:[%s170 + $0x50] sm:$0xff] %v291
      %324 = vst [vmem:[%s170 + $0x58] sm:$0xff] %v292
      %325 = vst [vmem:[%s170 + $0x60] sm:$0xff] %v293
      %326 = vst [vmem:[%s170 + $0x68] sm:$0xff] %v294
      %327 = vst [vmem:[%s170 + $0x70] sm:$0xff] %v295
      %328 = vst [vmem:[%s170 + $0x78] sm:$0xff] %v296
      %329 = vst [vmem:[%s170 + $0x80] sm:$0xff] %v297
      %330 = vst [vmem:[%s170 + $0x88] sm:$0xff] %v298
      %331 = vst [vmem:[%s170 + $0x90] sm:$0xff] %v299
      %332 = vst [vmem:[%s170 + $0x98] sm:$0xff] %v300
      %333 = vst [vmem:[%s170 + $0xa0] sm:$0xff] %v301
      %334 = vst [vmem:[%s170 + $0xa8] sm:$0xff] %v302
      %335 = vst [vmem:[%s170 + $0xb0] sm:$0xff] %v303
      %336 = vst [vmem:[%s170 + $0xb8] sm:$0xff] %v304
      %337 = vst [vmem:[%s170 + $0xc0] sm:$0xff] %v305
      %338 = vst [vmem:[%s170 + $0xc8] sm:$0xff] %v306
      %339 = vst [vmem:[%s170 + $0xd0] sm:$0xff] %v307
      %340 = vst [vmem:[%s170 + $0xd8] sm:$0xff] %v308
      %341 = vst [vmem:[%s170 + $0xe0] sm:$0xff] %v309
      %342 = vst [vmem:[%s170 + $0xe8] sm:$0xff] %v310
      %343 = vst [vmem:[%s170 + $0xf0] sm:$0xff] %v311
      %344 = vst [vmem:[%s170 + $0xf8] sm:$0xff] %v312
      %p345 = scmp.lt.s32.totalorder %s14, 1
      %s346 = scalar_select %p345, %s14, 1
      %s347 = smul.addr %s346, 32
      %s348 = smul.addr %s347, 8
      %s349 = scalar_lea.vmem %s3, %s348
      // Predicated region
      $region33: #{double_conv.5} parent=31 // pred_check
        %p350 = pneg %p100
      $region34: #{double_conv.5} parent=31 // pred_check_branch
        %352 = sbr.rel (%p350) target = $region36
      $region35: #{double_conv.5} parent=31 // pred_region
        _
      $region36: #{double_conv.5} parent=31 // pred_fallthru
        _
    $region32: #{double_conv.5} parent=5 // pred_fallthru
      _
    %p353 = scmp.le.s32.totalorder 2, %s9
    // Predicated region
    $region37: #{double_conv.5} parent=5 // pred_check
      %p354 = pneg %p353
    $region38: #{double_conv.5} parent=5 // pred_check_branch
      %356 = sbr.rel (%p354) target = $region40
    $region39: #{double_conv.5} parent=5 // pred_region
      %s357 = ssub.s32 %s9, 2
      // Predicated region
      $region41: #{double_conv.5} parent=39 // pred_check
        %p358 = pneg %p106
      $region42: #{double_conv.5} parent=39 // pred_check_branch
        %360 = sbr.rel (%p358) target = $region44
      $region43: #{double_conv.5} parent=39 // pred_region
        %p361 = scmp.lt.s32.totalorder %s15, 1
        %s362 = scalar_select %p361, %s15, 1
        %s363 = smul.addr %s362, 32
        %s364 = smul.addr %s363, 8
        %s365 = scalar_lea.vmem %s3, %s364
      $region44: #{double_conv.5} parent=39 // pred_fallthru
        _
    $region40: #{double_conv.5} parent=5 // pred_fallthru
      _
  $region6: #{double_conv.5} parent=0 // loop_footer
    %s13 = sadd.s32 1, %s9
  $region7: #{double_conv.5} parent=0 // loop_footer_branch
    %8 = sbr.rel target = $region3
  $region8: #{double_conv.5} parent=0 // loop_exit
    _

// kernel: double_conv.4
$region0: #{double_conv.4}
  #allocation0 [shape = 'u32[]', space=smem, size = 0x4, offset = 0x4, fixed_abs, tag = 'smem constant byte address 0x4 - core index']
  #allocation1 [shape = 'u32[144,128]{1,0:T(1,128)}', space=vmem, size = 0x12000, scoped, tag = 'internal scratch']
  %s0 = inlined_call_operand.vmem [shape: f32[2,18,18,4], index: 0, kind: input, shape index: {}]
  %s1 = inlined_call_operand.vmem [shape: f32[3,3,4,128], index: 1, kind: input, shape index: {}]
  %s2 = inlined_call_operand.vmem [shape: f32[2,256,128], index: 2, kind: output, shape index: {0}]
  %s3 = inlined_call_operand.vmem [shape: f32[2,2,128], index: 3, kind: output, shape index: {1}]
  %4 = xla_tuple %s2, %s3
  %s5 = sld [smem:[#allocation0]]
  $region49: #{double_conv.4} parent=0
    _
  %s7 = ssub.s32 1, %s5
  %s8 = scalar_select 0, %s7, %s5
  loop: start=0, step=1, limit=4
  $region2: #{double_conv.4} parent=0 // loop_pre_header
    _
  $region3: #{double_conv.4} parent=0 // loop_header
    %s10 = sphi 0, %s14
    %p11 = scmp.ge.s32.totalorder %s10, 4
    %s20 = sphi 0, %s22
    %s23 = sphi 0, %s20
    %s24 = sphi 0, %s23
    %s40 = sphi 0, %s24
    %s44 = sphi 0, %s44
    %s46 = sphi 0, %s44
    %s47 = sphi 0, %s46
    %s61 = sphi 0, %s47
    %s67 = sphi 0, %s69
    %s70 = sphi 0, %s67
    %s71 = sphi 0, %s70
    %s87 = sphi 0, %s71
    %s93 = sphi 0, %s95
    %s96 = sphi 0, %s93
    %s97 = sphi 0, %s96
    %s113 = sphi 0, %s97
  $region4: #{double_conv.4} parent=0 // loop_header_branch
    %13 = sbr.rel (%p11) target = $region8
  $region5: #{double_conv.4} parent=0 // loop_body
    %s15 = ssub.s32 %s10, 1
    %s16 = ssub.s32 %s10, 2
    %s17 = sadd.s32 %s10, 1
    %s18 = ssub.s32 %s10, %s17
    %p19 = scmp.eq.s32.totalorder %s18, 0
    %s21 = sadd.s32 %s20, 1
    %s22 = scalar_select %p19, %s20, %s21
    %p25 = pneg %p19
    %p26 = scmp.eq.s32.totalorder %s10, 1
    %p27 = por %p25, %p26
    %p28 = scmp.ne.s32.totalorder %s20, %s23
    %p29 = scmp.eq.s32.totalorder %s10, 0
    %p30 = por %p28, %p29
    %p31 = scmp.ne.s32.totalorder %s20, %s23
    %p32 = scmp.eq.s32.totalorder %s15, 1
    %p33 = por %p31, %p32
    %p34 = scmp.ne.s32.totalorder %s23, %s24
    %p35 = scmp.eq.s32.totalorder %s15, 0
    %p36 = por %p34, %p35
    %p37 = scmp.ne.s32.totalorder %s23, %s24
    %p38 = scmp.eq.s32.totalorder %s16, 1
    %p39 = por %p37, %p38
    %p41 = scmp.ne.s32.totalorder %s24, %s40
    %p42 = scmp.eq.s32.totalorder %s16, 0
    %p43 = por %p41, %p42
    %s45 = sadd.s32 %s44, 1
    %p48 = scmp.eq.s32.totalorder %s10, 1
    %p49 = scmp.ne.s32.totalorder %s44, %s46
    %p50 = scmp.eq.s32.totalorder %s10, 0
    %p51 = por %p49, %p50
    %p52 = scmp.ne.s32.totalorder %s44, %s46
    %p53 = scmp.eq.s32.totalorder %s15, 1
    %p54 = por %p52, %p53
    %p55 = scmp.ne.s32.totalorder %s46, %s47
    %p56 = scmp.eq.s32.totalorder %s15, 0
    %p57 = por %p55, %p56
    %p58 = scmp.ne.s32.totalorder %s46, %s47
    %p59 = scmp.eq.s32.totalorder %s16, 1
    %p60 = por %p58, %p59
    %p62 = scmp.ne.s32.totalorder %s47, %s61
    %p63 = scmp.eq.s32.totalorder %s16, 0
    %p64 = por %p62, %p63
    %s65 = ssub.s32 %s10, %s17
    %p66 = scmp.eq.s32.totalorder %s65, 0
    %s68 = sadd.s32 %s67, 1
    %s69 = scalar_select %p66, %s67, %s68
    %p72 = pneg %p66
    %p73 = scmp.eq.s32.totalorder %s10, 1
    %p74 = por %p72, %p73
    %p75 = scmp.ne.s32.totalorder %s67, %s70
    %p76 = scmp.eq.s32.totalorder %s10, 0
    %p77 = por %p75, %p76
    %p78 = scmp.ne.s32.totalorder %s67, %s70
    %p79 = scmp.eq.s32.totalorder %s15, 1
    %p80 = por %p78, %p79
    %p81 = scmp.ne.s32.totalorder %s70, %s71
    %p82 = scmp.eq.s32.totalorder %s15, 0
    %p83 = por %p81, %p82
    %p84 = scmp.ne.s32.totalorder %s70, %s71
    %p85 = scmp.eq.s32.totalorder %s16, 1
    %p86 = por %p84, %p85
    %p88 = scmp.ne.s32.totalorder %s71, %s87
    %p89 = scmp.eq.s32.totalorder %s16, 0
    %p90 = por %p88, %p89
    %s91 = ssub.s32 %s10, %s17
    %p92 = scmp.eq.s32.totalorder %s91, 0
    %s94 = sadd.s32 %s93, 1
    %s95 = scalar_select %p92, %s93, %s94
    %p98 = pneg %p92
    %p99 = scmp.eq.s32.totalorder %s10, 1
    %p100 = por %p98, %p99
    %p101 = scmp.ne.s32.totalorder %s93, %s96
    %p102 = scmp.eq.s32.totalorder %s10, 0
    %p103 = por %p101, %p102
    %p104 = scmp.ne.s32.totalorder %s93, %s96
    %p105 = scmp.eq.s32.totalorder %s15, 1
    %p106 = por %p104, %p105
    %p107 = scmp.ne.s32.totalorder %s96, %s97
    %p108 = scmp.eq.s32.totalorder %s15, 0
    %p109 = por %p107, %p108
    %p110 = scmp.ne.s32.totalorder %s96, %s97
    %p111 = scmp.eq.s32.totalorder %s16, 1
    %p112 = por %p110, %p111
    %p114 = scmp.ne.s32.totalorder %s97, %s113
    %p115 = scmp.eq.s32.totalorder %s16, 0
    %p116 = por %p114, %p115
    %p117 = scmp.le.s32.totalorder 1, %s10
    %p118 = scmp.lt.s32.totalorder %s10, 3
    %p119 = pnand %p117, %p118
    %p120 = pneg %p119
    // Predicated region
    $region9: #{double_conv.4} parent=5 // pred_check
      _
    $region10: #{double_conv.4} parent=5 // pred_check_branch
      %122 = sbr.rel (%p119) target = $region12
    $region11: #{double_conv.4} parent=5 // pred_region
      %s123 = ssub.s32 %s10, 1
      // Predicated region
      $region13: #{double_conv.4} parent=11 // pred_check
        %p124 = pneg %p57
      $region14: #{double_conv.4} parent=11 // pred_check_branch
        %126 = sbr.rel (%p124) target = $region16
      $region15: #{double_conv.4} parent=11 // pred_region
        _
      $region16: #{double_conv.4} parent=11 // pred_fallthru
        _
    $region12: #{double_conv.4} parent=5 // pred_fallthru
      _
    %p127 = scmp.lt.s32.totalorder %s10, 2
    // Predicated region
    $region17: #{double_conv.4} parent=5 // pred_check
      %p128 = pneg %p127
    $region18: #{double_conv.4} parent=5 // pred_check_branch
      %130 = sbr.rel (%p128) target = $region20
    $region19: #{double_conv.4} parent=5 // pred_region
      // Predicated region
      $region21: #{double_conv.4} parent=19 // pred_check
        %p131 = pneg %p30
      $region22: #{double_conv.4} parent=19 // pred_check_branch
        %133 = sbr.rel (%p131) target = $region24
      $region23: #{double_conv.4} parent=19 // pred_region
        %p134 = scmp.lt.s32.totalorder %s10, 1
        %s135 = scalar_select %p134, %s10, 1
        %s136 = smul.addr %s135, 54
        %s137 = smul.addr %s136, 8
        %s138 = scalar_lea.vmem %s0, %s137
      $region24: #{double_conv.4} parent=19 // pred_fallthru
        _
    $region20: #{double_conv.4} parent=5 // pred_fallthru
      _
    %p139 = scmp.le.s32.totalorder 1, %s10
    %p140 = scmp.lt.s32.totalorder %s10, 3
    %p141 = pnand %p139, %p140
    %p142 = pneg %p141
    // Predicated region
    $region25: #{double_conv.4} parent=5 // pred_check
      _
    $region26: #{double_conv.4} parent=5 // pred_check_branch
      %144 = sbr.rel (%p141) target = $region28
    $region27: #{double_conv.4} parent=5 // pred_region
      %s145 = ssub.s32 %s10, 1
      %p146 = scmp.lt.s32.totalorder %s15, 1
      %s147 = scalar_select %p146, %s15, 1
      %s148 = smul.addr %s147, 54
      %s149 = smul.addr %s148, 8
      %s150 = scalar_lea.vmem %s0, %s149
      %p151 = pneg %p36
      %p152 = pneg %p33
      %p153 = pneg %p57
      %p154 = pneg %p54
      %p155 = pneg %p83
      %p156 = pneg %p80
      %p157 = scmp.lt.s32.totalorder %s15, 1
      %s158 = scalar_select %p157, %s15, 1
      %s159 = smul.addr %s158, 32
      %s160 = smul.addr %s159, 8
      %s161 = scalar_lea.vmem %s2, %s160
      %p162 = pneg %p109
      %p163 = pneg %p106
      %p164 = scmp.lt.s32.totalorder %s15, 1
      %s165 = scalar_select %p164, %s15, 1
      %s166 = smul.addr %s165, 2
      %s167 = scalar_lea.vmem %s3, %s166
      %p168 = scmp.lt.s32.totalorder %s15, 1
      %s169 = scalar_select %p168, %s15, 1
      %s170 = smul.addr %s169, 54
      %s171 = smul.addr %s170, 8
      %s172 = scalar_lea.vmem %s0, %s171
      %p173 = scmp.lt.s32.totalorder %s15, 1
      %s174 = scalar_select %p173, %s15, 1
      %s175 = smul.addr %s174, 32
      %s176 = smul.addr %s175, 8
      %s177 = scalar_lea.vmem %s2, %s176
      %p178 = scmp.lt.s32.totalorder %s15, 1
      %s179 = scalar_select %p178, %s15, 1
      %s180 = smul.addr %s179, 2
      %s181 = scalar_lea.vmem %s3, %s180
      %v182 = vld [vmem:[%s172] sm:$0xff]
      %v183 = vld [vmem:[%s172 + $0x8] sm:$0xff]
      %v184 = vld [vmem:[%s172 + $0x10] sm:$0x3]
      %v185 = vld [vmem:[%s172 + $0x18] sm:$0xff]
      %v186 = vld [vmem:[%s172 + $0x20] sm:$0xff]
      %v187 = vld [vmem:[%s172 + $0x28] sm:$0x3]
      %v188 = vld [vmem:[%s172 + $0x30] sm:$0xff]
      %v189 = vld [vmem:[%s172 + $0x38] sm:$0xff]
      %v190 = vld [vmem:[%s172 + $0x40] sm:$0x3]
      %v191 = vld [vmem:[%s172 + $0x48] sm:$0xff]
      %v192 = vld [vmem:[%s172 + $0x50] sm:$0xff]
      %v193 = vld [vmem:[%s172 + $0x58] sm:$0x3]
      %v194 = vld [vmem:[%s172 + $0x60] sm:$0xff]
      %v195 = vld [vmem:[%s172 + $0x68] sm:$0xff]
      %v196 = vld [vmem:[%s172 + $0x70] sm:$0x3]
      %v197 = vld [vmem:[%s172 + $0x78] sm:$0xff]
      %v198 = vld [vmem:[%s172 + $0x80] sm:$0xff]
      %v199 = vld [vmem:[%s172 + $0x88] sm:$0x3]
      %v200 = vld [vmem:[%s172 + $0x90] sm:$0xff]
      %v201 = vld [vmem:[%s172 + $0x98] sm:$0xff]
      %v202 = vld [vmem:[%s172 + $0xa0] sm:$0x3]
      %v203 = vld [vmem:[%s172 + $0xa8] sm:$0xff]
      %v204 = vld [vmem:[%s172 + $0xb0] sm:$0xff]
      %v205 = vld [vmem:[%s172 + $0xb8] sm:$0x3]
      %v206 = vld [vmem:[%s172 + $0xc0] sm:$0xff]
      %v207 = vld [vmem:[%s172 + $0xc8] sm:$0xff]
      %v208 = vld [vmem:[%s172 + $0xd0] sm:$0x3]
      %v209 = vld [vmem:[%s172 + $0xd8] sm:$0xff]
      %v210 = vld [vmem:[%s172 + $0xe0] sm:$0xff]
      %v211 = vld [vmem:[%s172 + $0xe8] sm:$0x3]
      %v212 = vld [vmem:[%s172 + $0xf0] sm:$0xff]
      %v213 = vld [vmem:[%s172 + $0xf8] sm:$0xff]
      %v214 = vld [vmem:[%s172 + $0x100] sm:$0x3]
      %v215 = vld [vmem:[%s172 + $0x108] sm:$0xff]
      %v216 = vld [vmem:[%s172 + $0x110] sm:$0xff]
      %v217 = vld [vmem:[%s172 + $0x118] sm:$0x3]
      %v218 = vld [vmem:[%s172 + $0x120] sm:$0xff]
      %v219 = vld [vmem:[%s172 + $0x128] sm:$0xff]
      %v220 = vld [vmem:[%s172 + $0x130] sm:$0x3]
      %v221 = vld [vmem:[%s172 + $0x138] sm:$0xff]
      %v222 = vld [vmem:[%s172 + $0x140] sm:$0xff]
      %v223 = vld [vmem:[%s172 + $0x148] sm:$0x3]
      %v224 = vld [vmem:[%s172 + $0x150] sm:$0xff]
      %v225 = vld [vmem:[%s172 + $0x158] sm:$0xff]
      %v226 = vld [vmem:[%s172 + $0x160] sm:$0x3]
      %v227 = vld [vmem:[%s172 + $0x168] sm:$0xff]
      %v228 = vld [vmem:[%s172 + $0x170] sm:$0xff]
      %v229 = vld [vmem:[%s172 + $0x178] sm:$0x3]
      %v230 = vld [vmem:[%s172 + $0x180] sm:$0xff]
      %v231 = vld [vmem:[%s172 + $0x188] sm:$0xff]
      %v232 = vld [vmem:[%s172 + $0x190] sm:$0x3]
      %v233 = vld [vmem:[%s172 + $0x198] sm:$0xff]
      %v234 = vld [vmem:[%s172 + $0x1a0] sm:$0xff]
      %v235 = vld [vmem:[%s172 + $0x1a8] sm:$0x3]
      %v236 = vld [vmem:[%s1] sm:$0xf]
      %vm285 = vcmask 1046528
      %v286 = vrot.slane %v182, 1
      %v287 = vrot.slane %v183, 1
      %v288 = vsel %vm285, %v286, %v287
      %v289 = vrot.slane %v184, 1
      %v290 = vsel %vm285, %v287, %v289
      %v291 = vrot.slane %v185, 1
      %v292 = vrot.slane %v186, 1
      %v293 = vsel %vm285, %v291, %v292
      %v294 = vrot.slane %v187, 1
      %v295 = vsel %vm285, %v292, %v294
      %v296 = vrot.slane %v188, 1
      %v297 = vrot.slane %v189, 1
      %v298 = vsel %vm285, %v296, %v297
      %v299 = vrot.slane %v190, 1
      %v300 = vsel %vm285, %v297, %v299
      %v301 = vrot.slane %v191, 1
      %v302 = vrot.slane %v192, 1
      %v303 = vsel %vm285, %v301, %v302
      %v304 = vrot.slane %v193, 1
      %v305 = vsel %vm285, %v302, %v304
      %v306 = vrot.slane %v194, 1
      %v307 = vrot.slane %v195, 1
      %v308 = vsel %vm285, %v306, %v307
      %v309 = vrot.slane %v196, 1
      %v310 = vsel %vm285, %v307, %v309
      %v311 = vrot.slane %v197, 1
      %v312 = vrot.slane %v198, 1
      %v313 = vsel %vm285, %v311, %v312
      %v314 = vrot.slane %v199, 1
      %v315 = vsel %vm285, %v312, %v314
      %v316 = vrot.slane %v200, 1
      %v317 = vrot.slane %v201, 1
      %v318 = vsel %vm285, %v316, %v317
      %v319 = vrot.slane %v202, 1
      %v320 = vsel %vm285, %v317, %v319
      %v321 = vrot.slane %v203, 1
      %v322 = vrot.slane %v204, 1
      %v323 = vsel %vm285, %v321, %v322
      %v324 = vrot.slane %v205, 1
      %v325 = vsel %vm285, %v322, %v324
      %v326 = vrot.slane %v206, 1
      %v327 = vrot.slane %v207, 1
      %v328 = vsel %vm285, %v326, %v327
      %v329 = vrot.slane %v208, 1
      %v330 = vsel %vm285, %v327, %v329
      %v331 = vrot.slane %v209, 1
      %v332 = vrot.slane %v210, 1
      %v333 = vsel %vm285, %v331, %v332
      %v334 = vrot.slane %v211, 1
      %v335 = vsel %vm285, %v332, %v334
      %v336 = vrot.slane %v212, 1
      %v337 = vrot.slane %v213, 1
      %v338 = vsel %vm285, %v336, %v337
      %v339 = vrot.slane %v214, 1
      %v340 = vsel %vm285, %v337, %v339
      %v341 = vrot.slane %v215, 1
      %v342 = vrot.slane %v216, 1
      %v343 = vsel %vm285, %v341, %v342
      %v344 = vrot.slane %v217, 1
      %v345 = vsel %vm285, %v342, %v344
      %v346 = vrot.slane %v218, 1
      %v347 = vrot.slane %v219, 1
      %v348 = vsel %vm285, %v346, %v347
      %v349 = vrot.slane %v220, 1
      %v350 = vsel %vm285, %v347, %v349
      %v351 = vrot.slane %v221, 1
      %v352 = vrot.slane %v222, 1
      %v353 = vsel %vm285, %v351, %v352
      %v354 = vrot.slane %v223, 1
      %v355 = vsel %vm285, %v352, %v354
      %v356 = vrot.slane %v224, 1
      %v357 = vrot.slane %v225, 1
      %v358 = vsel %vm285, %v356, %v357
      %v359 = vrot.slane %v226, 1
      %v360 = vsel %vm285, %v357, %v359
      %v361 = vrot.slane %v227, 1
      %v362 = vrot.slane %v228, 1
      %v363 = vsel %vm285, %v361, %v362
      %v364 = vrot.slane %v229, 1
      %v365 = vsel %vm285, %v362, %v364
      %s366 = scalar_lea.vmem %s1, 4
      %v367 = vld [vmem:[%s366] sm:$0xf]
      %vm368 = vcmask 31744
      %v369 = vsel %vm368, %v288, 0
      %v371 = vsel %vm368, %v290, 0
      %v373 = vsel %vm368, %v293, 0
      %v375 = vsel %vm368, %v295, 0
      %v377 = vsel %vm368, %v298, 0
      %v379 = vsel %vm368, %v300, 0
      %v381 = vsel %vm368, %v303, 0
      %v383 = vsel %vm368, %v305, 0
      %v385 = vsel %vm368, %v308, 0
      %v387 = vsel %vm368, %v310, 0
      %v389 = vsel %vm368, %v313, 0
      %v391 = vsel %vm368, %v315, 0
      %v393 = vsel %vm368, %v318, 0
      %v395 = vsel %vm368, %v320, 0
      %v397 = vsel %vm368, %v323, 0
      %v399 = vsel %vm368, %v325, 0
      %v401 = vsel %vm368, %v328, 0
      %v403 = vsel %vm368, %v330, 0
      %v405 = vsel %vm368, %v333, 0
      %v407 = vsel %vm368, %v335, 0
      %v409 = vsel %vm368, %v338, 0
      %v411 = vsel %vm368, %v340, 0
      %v413 = vsel %vm368, %v343, 0
      %v415 = vsel %vm368, %v345, 0
      %v417 = vsel %vm368, %v348, 0
      %v419 = vsel %vm368, %v350, 0
      %v421 = vsel %vm368, %v353, 0
      %v423 = vsel %vm368, %v355, 0
      %v425 = vsel %vm368, %v358, 0
      %v427 = vsel %vm368, %v360, 0
      %v429 = vsel %vm368, %v363, 0
      %v431 = vsel %vm368, %v365, 0
      %vm433 = vcmask 1043456
      %v435 = vsel %vm433, %v367, 0
      %437 = vmatprep.subr.mxu0 0.0
      %438 = vmatpush1.msra.mxu0 0.0
      %439 = vmatprep.subr.mxu0 0.0
      %440 = vmatpush1.msra.mxu0 0.0
      %441 = vmatprep.subr.mxu0 0.0
      %442 = vmatpush1.msra.mxu0 0.0
      %443 = vmatprep.subr.mxu0 0.0
      %444 = vmatpush1.msra.mxu0 0.0
      %445 = vmatprep.subr.mxu0 0.0
      %446 = vmatpush1.msra.mxu0 0.0
      %447 = vmatprep.subr.mxu0 0.0
      %448 = vmatpush1.msra.mxu0 0.0
      %449 = vmatprep.subr.mxu0 0.0
      %450 = vmatpush1.msra.mxu0 0.0
      %451 = vmatprep.subr.mxu0 0.0
      %452 = vmatpush1.msra.mxu0 0.0
      %453 = vmatprep.subr.mxu0 0.0
      %454 = vmatpush1.msra.mxu0 0.0
      %455 = vmatprep.subr.mxu0 0.0
      %456 = vmatpush1.msra.mxu0 0.0
      %457 = vmatprep.subr.mxu0 0.0
      %458 = vmatpush1.msra.mxu0 0.0
      %459 = vmatprep.subr.mxu0 0.0
      %460 = vmatpush1.msra.mxu0 0.0
      %461 = vmatprep.subr.mxu0 0.0
      %462 = vmatpush1.msra.mxu0 0.0
      %463 = vmatprep.subr.mxu0 0.0
      %464 = vmatpush1.msra.mxu0 0.0
      %465 = vmatprep.subr.mxu0 0.0
      %466 = vmatpush1.msra.mxu0 0.0
      %467 = vmatprep.subr.mxu0 0.0
      %468 = vmatpush1.msra.mxu0 %v435
      %469 = vmatprep.subr.mxu0 0.0
      %470 = vmatpush2.msra.mxu0 0.0
      %471 = vmatprep.subr.mxu0 0.0
      %472 = vmatpush2.msra.mxu0 0.0
      %473 = vmatprep.subr.mxu0 0.0
      %474 = vmatpush2.msra.mxu0 0.0
      %475 = vmatprep.subr.mxu0 0.0
      %476 = vmatpush2.msra.mxu0 0.0
      %477 = vmatprep.subr.mxu0 0.0
      %478 = vmatpush2.msra.mxu0 0.0
      %479 = vmatprep.subr.mxu0 0.0
      %480 = vmatpush2.msra.mxu0 0.0
      %481 = vmatprep.subr.mxu0 0.0
      %482 = vmatpush2.msra.mxu0 0.0
      %483 = vmatprep.subr.mxu0 0.0
      %484 = vmatpush2.msra.mxu0 0.0
      %485 = vmatprep.subr.mxu0 0.0
      %486 = vmatpush2.msra.mxu0 0.0
      %487 = vmatprep.subr.mxu0 0.0
      %488 = vmatpush2.msra.mxu0 0.0
      %489 = vmatprep.subr.mxu0 0.0
      %490 = vmatpush2.msra.mxu0 0.0
      %491 = vmatprep.subr.mxu0 0.0
      %492 = vmatpush2.msra.mxu0 0.0
      %493 = vmatprep.subr.mxu0 0.0
      %494 = vmatpush2.msra.mxu0 0.0
      %495 = vmatprep.subr.mxu0 0.0
      %496 = vmatpush2.msra.mxu0 0.0
      %497 = vmatprep.subr.mxu0 0.0
      %498 = vmatpush2.msra.mxu0 0.0
      %499 = vmatprep.subr.mxu0 0.0
      %500 = vmatpush2.msra.mxu0 0.0
      %501 = vmatprep.mubr.f32.mxu0 0.0
      %502 = vmatmul.mubr.f32.gmra.mxu0 %v369
      %v503 = vpop.f32.mrf.mxu0
      %v504 = vadd.f32 0.0, %v503
      %v505 = vpop.f32.mrf.mxu0
      %506 = vmatprep.mubr.f32.mxu0 0.0
      %507 = vmatmul.mubr.f32.gmra.mxu0 %v371
      %v508 = vpop.f32.mrf.mxu0
      %v509 = vadd.f32 0.0, %v508
      %v510 = vpop.f32.mrf.mxu0
      %511 = vmatprep.mubr.f32.mxu0 0.0
      %512 = vmatmul.mubr.f32.gmra.mxu0 %v373
      %v513 = vpop.f32.mrf.mxu0
      %v514 = vadd.f32 0.0, %v513
      %v515 = vpop.f32.mrf.mxu0
      %516 = vmatprep.mubr.f32.mxu0 0.0
      %517 = vmatmul.mubr.f32.gmra.mxu0 %v375
      %v518 = vpop.f32.mrf.mxu0
      %v519 = vadd.f32 0.0, %v518
      %v520 = vpop.f32.mrf.mxu0
      %521 = vmatprep.mubr.f32.mxu0 0.0
      %522 = vmatmul.mubr.f32.gmra.mxu0 %v377
      %v523 = vpop.f32.mrf.mxu0
      %v524 = vadd.f32 0.0, %v523
      %v525 = vpop.f32.mrf.mxu0
      %526 = vmatprep.mubr.f32.mxu0 0.0
      %527 = vmatmul.mubr.f32.gmra.mxu0 %v379
      %v528 = vpop.f32.mrf.mxu0
      %v529 = vadd.f32 0.0, %v528
      %v530 = vpop.f32.mrf.mxu0
      %531 = vmatprep.mubr.f32.mxu0 0.0
      %532 = vmatmul.mubr.f32.gmra.mxu0 %v381
      %v533 = vpop.f32.mrf.mxu0
      %v534 = vadd.f32 0.0, %v533
      %v535 = vpop.f32.mrf.mxu0
      %536 = vmatprep.mubr.f32.mxu0 0.0
      %537 = vmatmul.mubr.f32.gmra.mxu0 %v383
      %v538 = vpop.f32.mrf.mxu0
      %v539 = vadd.f32 0.0, %v538
      %v540 = vpop.f32.mrf.mxu0
      %541 = vmatprep.mubr.f32.mxu0 0.0
      %542 = vmatmul.mubr.f32.gmra.mxu0 %v385
      %v543 = vpop.f32.mrf.mxu0
      %v544 = vadd.f32 0.0, %v543
      %v545 = vpop.f32.mrf.mxu0
      %546 = vmatprep.mubr.f32.mxu0 0.0
      %547 = vmatmul.mubr.f32.gmra.mxu0 %v387
      %v548 = vpop.f32.mrf.mxu0
      %v549 = vadd.f32 0.0, %v548
      %v550 = vpop.f32.mrf.mxu0
      %551 = vmatprep.mubr.f32.mxu0 0.0
      %552 = vmatmul.mubr.f32.gmra.mxu0 %v389
      %v553 = vpop.f32.mrf.mxu0
      %v554 = vadd.f32 0.0, %v553
      %v555 = vpop.f32.mrf.mxu0
      %556 = vmatprep.mubr.f32.mxu0 0.0
      %557 = vmatmul.mubr.f32.gmra.mxu0 %v391
      %v558 = vpop.f32.mrf.mxu0
      %v559 = vadd.f32 0.0, %v558
      %v560 = vpop.f32.mrf.mxu0
      %561 = vmatprep.mubr.f32.mxu0 0.0
      %562 = vmatmul.mubr.f32.gmra.mxu0 %v393
      %v563 = vpop.f32.mrf.mxu0
      %v564 = vadd.f32 0.0, %v563
      %v565 = vpop.f32.mrf.mxu0
      %566 = vmatprep.mubr.f32.mxu0 0.0
      %567 = vmatmul.mubr.f32.gmra.mxu0 %v395
      %v568 = vpop.f32.mrf.mxu0
      %v569 = vadd.f32 0.0, %v568
      %v570 = vpop.f32.mrf.mxu0
      %571 = vmatprep.mubr.f32.mxu0 0.0
      %572 = vmatmul.mubr.f32.gmra.mxu0 %v397
      %v573 = vpop.f32.mrf.mxu0
      %v574 = vadd.f32 0.0, %v573
      %v575 = vpop.f32.mrf.mxu0
      %576 = vmatprep.mubr.f32.mxu0 0.0
      %577 = vmatmul.mubr.f32.gmra.mxu0 %v399
      %v578 = vpop.f32.mrf.mxu0
      %v579 = vadd.f32 0.0, %v578
      %v580 = vpop.f32.mrf.mxu0
      %581 = vmatprep.mubr.f32.mxu0 0.0
      %582 = vmatmul.mubr.f32.gmra.mxu0 %v401
      %v583 = vpop.f32.mrf.mxu0
      %v584 = vadd.f32 0.0, %v583
      %v585 = vpop.f32.mrf.mxu0
      %586 = vmatprep.mubr.f32.mxu0 0.0
      %587 = vmatmul.mubr.f32.gmra.mxu0 %v403
      %v588 = vpop.f32.mrf.mxu0
      %v589 = vadd.f32 0.0, %v588
      %v590 = vpop.f32.mrf.mxu0
      %591 = vmatprep.mubr.f32.mxu0 0.0
      %592 = vmatmul.mubr.f32.gmra.mxu0 %v405
      %v593 = vpop.f32.mrf.mxu0
      %v594 = vadd.f32 0.0, %v593
      %v595 = vpop.f32.mrf.mxu0
      %596 = vmatprep.mubr.f32.mxu0 0.0
      %597 = vmatmul.mubr.f32.gmra.mxu0 %v407
      %v598 = vpop.f32.mrf.mxu0
      %v599 = vadd.f32 0.0, %v598
      %v600 = vpop.f32.mrf.mxu0
      %601 = vmatprep.mubr.f32.mxu0 0.0
      %602 = vmatmul.mubr.f32.gmra.mxu0 %v409
      %v603 = vpop.f32.mrf.mxu0
      %v604 = vadd.f32 0.0, %v603
      %v605 = vpop.f32.mrf.mxu0
      %606 = vmatprep.mubr.f32.mxu0 0.0
      %607 = vmatmul.mubr.f32.gmra.mxu0 %v411
      %v608 = vpop.f32.mrf.mxu0
      %v609 = vadd.f32 0.0, %v608
      %v610 = vpop.f32.mrf.mxu0
      %611 = vmatprep.mubr.f32.mxu0 0.0
      %612 = vmatmul.mubr.f32.gmra.mxu0 %v413
      %v613 = vpop.f32.mrf.mxu0
      %v614 = vadd.f32 0.0, %v613
      %v615 = vpop.f32.mrf.mxu0
      %616 = vmatprep.mubr.f32.mxu0 0.0
      %617 = vmatmul.mubr.f32.gmra.mxu0 %v415
      %v618 = vpop.f32.mrf.mxu0
      %v619 = vadd.f32 0.0, %v618
      %v620 = vpop.f32.mrf.mxu0
      %621 = vmatprep.mubr.f32.mxu0 0.0
      %622 = vmatmul.mubr.f32.gmra.mxu0 %v417
      %v623 = vpop.f32.mrf.mxu0
      %v624 = vadd.f32 0.0, %v623
      %v625 = vpop.f32.mrf.mxu0
      %626 = vmatprep.mubr.f32.mxu0 0.0
      %627 = vmatmul.mubr.f32.gmra.mxu0 %v419
      %v628 = vpop.f32.mrf.mxu0
      %v629 = vadd.f32 0.0, %v628
      %v630 = vpop.f32.mrf.mxu0
      %631 = vmatprep.mubr.f32.mxu0 0.0
      %632 = vmatmul.mubr.f32.gmra.mxu0 %v421
      %v633 = vpop.f32.mrf.mxu0
      %v634 = vadd.f32 0.0, %v633
      %v635 = vpop.f32.mrf.mxu0
      %636 = vmatprep.mubr.f32.mxu0 0.0
      %637 = vmatmul.mubr.f32.gmra.mxu0 %v423
      %v638 = vpop.f32.mrf.mxu0
      %v639 = vadd.f32 0.0, %v638
      %v640 = vpop.f32.mrf.mxu0
      %641 = vmatprep.mubr.f32.mxu0 0.0
      %642 = vmatmul.mubr.f32.gmra.mxu0 %v425
      %v643 = vpop.f32.mrf.mxu0
      %v644 = vadd.f32 0.0, %v643
      %v645 = vpop.f32.mrf.mxu0
      %646 = vmatprep.mubr.f32.mxu0 0.0
      %647 = vmatmul.mubr.f32.gmra.mxu0 %v427
      %v648 = vpop.f32.mrf.mxu0
      %v649 = vadd.f32 0.0, %v648
      %v650 = vpop.f32.mrf.mxu0
      %651 = vmatprep.mubr.f32.mxu0 0.0
      %652 = vmatmul.mubr.f32.gmra.mxu0 %v429
      %v653 = vpop.f32.mrf.mxu0
      %v654 = vadd.f32 0.0, %v653
      %v655 = vpop.f32.mrf.mxu0
      %656 = vmatprep.mubr.f32.mxu0 0.0
      %657 = vmatmul.mubr.f32.gmra.mxu0 %v431
      %v658 = vpop.f32.mrf.mxu0
      %v659 = vadd.f32 0.0, %v658
      %v660 = vpop.f32.mrf.mxu0
      %661 = vdwg.mxu0
      %v662 = vsel %vm368, %v182, 0
      %v664 = vsel %vm368, %v183, 0
      %v666 = vsel %vm368, %v185, 0
      %v668 = vsel %vm368, %v186, 0
      %v670 = vsel %vm368, %v188, 0
      %v672 = vsel %vm368, %v189, 0
      %v674 = vsel %vm368, %v191, 0
      %v676 = vsel %vm368, %v192, 0
      %v678 = vsel %vm368, %v194, 0
      %v680 = vsel %vm368, %v195, 0
      %v682 = vsel %vm368, %v197, 0
      %v684 = vsel %vm368, %v198, 0
      %v686 = vsel %vm368, %v200, 0
      %v688 = vsel %vm368, %v201, 0
      %v690 = vsel %vm368, %v203, 0
      %v692 = vsel %vm368, %v204, 0
      %v694 = vsel %vm368, %v206, 0
      %v696 = vsel %vm368, %v207, 0
      %v698 = vsel %vm368, %v209, 0
      %v700 = vsel %vm368, %v210, 0
      %v702 = vsel %vm368, %v212, 0
      %v704 = vsel %vm368, %v213, 0
      %v706 = vsel %vm368, %v215, 0
      %v708 = vsel %vm368, %v216, 0
      %v710 = vsel %vm368, %v218, 0
      %v712 = vsel %vm368, %v219, 0
      %v714 = vsel %vm368, %v221, 0
      %v716 = vsel %vm368, %v222, 0
      %v718 = vsel %vm368, %v224, 0
      %v720 = vsel %vm368, %v225, 0
      %v722 = vsel %vm368, %v227, 0
      %v724 = vsel %vm368, %v228, 0
      %v727 = vsel %vm433, %v236, 0
      %729 = vmatprep.subr.mxu0 0.0
      %730 = vmatpush1.msra.mxu0 0.0
      %731 = vmatprep.subr.mxu0 0.0
      %732 = vmatpush1.msra.mxu0 0.0
      %733 = vmatprep.subr.mxu0 0.0
      %734 = vmatpush1.msra.mxu0 0.0
      %735 = vmatprep.subr.mxu0 0.0
      %736 = vmatpush1.msra.mxu0 0.0
      %737 = vmatprep.subr.mxu0 0.0
      %738 = vmatpush1.msra.mxu0 0.0
      %739 = vmatprep.subr.mxu0 0.0
      %740 = vmatpush1.msra.mxu0 0.0
      %741 = vmatprep.subr.mxu0 0.0
      %742 = vmatpush1.msra.mxu0 0.0
      %743 = vmatprep.subr.mxu0 0.0
      %744 = vmatpush1.msra.mxu0 0.0
      %745 = vmatprep.subr.mxu0 0.0
      %746 = vmatpush1.msra.mxu0 0.0
      %747 = vmatprep.subr.mxu0 0.0
      %748 = vmatpush1.msra.mxu0 0.0
      %749 = vmatprep.subr.mxu0 0.0
      %750 = vmatpush1.msra.mxu0 0.0
      %751 = vmatprep.subr.mxu0 0.0
      %752 = vmatpush1.msra.mxu0 0.0
      %753 = vmatprep.subr.mxu0 0.0
      %754 = vmatpush1.msra.mxu0 0.0
      %755 = vmatprep.subr.mxu0 0.0
      %756 = vmatpush1.msra.mxu0 0.0
      %757 = vmatprep.subr.mxu0 0.0
      %758 = vmatpush1.msra.mxu0 0.0
      %759 = vmatprep.subr.mxu0 0.0
      %760 = vmatpush1.msra.mxu0 %v727
      %761 = vmatprep.subr.mxu0 0.0
      %762 = vmatpush2.msra.mxu0 0.0
      %763 = vmatprep.subr.mxu0 0.0
      %764 = vmatpush2.msra.mxu0 0.0
      %765 = vmatprep.subr.mxu0 0.0
      %766 = vmatpush2.msra.mxu0 0.0
      %767 = vmatprep.subr.mxu0 0.0
      %768 = vmatpush2.msra.mxu0 0.0
      %769 = vmatprep.subr.mxu0 0.0
      %770 = vmatpush2.msra.mxu0 0.0
      %771 = vmatprep.subr.mxu0 0.0
      %772 = vmatpush2.msra.mxu0 0.0
      %773 = vmatprep.subr.mxu0 0.0
      %774 = vmatpush2.msra.mxu0 0.0
      %775 = vmatprep.subr.mxu0 0.0
      %776 = vmatpush2.msra.mxu0 0.0
      %777 = vmatprep.subr.mxu0 0.0
      %778 = vmatpush2.msra.mxu0 0.0
      %779 = vmatprep.subr.mxu0 0.0
      %780 = vmatpush2.msra.mxu0 0.0
      %781 = vmatprep.subr.mxu0 0.0
      %782 = vmatpush2.msra.mxu0 0.0
      %783 = vmatprep.subr.mxu0 0.0
      %784 = vmatpush2.msra.mxu0 0.0
      %785 = vmatprep.subr.mxu0 0.0
      %786 = vmatpush2.msra.mxu0 0.0
      %787 = vmatprep.subr.mxu0 0.0
      %788 = vmatpush2.msra.mxu0 0.0
      %789 = vmatprep.subr.mxu0 0.0
      %790 = vmatpush2.msra.mxu0 0.0
      %791 = vmatprep.subr.mxu0 0.0
      %792 = vmatpush2.msra.mxu0 0.0
      %793 = vmatprep.mubr.f32.mxu0 0.0
      %794 = vmatmul.mubr.f32.gmra.mxu0 %v662
      %v795 = vpop.f32.mrf.mxu0
      %v796 = vadd.f32 %v504, %v795
      %v797 = vpop.f32.mrf.mxu0
      %798 = vmatprep.mubr.f32.mxu0 0.0
      %799 = vmatmul.mubr.f32.gmra.mxu0 %v664
      %v800 = vpop.f32.mrf.mxu0
      %v801 = vadd.f32 %v509, %v800
      %v802 = vpop.f32.mrf.mxu0
      %803 = vmatprep.mubr.f32.mxu0 0.0
      %804 = vmatmul.mubr.f32.gmra.mxu0 %v666
      %v805 = vpop.f32.mrf.mxu0
      %v806 = vadd.f32 %v514, %v805
      %v807 = vpop.f32.mrf.mxu0
      %808 = vmatprep.mubr.f32.mxu0 0.0
      %809 = vmatmul.mubr.f32.gmra.mxu0 %v668
      %v810 = vpop.f32.mrf.mxu0
      %v811 = vadd.f32 %v519, %v810
      %v812 = vpop.f32.mrf.mxu0
      %813 = vmatprep.mubr.f32.mxu0 0.0
      %814 = vmatmul.mubr.f32.gmra.mxu0 %v670
      %v815 = vpop.f32.mrf.mxu0
      %v816 = vadd.f32 %v524, %v815
      %v817 = vpop.f32.mrf.mxu0
      %818 = vmatprep.mubr.f32.mxu0 0.0
      %819 = vmatmul.mubr.f32.gmra.mxu0 %v672
      %v820 = vpop.f32.mrf.mxu0
      %v821 = vadd.f32 %v529, %v820
      %v822 = vpop.f32.mrf.mxu0
      %823 = vmatprep.mubr.f32.mxu0 0.0
      %824 = vmatmul.mubr.f32.gmra.mxu0 %v674
      %v825 = vpop.f32.mrf.mxu0
      %v826 = vadd.f32 %v534, %v825
      %v827 = vpop.f32.mrf.mxu0
      %828 = vmatprep.mubr.f32.mxu0 0.0
      %829 = vmatmul.mubr.f32.gmra.mxu0 %v676
      %v830 = vpop.f32.mrf.mxu0
      %v831 = vadd.f32 %v539, %v830
      %v832 = vpop.f32.mrf.mxu0
      %833 = vmatprep.mubr.f32.mxu0 0.0
      %834 = vmatmul.mubr.f32.gmra.mxu0 %v678
      %v835 = vpop.f32.mrf.mxu0
      %v836 = vadd.f32 %v544, %v835
      %v837 = vpop.f32.mrf.mxu0
      %838 = vmatprep.mubr.f32.mxu0 0.0
      %839 = vmatmul.mubr.f32.gmra.mxu0 %v680
      %v840 = vpop.f32.mrf.mxu0
      %v841 = vadd.f32 %v549, %v840
      %v842 = vpop.f32.mrf.mxu0
      %843 = vmatprep.mubr.f32.mxu0 0.0
      %844 = vmatmul.mubr.f32.gmra.mxu0 %v682
      %v845 = vpop.f32.mrf.mxu0
      %v846 = vadd.f32 %v554, %v845
      %v847 = vpop.f32.mrf.mxu0
      %848 = vmatprep.mubr.f32.mxu0 0.0
      %849 = vmatmul.mubr.f32.gmra.mxu0 %v684
      %v850 = vpop.f32.mrf.mxu0
      %v851 = vadd.f32 %v559, %v850
      %v852 = vpop.f32.mrf.mxu0
      %853 = vmatprep.mubr.f32.mxu0 0.0
      %854 = vmatmul.mubr.f32.gmra.mxu0 %v686
      %v855 = vpop.f32.mrf.mxu0
      %v856 = vadd.f32 %v564, %v855
      %v857 = vpop.f32.mrf.mxu0
      %858 = vmatprep.mubr.f32.mxu0 0.0
      %859 = vmatmul.mubr.f32.gmra.mxu0 %v688
      %v860 = vpop.f32.mrf.mxu0
      %v861 = vadd.f32 %v569, %v860
      %v862 = vpop.f32.mrf.mxu0
      %863 = vmatprep.mubr.f32.mxu0 0.0
      %864 = vmatmul.mubr.f32.gmra.mxu0 %v690
      %v865 = vpop.f32.mrf.mxu0
      %v866 = vadd.f32 %v574, %v865
      %v867 = vpop.f32.mrf.mxu0
      %868 = vmatprep.mubr.f32.mxu0 0.0
      %869 = vmatmul.mubr.f32.gmra.mxu0 %v692
      %v870 = vpop.f32.mrf.mxu0
      %v871 = vadd.f32 %v579, %v870
      %v872 = vpop.f32.mrf.mxu0
      %873 = vmatprep.mubr.f32.mxu0 0.0
      %874 = vmatmul.mubr.f32.gmra.mxu0 %v694
      %v875 = vpop.f32.mrf.mxu0
      %v876 = vadd.f32 %v584, %v875
      %v877 = vpop.f32.mrf.mxu0
      %878 = vmatprep.mubr.f32.mxu0 0.0
      %879 = vmatmul.mubr.f32.gmra.mxu0 %v696
      %v880 = vpop.f32.mrf.mxu0
      %v881 = vadd.f32 %v589, %v880
      %v882 = vpop.f32.mrf.mxu0
      %883 = vmatprep.mubr.f32.mxu0 0.0
      %884 = vmatmul.mubr.f32.gmra.mxu0 %v698
      %v885 = vpop.f32.mrf.mxu0
      %v886 = vadd.f32 %v594, %v885
      %v887 = vpop.f32.mrf.mxu0
      %888 = vmatprep.mubr.f32.mxu0 0.0
      %889 = vmatmul.mubr.f32.gmra.mxu0 %v700
      %v890 = vpop.f32.mrf.mxu0
      %v891 = vadd.f32 %v599, %v890
      %v892 = vpop.f32.mrf.mxu0
      %893 = vmatprep.mubr.f32.mxu0 0.0
      %894 = vmatmul.mubr.f32.gmra.mxu0 %v702
      %v895 = vpop.f32.mrf.mxu0
      %v896 = vadd.f32 %v604, %v895
      %v897 = vpop.f32.mrf.mxu0
      %898 = vmatprep.mubr.f32.mxu0 0.0
      %899 = vmatmul.mubr.f32.gmra.mxu0 %v704
      %v900 = vpop.f32.mrf.mxu0
      %v901 = vadd.f32 %v609, %v900
      %v902 = vpop.f32.mrf.mxu0
      %903 = vmatprep.mubr.f32.mxu0 0.0
      %904 = vmatmul.mubr.f32.gmra.mxu0 %v706
      %v905 = vpop.f32.mrf.mxu0
      %v906 = vadd.f32 %v614, %v905
      %v907 = vpop.f32.mrf.mxu0
      %908 = vmatprep.mubr.f32.mxu0 0.0
      %909 = vmatmul.mubr.f32.gmra.mxu0 %v708
      %v910 = vpop.f32.mrf.mxu0
      %v911 = vadd.f32 %v619, %v910
      %v912 = vpop.f32.mrf.mxu0
      %913 = vmatprep.mubr.f32.mxu0 0.0
      %914 = vmatmul.mubr.f32.gmra.mxu0 %v710
      %v915 = vpop.f32.mrf.mxu0
      %v916 = vadd.f32 %v624, %v915
      %v917 = vpop.f32.mrf.mxu0
      %918 = vmatprep.mubr.f32.mxu0 0.0
      %919 = vmatmul.mubr.f32.gmra.mxu0 %v712
      %v920 = vpop.f32.mrf.mxu0
      %v921 = vadd.f32 %v629, %v920
      %v922 = vpop.f32.mrf.mxu0
      %923 = vmatprep.mubr.f32.mxu0 0.0
      %924 = vmatmul.mubr.f32.gmra.mxu0 %v714
      %v925 = vpop.f32.mrf.mxu0
      %v926 = vadd.f32 %v634, %v925
      %v927 = vpop.f32.mrf.mxu0
      %928 = vmatprep.mubr.f32.mxu0 0.0
      %929 = vmatmul.mubr.f32.gmra.mxu0 %v716
      %v930 = vpop.f32.mrf.mxu0
      %v931 = vadd.f32 %v639, %v930
      %v932 = vpop.f32.mrf.mxu0
      %933 = vmatprep.mubr.f32.mxu0 0.0
      %934 = vmatmul.mubr.f32.gmra.mxu0 %v718
      %v935 = vpop.f32.mrf.mxu0
      %v936 = vadd.f32 %v644, %v935
      %v937 = vpop.f32.mrf.mxu0
      %938 = vmatprep.mubr.f32.mxu0 0.0
      %939 = vmatmul.mubr.f32.gmra.mxu0 %v720
      %v940 = vpop.f32.mrf.mxu0
      %v941 = vadd.f32 %v649, %v940
      %v942 = vpop.f32.mrf.mxu0
      %943 = vmatprep.mubr.f32.mxu0 0.0
      %944 = vmatmul.mubr.f32.gmra.mxu0 %v722
      %v945 = vpop.f32.mrf.mxu0
      %v946 = vadd.f32 %v654, %v945
      %v947 = vpop.f32.mrf.mxu0
      %948 = vmatprep.mubr.f32.mxu0 0.0
      %949 = vmatmul.mubr.f32.gmra.mxu0 %v724
      %v950 = vpop.f32.mrf.mxu0
      %v951 = vadd.f32 %v659, %v950
      %v952 = vpop.f32.mrf.mxu0
      %953 = vdwg.mxu0
      %vm954 = vcmask 1045504
      %v955 = vrot.slane %v182, 2
      %v956 = vrot.slane %v183, 2
      %v957 = vsel %vm954, %v955, %v956
      %v958 = vrot.slane %v184, 2
      %v959 = vsel %vm954, %v956, %v958
      %v960 = vrot.slane %v185, 2
      %v961 = vrot.slane %v186, 2
      %v962 = vsel %vm954, %v960, %v961
      %v963 = vrot.slane %v187, 2
      %v964 = vsel %vm954, %v961, %v963
      %v965 = vrot.slane %v188, 2
      %v966 = vrot.slane %v189, 2
      %v967 = vsel %vm954, %v965, %v966
      %v968 = vrot.slane %v190, 2
      %v969 = vsel %vm954, %v966, %v968
      %v970 = vrot.slane %v191, 2
      %v971 = vrot.slane %v192, 2
      %v972 = vsel %vm954, %v970, %v971
      %v973 = vrot.slane %v193, 2
      %v974 = vsel %vm954, %v971, %v973
      %v975 = vrot.slane %v194, 2
      %v976 = vrot.slane %v195, 2
      %v977 = vsel %vm954, %v975, %v976
      %v978 = vrot.slane %v196, 2
      %v979 = vsel %vm954, %v976, %v978
      %v980 = vrot.slane %v197, 2
      %v981 = vrot.slane %v198, 2
      %v982 = vsel %vm954, %v980, %v981
      %v983 = vrot.slane %v199, 2
      %v984 = vsel %vm954, %v981, %v983
      %v985 = vrot.slane %v200, 2
      %v986 = vrot.slane %v201, 2
      %v987 = vsel %vm954, %v985, %v986
      %v988 = vrot.slane %v202, 2
      %v989 = vsel %vm954, %v986, %v988
      %v990 = vrot.slane %v203, 2
      %v991 = vrot.slane %v204, 2
      %v992 = vsel %vm954, %v990, %v991
      %v993 = vrot.slane %v205, 2
      %v994 = vsel %vm954, %v991, %v993
      %v995 = vrot.slane %v206, 2
      %v996 = vrot.slane %v207, 2
      %v997 = vsel %vm954, %v995, %v996
      %v998 = vrot.slane %v208, 2
      %v999 = vsel %vm954, %v996, %v998
      %v1000 = vrot.slane %v209, 2
      %v1001 = vrot.slane %v210, 2
      %v1002 = vsel %vm954, %v1000, %v1001
      %v1003 = vrot.slane %v211, 2
      %v1004 = vsel %vm954, %v1001, %v1003
      %v1005 = vrot.slane %v212, 2
      %v1006 = vrot.slane %v213, 2
      %v1007 = vsel %vm954, %v1005, %v1006
      %v1008 = vrot.slane %v214, 2
      %v1009 = vsel %vm954, %v1006, %v1008
      %v1010 = vrot.slane %v215, 2
      %v1011 = vrot.slane %v216, 2
      %v1012 = vsel %vm954, %v1010, %v1011
      %v1013 = vrot.slane %v217, 2
      %v1014 = vsel %vm954, %v1011, %v1013
      %v1015 = vrot.slane %v218, 2
      %v1016 = vrot.slane %v219, 2
      %v1017 = vsel %vm954, %v1015, %v1016
      %v1018 = vrot.slane %v220, 2
      %v1019 = vsel %vm954, %v1016, %v1018
      %v1020 = vrot.slane %v221, 2
      %v1021 = vrot.slane %v222, 2
      %v1022 = vsel %vm954, %v1020, %v1021
      %v1023 = vrot.slane %v223, 2
      %v1024 = vsel %vm954, %v1021, %v1023
      %v1025 = vrot.slane %v224, 2
      %v1026 = vrot.slane %v225, 2
      %v1027 = vsel %vm954, %v1025, %v1026
      %v1028 = vrot.slane %v226, 2
      %v1029 = vsel %vm954, %v1026, %v1028
      %v1030 = vrot.slane %v227, 2
      %v1031 = vrot.slane %v228, 2
      %v1032 = vsel %vm954, %v1030, %v1031
      %v1033 = vrot.slane %v229, 2
      %v1034 = vsel %vm954, %v1031, %v1033
      %s1035 = scalar_lea.vmem %s1, 8
      %v1036 = vld [vmem:[%s1035] sm:$0xf]
      %v1037 = vsel %vm368, %v957, 0
      %v1039 = vsel %vm368, %v959, 0
      %v1041 = vsel %vm368, %v962, 0
      %v1043 = vsel %vm368, %v964, 0
      %v1045 = vsel %vm368, %v967, 0
      %v1047 = vsel %vm368, %v969, 0
      %v1049 = vsel %vm368, %v972, 0
      %v1051 = vsel %vm368, %v974, 0
      %v1053 = vsel %vm368, %v977, 0
      %v1055 = vsel %vm368, %v979, 0
      %v1057 = vsel %vm368, %v982, 0
      %v1059 = vsel %vm368, %v984, 0
      %v1061 = vsel %vm368, %v987, 0
      %v1063 = vsel %vm368, %v989, 0
      %v1065 = vsel %vm368, %v992, 0
      %v1067 = vsel %vm368, %v994, 0
      %v1069 = vsel %vm368, %v997, 0
      %v1071 = vsel %vm368, %v999, 0
      %v1073 = vsel %vm368, %v1002, 0
      %v1075 = vsel %vm368, %v1004, 0
      %v1077 = vsel %vm368, %v1007, 0
      %v1079 = vsel %vm368, %v1009, 0
      %v1081 = vsel %vm368, %v1012, 0
      %v1083 = vsel %vm368, %v1014, 0
      %v1085 = vsel %vm368, %v1017, 0
      %v1087 = vsel %vm368, %v1019, 0
      %v1089 = vsel %vm368, %v1022, 0
      %v1091 = vsel %vm368, %v1024, 0
      %v1093 = vsel %vm368, %v1027, 0
      %v1095 = vsel %vm368, %v1029, 0
      %v1097 = vsel %vm368, %v1032, 0
      %v1099 = vsel %vm368, %v1034, 0
      %v1102 = vsel %vm433, %v1036, 0
      %1104 = vmatprep.subr.mxu0 0.0
      %1105 = vmatpush1.msra.mxu0 0.0
      %1106 = vmatprep.subr.mxu0 0.0
      %1107 = vmatpush1.msra.mxu0 0.0
      %1108 = vmatprep.subr.mxu0 0.0
      %1109 = vmatpush1.msra.mxu0 0.0
      %1110 = vmatprep.subr.mxu0 0.0
      %1111 = vmatpush1.msra.mxu0 0.0
      %1112 = vmatprep.subr.mxu0 0.0
      %1113 = vmatpush1.msra.mxu0 0.0
      %1114 = vmatprep.subr.mxu0 0.0
      %1115 = vmatpush1.msra.mxu0 0.0
      %1116 = vmatprep.subr.mxu0 0.0
      %1117 = vmatpush1.msra.mxu0 0.0
      %1118 = vmatprep.subr.mxu0 0.0
      %1119 = vmatpush1.msra.mxu0 0.0
      %1120 = vmatprep.subr.mxu0 0.0
      %1121 = vmatpush1.msra.mxu0 0.0
      %1122 = vmatprep.subr.mxu0 0.0
      %1123 = vmatpush1.msra.mxu0 0.0
      %1124 = vmatprep.subr.mxu0 0.0
      %1125 = vmatpush1.msra.mxu0 0.0
      %1126 = vmatprep.subr.mxu0 0.0
      %1127 = vmatpush1.msra.mxu0 0.0
      %1128 = vmatprep.subr.mxu0 0.0
      %1129 = vmatpush1.msra.mxu0 0.0
      %1130 = vmatprep.subr.mxu0 0.0
      %1131 = vmatpush1.msra.mxu0 0.0
      %1132 = vmatprep.subr.mxu0 0.0
      %1133 = vmatpush1.msra.mxu0 0.0
      %1134 = vmatprep.subr.mxu0 0.0
      %1135 = vmatpush1.msra.mxu0 %v1102
      %1136 = vmatprep.subr.mxu0 0.0
      %1137 = vmatpush2.msra.mxu0 0.0
      %1138 = vmatprep.subr.mxu0 0.0
      %1139 = vmatpush2.msra.mxu0 0.0
      %1140 = vmatprep.subr.mxu0 0.0
      %1141 = vmatpush2.msra.mxu0 0.0
      %1142 = vmatprep.subr.mxu0 0.0
      %1143 = vmatpush2.msra.mxu0 0.0
      %1144 = vmatprep.subr.mxu0 0.0
      %1145 = vmatpush2.msra.mxu0 0.0
      %1146 = vmatprep.subr.mxu0 0.0
      %1147 = vmatpush2.msra.mxu0 0.0
      %1148 = vmatprep.subr.mxu0 0.0
      %1149 = vmatpush2.msra.mxu0 0.0
      %1150 = vmatprep.subr.mxu0 0.0
      %1151 = vmatpush2.msra.mxu0 0.0
      %1152 = vmatprep.subr.mxu0 0.0
      %1153 = vmatpush2.msra.mxu0 0.0
      %1154 = vmatprep.subr.mxu0 0.0
      %1155 = vmatpush2.msra.mxu0 0.0
      %1156 = vmatprep.subr.mxu0 0.0
      %1157 = vmatpush2.msra.mxu0 0.0
      %1158 = vmatprep.subr.mxu0 0.0
      %1159 = vmatpush2.msra.mxu0 0.0
      %1160 = vmatprep.subr.mxu0 0.0
      %1161 = vmatpush2.msra.mxu0 0.0
      %1162 = vmatprep.subr.mxu0 0.0
      %1163 = vmatpush2.msra.mxu0 0.0
      %1164 = vmatprep.subr.mxu0 0.0
      %1165 = vmatpush2.msra.mxu0 0.0
      %1166 = vmatprep.subr.mxu0 0.0
      %1167 = vmatpush2.msra.mxu0 0.0
      %1168 = vmatprep.mubr.f32.mxu0 0.0
      %1169 = vmatmul.mubr.f32.gmra.mxu0 %v1037
      %v1170 = vpop.f32.mrf.mxu0
      %v1171 = vadd.f32 0.0, %v1170
      %v1172 = vpop.f32.mrf.mxu0
      %1173 = vmatprep.mubr.f32.mxu0 0.0
      %1174 = vmatmul.mubr.f32.gmra.mxu0 %v1039
      %v1175 = vpop.f32.mrf.mxu0
      %v1176 = vadd.f32 0.0, %v1175
      %v1177 = vpop.f32.mrf.mxu0
      %1178 = vmatprep.mubr.f32.mxu0 0.0
      %1179 = vmatmul.mubr.f32.gmra.mxu0 %v1041
      %v1180 = vpop.f32.mrf.mxu0
      %v1181 = vadd.f32 0.0, %v1180
      %v1182 = vpop.f32.mrf.mxu0
      %1183 = vmatprep.mubr.f32.mxu0 0.0
      %1184 = vmatmul.mubr.f32.gmra.mxu0 %v1043
      %v1185 = vpop.f32.mrf.mxu0
      %v1186 = vadd.f32 0.0, %v1185
      %v1187 = vpop.f32.mrf.mxu0
      %1188 = vmatprep.mubr.f32.mxu0 0.0
      %1189 = vmatmul.mubr.f32.gmra.mxu0 %v1045
      %v1190 = vpop.f32.mrf.mxu0
      %v1191 = vadd.f32 0.0, %v1190
      %v1192 = vpop.f32.mrf.mxu0
      %1193 = vmatprep.mubr.f32.mxu0 0.0
      %1194 = vmatmul.mubr.f32.gmra.mxu0 %v1047
      %v1195 = vpop.f32.mrf.mxu0
      %v1196 = vadd.f32 0.0, %v1195
      %v1197 = vpop.f32.mrf.mxu0
      %1198 = vmatprep.mubr.f32.mxu0 0.0
      %1199 = vmatmul.mubr.f32.gmra.mxu0 %v1049
      %v1200 = vpop.f32.mrf.mxu0
      %v1201 = vadd.f32 0.0, %v1200
      %v1202 = vpop.f32.mrf.mxu0
      %1203 = vmatprep.mubr.f32.mxu0 0.0
      %1204 = vmatmul.mubr.f32.gmra.mxu0 %v1051
      %v1205 = vpop.f32.mrf.mxu0
      %v1206 = vadd.f32 0.0, %v1205
      %v1207 = vpop.f32.mrf.mxu0
      %1208 = vmatprep.mubr.f32.mxu0 0.0
      %1209 = vmatmul.mubr.f32.gmra.mxu0 %v1053
      %v1210 = vpop.f32.mrf.mxu0
      %v1211 = vadd.f32 0.0, %v1210
      %v1212 = vpop.f32.mrf.mxu0
      %1213 = vmatprep.mubr.f32.mxu0 0.0
      %1214 = vmatmul.mubr.f32.gmra.mxu0 %v1055
      %v1215 = vpop.f32.mrf.mxu0
      %v1216 = vadd.f32 0.0, %v1215
      %v1217 = vpop.f32.mrf.mxu0
      %1218 = vmatprep.mubr.f32.mxu0 0.0
      %1219 = vmatmul.mubr.f32.gmra.mxu0 %v1057
      %v1220 = vpop.f32.mrf.mxu0
      %v1221 = vadd.f32 0.0, %v1220
      %v1222 = vpop.f32.mrf.mxu0
      %1223 = vmatprep.mubr.f32.mxu0 0.0
      %1224 = vmatmul.mubr.f32.gmra.mxu0 %v1059
      %v1225 = vpop.f32.mrf.mxu0
      %v1226 = vadd.f32 0.0, %v1225
      %v1227 = vpop.f32.mrf.mxu0
      %1228 = vmatprep.mubr.f32.mxu0 0.0
      %1229 = vmatmul.mubr.f32.gmra.mxu0 %v1061
      %v1230 = vpop.f32.mrf.mxu0
      %v1231 = vadd.f32 0.0, %v1230
      %v1232 = vpop.f32.mrf.mxu0
      %1233 = vmatprep.mubr.f32.mxu0 0.0
      %1234 = vmatmul.mubr.f32.gmra.mxu0 %v1063
      %v1235 = vpop.f32.mrf.mxu0
      %v1236 = vadd.f32 0.0, %v1235
      %v1237 = vpop.f32.mrf.mxu0
      %1238 = vmatprep.mubr.f32.mxu0 0.0
      %1239 = vmatmul.mubr.f32.gmra.mxu0 %v1065
      %v1240 = vpop.f32.mrf.mxu0
      %v1241 = vadd.f32 0.0, %v1240
      %v1242 = vpop.f32.mrf.mxu0
      %1243 = vmatprep.mubr.f32.mxu0 0.0
      %1244 = vmatmul.mubr.f32.gmra.mxu0 %v1067
      %v1245 = vpop.f32.mrf.mxu0
      %v1246 = vadd.f32 0.0, %v1245
      %v1247 = vpop.f32.mrf.mxu0
      %1248 = vmatprep.mubr.f32.mxu0 0.0
      %1249 = vmatmul.mubr.f32.gmra.mxu0 %v1069
      %v1250 = vpop.f32.mrf.mxu0
      %v1251 = vadd.f32 0.0, %v1250
      %v1252 = vpop.f32.mrf.mxu0
      %1253 = vmatprep.mubr.f32.mxu0 0.0
      %1254 = vmatmul.mubr.f32.gmra.mxu0 %v1071
      %v1255 = vpop.f32.mrf.mxu0
      %v1256 = vadd.f32 0.0, %v1255
      %v1257 = vpop.f32.mrf.mxu0
      %1258 = vmatprep.mubr.f32.mxu0 0.0
      %1259 = vmatmul.mubr.f32.gmra.mxu0 %v1073
      %v1260 = vpop.f32.mrf.mxu0
      %v1261 = vadd.f32 0.0, %v1260
      %v1262 = vpop.f32.mrf.mxu0
      %1263 = vmatprep.mubr.f32.mxu0 0.0
      %1264 = vmatmul.mubr.f32.gmra.mxu0 %v1075
      %v1265 = vpop.f32.mrf.mxu0
      %v1266 = vadd.f32 0.0, %v1265
      %v1267 = vpop.f32.mrf.mxu0
      %1268 = vmatprep.mubr.f32.mxu0 0.0
      %1269 = vmatmul.mubr.f32.gmra.mxu0 %v1077
      %v1270 = vpop.f32.mrf.mxu0
      %v1271 = vadd.f32 0.0, %v1270
      %v1272 = vpop.f32.mrf.mxu0
      %1273 = vmatprep.mubr.f32.mxu0 0.0
      %1274 = vmatmul.mubr.f32.gmra.mxu0 %v1079
      %v1275 = vpop.f32.mrf.mxu0
      %v1276 = vadd.f32 0.0, %v1275
      %v1277 = vpop.f32.mrf.mxu0
      %1278 = vmatprep.mubr.f32.mxu0 0.0
      %1279 = vmatmul.mubr.f32.gmra.mxu0 %v1081
      %v1280 = vpop.f32.mrf.mxu0
      %v1281 = vadd.f32 0.0, %v1280
      %v1282 = vpop.f32.mrf.mxu0
      %1283 = vmatprep.mubr.f32.mxu0 0.0
      %1284 = vmatmul.mubr.f32.gmra.mxu0 %v1083
      %v1285 = vpop.f32.mrf.mxu0
      %v1286 = vadd.f32 0.0, %v1285
      %v1287 = vpop.f32.mrf.mxu0
      %1288 = vmatprep.mubr.f32.mxu0 0.0
      %1289 = vmatmul.mubr.f32.gmra.mxu0 %v1085
      %v1290 = vpop.f32.mrf.mxu0
      %v1291 = vadd.f32 0.0, %v1290
      %v1292 = vpop.f32.mrf.mxu0
      %1293 = vmatprep.mubr.f32.mxu0 0.0
      %1294 = vmatmul.mubr.f32.gmra.mxu0 %v1087
      %v1295 = vpop.f32.mrf.mxu0
      %v1296 = vadd.f32 0.0, %v1295
      %v1297 = vpop.f32.mrf.mxu0
      %1298 = vmatprep.mubr.f32.mxu0 0.0
      %1299 = vmatmul.mubr.f32.gmra.mxu0 %v1089
      %v1300 = vpop.f32.mrf.mxu0
      %v1301 = vadd.f32 0.0, %v1300
      %v1302 = vpop.f32.mrf.mxu0
      %1303 = vmatprep.mubr.f32.mxu0 0.0
      %1304 = vmatmul.mubr.f32.gmra.mxu0 %v1091
      %v1305 = vpop.f32.mrf.mxu0
      %v1306 = vadd.f32 0.0, %v1305
      %v1307 = vpop.f32.mrf.mxu0
      %1308 = vmatprep.mubr.f32.mxu0 0.0
      %1309 = vmatmul.mubr.f32.gmra.mxu0 %v1093
      %v1310 = vpop.f32.mrf.mxu0
      %v1311 = vadd.f32 0.0, %v1310
      %v1312 = vpop.f32.mrf.mxu0
      %1313 = vmatprep.mubr.f32.mxu0 0.0
      %1314 = vmatmul.mubr.f32.gmra.mxu0 %v1095
      %v1315 = vpop.f32.mrf.mxu0
      %v1316 = vadd.f32 0.0, %v1315
      %v1317 = vpop.f32.mrf.mxu0
      %1318 = vmatprep.mubr.f32.mxu0 0.0
      %1319 = vmatmul.mubr.f32.gmra.mxu0 %v1097
      %v1320 = vpop.f32.mrf.mxu0
      %v1321 = vadd.f32 0.0, %v1320
      %v1322 = vpop.f32.mrf.mxu0
      %1323 = vmatprep.mubr.f32.mxu0 0.0
      %1324 = vmatmul.mubr.f32.gmra.mxu0 %v1099
      %v1325 = vpop.f32.mrf.mxu0
      %v1326 = vadd.f32 0.0, %v1325
      %v1327 = vpop.f32.mrf.mxu0
      %1328 = vdwg.mxu0
      %v1329 = vadd.f32 %v796, %v1171
      %v1330 = vadd.f32 %v801, %v1176
      %v1331 = vadd.f32 %v806, %v1181
      %v1332 = vadd.f32 %v811, %v1186
      %v1333 = vadd.f32 %v816, %v1191
      %v1334 = vadd.f32 %v821, %v1196
      %v1335 = vadd.f32 %v826, %v1201
      %v1336 = vadd.f32 %v831, %v1206
      %v1337 = vadd.f32 %v836, %v1211
      %v1338 = vadd.f32 %v841, %v1216
      %v1339 = vadd.f32 %v846, %v1221
      %v1340 = vadd.f32 %v851, %v1226
      %v1341 = vadd.f32 %v856, %v1231
      %v1342 = vadd.f32 %v861, %v1236
      %v1343 = vadd.f32 %v866, %v1241
      %v1344 = vadd.f32 %v871, %v1246
      %v1345 = vadd.f32 %v876, %v1251
      %v1346 = vadd.f32 %v881, %v1256
      %v1347 = vadd.f32 %v886, %v1261
      %v1348 = vadd.f32 %v891, %v1266
      %v1349 = vadd.f32 %v896, %v1271
      %v1350 = vadd.f32 %v901, %v1276
      %v1351 = vadd.f32 %v906, %v1281
      %v1352 = vadd.f32 %v911, %v1286
      %v1353 = vadd.f32 %v916, %v1291
      %v1354 = vadd.f32 %v921, %v1296
      %v1355 = vadd.f32 %v926, %v1301
      %v1356 = vadd.f32 %v931, %v1306
      %v1357 = vadd.f32 %v936, %v1311
      %v1358 = vadd.f32 %v941, %v1316
      %v1359 = vadd.f32 %v946, %v1321
      %v1360 = vadd.f32 %v951, %v1326
      %s1361 = scalar_lea.vmem %s1, 12
      %v1362 = vld [vmem:[%s1361] sm:$0xf]
      %v1364 = vsel %vm368, %v230, 0
      %v1367 = vsel %vm368, %v231, 0
      %v1370 = vsel %vm433, %v1362, 0
      %1372 = vmatprep.subr.mxu0 0.0
      %1373 = vmatpush1.msra.mxu0 0.0
      %1374 = vmatprep.subr.mxu0 0.0
      %1375 = vmatpush1.msra.mxu0 0.0
      %1376 = vmatprep.subr.mxu0 0.0
      %1377 = vmatpush1.msra.mxu0 0.0
      %1378 = vmatprep.subr.mxu0 0.0
      %1379 = vmatpush1.msra.mxu0 0.0
      %1380 = vmatprep.subr.mxu0 0.0
      %1381 = vmatpush1.msra.mxu0 0.0
      %1382 = vmatprep.subr.mxu0 0.0
      %1383 = vmatpush1.msra.mxu0 0.0
      %1384 = vmatprep.subr.mxu0 0.0
      %1385 = vmatpush1.msra.mxu0 0.0
      %1386 = vmatprep.subr.mxu0 0.0
      %1387 = vmatpush1.msra.mxu0 0.0
      %1388 = vmatprep.subr.mxu0 0.0
      %1389 = vmatpush1.msra.mxu0 0.0
      %1390 = vmatprep.subr.mxu0 0.0
      %1391 = vmatpush1.msra.mxu0 0.0
      %1392 = vmatprep.subr.mxu0 0.0
      %1393 = vmatpush1.msra.mxu0 0.0
      %1394 = vmatprep.subr.mxu0 0.0
      %1395 = vmatpush1.msra.mxu0 0.0
      %1396 = vmatprep.subr.mxu0 0.0
      %1397 = vmatpush1.msra.mxu0 0.0
      %1398 = vmatprep.subr.mxu0 0.0
      %1399 = vmatpush1.msra.mxu0 0.0
      %1400 = vmatprep.subr.mxu0 0.0
      %1401 = vmatpush1.msra.mxu0 0.0
      %1402 = vmatprep.subr.mxu0 0.0
      %1403 = vmatpush1.msra.mxu0 %v1370
      %1404 = vmatprep.subr.mxu0 0.0
      %1405 = vmatpush2.msra.mxu0 0.0
      %1406 = vmatprep.subr.mxu0 0.0
      %1407 = vmatpush2.msra.mxu0 0.0
      %1408 = vmatprep.subr.mxu0 0.0
      %1409 = vmatpush2.msra.mxu0 0.0
      %1410 = vmatprep.subr.mxu0 0.0
      %1411 = vmatpush2.msra.mxu0 0.0
      %1412 = vmatprep.subr.mxu0 0.0
      %1413 = vmatpush2.msra.mxu0 0.0
      %1414 = vmatprep.subr.mxu0 0.0
      %1415 = vmatpush2.msra.mxu0 0.0
      %1416 = vmatprep.subr.mxu0 0.0
      %1417 = vmatpush2.msra.mxu0 0.0
      %1418 = vmatprep.subr.mxu0 0.0
      %1419 = vmatpush2.msra.mxu0 0.0
      %1420 = vmatprep.subr.mxu0 0.0
      %1421 = vmatpush2.msra.mxu0 0.0
      %1422 = vmatprep.subr.mxu0 0.0
      %1423 = vmatpush2.msra.mxu0 0.0
      %1424 = vmatprep.subr.mxu0 0.0
      %1425 = vmatpush2.msra.mxu0 0.0
      %1426 = vmatprep.subr.mxu0 0.0
      %1427 = vmatpush2.msra.mxu0 0.0
      %1428 = vmatprep.subr.mxu0 0.0
      %1429 = vmatpush2.msra.mxu0 0.0
      %1430 = vmatprep.subr.mxu0 0.0
      %1431 = vmatpush2.msra.mxu0 0.0
      %1432 = vmatprep.subr.mxu0 0.0
      %1433 = vmatpush2.msra.mxu0 0.0
      %1434 = vmatprep.subr.mxu0 0.0
      %1435 = vmatpush2.msra.mxu0 0.0
      %1436 = vmatprep.mubr.f32.mxu0 0.0
      %1437 = vmatmul.mubr.f32.gmra.mxu0 %v666
      %v1438 = vpop.f32.mrf.mxu0
      %v1439 = vadd.f32 0.0, %v1438
      %v1440 = vpop.f32.mrf.mxu0
      %1441 = vmatprep.mubr.f32.mxu0 0.0
      %1442 = vmatmul.mubr.f32.gmra.mxu0 %v668
      %v1443 = vpop.f32.mrf.mxu0
      %v1444 = vadd.f32 0.0, %v1443
      %v1445 = vpop.f32.mrf.mxu0
      %1446 = vmatprep.mubr.f32.mxu0 0.0
      %1447 = vmatmul.mubr.f32.gmra.mxu0 %v670
      %v1448 = vpop.f32.mrf.mxu0
      %v1449 = vadd.f32 0.0, %v1448
      %v1450 = vpop.f32.mrf.mxu0
      %1451 = vmatprep.mubr.f32.mxu0 0.0
      %1452 = vmatmul.mubr.f32.gmra.mxu0 %v672
      %v1453 = vpop.f32.mrf.mxu0
      %v1454 = vadd.f32 0.0, %v1453
      %v1455 = vpop.f32.mrf.mxu0
      %1456 = vmatprep.mubr.f32.mxu0 0.0
      %1457 = vmatmul.mubr.f32.gmra.mxu0 %v674
      %v1458 = vpop.f32.mrf.mxu0
      %v1459 = vadd.f32 0.0, %v1458
      %v1460 = vpop.f32.mrf.mxu0
      %1461 = vmatprep.mubr.f32.mxu0 0.0
      %1462 = vmatmul.mubr.f32.gmra.mxu0 %v676
      %v1463 = vpop.f32.mrf.mxu0
      %v1464 = vadd.f32 0.0, %v1463
      %v1465 = vpop.f32.mrf.mxu0
      %1466 = vmatprep.mubr.f32.mxu0 0.0
      %1467 = vmatmul.mubr.f32.gmra.mxu0 %v678
      %v1468 = vpop.f32.mrf.mxu0
      %v1469 = vadd.f32 0.0, %v1468
      %v1470 = vpop.f32.mrf.mxu0
      %1471 = vmatprep.mubr.f32.mxu0 0.0
      %1472 = vmatmul.mubr.f32.gmra.mxu0 %v680
      %v1473 = vpop.f32.mrf.mxu0
      %v1474 = vadd.f32 0.0, %v1473
      %v1475 = vpop.f32.mrf.mxu0
      %1476 = vmatprep.mubr.f32.mxu0 0.0
      %1477 = vmatmul.mubr.f32.gmra.mxu0 %v682
      %v1478 = vpop.f32.mrf.mxu0
      %v1479 = vadd.f32 0.0, %v1478
      %v1480 = vpop.f32.mrf.mxu0
      %1481 = vmatprep.mubr.f32.mxu0 0.0
      %1482 = vmatmul.mubr.f32.gmra.mxu0 %v684
      %v1483 = vpop.f32.mrf.mxu0
      %v1484 = vadd.f32 0.0, %v1483
      %v1485 = vpop.f32.mrf.mxu0
      %1486 = vmatprep.mubr.f32.mxu0 0.0
      %1487 = vmatmul.mubr.f32.gmra.mxu0 %v686
      %v1488 = vpop.f32.mrf.mxu0
      %v1489 = vadd.f32 0.0, %v1488
      %v1490 = vpop.f32.mrf.mxu0
      %1491 = vmatprep.mubr.f32.mxu0 0.0
      %1492 = vmatmul.mubr.f32.gmra.mxu0 %v688
      %v1493 = vpop.f32.mrf.mxu0
      %v1494 = vadd.f32 0.0, %v1493
      %v1495 = vpop.f32.mrf.mxu0
      %1496 = vmatprep.mubr.f32.mxu0 0.0
      %1497 = vmatmul.mubr.f32.gmra.mxu0 %v690
      %v1498 = vpop.f32.mrf.mxu0
      %v1499 = vadd.f32 0.0, %v1498
      %v1500 = vpop.f32.mrf.mxu0
      %1501 = vmatprep.mubr.f32.mxu0 0.0
      %1502 = vmatmul.mubr.f32.gmra.mxu0 %v692
      %v1503 = vpop.f32.mrf.mxu0
      %v1504 = vadd.f32 0.0, %v1503
      %v1505 = vpop.f32.mrf.mxu0
      %1506 = vmatprep.mubr.f32.mxu0 0.0
      %1507 = vmatmul.mubr.f32.gmra.mxu0 %v694
      %v1508 = vpop.f32.mrf.mxu0
      %v1509 = vadd.f32 0.0, %v1508
      %v1510 = vpop.f32.mrf.mxu0
      %1511 = vmatprep.mubr.f32.mxu0 0.0
      %1512 = vmatmul.mubr.f32.gmra.mxu0 %v696
      %v1513 = vpop.f32.mrf.mxu0
      %v1514 = vadd.f32 0.0, %v1513
      %v1515 = vpop.f32.mrf.mxu0
      %1516 = vmatprep.mubr.f32.mxu0 0.0
      %1517 = vmatmul.mubr.f32.gmra.mxu0 %v698
      %v1518 = vpop.f32.mrf.mxu0
      %v1519 = vadd.f32 0.0, %v1518
      %v1520 = vpop.f32.mrf.mxu0
      %1521 = vmatprep.mubr.f32.mxu0 0.0
      %1522 = vmatmul.mubr.f32.gmra.mxu0 %v700
      %v1523 = vpop.f32.mrf.mxu0
      %v1524 = vadd.f32 0.0, %v1523
      %v1525 = vpop.f32.mrf.mxu0
      %1526 = vmatprep.mubr.f32.mxu0 0.0
      %1527 = vmatmul.mubr.f32.gmra.mxu0 %v702
      %v1528 = vpop.f32.mrf.mxu0
      %v1529 = vadd.f32 0.0, %v1528
      %v1530 = vpop.f32.mrf.mxu0
      %1531 = vmatprep.mubr.f32.mxu0 0.0
      %1532 = vmatmul.mubr.f32.gmra.mxu0 %v704
      %v1533 = vpop.f32.mrf.mxu0
      %v1534 = vadd.f32 0.0, %v1533
      %v1535 = vpop.f32.mrf.mxu0
      %1536 = vmatprep.mubr.f32.mxu0 0.0
      %1537 = vmatmul.mubr.f32.gmra.mxu0 %v706
      %v1538 = vpop.f32.mrf.mxu0
      %v1539 = vadd.f32 0.0, %v1538
      %v1540 = vpop.f32.mrf.mxu0
      %1541 = vmatprep.mubr.f32.mxu0 0.0
      %1542 = vmatmul.mubr.f32.gmra.mxu0 %v708
      %v1543 = vpop.f32.mrf.mxu0
      %v1544 = vadd.f32 0.0, %v1543
      %v1545 = vpop.f32.mrf.mxu0
      %1546 = vmatprep.mubr.f32.mxu0 0.0
      %1547 = vmatmul.mubr.f32.gmra.mxu0 %v710
      %v1548 = vpop.f32.mrf.mxu0
      %v1549 = vadd.f32 0.0, %v1548
      %v1550 = vpop.f32.mrf.mxu0
      %1551 = vmatprep.mubr.f32.mxu0 0.0
      %1552 = vmatmul.mubr.f32.gmra.mxu0 %v712
      %v1553 = vpop.f32.mrf.mxu0
      %v1554 = vadd.f32 0.0, %v1553
      %v1555 = vpop.f32.mrf.mxu0
      %1556 = vmatprep.mubr.f32.mxu0 0.0
      %1557 = vmatmul.mubr.f32.gmra.mxu0 %v714
      %v1558 = vpop.f32.mrf.mxu0
      %v1559 = vadd.f32 0.0, %v1558
      %v1560 = vpop.f32.mrf.mxu0
      %1561 = vmatprep.mubr.f32.mxu0 0.0
      %1562 = vmatmul.mubr.f32.gmra.mxu0 %v716
      %v1563 = vpop.f32.mrf.mxu0
      %v1564 = vadd.f32 0.0, %v1563
      %v1565 = vpop.f32.mrf.mxu0
      %1566 = vmatprep.mubr.f32.mxu0 0.0
      %1567 = vmatmul.mubr.f32.gmra.mxu0 %v718
      %v1568 = vpop.f32.mrf.mxu0
      %v1569 = vadd.f32 0.0, %v1568
      %v1570 = vpop.f32.mrf.mxu0
      %1571 = vmatprep.mubr.f32.mxu0 0.0
      %1572 = vmatmul.mubr.f32.gmra.mxu0 %v720
      %v1573 = vpop.f32.mrf.mxu0
      %v1574 = vadd.f32 0.0, %v1573
      %v1575 = vpop.f32.mrf.mxu0
      %1576 = vmatprep.mubr.f32.mxu0 0.0
      %1577 = vmatmul.mubr.f32.gmra.mxu0 %v722
      %v1578 = vpop.f32.mrf.mxu0
      %v1579 = vadd.f32 0.0, %v1578
      %v1580 = vpop.f32.mrf.mxu0
      %1581 = vmatprep.mubr.f32.mxu0 0.0
      %1582 = vmatmul.mubr.f32.gmra.mxu0 %v724
      %v1583 = vpop.f32.mrf.mxu0
      %v1584 = vadd.f32 0.0, %v1583
      %v1585 = vpop.f32.mrf.mxu0
      %1586 = vmatprep.mubr.f32.mxu0 0.0
      %1587 = vmatmul.mubr.f32.gmra.mxu0 %v1364
      %v1588 = vpop.f32.mrf.mxu0
      %v1589 = vadd.f32 0.0, %v1588
      %v1590 = vpop.f32.mrf.mxu0
      %1591 = vmatprep.mubr.f32.mxu0 0.0
      %1592 = vmatmul.mubr.f32.gmra.mxu0 %v1367
      %v1593 = vpop.f32.mrf.mxu0
      %v1594 = vadd.f32 0.0, %v1593
      %v1595 = vpop.f32.mrf.mxu0
      %1596 = vdwg.mxu0
      %v1597 = vadd.f32 %v1329, %v1439
      %v1598 = vadd.f32 %v1330, %v1444
      %v1599 = vadd.f32 %v1331, %v1449
      %v1600 = vadd.f32 %v1332, %v1454
      %v1601 = vadd.f32 %v1333, %v1459
      %v1602 = vadd.f32 %v1334, %v1464
      %v1603 = vadd.f32 %v1335, %v1469
      %v1604 = vadd.f32 %v1336, %v1474
      %v1605 = vadd.f32 %v1337, %v1479
      %v1606 = vadd.f32 %v1338, %v1484
      %v1607 = vadd.f32 %v1339, %v1489
      %v1608 = vadd.f32 %v1340, %v1494
      %v1609 = vadd.f32 %v1341, %v1499
      %v1610 = vadd.f32 %v1342, %v1504
      %v1611 = vadd.f32 %v1343, %v1509
      %v1612 = vadd.f32 %v1344, %v1514
      %v1613 = vadd.f32 %v1345, %v1519
      %v1614 = vadd.f32 %v1346, %v1524
      %v1615 = vadd.f32 %v1347, %v1529
      %v1616 = vadd.f32 %v1348, %v1534
      %v1617 = vadd.f32 %v1349, %v1539
      %v1618 = vadd.f32 %v1350, %v1544
      %v1619 = vadd.f32 %v1351, %v1549
      %v1620 = vadd.f32 %v1352, %v1554
      %v1621 = vadd.f32 %v1353, %v1559
      %v1622 = vadd.f32 %v1354, %v1564
      %v1623 = vadd.f32 %v1355, %v1569
      %v1624 = vadd.f32 %v1356, %v1574
      %v1625 = vadd.f32 %v1357, %v1579
      %v1626 = vadd.f32 %v1358, %v1584
      %v1627 = vadd.f32 %v1359, %v1589
      %v1628 = vadd.f32 %v1360, %v1594
      %v1630 = vrot.slane %v230, 1
      %v1631 = vrot.slane %v231, 1
      %v1632 = vsel %vm285, %v1630, %v1631
      %v1633 = vrot.slane %v232, 1
      %v1634 = vsel %vm285, %v1631, %v1633
      %s1635 = scalar_lea.vmem %s1, 16
      %v1636 = vld [vmem:[%s1635] sm:$0xf]
      %v1637 = vsel %vm368, %v1632, 0
      %v1639 = vsel %vm368, %v1634, 0
      %v1642 = vsel %vm433, %v1636, 0
      %1644 = vmatprep.subr.mxu0 0.0
      %1645 = vmatpush1.msra.mxu0 0.0
      %1646 = vmatprep.subr.mxu0 0.0
      %1647 = vmatpush1.msra.mxu0 0.0
      %1648 = vmatprep.subr.mxu0 0.0
      %1649 = vmatpush1.msra.mxu0 0.0
      %1650 = vmatprep.subr.mxu0 0.0
      %1651 = vmatpush1.msra.mxu0 0.0
      %1652 = vmatprep.subr.mxu0 0.0
      %1653 = vmatpush1.msra.mxu0 0.0
      %1654 = vmatprep.subr.mxu0 0.0
      %1655 = vmatpush1.msra.mxu0 0.0
      %1656 = vmatprep.subr.mxu0 0.0
      %1657 = vmatpush1.msra.mxu0 0.0
      %1658 = vmatprep.subr.mxu0 0.0
      %1659 = vmatpush1.msra.mxu0 0.0
      %1660 = vmatprep.subr.mxu0 0.0
      %1661 = vmatpush1.msra.mxu0 0.0
      %1662 = vmatprep.subr.mxu0 0.0
      %1663 = vmatpush1.msra.mxu0 0.0
      %1664 = vmatprep.subr.mxu0 0.0
      %1665 = vmatpush1.msra.mxu0 0.0
      %1666 = vmatprep.subr.mxu0 0.0
      %1667 = vmatpush1.msra.mxu0 0.0
      %1668 = vmatprep.subr.mxu0 0.0
      %1669 = vmatpush1.msra.mxu0 0.0
      %1670 = vmatprep.subr.mxu0 0.0
      %1671 = vmatpush1.msra.mxu0 0.0
      %1672 = vmatprep.subr.mxu0 0.0
      %1673 = vmatpush1.msra.mxu0 0.0
      %1674 = vmatprep.subr.mxu0 0.0
      %1675 = vmatpush1.msra.mxu0 %v1642
      %1676 = vmatprep.subr.mxu0 0.0
      %1677 = vmatpush2.msra.mxu0 0.0
      %1678 = vmatprep.subr.mxu0 0.0
      %1679 = vmatpush2.msra.mxu0 0.0
      %1680 = vmatprep.subr.mxu0 0.0
      %1681 = vmatpush2.msra.mxu0 0.0
      %1682 = vmatprep.subr.mxu0 0.0
      %1683 = vmatpush2.msra.mxu0 0.0
      %1684 = vmatprep.subr.mxu0 0.0
      %1685 = vmatpush2.msra.mxu0 0.0
      %1686 = vmatprep.subr.mxu0 0.0
      %1687 = vmatpush2.msra.mxu0 0.0
      %1688 = vmatprep.subr.mxu0 0.0
      %1689 = vmatpush2.msra.mxu0 0.0
      %1690 = vmatprep.subr.mxu0 0.0
      %1691 = vmatpush2.msra.mxu0 0.0
      %1692 = vmatprep.subr.mxu0 0.0
      %1693 = vmatpush2.msra.mxu0 0.0
      %1694 = vmatprep.subr.mxu0 0.0
      %1695 = vmatpush2.msra.mxu0 0.0
      %1696 = vmatprep.subr.mxu0 0.0
      %1697 = vmatpush2.msra.mxu0 0.0
      %1698 = vmatprep.subr.mxu0 0.0
      %1699 = vmatpush2.msra.mxu0 0.0
      %1700 = vmatprep.subr.mxu0 0.0
      %1701 = vmatpush2.msra.mxu0 0.0
      %1702 = vmatprep.subr.mxu0 0.0
      %1703 = vmatpush2.msra.mxu0 0.0
      %1704 = vmatprep.subr.mxu0 0.0
      %1705 = vmatpush2.msra.mxu0 0.0
      %1706 = vmatprep.subr.mxu0 0.0
      %1707 = vmatpush2.msra.mxu0 0.0
      %1708 = vmatprep.mubr.f32.mxu0 0.0
      %1709 = vmatmul.mubr.f32.gmra.mxu0 %v373
      %v1710 = vpop.f32.mrf.mxu0
      %v1711 = vadd.f32 0.0, %v1710
      %v1712 = vpop.f32.mrf.mxu0
      %1713 = vmatprep.mubr.f32.mxu0 0.0
      %1714 = vmatmul.mubr.f32.gmra.mxu0 %v375
      %v1715 = vpop.f32.mrf.mxu0
      %v1716 = vadd.f32 0.0, %v1715
      %v1717 = vpop.f32.mrf.mxu0
      %1718 = vmatprep.mubr.f32.mxu0 0.0
      %1719 = vmatmul.mubr.f32.gmra.mxu0 %v377
      %v1720 = vpop.f32.mrf.mxu0
      %v1721 = vadd.f32 0.0, %v1720
      %v1722 = vpop.f32.mrf.mxu0
      %1723 = vmatprep.mubr.f32.mxu0 0.0
      %1724 = vmatmul.mubr.f32.gmra.mxu0 %v379
      %v1725 = vpop.f32.mrf.mxu0
      %v1726 = vadd.f32 0.0, %v1725
      %v1727 = vpop.f32.mrf.mxu0
      %1728 = vmatprep.mubr.f32.mxu0 0.0
      %1729 = vmatmul.mubr.f32.gmra.mxu0 %v381
      %v1730 = vpop.f32.mrf.mxu0
      %v1731 = vadd.f32 0.0, %v1730
      %v1732 = vpop.f32.mrf.mxu0
      %1733 = vmatprep.mubr.f32.mxu0 0.0
      %1734 = vmatmul.mubr.f32.gmra.mxu0 %v383
      %v1735 = vpop.f32.mrf.mxu0
      %v1736 = vadd.f32 0.0, %v1735
      %v1737 = vpop.f32.mrf.mxu0
      %1738 = vmatprep.mubr.f32.mxu0 0.0
      %1739 = vmatmul.mubr.f32.gmra.mxu0 %v385
      %v1740 = vpop.f32.mrf.mxu0
      %v1741 = vadd.f32 0.0, %v1740
      %v1742 = vpop.f32.mrf.mxu0
      %1743 = vmatprep.mubr.f32.mxu0 0.0
      %1744 = vmatmul.mubr.f32.gmra.mxu0 %v387
      %v1745 = vpop.f32.mrf.mxu0
      %v1746 = vadd.f32 0.0, %v1745
      %v1747 = vpop.f32.mrf.mxu0
      %1748 = vmatprep.mubr.f32.mxu0 0.0
      %1749 = vmatmul.mubr.f32.gmra.mxu0 %v389
      %v1750 = vpop.f32.mrf.mxu0
      %v1751 = vadd.f32 0.0, %v1750
      %v1752 = vpop.f32.mrf.mxu0
      %1753 = vmatprep.mubr.f32.mxu0 0.0
      %1754 = vmatmul.mubr.f32.gmra.mxu0 %v391
      %v1755 = vpop.f32.mrf.mxu0
      %v1756 = vadd.f32 0.0, %v1755
      %v1757 = vpop.f32.mrf.mxu0
      %1758 = vmatprep.mubr.f32.mxu0 0.0
      %1759 = vmatmul.mubr.f32.gmra.mxu0 %v393
      %v1760 = vpop.f32.mrf.mxu0
      %v1761 = vadd.f32 0.0, %v1760
      %v1762 = vpop.f32.mrf.mxu0
      %1763 = vmatprep.mubr.f32.mxu0 0.0
      %1764 = vmatmul.mubr.f32.gmra.mxu0 %v395
      %v1765 = vpop.f32.mrf.mxu0
      %v1766 = vadd.f32 0.0, %v1765
      %v1767 = vpop.f32.mrf.mxu0
      %1768 = vmatprep.mubr.f32.mxu0 0.0
      %1769 = vmatmul.mubr.f32.gmra.mxu0 %v397
      %v1770 = vpop.f32.mrf.mxu0
      %v1771 = vadd.f32 0.0, %v1770
      %v1772 = vpop.f32.mrf.mxu0
      %1773 = vmatprep.mubr.f32.mxu0 0.0
      %1774 = vmatmul.mubr.f32.gmra.mxu0 %v399
      %v1775 = vpop.f32.mrf.mxu0
      %v1776 = vadd.f32 0.0, %v1775
      %v1777 = vpop.f32.mrf.mxu0
      %1778 = vmatprep.mubr.f32.mxu0 0.0
      %1779 = vmatmul.mubr.f32.gmra.mxu0 %v401
      %v1780 = vpop.f32.mrf.mxu0
      %v1781 = vadd.f32 0.0, %v1780
      %v1782 = vpop.f32.mrf.mxu0
      %1783 = vmatprep.mubr.f32.mxu0 0.0
      %1784 = vmatmul.mubr.f32.gmra.mxu0 %v403
      %v1785 = vpop.f32.mrf.mxu0
      %v1786 = vadd.f32 0.0, %v1785
      %v1787 = vpop.f32.mrf.mxu0
      %1788 = vmatprep.mubr.f32.mxu0 0.0
      %1789 = vmatmul.mubr.f32.gmra.mxu0 %v405
      %v1790 = vpop.f32.mrf.mxu0
      %v1791 = vadd.f32 0.0, %v1790
      %v1792 = vpop.f32.mrf.mxu0
      %1793 = vmatprep.mubr.f32.mxu0 0.0
      %1794 = vmatmul.mubr.f32.gmra.mxu0 %v407
      %v1795 = vpop.f32.mrf.mxu0
      %v1796 = vadd.f32 0.0, %v1795
      %v1797 = vpop.f32.mrf.mxu0
      %1798 = vmatprep.mubr.f32.mxu0 0.0
      %1799 = vmatmul.mubr.f32.gmra.mxu0 %v409
      %v1800 = vpop.f32.mrf.mxu0
      %v1801 = vadd.f32 0.0, %v1800
      %v1802 = vpop.f32.mrf.mxu0
      %1803 = vmatprep.mubr.f32.mxu0 0.0
      %1804 = vmatmul.mubr.f32.gmra.mxu0 %v411
      %v1805 = vpop.f32.mrf.mxu0
      %v1806 = vadd.f32 0.0, %v1805
      %v1807 = vpop.f32.mrf.mxu0
      %1808 = vmatprep.mubr.f32.mxu0 0.0
      %1809 = vmatmul.mubr.f32.gmra.mxu0 %v413
      %v1810 = vpop.f32.mrf.mxu0
      %v1811 = vadd.f32 0.0, %v1810
      %v1812 = vpop.f32.mrf.mxu0
      %1813 = vmatprep.mubr.f32.mxu0 0.0
      %1814 = vmatmul.mubr.f32.gmra.mxu0 %v415
      %v1815 = vpop.f32.mrf.mxu0
      %v1816 = vadd.f32 0.0, %v1815
      %v1817 = vpop.f32.mrf.mxu0
      %1818 = vmatprep.mubr.f32.mxu0 0.0
      %1819 = vmatmul.mubr.f32.gmra.mxu0 %v417
      %v1820 = vpop.f32.mrf.mxu0
      %v1821 = vadd.f32 0.0, %v1820
      %v1822 = vpop.f32.mrf.mxu0
      %1823 = vmatprep.mubr.f32.mxu0 0.0
      %1824 = vmatmul.mubr.f32.gmra.mxu0 %v419
      %v1825 = vpop.f32.mrf.mxu0
      %v1826 = vadd.f32 0.0, %v1825
      %v1827 = vpop.f32.mrf.mxu0
      %1828 = vmatprep.mubr.f32.mxu0 0.0
      %1829 = vmatmul.mubr.f32.gmra.mxu0 %v421
      %v1830 = vpop.f32.mrf.mxu0
      %v1831 = vadd.f32 0.0, %v1830
      %v1832 = vpop.f32.mrf.mxu0
      %1833 = vmatprep.mubr.f32.mxu0 0.0
      %1834 = vmatmul.mubr.f32.gmra.mxu0 %v423
      %v1835 = vpop.f32.mrf.mxu0
      %v1836 = vadd.f32 0.0, %v1835
      %v1837 = vpop.f32.mrf.mxu0
      %1838 = vmatprep.mubr.f32.mxu0 0.0
      %1839 = vmatmul.mubr.f32.gmra.mxu0 %v425
      %v1840 = vpop.f32.mrf.mxu0
      %v1841 = vadd.f32 0.0, %v1840
      %v1842 = vpop.f32.mrf.mxu0
      %1843 = vmatprep.mubr.f32.mxu0 0.0
      %1844 = vmatmul.mubr.f32.gmra.mxu0 %v427
      %v1845 = vpop.f32.mrf.mxu0
      %v1846 = vadd.f32 0.0, %v1845
      %v1847 = vpop.f32.mrf.mxu0
      %1848 = vmatprep.mubr.f32.mxu0 0.0
      %1849 = vmatmul.mubr.f32.gmra.mxu0 %v429
      %v1850 = vpop.f32.mrf.mxu0
      %v1851 = vadd.f32 0.0, %v1850
      %v1852 = vpop.f32.mrf.mxu0
      %1853 = vmatprep.mubr.f32.mxu0 0.0
      %1854 = vmatmul.mubr.f32.gmra.mxu0 %v431
      %v1855 = vpop.f32.mrf.mxu0
      %v1856 = vadd.f32 0.0, %v1855
      %v1857 = vpop.f32.mrf.mxu0
      %1858 = vmatprep.mubr.f32.mxu0 0.0
      %1859 = vmatmul.mubr.f32.gmra.mxu0 %v1637
      %v1860 = vpop.f32.mrf.mxu0
      %v1861 = vadd.f32 0.0, %v1860
      %v1862 = vpop.f32.mrf.mxu0
      %1863 = vmatprep.mubr.f32.mxu0 0.0
      %1864 = vmatmul.mubr.f32.gmra.mxu0 %v1639
      %v1865 = vpop.f32.mrf.mxu0
      %v1866 = vadd.f32 0.0, %v1865
      %v1867 = vpop.f32.mrf.mxu0
      %1868 = vdwg.mxu0
      %v1869 = vadd.f32 %v1597, %v1711
      %v1870 = vadd.f32 %v1598, %v1716
      %v1871 = vadd.f32 %v1599, %v1721
      %v1872 = vadd.f32 %v1600, %v1726
      %v1873 = vadd.f32 %v1601, %v1731
      %v1874 = vadd.f32 %v1602, %v1736
      %v1875 = vadd.f32 %v1603, %v1741
      %v1876 = vadd.f32 %v1604, %v1746
      %v1877 = vadd.f32 %v1605, %v1751
      %v1878 = vadd.f32 %v1606, %v1756
      %v1879 = vadd.f32 %v1607, %v1761
      %v1880 = vadd.f32 %v1608, %v1766
      %v1881 = vadd.f32 %v1609, %v1771
      %v1882 = vadd.f32 %v1610, %v1776
      %v1883 = vadd.f32 %v1611, %v1781
      %v1884 = vadd.f32 %v1612, %v1786
      %v1885 = vadd.f32 %v1613, %v1791
      %v1886 = vadd.f32 %v1614, %v1796
      %v1887 = vadd.f32 %v1615, %v1801
      %v1888 = vadd.f32 %v1616, %v1806
      %v1889 = vadd.f32 %v1617, %v1811
      %v1890 = vadd.f32 %v1618, %v1816
      %v1891 = vadd.f32 %v1619, %v1821
      %v1892 = vadd.f32 %v1620, %v1826
      %v1893 = vadd.f32 %v1621, %v1831
      %v1894 = vadd.f32 %v1622, %v1836
      %v1895 = vadd.f32 %v1623, %v1841
      %v1896 = vadd.f32 %v1624, %v1846
      %v1897 = vadd.f32 %v1625, %v1851
      %v1898 = vadd.f32 %v1626, %v1856
      %v1899 = vadd.f32 %v1627, %v1861
      %v1900 = vadd.f32 %v1628, %v1866
      %v1901 = vrot.slane %v230, 2
      %v1902 = vrot.slane %v231, 2
      %v1903 = vsel %vm954, %v1901, %v1902
      %v1904 = vrot.slane %v232, 2
      %v1905 = vsel %vm954, %v1902, %v1904
      %s1906 = scalar_lea.vmem %s1, 20
      %v1907 = vld [vmem:[%s1906] sm:$0xf]
      %v1908 = vsel %vm368, %v1903, 0
      %v1910 = vsel %vm368, %v1905, 0
      %v1913 = vsel %vm433, %v1907, 0
      %1915 = vmatprep.subr.mxu0 0.0
      %1916 = vmatpush1.msra.mxu0 0.0
      %1917 = vmatprep.subr.mxu0 0.0
      %1918 = vmatpush1.msra.mxu0 0.0
      %1919 = vmatprep.subr.mxu0 0.0
      %1920 = vmatpush1.msra.mxu0 0.0
      %1921 = vmatprep.subr.mxu0 0.0
      %1922 = vmatpush1.msra.mxu0 0.0
      %1923 = vmatprep.subr.mxu0 0.0
      %1924 = vmatpush1.msra.mxu0 0.0
      %1925 = vmatprep.subr.mxu0 0.0
      %1926 = vmatpush1.msra.mxu0 0.0
      %1927 = vmatprep.subr.mxu0 0.0
      %1928 = vmatpush1.msra.mxu0 0.0
      %1929 = vmatprep.subr.mxu0 0.0
      %1930 = vmatpush1.msra.mxu0 0.0
      %1931 = vmatprep.subr.mxu0 0.0
      %1932 = vmatpush1.msra.mxu0 0.0
      %1933 = vmatprep.subr.mxu0 0.0
      %1934 = vmatpush1.msra.mxu0 0.0
      %1935 = vmatprep.subr.mxu0 0.0
      %1936 = vmatpush1.msra.mxu0 0.0
      %1937 = vmatprep.subr.mxu0 0.0
      %1938 = vmatpush1.msra.mxu0 0.0
      %1939 = vmatprep.subr.mxu0 0.0
      %1940 = vmatpush1.msra.mxu0 0.0
      %1941 = vmatprep.subr.mxu0 0.0
      %1942 = vmatpush1.msra.mxu0 0.0
      %1943 = vmatprep.subr.mxu0 0.0
      %1944 = vmatpush1.msra.mxu0 0.0
      %1945 = vmatprep.subr.mxu0 0.0
      %1946 = vmatpush1.msra.mxu0 %v1913
      %1947 = vmatprep.subr.mxu0 0.0
      %1948 = vmatpush2.msra.mxu0 0.0
      %1949 = vmatprep.subr.mxu0 0.0
      %1950 = vmatpush2.msra.mxu0 0.0
      %1951 = vmatprep.subr.mxu0 0.0
      %1952 = vmatpush2.msra.mxu0 0.0
      %1953 = vmatprep.subr.mxu0 0.0
      %1954 = vmatpush2.msra.mxu0 0.0
      %1955 = vmatprep.subr.mxu0 0.0
      %1956 = vmatpush2.msra.mxu0 0.0
      %1957 = vmatprep.subr.mxu0 0.0
      %1958 = vmatpush2.msra.mxu0 0.0
      %1959 = vmatprep.subr.mxu0 0.0
      %1960 = vmatpush2.msra.mxu0 0.0
      %1961 = vmatprep.subr.mxu0 0.0
      %1962 = vmatpush2.msra.mxu0 0.0
      %1963 = vmatprep.subr.mxu0 0.0
      %1964 = vmatpush2.msra.mxu0 0.0
      %1965 = vmatprep.subr.mxu0 0.0
      %1966 = vmatpush2.msra.mxu0 0.0
      %1967 = vmatprep.subr.mxu0 0.0
      %1968 = vmatpush2.msra.mxu0 0.0
      %1969 = vmatprep.subr.mxu0 0.0
      %1970 = vmatpush2.msra.mxu0 0.0
      %1971 = vmatprep.subr.mxu0 0.0
      %1972 = vmatpush2.msra.mxu0 0.0
      %1973 = vmatprep.subr.mxu0 0.0
      %1974 = vmatpush2.msra.mxu0 0.0
      %1975 = vmatprep.subr.mxu0 0.0
      %1976 = vmatpush2.msra.mxu0 0.0
      %1977 = vmatprep.subr.mxu0 0.0
      %1978 = vmatpush2.msra.mxu0 0.0
      %1979 = vmatprep.mubr.f32.mxu0 0.0
      %1980 = vmatmul.mubr.f32.gmra.mxu0 %v1041
      %v1981 = vpop.f32.mrf.mxu0
      %v1982 = vadd.f32 0.0, %v1981
      %v1983 = vpop.f32.mrf.mxu0
      %1984 = vmatprep.mubr.f32.mxu0 0.0
      %1985 = vmatmul.mubr.f32.gmra.mxu0 %v1043
      %v1986 = vpop.f32.mrf.mxu0
      %v1987 = vadd.f32 0.0, %v1986
      %v1988 = vpop.f32.mrf.mxu0
      %1989 = vmatprep.mubr.f32.mxu0 0.0
      %1990 = vmatmul.mubr.f32.gmra.mxu0 %v1045
      %v1991 = vpop.f32.mrf.mxu0
      %v1992 = vadd.f32 0.0, %v1991
      %v1993 = vpop.f32.mrf.mxu0
      %1994 = vmatprep.mubr.f32.mxu0 0.0
      %1995 = vmatmul.mubr.f32.gmra.mxu0 %v1047
      %v1996 = vpop.f32.mrf.mxu0
      %v1997 = vadd.f32 0.0, %v1996
      %v1998 = vpop.f32.mrf.mxu0
      %1999 = vmatprep.mubr.f32.mxu0 0.0
      %2000 = vmatmul.mubr.f32.gmra.mxu0 %v1049
      %v2001 = vpop.f32.mrf.mxu0
      %v2002 = vadd.f32 0.0, %v2001
      %v2003 = vpop.f32.mrf.mxu0
      %2004 = vmatprep.mubr.f32.mxu0 0.0
      %2005 = vmatmul.mubr.f32.gmra.mxu0 %v1051
      %v2006 = vpop.f32.mrf.mxu0
      %v2007 = vadd.f32 0.0, %v2006
      %v2008 = vpop.f32.mrf.mxu0
      %2009 = vmatprep.mubr.f32.mxu0 0.0
      %2010 = vmatmul.mubr.f32.gmra.mxu0 %v1053
      %v2011 = vpop.f32.mrf.mxu0
      %v2012 = vadd.f32 0.0, %v2011
      %v2013 = vpop.f32.mrf.mxu0
      %2014 = vmatprep.mubr.f32.mxu0 0.0
      %2015 = vmatmul.mubr.f32.gmra.mxu0 %v1055
      %v2016 = vpop.f32.mrf.mxu0
      %v2017 = vadd.f32 0.0, %v2016
      %v2018 = vpop.f32.mrf.mxu0
      %2019 = vmatprep.mubr.f32.mxu0 0.0
      %2020 = vmatmul.mubr.f32.gmra.mxu0 %v1057
      %v2021 = vpop.f32.mrf.mxu0
      %v2022 = vadd.f32 0.0, %v2021
      %v2023 = vpop.f32.mrf.mxu0
      %2024 = vmatprep.mubr.f32.mxu0 0.0
      %2025 = vmatmul.mubr.f32.gmra.mxu0 %v1059
      %v2026 = vpop.f32.mrf.mxu0
      %v2027 = vadd.f32 0.0, %v2026
      %v2028 = vpop.f32.mrf.mxu0
      %2029 = vmatprep.mubr.f32.mxu0 0.0
      %2030 = vmatmul.mubr.f32.gmra.mxu0 %v1061
      %v2031 = vpop.f32.mrf.mxu0
      %v2032 = vadd.f32 0.0, %v2031
      %v2033 = vpop.f32.mrf.mxu0
      %2034 = vmatprep.mubr.f32.mxu0 0.0
      %2035 = vmatmul.mubr.f32.gmra.mxu0 %v1063
      %v2036 = vpop.f32.mrf.mxu0
      %v2037 = vadd.f32 0.0, %v2036
      %v2038 = vpop.f32.mrf.mxu0
      %2039 = vmatprep.mubr.f32.mxu0 0.0
      %2040 = vmatmul.mubr.f32.gmra.mxu0 %v1065
      %v2041 = vpop.f32.mrf.mxu0
      %v2042 = vadd.f32 0.0, %v2041
      %v2043 = vpop.f32.mrf.mxu0
      %2044 = vmatprep.mubr.f32.mxu0 0.0
      %2045 = vmatmul.mubr.f32.gmra.mxu0 %v1067
      %v2046 = vpop.f32.mrf.mxu0
      %v2047 = vadd.f32 0.0, %v2046
      %v2048 = vpop.f32.mrf.mxu0
      %2049 = vmatprep.mubr.f32.mxu0 0.0
      %2050 = vmatmul.mubr.f32.gmra.mxu0 %v1069
      %v2051 = vpop.f32.mrf.mxu0
      %v2052 = vadd.f32 0.0, %v2051
      %v2053 = vpop.f32.mrf.mxu0
      %2054 = vmatprep.mubr.f32.mxu0 0.0
      %2055 = vmatmul.mubr.f32.gmra.mxu0 %v1071
      %v2056 = vpop.f32.mrf.mxu0
      %v2057 = vadd.f32 0.0, %v2056
      %v2058 = vpop.f32.mrf.mxu0
      %2059 = vmatprep.mubr.f32.mxu0 0.0
      %2060 = vmatmul.mubr.f32.gmra.mxu0 %v1073
      %v2061 = vpop.f32.mrf.mxu0
      %v2062 = vadd.f32 0.0, %v2061
      %v2063 = vpop.f32.mrf.mxu0
      %2064 = vmatprep.mubr.f32.mxu0 0.0
      %2065 = vmatmul.mubr.f32.gmra.mxu0 %v1075
      %v2066 = vpop.f32.mrf.mxu0
      %v2067 = vadd.f32 0.0, %v2066
      %v2068 = vpop.f32.mrf.mxu0
      %2069 = vmatprep.mubr.f32.mxu0 0.0
      %2070 = vmatmul.mubr.f32.gmra.mxu0 %v1077
      %v2071 = vpop.f32.mrf.mxu0
      %v2072 = vadd.f32 0.0, %v2071
      %v2073 = vpop.f32.mrf.mxu0
      %2074 = vmatprep.mubr.f32.mxu0 0.0
      %2075 = vmatmul.mubr.f32.gmra.mxu0 %v1079
      %v2076 = vpop.f32.mrf.mxu0
      %v2077 = vadd.f32 0.0, %v2076
      %v2078 = vpop.f32.mrf.mxu0
      %2079 = vmatprep.mubr.f32.mxu0 0.0
      %2080 = vmatmul.mubr.f32.gmra.mxu0 %v1081
      %v2081 = vpop.f32.mrf.mxu0
      %v2082 = vadd.f32 0.0, %v2081
      %v2083 = vpop.f32.mrf.mxu0
      %2084 = vmatprep.mubr.f32.mxu0 0.0
      %2085 = vmatmul.mubr.f32.gmra.mxu0 %v1083
      %v2086 = vpop.f32.mrf.mxu0
      %v2087 = vadd.f32 0.0, %v2086
      %v2088 = vpop.f32.mrf.mxu0
      %2089 = vmatprep.mubr.f32.mxu0 0.0
      %2090 = vmatmul.mubr.f32.gmra.mxu0 %v1085
      %v2091 = vpop.f32.mrf.mxu0
      %v2092 = vadd.f32 0.0, %v2091
      %v2093 = vpop.f32.mrf.mxu0
      %2094 = vmatprep.mubr.f32.mxu0 0.0
      %2095 = vmatmul.mubr.f32.gmra.mxu0 %v1087
      %v2096 = vpop.f32.mrf.mxu0
      %v2097 = vadd.f32 0.0, %v2096
      %v2098 = vpop.f32.mrf.mxu0
      %2099 = vmatprep.mubr.f32.mxu0 0.0
      %2100 = vmatmul.mubr.f32.gmra.mxu0 %v1089
      %v2101 = vpop.f32.mrf.mxu0
      %v2102 = vadd.f32 0.0, %v2101
      %v2103 = vpop.f32.mrf.mxu0
      %2104 = vmatprep.mubr.f32.mxu0 0.0
      %2105 = vmatmul.mubr.f32.gmra.mxu0 %v1091
      %v2106 = vpop.f32.mrf.mxu0
      %v2107 = vadd.f32 0.0, %v2106
      %v2108 = vpop.f32.mrf.mxu0
      %2109 = vmatprep.mubr.f32.mxu0 0.0
      %2110 = vmatmul.mubr.f32.gmra.mxu0 %v1093
      %v2111 = vpop.f32.mrf.mxu0
      %v2112 = vadd.f32 0.0, %v2111
      %v2113 = vpop.f32.mrf.mxu0
      %2114 = vmatprep.mubr.f32.mxu0 0.0
      %2115 = vmatmul.mubr.f32.gmra.mxu0 %v1095
      %v2116 = vpop.f32.mrf.mxu0
      %v2117 = vadd.f32 0.0, %v2116
      %v2118 = vpop.f32.mrf.mxu0
      %2119 = vmatprep.mubr.f32.mxu0 0.0
      %2120 = vmatmul.mubr.f32.gmra.mxu0 %v1097
      %v2121 = vpop.f32.mrf.mxu0
      %v2122 = vadd.f32 0.0, %v2121
      %v2123 = vpop.f32.mrf.mxu0
      %2124 = vmatprep.mubr.f32.mxu0 0.0
      %2125 = vmatmul.mubr.f32.gmra.mxu0 %v1099
      %v2126 = vpop.f32.mrf.mxu0
      %v2127 = vadd.f32 0.0, %v2126
      %v2128 = vpop.f32.mrf.mxu0
      %2129 = vmatprep.mubr.f32.mxu0 0.0
      %2130 = vmatmul.mubr.f32.gmra.mxu0 %v1908
      %v2131 = vpop.f32.mrf.mxu0
      %v2132 = vadd.f32 0.0, %v2131
      %v2133 = vpop.f32.mrf.mxu0
      %2134 = vmatprep.mubr.f32.mxu0 0.0
      %2135 = vmatmul.mubr.f32.gmra.mxu0 %v1910
      %v2136 = vpop.f32.mrf.mxu0
      %v2137 = vadd.f32 0.0, %v2136
      %v2138 = vpop.f32.mrf.mxu0
      %2139 = vdwg.mxu0
      %v2140 = vadd.f32 %v1869, %v1982
      %v2141 = vadd.f32 %v1870, %v1987
      %v2142 = vadd.f32 %v1871, %v1992
      %v2143 = vadd.f32 %v1872, %v1997
      %v2144 = vadd.f32 %v1873, %v2002
      %v2145 = vadd.f32 %v1874, %v2007
      %v2146 = vadd.f32 %v1875, %v2012
      %v2147 = vadd.f32 %v1876, %v2017
      %v2148 = vadd.f32 %v1877, %v2022
      %v2149 = vadd.f32 %v1878, %v2027
      %v2150 = vadd.f32 %v1879, %v2032
      %v2151 = vadd.f32 %v1880, %v2037
      %v2152 = vadd.f32 %v1881, %v2042
      %v2153 = vadd.f32 %v1882, %v2047
      %v2154 = vadd.f32 %v1883, %v2052
      %v2155 = vadd.f32 %v1884, %v2057
      %v2156 = vadd.f32 %v1885, %v2062
      %v2157 = vadd.f32 %v1886, %v2067
      %v2158 = vadd.f32 %v1887, %v2072
      %v2159 = vadd.f32 %v1888, %v2077
      %v2160 = vadd.f32 %v1889, %v2082
      %v2161 = vadd.f32 %v1890, %v2087
      %v2162 = vadd.f32 %v1891, %v2092
      %v2163 = vadd.f32 %v1892, %v2097
      %v2164 = vadd.f32 %v1893, %v2102
      %v2165 = vadd.f32 %v1894, %v2107
      %v2166 = vadd.f32 %v1895, %v2112
      %v2167 = vadd.f32 %v1896, %v2117
      %v2168 = vadd.f32 %v1897, %v2122
      %v2169 = vadd.f32 %v1898, %v2127
      %v2170 = vadd.f32 %v1899, %v2132
      %v2171 = vadd.f32 %v1900, %v2137
      %s2172 = scalar_lea.vmem %s1, 24
      %v2173 = vld [vmem:[%s2172] sm:$0xf]
      %v2175 = vsel %vm368, %v233, 0
      %v2178 = vsel %vm368, %v234, 0
      %v2181 = vsel %vm433, %v2173, 0
      %2183 = vmatprep.subr.mxu0 0.0
      %2184 = vmatpush1.msra.mxu0 0.0
      %2185 = vmatprep.subr.mxu0 0.0
      %2186 = vmatpush1.msra.mxu0 0.0
      %2187 = vmatprep.subr.mxu0 0.0
      %2188 = vmatpush1.msra.mxu0 0.0
      %2189 = vmatprep.subr.mxu0 0.0
      %2190 = vmatpush1.msra.mxu0 0.0
      %2191 = vmatprep.subr.mxu0 0.0
      %2192 = vmatpush1.msra.mxu0 0.0
      %2193 = vmatprep.subr.mxu0 0.0
      %2194 = vmatpush1.msra.mxu0 0.0
      %2195 = vmatprep.subr.mxu0 0.0
      %2196 = vmatpush1.msra.mxu0 0.0
      %2197 = vmatprep.subr.mxu0 0.0
      %2198 = vmatpush1.msra.mxu0 0.0
      %2199 = vmatprep.subr.mxu0 0.0
      %2200 = vmatpush1.msra.mxu0 0.0
      %2201 = vmatprep.subr.mxu0 0.0
      %2202 = vmatpush1.msra.mxu0 0.0
      %2203 = vmatprep.subr.mxu0 0.0
      %2204 = vmatpush1.msra.mxu0 0.0
      %2205 = vmatprep.subr.mxu0 0.0
      %2206 = vmatpush1.msra.mxu0 0.0
      %2207 = vmatprep.subr.mxu0 0.0
      %2208 = vmatpush1.msra.mxu0 0.0
      %2209 = vmatprep.subr.mxu0 0.0
      %2210 = vmatpush1.msra.mxu0 0.0
      %2211 = vmatprep.subr.mxu0 0.0
      %2212 = vmatpush1.msra.mxu0 0.0
      %2213 = vmatprep.subr.mxu0 0.0
      %2214 = vmatpush1.msra.mxu0 %v2181
      %2215 = vmatprep.subr.mxu0 0.0
      %2216 = vmatpush2.msra.mxu0 0.0
      %2217 = vmatprep.subr.mxu0 0.0
      %2218 = vmatpush2.msra.mxu0 0.0
      %2219 = vmatprep.subr.mxu0 0.0
      %2220 = vmatpush2.msra.mxu0 0.0
      %2221 = vmatprep.subr.mxu0 0.0
      %2222 = vmatpush2.msra.mxu0 0.0
      %2223 = vmatprep.subr.mxu0 0.0
      %2224 = vmatpush2.msra.mxu0 0.0
      %2225 = vmatprep.subr.mxu0 0.0
      %2226 = vmatpush2.msra.mxu0 0.0
      %2227 = vmatprep.subr.mxu0 0.0
      %2228 = vmatpush2.msra.mxu0 0.0
      %2229 = vmatprep.subr.mxu0 0.0
      %2230 = vmatpush2.msra.mxu0 0.0
      %2231 = vmatprep.subr.mxu0 0.0
      %2232 = vmatpush2.msra.mxu0 0.0
      %2233 = vmatprep.subr.mxu0 0.0
      %2234 = vmatpush2.msra.mxu0 0.0
      %2235 = vmatprep.subr.mxu0 0.0
      %2236 = vmatpush2.msra.mxu0 0.0
      %2237 = vmatprep.subr.mxu0 0.0
      %2238 = vmatpush2.msra.mxu0 0.0
      %2239 = vmatprep.subr.mxu0 0.0
      %2240 = vmatpush2.msra.mxu0 0.0
      %2241 = vmatprep.subr.mxu0 0.0
      %2242 = vmatpush2.msra.mxu0 0.0
      %2243 = vmatprep.subr.mxu0 0.0
      %2244 = vmatpush2.msra.mxu0 0.0
      %2245 = vmatprep.subr.mxu0 0.0
      %2246 = vmatpush2.msra.mxu0 0.0
      %2247 = vmatprep.mubr.f32.mxu0 0.0
      %2248 = vmatmul.mubr.f32.gmra.mxu0 %v670
      %v2249 = vpop.f32.mrf.mxu0
      %v2250 = vadd.f32 0.0, %v2249
      %v2251 = vpop.f32.mrf.mxu0
      %2252 = vmatprep.mubr.f32.mxu0 0.0
      %2253 = vmatmul.mubr.f32.gmra.mxu0 %v672
      %v2254 = vpop.f32.mrf.mxu0
      %v2255 = vadd.f32 0.0, %v2254
      %v2256 = vpop.f32.mrf.mxu0
      %2257 = vmatprep.mubr.f32.mxu0 0.0
      %2258 = vmatmul.mubr.f32.gmra.mxu0 %v674
      %v2259 = vpop.f32.mrf.mxu0
      %v2260 = vadd.f32 0.0, %v2259
      %v2261 = vpop.f32.mrf.mxu0
      %2262 = vmatprep.mubr.f32.mxu0 0.0
      %2263 = vmatmul.mubr.f32.gmra.mxu0 %v676
      %v2264 = vpop.f32.mrf.mxu0
      %v2265 = vadd.f32 0.0, %v2264
      %v2266 = vpop.f32.mrf.mxu0
      %2267 = vmatprep.mubr.f32.mxu0 0.0
      %2268 = vmatmul.mubr.f32.gmra.mxu0 %v678
      %v2269 = vpop.f32.mrf.mxu0
      %v2270 = vadd.f32 0.0, %v2269
      %v2271 = vpop.f32.mrf.mxu0
      %2272 = vmatprep.mubr.f32.mxu0 0.0
      %2273 = vmatmul.mubr.f32.gmra.mxu0 %v680
      %v2274 = vpop.f32.mrf.mxu0
      %v2275 = vadd.f32 0.0, %v2274
      %v2276 = vpop.f32.mrf.mxu0
      %2277 = vmatprep.mubr.f32.mxu0 0.0
      %2278 = vmatmul.mubr.f32.gmra.mxu0 %v682
      %v2279 = vpop.f32.mrf.mxu0
      %v2280 = vadd.f32 0.0, %v2279
      %v2281 = vpop.f32.mrf.mxu0
      %2282 = vmatprep.mubr.f32.mxu0 0.0
      %2283 = vmatmul.mubr.f32.gmra.mxu0 %v684
      %v2284 = vpop.f32.mrf.mxu0
      %v2285 = vadd.f32 0.0, %v2284
      %v2286 = vpop.f32.mrf.mxu0
      %2287 = vmatprep.mubr.f32.mxu0 0.0
      %2288 = vmatmul.mubr.f32.gmra.mxu0 %v686
      %v2289 = vpop.f32.mrf.mxu0
      %v2290 = vadd.f32 0.0, %v2289
      %v2291 = vpop.f32.mrf.mxu0
      %2292 = vmatprep.mubr.f32.mxu0 0.0
      %2293 = vmatmul.mubr.f32.gmra.mxu0 %v688
      %v2294 = vpop.f32.mrf.mxu0
      %v2295 = vadd.f32 0.0, %v2294
      %v2296 = vpop.f32.mrf.mxu0
      %2297 = vmatprep.mubr.f32.mxu0 0.0
      %2298 = vmatmul.mubr.f32.gmra.mxu0 %v690
      %v2299 = vpop.f32.mrf.mxu0
      %v2300 = vadd.f32 0.0, %v2299
      %v2301 = vpop.f32.mrf.mxu0
      %2302 = vmatprep.mubr.f32.mxu0 0.0
      %2303 = vmatmul.mubr.f32.gmra.mxu0 %v692
      %v2304 = vpop.f32.mrf.mxu0
      %v2305 = vadd.f32 0.0, %v2304
      %v2306 = vpop.f32.mrf.mxu0
      %2307 = vmatprep.mubr.f32.mxu0 0.0
      %2308 = vmatmul.mubr.f32.gmra.mxu0 %v694
      %v2309 = vpop.f32.mrf.mxu0
      %v2310 = vadd.f32 0.0, %v2309
      %v2311 = vpop.f32.mrf.mxu0
      %2312 = vmatprep.mubr.f32.mxu0 0.0
      %2313 = vmatmul.mubr.f32.gmra.mxu0 %v696
      %v2314 = vpop.f32.mrf.mxu0
      %v2315 = vadd.f32 0.0, %v2314
      %v2316 = vpop.f32.mrf.mxu0
      %2317 = vmatprep.mubr.f32.mxu0 0.0
      %2318 = vmatmul.mubr.f32.gmra.mxu0 %v698
      %v2319 = vpop.f32.mrf.mxu0
      %v2320 = vadd.f32 0.0, %v2319
      %v2321 = vpop.f32.mrf.mxu0
      %2322 = vmatprep.mubr.f32.mxu0 0.0
      %2323 = vmatmul.mubr.f32.gmra.mxu0 %v700
      %v2324 = vpop.f32.mrf.mxu0
      %v2325 = vadd.f32 0.0, %v2324
      %v2326 = vpop.f32.mrf.mxu0
      %2327 = vmatprep.mubr.f32.mxu0 0.0
      %2328 = vmatmul.mubr.f32.gmra.mxu0 %v702
      %v2329 = vpop.f32.mrf.mxu0
      %v2330 = vadd.f32 0.0, %v2329
      %v2331 = vpop.f32.mrf.mxu0
      %2332 = vmatprep.mubr.f32.mxu0 0.0
      %2333 = vmatmul.mubr.f32.gmra.mxu0 %v704
      %v2334 = vpop.f32.mrf.mxu0
      %v2335 = vadd.f32 0.0, %v2334
      %v2336 = vpop.f32.mrf.mxu0
      %2337 = vmatprep.mubr.f32.mxu0 0.0
      %2338 = vmatmul.mubr.f32.gmra.mxu0 %v706
      %v2339 = vpop.f32.mrf.mxu0
      %v2340 = vadd.f32 0.0, %v2339
      %v2341 = vpop.f32.mrf.mxu0
      %2342 = vmatprep.mubr.f32.mxu0 0.0
      %2343 = vmatmul.mubr.f32.gmra.mxu0 %v708
      %v2344 = vpop.f32.mrf.mxu0
      %v2345 = vadd.f32 0.0, %v2344
      %v2346 = vpop.f32.mrf.mxu0
      %2347 = vmatprep.mubr.f32.mxu0 0.0
      %2348 = vmatmul.mubr.f32.gmra.mxu0 %v710
      %v2349 = vpop.f32.mrf.mxu0
      %v2350 = vadd.f32 0.0, %v2349
      %v2351 = vpop.f32.mrf.mxu0
      %2352 = vmatprep.mubr.f32.mxu0 0.0
      %2353 = vmatmul.mubr.f32.gmra.mxu0 %v712
      %v2354 = vpop.f32.mrf.mxu0
      %v2355 = vadd.f32 0.0, %v2354
      %v2356 = vpop.f32.mrf.mxu0
      %2357 = vmatprep.mubr.f32.mxu0 0.0
      %2358 = vmatmul.mubr.f32.gmra.mxu0 %v714
      %v2359 = vpop.f32.mrf.mxu0
      %v2360 = vadd.f32 0.0, %v2359
      %v2361 = vpop.f32.mrf.mxu0
      %2362 = vmatprep.mubr.f32.mxu0 0.0
      %2363 = vmatmul.mubr.f32.gmra.mxu0 %v716
      %v2364 = vpop.f32.mrf.mxu0
      %v2365 = vadd.f32 0.0, %v2364
      %v2366 = vpop.f32.mrf.mxu0
      %2367 = vmatprep.mubr.f32.mxu0 0.0
      %2368 = vmatmul.mubr.f32.gmra.mxu0 %v718
      %v2369 = vpop.f32.mrf.mxu0
      %v2370 = vadd.f32 0.0, %v2369
      %v2371 = vpop.f32.mrf.mxu0
      %2372 = vmatprep.mubr.f32.mxu0 0.0
      %2373 = vmatmul.mubr.f32.gmra.mxu0 %v720
      %v2374 = vpop.f32.mrf.mxu0
      %v2375 = vadd.f32 0.0, %v2374
      %v2376 = vpop.f32.mrf.mxu0
      %2377 = vmatprep.mubr.f32.mxu0 0.0
      %2378 = vmatmul.mubr.f32.gmra.mxu0 %v722
      %v2379 = vpop.f32.mrf.mxu0
      %v2380 = vadd.f32 0.0, %v2379
      %v2381 = vpop.f32.mrf.mxu0
      %2382 = vmatprep.mubr.f32.mxu0 0.0
      %2383 = vmatmul.mubr.f32.gmra.mxu0 %v724
      %v2384 = vpop.f32.mrf.mxu0
      %v2385 = vadd.f32 0.0, %v2384
      %v2386 = vpop.f32.mrf.mxu0
      %2387 = vmatprep.mubr.f32.mxu0 0.0
      %2388 = vmatmul.mubr.f32.gmra.mxu0 %v1364
      %v2389 = vpop.f32.mrf.mxu0
      %v2390 = vadd.f32 0.0, %v2389
      %v2391 = vpop.f32.mrf.mxu0
      %2392 = vmatprep.mubr.f32.mxu0 0.0
      %2393 = vmatmul.mubr.f32.gmra.mxu0 %v1367
      %v2394 = vpop.f32.mrf.mxu0
      %v2395 = vadd.f32 0.0, %v2394
      %v2396 = vpop.f32.mrf.mxu0
      %2397 = vmatprep.mubr.f32.mxu0 0.0
      %2398 = vmatmul.mubr.f32.gmra.mxu0 %v2175
      %v2399 = vpop.f32.mrf.mxu0
      %v2400 = vadd.f32 0.0, %v2399
      %v2401 = vpop.f32.mrf.mxu0
      %2402 = vmatprep.mubr.f32.mxu0 0.0
      %2403 = vmatmul.mubr.f32.gmra.mxu0 %v2178
      %v2404 = vpop.f32.mrf.mxu0
      %v2405 = vadd.f32 0.0, %v2404
      %v2406 = vpop.f32.mrf.mxu0
      %2407 = vdwg.mxu0
      %v2408 = vadd.f32 %v2140, %v2250
      %v2409 = vadd.f32 %v2141, %v2255
      %v2410 = vadd.f32 %v2142, %v2260
      %v2411 = vadd.f32 %v2143, %v2265
      %v2412 = vadd.f32 %v2144, %v2270
      %v2413 = vadd.f32 %v2145, %v2275
      %v2414 = vadd.f32 %v2146, %v2280
      %v2415 = vadd.f32 %v2147, %v2285
      %v2416 = vadd.f32 %v2148, %v2290
      %v2417 = vadd.f32 %v2149, %v2295
      %v2418 = vadd.f32 %v2150, %v2300
      %v2419 = vadd.f32 %v2151, %v2305
      %v2420 = vadd.f32 %v2152, %v2310
      %v2421 = vadd.f32 %v2153, %v2315
      %v2422 = vadd.f32 %v2154, %v2320
      %v2423 = vadd.f32 %v2155, %v2325
      %v2424 = vadd.f32 %v2156, %v2330
      %v2425 = vadd.f32 %v2157, %v2335
      %v2426 = vadd.f32 %v2158, %v2340
      %v2427 = vadd.f32 %v2159, %v2345
      %v2428 = vadd.f32 %v2160, %v2350
      %v2429 = vadd.f32 %v2161, %v2355
      %v2430 = vadd.f32 %v2162, %v2360
      %v2431 = vadd.f32 %v2163, %v2365
      %v2432 = vadd.f32 %v2164, %v2370
      %v2433 = vadd.f32 %v2165, %v2375
      %v2434 = vadd.f32 %v2166, %v2380
      %v2435 = vadd.f32 %v2167, %v2385
      %v2436 = vadd.f32 %v2168, %v2390
      %v2437 = vadd.f32 %v2169, %v2395
      %v2438 = vadd.f32 %v2170, %v2400
      %v2439 = vadd.f32 %v2171, %v2405
      %v2441 = vrot.slane %v233, 1
      %v2442 = vrot.slane %v234, 1
      %v2443 = vsel %vm285, %v2441, %v2442
      %v2444 = vrot.slane %v235, 1
      %v2445 = vsel %vm285, %v2442, %v2444
      %s2446 = scalar_lea.vmem %s1, 28
      %v2447 = vld [vmem:[%s2446] sm:$0xf]
      %v2448 = vsel %vm368, %v2443, 0
      %v2450 = vsel %vm368, %v2445, 0
      %v2453 = vsel %vm433, %v2447, 0
      %2455 = vmatprep.subr.mxu0 0.0
      %2456 = vmatpush1.msra.mxu0 0.0
      %2457 = vmatprep.subr.mxu0 0.0
      %2458 = vmatpush1.msra.mxu0 0.0
      %2459 = vmatprep.subr.mxu0 0.0
      %2460 = vmatpush1.msra.mxu0 0.0
      %2461 = vmatprep.subr.mxu0 0.0
      %2462 = vmatpush1.msra.mxu0 0.0
      %2463 = vmatprep.subr.mxu0 0.0
      %2464 = vmatpush1.msra.mxu0 0.0
      %2465 = vmatprep.subr.mxu0 0.0
      %2466 = vmatpush1.msra.mxu0 0.0
      %2467 = vmatprep.subr.mxu0 0.0
      %2468 = vmatpush1.msra.mxu0 0.0
      %2469 = vmatprep.subr.mxu0 0.0
      %2470 = vmatpush1.msra.mxu0 0.0
      %2471 = vmatprep.subr.mxu0 0.0
      %2472 = vmatpush1.msra.mxu0 0.0
      %2473 = vmatprep.subr.mxu0 0.0
      %2474 = vmatpush1.msra.mxu0 0.0
      %2475 = vmatprep.subr.mxu0 0.0
      %2476 = vmatpush1.msra.mxu0 0.0
      %2477 = vmatprep.subr.mxu0 0.0
      %2478 = vmatpush1.msra.mxu0 0.0
      %2479 = vmatprep.subr.mxu0 0.0
      %2480 = vmatpush1.msra.mxu0 0.0
      %2481 = vmatprep.subr.mxu0 0.0
      %2482 = vmatpush1.msra.mxu0 0.0
      %2483 = vmatprep.subr.mxu0 0.0
      %2484 = vmatpush1.msra.mxu0 0.0
      %2485 = vmatprep.subr.mxu0 0.0
      %2486 = vmatpush1.msra.mxu0 %v2453
      %2487 = vmatprep.subr.mxu0 0.0
      %2488 = vmatpush2.msra.mxu0 0.0
      %2489 = vmatprep.subr.mxu0 0.0
      %2490 = vmatpush2.msra.mxu0 0.0
      %2491 = vmatprep.subr.mxu0 0.0
      %2492 = vmatpush2.msra.mxu0 0.0
      %2493 = vmatprep.subr.mxu0 0.0
      %2494 = vmatpush2.msra.mxu0 0.0
      %2495 = vmatprep.subr.mxu0 0.0
      %2496 = vmatpush2.msra.mxu0 0.0
      %2497 = vmatprep.subr.mxu0 0.0
      %2498 = vmatpush2.msra.mxu0 0.0
      %2499 = vmatprep.subr.mxu0 0.0
      %2500 = vmatpush2.msra.mxu0 0.0
      %2501 = vmatprep.subr.mxu0 0.0
      %2502 = vmatpush2.msra.mxu0 0.0
      %2503 = vmatprep.subr.mxu0 0.0
      %2504 = vmatpush2.msra.mxu0 0.0
      %2505 = vmatprep.subr.mxu0 0.0
      %2506 = vmatpush2.msra.mxu0 0.0
      %2507 = vmatprep.subr.mxu0 0.0
      %2508 = vmatpush2.msra.mxu0 0.0
      %2509 = vmatprep.subr.mxu0 0.0
      %2510 = vmatpush2.msra.mxu0 0.0
      %2511 = vmatprep.subr.mxu0 0.0
      %2512 = vmatpush2.msra.mxu0 0.0
      %2513 = vmatprep.subr.mxu0 0.0
      %2514 = vmatpush2.msra.mxu0 0.0
      %2515 = vmatprep.subr.mxu0 0.0
      %2516 = vmatpush2.msra.mxu0 0.0
      %2517 = vmatprep.subr.mxu0 0.0
      %2518 = vmatpush2.msra.mxu0 0.0
      %2519 = vmatprep.mubr.f32.mxu0 0.0
      %2520 = vmatmul.mubr.f32.gmra.mxu0 %v377
      %v2521 = vpop.f32.mrf.mxu0
      %v2522 = vadd.f32 0.0, %v2521
      %v2523 = vpop.f32.mrf.mxu0
      %2524 = vmatprep.mubr.f32.mxu0 0.0
      %2525 = vmatmul.mubr.f32.gmra.mxu0 %v379
      %v2526 = vpop.f32.mrf.mxu0
      %v2527 = vadd.f32 0.0, %v2526
      %v2528 = vpop.f32.mrf.mxu0
      %2529 = vmatprep.mubr.f32.mxu0 0.0
      %2530 = vmatmul.mubr.f32.gmra.mxu0 %v381
      %v2531 = vpop.f32.mrf.mxu0
      %v2532 = vadd.f32 0.0, %v2531
      %v2533 = vpop.f32.mrf.mxu0
      %2534 = vmatprep.mubr.f32.mxu0 0.0
      %2535 = vmatmul.mubr.f32.gmra.mxu0 %v383
      %v2536 = vpop.f32.mrf.mxu0
      %v2537 = vadd.f32 0.0, %v2536
      %v2538 = vpop.f32.mrf.mxu0
      %2539 = vmatprep.mubr.f32.mxu0 0.0
      %2540 = vmatmul.mubr.f32.gmra.mxu0 %v385
      %v2541 = vpop.f32.mrf.mxu0
      %v2542 = vadd.f32 0.0, %v2541
      %v2543 = vpop.f32.mrf.mxu0
      %2544 = vmatprep.mubr.f32.mxu0 0.0
      %2545 = vmatmul.mubr.f32.gmra.mxu0 %v387
      %v2546 = vpop.f32.mrf.mxu0
      %v2547 = vadd.f32 0.0, %v2546
      %v2548 = vpop.f32.mrf.mxu0
      %2549 = vmatprep.mubr.f32.mxu0 0.0
      %2550 = vmatmul.mubr.f32.gmra.mxu0 %v389
      %v2551 = vpop.f32.mrf.mxu0
      %v2552 = vadd.f32 0.0, %v2551
      %v2553 = vpop.f32.mrf.mxu0
      %2554 = vmatprep.mubr.f32.mxu0 0.0
      %2555 = vmatmul.mubr.f32.gmra.mxu0 %v391
      %v2556 = vpop.f32.mrf.mxu0
      %v2557 = vadd.f32 0.0, %v2556
      %v2558 = vpop.f32.mrf.mxu0
      %2559 = vmatprep.mubr.f32.mxu0 0.0
      %2560 = vmatmul.mubr.f32.gmra.mxu0 %v393
      %v2561 = vpop.f32.mrf.mxu0
      %v2562 = vadd.f32 0.0, %v2561
      %v2563 = vpop.f32.mrf.mxu0
      %2564 = vmatprep.mubr.f32.mxu0 0.0
      %2565 = vmatmul.mubr.f32.gmra.mxu0 %v395
      %v2566 = vpop.f32.mrf.mxu0
      %v2567 = vadd.f32 0.0, %v2566
      %v2568 = vpop.f32.mrf.mxu0
      %2569 = vmatprep.mubr.f32.mxu0 0.0
      %2570 = vmatmul.mubr.f32.gmra.mxu0 %v397
      %v2571 = vpop.f32.mrf.mxu0
      %v2572 = vadd.f32 0.0, %v2571
      %v2573 = vpop.f32.mrf.mxu0
      %2574 = vmatprep.mubr.f32.mxu0 0.0
      %2575 = vmatmul.mubr.f32.gmra.mxu0 %v399
      %v2576 = vpop.f32.mrf.mxu0
      %v2577 = vadd.f32 0.0, %v2576
      %v2578 = vpop.f32.mrf.mxu0
      %2579 = vmatprep.mubr.f32.mxu0 0.0
      %2580 = vmatmul.mubr.f32.gmra.mxu0 %v401
      %v2581 = vpop.f32.mrf.mxu0
      %v2582 = vadd.f32 0.0, %v2581
      %v2583 = vpop.f32.mrf.mxu0
      %2584 = vmatprep.mubr.f32.mxu0 0.0
      %2585 = vmatmul.mubr.f32.gmra.mxu0 %v403
      %v2586 = vpop.f32.mrf.mxu0
      %v2587 = vadd.f32 0.0, %v2586
      %v2588 = vpop.f32.mrf.mxu0
      %2589 = vmatprep.mubr.f32.mxu0 0.0
      %2590 = vmatmul.mubr.f32.gmra.mxu0 %v405
      %v2591 = vpop.f32.mrf.mxu0
      %v2592 = vadd.f32 0.0, %v2591
      %v2593 = vpop.f32.mrf.mxu0
      %2594 = vmatprep.mubr.f32.mxu0 0.0
      %2595 = vmatmul.mubr.f32.gmra.mxu0 %v407
      %v2596 = vpop.f32.mrf.mxu0
      %v2597 = vadd.f32 0.0, %v2596
      %v2598 = vpop.f32.mrf.mxu0
      %2599 = vmatprep.mubr.f32.mxu0 0.0
      %2600 = vmatmul.mubr.f32.gmra.mxu0 %v409
      %v2601 = vpop.f32.mrf.mxu0
      %v2602 = vadd.f32 0.0, %v2601
      %v2603 = vpop.f32.mrf.mxu0
      %2604 = vmatprep.mubr.f32.mxu0 0.0
      %2605 = vmatmul.mubr.f32.gmra.mxu0 %v411
      %v2606 = vpop.f32.mrf.mxu0
      %v2607 = vadd.f32 0.0, %v2606
      %v2608 = vpop.f32.mrf.mxu0
      %2609 = vmatprep.mubr.f32.mxu0 0.0
      %2610 = vmatmul.mubr.f32.gmra.mxu0 %v413
      %v2611 = vpop.f32.mrf.mxu0
      %v2612 = vadd.f32 0.0, %v2611
      %v2613 = vpop.f32.mrf.mxu0
      %2614 = vmatprep.mubr.f32.mxu0 0.0
      %2615 = vmatmul.mubr.f32.gmra.mxu0 %v415
      %v2616 = vpop.f32.mrf.mxu0
      %v2617 = vadd.f32 0.0, %v2616
      %v2618 = vpop.f32.mrf.mxu0
      %2619 = vmatprep.mubr.f32.mxu0 0.0
      %2620 = vmatmul.mubr.f32.gmra.mxu0 %v417
      %v2621 = vpop.f32.mrf.mxu0
      %v2622 = vadd.f32 0.0, %v2621
      %v2623 = vpop.f32.mrf.mxu0
      %2624 = vmatprep.mubr.f32.mxu0 0.0
      %2625 = vmatmul.mubr.f32.gmra.mxu0 %v419
      %v2626 = vpop.f32.mrf.mxu0
      %v2627 = vadd.f32 0.0, %v2626
      %v2628 = vpop.f32.mrf.mxu0
      %2629 = vmatprep.mubr.f32.mxu0 0.0
      %2630 = vmatmul.mubr.f32.gmra.mxu0 %v421
      %v2631 = vpop.f32.mrf.mxu0
      %v2632 = vadd.f32 0.0, %v2631
      %v2633 = vpop.f32.mrf.mxu0
      %2634 = vmatprep.mubr.f32.mxu0 0.0
      %2635 = vmatmul.mubr.f32.gmra.mxu0 %v423
      %v2636 = vpop.f32.mrf.mxu0
      %v2637 = vadd.f32 0.0, %v2636
      %v2638 = vpop.f32.mrf.mxu0
      %2639 = vmatprep.mubr.f32.mxu0 0.0
      %2640 = vmatmul.mubr.f32.gmra.mxu0 %v425
      %v2641 = vpop.f32.mrf.mxu0
      %v2642 = vadd.f32 0.0, %v2641
      %v2643 = vpop.f32.mrf.mxu0
      %2644 = vmatprep.mubr.f32.mxu0 0.0
      %2645 = vmatmul.mubr.f32.gmra.mxu0 %v427
      %v2646 = vpop.f32.mrf.mxu0
      %v2647 = vadd.f32 0.0, %v2646
      %v2648 = vpop.f32.mrf.mxu0
      %2649 = vmatprep.mubr.f32.mxu0 0.0
      %2650 = vmatmul.mubr.f32.gmra.mxu0 %v429
      %v2651 = vpop.f32.mrf.mxu0
      %v2652 = vadd.f32 0.0, %v2651
      %v2653 = vpop.f32.mrf.mxu0
      %2654 = vmatprep.mubr.f32.mxu0 0.0
      %2655 = vmatmul.mubr.f32.gmra.mxu0 %v431
      %v2656 = vpop.f32.mrf.mxu0
      %v2657 = vadd.f32 0.0, %v2656
      %v2658 = vpop.f32.mrf.mxu0
      %2659 = vmatprep.mubr.f32.mxu0 0.0
      %2660 = vmatmul.mubr.f32.gmra.mxu0 %v1637
      %v2661 = vpop.f32.mrf.mxu0
      %v2662 = vadd.f32 0.0, %v2661
      %v2663 = vpop.f32.mrf.mxu0
      %2664 = vmatprep.mubr.f32.mxu0 0.0
      %2665 = vmatmul.mubr.f32.gmra.mxu0 %v1639
      %v2666 = vpop.f32.mrf.mxu0
      %v2667 = vadd.f32 0.0, %v2666
      %v2668 = vpop.f32.mrf.mxu0
      %2669 = vmatprep.mubr.f32.mxu0 0.0
      %2670 = vmatmul.mubr.f32.gmra.mxu0 %v2448
      %v2671 = vpop.f32.mrf.mxu0
      %v2672 = vadd.f32 0.0, %v2671
      %v2673 = vpop.f32.mrf.mxu0
      %2674 = vmatprep.mubr.f32.mxu0 0.0
      %2675 = vmatmul.mubr.f32.gmra.mxu0 %v2450
      %v2676 = vpop.f32.mrf.mxu0
      %v2677 = vadd.f32 0.0, %v2676
      %v2678 = vpop.f32.mrf.mxu0
      %2679 = vdwg.mxu0
      %v2680 = vadd.f32 %v2408, %v2522
      %v2681 = vadd.f32 %v2409, %v2527
      %v2682 = vadd.f32 %v2410, %v2532
      %v2683 = vadd.f32 %v2411, %v2537
      %v2684 = vadd.f32 %v2412, %v2542
      %v2685 = vadd.f32 %v2413, %v2547
      %v2686 = vadd.f32 %v2414, %v2552
      %v2687 = vadd.f32 %v2415, %v2557
      %v2688 = vadd.f32 %v2416, %v2562
      %v2689 = vadd.f32 %v2417, %v2567
      %v2690 = vadd.f32 %v2418, %v2572
      %v2691 = vadd.f32 %v2419, %v2577
      %v2692 = vadd.f32 %v2420, %v2582
      %v2693 = vadd.f32 %v2421, %v2587
      %v2694 = vadd.f32 %v2422, %v2592
      %v2695 = vadd.f32 %v2423, %v2597
      %v2696 = vadd.f32 %v2424, %v2602
      %v2697 = vadd.f32 %v2425, %v2607
      %v2698 = vadd.f32 %v2426, %v2612
      %v2699 = vadd.f32 %v2427, %v2617
      %v2700 = vadd.f32 %v2428, %v2622
      %v2701 = vadd.f32 %v2429, %v2627
      %v2702 = vadd.f32 %v2430, %v2632
      %v2703 = vadd.f32 %v2431, %v2637
      %v2704 = vadd.f32 %v2432, %v2642
      %v2705 = vadd.f32 %v2433, %v2647
      %v2706 = vadd.f32 %v2434, %v2652
      %v2707 = vadd.f32 %v2435, %v2657
      %v2708 = vadd.f32 %v2436, %v2662
      %v2709 = vadd.f32 %v2437, %v2667
      %v2710 = vadd.f32 %v2438, %v2672
      %v2711 = vadd.f32 %v2439, %v2677
      %v2712 = vrot.slane %v233, 2
      %v2713 = vrot.slane %v234, 2
      %v2714 = vsel %vm954, %v2712, %v2713
      %v2715 = vrot.slane %v235, 2
      %v2716 = vsel %vm954, %v2713, %v2715
      %s2717 = scalar_lea.vmem %s1, 32
      %v2718 = vld [vmem:[%s2717] sm:$0xf]
      %v2719 = vsel %vm368, %v2714, 0
      %v2721 = vsel %vm368, %v2716, 0
      %v2724 = vsel %vm433, %v2718, 0
      %2726 = vmatprep.subr.mxu0 0.0
      %2727 = vmatpush1.msra.mxu0 0.0
      %2728 = vmatprep.subr.mxu0 0.0
      %2729 = vmatpush1.msra.mxu0 0.0
      %2730 = vmatprep.subr.mxu0 0.0
      %2731 = vmatpush1.msra.mxu0 0.0
      %2732 = vmatprep.subr.mxu0 0.0
      %2733 = vmatpush1.msra.mxu0 0.0
      %2734 = vmatprep.subr.mxu0 0.0
      %2735 = vmatpush1.msra.mxu0 0.0
      %2736 = vmatprep.subr.mxu0 0.0
      %2737 = vmatpush1.msra.mxu0 0.0
      %2738 = vmatprep.subr.mxu0 0.0
      %2739 = vmatpush1.msra.mxu0 0.0
      %2740 = vmatprep.subr.mxu0 0.0
      %2741 = vmatpush1.msra.mxu0 0.0
      %2742 = vmatprep.subr.mxu0 0.0
      %2743 = vmatpush1.msra.mxu0 0.0
      %2744 = vmatprep.subr.mxu0 0.0
      %2745 = vmatpush1.msra.mxu0 0.0
      %2746 = vmatprep.subr.mxu0 0.0
      %2747 = vmatpush1.msra.mxu0 0.0
      %2748 = vmatprep.subr.mxu0 0.0
      %2749 = vmatpush1.msra.mxu0 0.0
      %2750 = vmatprep.subr.mxu0 0.0
      %2751 = vmatpush1.msra.mxu0 0.0
      %2752 = vmatprep.subr.mxu0 0.0
      %2753 = vmatpush1.msra.mxu0 0.0
      %2754 = vmatprep.subr.mxu0 0.0
      %2755 = vmatpush1.msra.mxu0 0.0
      %2756 = vmatprep.subr.mxu0 0.0
      %2757 = vmatpush1.msra.mxu0 %v2724
      %2758 = vmatprep.subr.mxu0 0.0
      %2759 = vmatpush2.msra.mxu0 0.0
      %2760 = vmatprep.subr.mxu0 0.0
      %2761 = vmatpush2.msra.mxu0 0.0
      %2762 = vmatprep.subr.mxu0 0.0
      %2763 = vmatpush2.msra.mxu0 0.0
      %2764 = vmatprep.subr.mxu0 0.0
      %2765 = vmatpush2.msra.mxu0 0.0
      %2766 = vmatprep.subr.mxu0 0.0
      %2767 = vmatpush2.msra.mxu0 0.0
      %2768 = vmatprep.subr.mxu0 0.0
      %2769 = vmatpush2.msra.mxu0 0.0
      %2770 = vmatprep.subr.mxu0 0.0
      %2771 = vmatpush2.msra.mxu0 0.0
      %2772 = vmatprep.subr.mxu0 0.0
      %2773 = vmatpush2.msra.mxu0 0.0
      %2774 = vmatprep.subr.mxu0 0.0
      %2775 = vmatpush2.msra.mxu0 0.0
      %2776 = vmatprep.subr.mxu0 0.0
      %2777 = vmatpush2.msra.mxu0 0.0
      %2778 = vmatprep.subr.mxu0 0.0
      %2779 = vmatpush2.msra.mxu0 0.0
      %2780 = vmatprep.subr.mxu0 0.0
      %2781 = vmatpush2.msra.mxu0 0.0
      %2782 = vmatprep.subr.mxu0 0.0
      %2783 = vmatpush2.msra.mxu0 0.0
      %2784 = vmatprep.subr.mxu0 0.0
      %2785 = vmatpush2.msra.mxu0 0.0
      %2786 = vmatprep.subr.mxu0 0.0
      %2787 = vmatpush2.msra.mxu0 0.0
      %2788 = vmatprep.subr.mxu0 0.0
      %2789 = vmatpush2.msra.mxu0 0.0
      %2790 = vmatprep.mubr.f32.mxu0 0.0
      %2791 = vmatmul.mubr.f32.gmra.mxu0 %v1045
      %v2792 = vpop.f32.mrf.mxu0
      %v2793 = vadd.f32 0.0, %v2792
      %v2794 = vpop.f32.mrf.mxu0
      %2795 = vmatprep.mubr.f32.mxu0 0.0
      %2796 = vmatmul.mubr.f32.gmra.mxu0 %v1047
      %v2797 = vpop.f32.mrf.mxu0
      %v2798 = vadd.f32 0.0, %v2797
      %v2799 = vpop.f32.mrf.mxu0
      %2800 = vmatprep.mubr.f32.mxu0 0.0
      %2801 = vmatmul.mubr.f32.gmra.mxu0 %v1049
      %v2802 = vpop.f32.mrf.mxu0
      %v2803 = vadd.f32 0.0, %v2802
      %v2804 = vpop.f32.mrf.mxu0
      %2805 = vmatprep.mubr.f32.mxu0 0.0
      %2806 = vmatmul.mubr.f32.gmra.mxu0 %v1051
      %v2807 = vpop.f32.mrf.mxu0
      %v2808 = vadd.f32 0.0, %v2807
      %v2809 = vpop.f32.mrf.mxu0
      %2810 = vmatprep.mubr.f32.mxu0 0.0
      %2811 = vmatmul.mubr.f32.gmra.mxu0 %v1053
      %v2812 = vpop.f32.mrf.mxu0
      %v2813 = vadd.f32 0.0, %v2812
      %v2814 = vpop.f32.mrf.mxu0
      %2815 = vmatprep.mubr.f32.mxu0 0.0
      %2816 = vmatmul.mubr.f32.gmra.mxu0 %v1055
      %v2817 = vpop.f32.mrf.mxu0
      %v2818 = vadd.f32 0.0, %v2817
      %v2819 = vpop.f32.mrf.mxu0
      %2820 = vmatprep.mubr.f32.mxu0 0.0
      %2821 = vmatmul.mubr.f32.gmra.mxu0 %v1057
      %v2822 = vpop.f32.mrf.mxu0
      %v2823 = vadd.f32 0.0, %v2822
      %v2824 = vpop.f32.mrf.mxu0
      %2825 = vmatprep.mubr.f32.mxu0 0.0
      %2826 = vmatmul.mubr.f32.gmra.mxu0 %v1059
      %v2827 = vpop.f32.mrf.mxu0
      %v2828 = vadd.f32 0.0, %v2827
      %v2829 = vpop.f32.mrf.mxu0
      %2830 = vmatprep.mubr.f32.mxu0 0.0
      %2831 = vmatmul.mubr.f32.gmra.mxu0 %v1061
      %v2832 = vpop.f32.mrf.mxu0
      %v2833 = vadd.f32 0.0, %v2832
      %v2834 = vpop.f32.mrf.mxu0
      %2835 = vmatprep.mubr.f32.mxu0 0.0
      %2836 = vmatmul.mubr.f32.gmra.mxu0 %v1063
      %v2837 = vpop.f32.mrf.mxu0
      %v2838 = vadd.f32 0.0, %v2837
      %v2839 = vpop.f32.mrf.mxu0
      %2840 = vmatprep.mubr.f32.mxu0 0.0
      %2841 = vmatmul.mubr.f32.gmra.mxu0 %v1065
      %v2842 = vpop.f32.mrf.mxu0
      %v2843 = vadd.f32 0.0, %v2842
      %v2844 = vpop.f32.mrf.mxu0
      %2845 = vmatprep.mubr.f32.mxu0 0.0
      %2846 = vmatmul.mubr.f32.gmra.mxu0 %v1067
      %v2847 = vpop.f32.mrf.mxu0
      %v2848 = vadd.f32 0.0, %v2847
      %v2849 = vpop.f32.mrf.mxu0
      %2850 = vmatprep.mubr.f32.mxu0 0.0
      %2851 = vmatmul.mubr.f32.gmra.mxu0 %v1069
      %v2852 = vpop.f32.mrf.mxu0
      %v2853 = vadd.f32 0.0, %v2852
      %v2854 = vpop.f32.mrf.mxu0
      %2855 = vmatprep.mubr.f32.mxu0 0.0
      %2856 = vmatmul.mubr.f32.gmra.mxu0 %v1071
      %v2857 = vpop.f32.mrf.mxu0
      %v2858 = vadd.f32 0.0, %v2857
      %v2859 = vpop.f32.mrf.mxu0
      %2860 = vmatprep.mubr.f32.mxu0 0.0
      %2861 = vmatmul.mubr.f32.gmra.mxu0 %v1073
      %v2862 = vpop.f32.mrf.mxu0
      %v2863 = vadd.f32 0.0, %v2862
      %v2864 = vpop.f32.mrf.mxu0
      %2865 = vmatprep.mubr.f32.mxu0 0.0
      %2866 = vmatmul.mubr.f32.gmra.mxu0 %v1075
      %v2867 = vpop.f32.mrf.mxu0
      %v2868 = vadd.f32 0.0, %v2867
      %v2869 = vpop.f32.mrf.mxu0
      %2870 = vmatprep.mubr.f32.mxu0 0.0
      %2871 = vmatmul.mubr.f32.gmra.mxu0 %v1077
      %v2872 = vpop.f32.mrf.mxu0
      %v2873 = vadd.f32 0.0, %v2872
      %v2874 = vpop.f32.mrf.mxu0
      %2875 = vmatprep.mubr.f32.mxu0 0.0
      %2876 = vmatmul.mubr.f32.gmra.mxu0 %v1079
      %v2877 = vpop.f32.mrf.mxu0
      %v2878 = vadd.f32 0.0, %v2877
      %v2879 = vpop.f32.mrf.mxu0
      %2880 = vmatprep.mubr.f32.mxu0 0.0
      %2881 = vmatmul.mubr.f32.gmra.mxu0 %v1081
      %v2882 = vpop.f32.mrf.mxu0
      %v2883 = vadd.f32 0.0, %v2882
      %v2884 = vpop.f32.mrf.mxu0
      %2885 = vmatprep.mubr.f32.mxu0 0.0
      %2886 = vmatmul.mubr.f32.gmra.mxu0 %v1083
      %v2887 = vpop.f32.mrf.mxu0
      %v2888 = vadd.f32 0.0, %v2887
      %v2889 = vpop.f32.mrf.mxu0
      %2890 = vmatprep.mubr.f32.mxu0 0.0
      %2891 = vmatmul.mubr.f32.gmra.mxu0 %v1085
      %v2892 = vpop.f32.mrf.mxu0
      %v2893 = vadd.f32 0.0, %v2892
      %v2894 = vpop.f32.mrf.mxu0
      %2895 = vmatprep.mubr.f32.mxu0 0.0
      %2896 = vmatmul.mubr.f32.gmra.mxu0 %v1087
      %v2897 = vpop.f32.mrf.mxu0
      %v2898 = vadd.f32 0.0, %v2897
      %v2899 = vpop.f32.mrf.mxu0
      %2900 = vmatprep.mubr.f32.mxu0 0.0
      %2901 = vmatmul.mubr.f32.gmra.mxu0 %v1089
      %v2902 = vpop.f32.mrf.mxu0
      %v2903 = vadd.f32 0.0, %v2902
      %v2904 = vpop.f32.mrf.mxu0
      %2905 = vmatprep.mubr.f32.mxu0 0.0
      %2906 = vmatmul.mubr.f32.gmra.mxu0 %v1091
      %v2907 = vpop.f32.mrf.mxu0
      %v2908 = vadd.f32 0.0, %v2907
      %v2909 = vpop.f32.mrf.mxu0
      %2910 = vmatprep.mubr.f32.mxu0 0.0
      %2911 = vmatmul.mubr.f32.gmra.mxu0 %v1093
      %v2912 = vpop.f32.mrf.mxu0
      %v2913 = vadd.f32 0.0, %v2912
      %v2914 = vpop.f32.mrf.mxu0
      %2915 = vmatprep.mubr.f32.mxu0 0.0
      %2916 = vmatmul.mubr.f32.gmra.mxu0 %v1095
      %v2917 = vpop.f32.mrf.mxu0
      %v2918 = vadd.f32 0.0, %v2917
      %v2919 = vpop.f32.mrf.mxu0
      %2920 = vmatprep.mubr.f32.mxu0 0.0
      %2921 = vmatmul.mubr.f32.gmra.mxu0 %v1097
      %v2922 = vpop.f32.mrf.mxu0
      %v2923 = vadd.f32 0.0, %v2922
      %v2924 = vpop.f32.mrf.mxu0
      %2925 = vmatprep.mubr.f32.mxu0 0.0
      %2926 = vmatmul.mubr.f32.gmra.mxu0 %v1099
      %v2927 = vpop.f32.mrf.mxu0
      %v2928 = vadd.f32 0.0, %v2927
      %v2929 = vpop.f32.mrf.mxu0
      %2930 = vmatprep.mubr.f32.mxu0 0.0
      %2931 = vmatmul.mubr.f32.gmra.mxu0 %v1908
      %v2932 = vpop.f32.mrf.mxu0
      %v2933 = vadd.f32 0.0, %v2932
      %v2934 = vpop.f32.mrf.mxu0
      %2935 = vmatprep.mubr.f32.mxu0 0.0
      %2936 = vmatmul.mubr.f32.gmra.mxu0 %v1910
      %v2937 = vpop.f32.mrf.mxu0
      %v2938 = vadd.f32 0.0, %v2937
      %v2939 = vpop.f32.mrf.mxu0
      %2940 = vmatprep.mubr.f32.mxu0 0.0
      %2941 = vmatmul.mubr.f32.gmra.mxu0 %v2719
      %v2942 = vpop.f32.mrf.mxu0
      %v2943 = vadd.f32 0.0, %v2942
      %v2944 = vpop.f32.mrf.mxu0
      %2945 = vmatprep.mubr.f32.mxu0 0.0
      %2946 = vmatmul.mubr.f32.gmra.mxu0 %v2721
      %v2947 = vpop.f32.mrf.mxu0
      %v2948 = vadd.f32 0.0, %v2947
      %v2949 = vpop.f32.mrf.mxu0
      %2950 = vdwg.mxu0
      %v2951 = vadd.f32 %v2680, %v2793
      %v2952 = vadd.f32 %v2681, %v2798
      %v2953 = vadd.f32 %v2682, %v2803
      %v2954 = vadd.f32 %v2683, %v2808
      %v2955 = vadd.f32 %v2684, %v2813
      %v2956 = vadd.f32 %v2685, %v2818
      %v2957 = vadd.f32 %v2686, %v2823
      %v2958 = vadd.f32 %v2687, %v2828
      %v2959 = vadd.f32 %v2688, %v2833
      %v2960 = vadd.f32 %v2689, %v2838
      %v2961 = vadd.f32 %v2690, %v2843
      %v2962 = vadd.f32 %v2691, %v2848
      %v2963 = vadd.f32 %v2692, %v2853
      %v2964 = vadd.f32 %v2693, %v2858
      %v2965 = vadd.f32 %v2694, %v2863
      %v2966 = vadd.f32 %v2695, %v2868
      %v2967 = vadd.f32 %v2696, %v2873
      %v2968 = vadd.f32 %v2697, %v2878
      %v2969 = vadd.f32 %v2698, %v2883
      %v2970 = vadd.f32 %v2699, %v2888
      %v2971 = vadd.f32 %v2700, %v2893
      %v2972 = vadd.f32 %v2701, %v2898
      %v2973 = vadd.f32 %v2702, %v2903
      %v2974 = vadd.f32 %v2703, %v2908
      %v2975 = vadd.f32 %v2704, %v2913
      %v2976 = vadd.f32 %v2705, %v2918
      %v2977 = vadd.f32 %v2706, %v2923
      %v2978 = vadd.f32 %v2707, %v2928
      %v2979 = vadd.f32 %v2708, %v2933
      %v2980 = vadd.f32 %v2709, %v2938
      %v2981 = vadd.f32 %v2710, %v2943
      %v2982 = vadd.f32 %v2711, %v2948
      %2983 = vst [vmem:[%s177] sm:$0xff] %v2951
      %2984 = vst [vmem:[%s177 + $0x8] sm:$0xff] %v2952
      %2985 = vst [vmem:[%s177 + $0x10] sm:$0xff] %v2953
      %2986 = vst [vmem:[%s177 + $0x18] sm:$0xff] %v2954
      %2987 = vst [vmem:[%s177 + $0x20] sm:$0xff] %v2955
      %2988 = vst [vmem:[%s177 + $0x28] sm:$0xff] %v2956
      %2989 = vst [vmem:[%s177 + $0x30] sm:$0xff] %v2957
      %2990 = vst [vmem:[%s177 + $0x38] sm:$0xff] %v2958
      %2991 = vst [vmem:[%s177 + $0x40] sm:$0xff] %v2959
      %2992 = vst [vmem:[%s177 + $0x48] sm:$0xff] %v2960
      %2993 = vst [vmem:[%s177 + $0x50] sm:$0xff] %v2961
      %2994 = vst [vmem:[%s177 + $0x58] sm:$0xff] %v2962
      %2995 = vst [vmem:[%s177 + $0x60] sm:$0xff] %v2963
      %2996 = vst [vmem:[%s177 + $0x68] sm:$0xff] %v2964
      %2997 = vst [vmem:[%s177 + $0x70] sm:$0xff] %v2965
      %2998 = vst [vmem:[%s177 + $0x78] sm:$0xff] %v2966
      %2999 = vst [vmem:[%s177 + $0x80] sm:$0xff] %v2967
      %3000 = vst [vmem:[%s177 + $0x88] sm:$0xff] %v2968
      %3001 = vst [vmem:[%s177 + $0x90] sm:$0xff] %v2969
      %3002 = vst [vmem:[%s177 + $0x98] sm:$0xff] %v2970
      %3003 = vst [vmem:[%s177 + $0xa0] sm:$0xff] %v2971
      %3004 = vst [vmem:[%s177 + $0xa8] sm:$0xff] %v2972
      %3005 = vst [vmem:[%s177 + $0xb0] sm:$0xff] %v2973
      %3006 = vst [vmem:[%s177 + $0xb8] sm:$0xff] %v2974
      %3007 = vst [vmem:[%s177 + $0xc0] sm:$0xff] %v2975
      %3008 = vst [vmem:[%s177 + $0xc8] sm:$0xff] %v2976
      %3009 = vst [vmem:[%s177 + $0xd0] sm:$0xff] %v2977
      %3010 = vst [vmem:[%s177 + $0xd8] sm:$0xff] %v2978
      %3011 = vst [vmem:[%s177 + $0xe0] sm:$0xff] %v2979
      %3012 = vst [vmem:[%s177 + $0xe8] sm:$0xff] %v2980
      %3013 = vst [vmem:[%s177 + $0xf0] sm:$0xff] %v2981
      %3014 = vst [vmem:[%s177 + $0xf8] sm:$0xff] %v2982
      %v3015 = vadd.f32 %v2951, %v2952
      %v3016 = vadd.f32 %v3015, %v2953
      %v3017 = vadd.f32 %v3016, %v2954
      %v3018 = vadd.f32 %v3017, %v2955
      %v3019 = vadd.f32 %v3018, %v2956
      %v3020 = vadd.f32 %v3019, %v2957
      %v3021 = vadd.f32 %v3020, %v2958
      %v3022 = vadd.f32 %v3021, %v2959
      %v3023 = vadd.f32 %v3022, %v2960
      %v3024 = vadd.f32 %v3023, %v2961
      %v3025 = vadd.f32 %v3024, %v2962
      %v3026 = vadd.f32 %v3025, %v2963
      %v3027 = vadd.f32 %v3026, %v2964
      %v3028 = vadd.f32 %v3027, %v2965
      %v3029 = vadd.f32 %v3028, %v2966
      %v3030 = vadd.f32 %v3029, %v2967
      %v3031 = vadd.f32 %v3030, %v2968
      %v3032 = vadd.f32 %v3031, %v2969
      %v3033 = vadd.f32 %v3032, %v2970
      %v3034 = vadd.f32 %v3033, %v2971
      %v3035 = vadd.f32 %v3034, %v2972
      %v3036 = vadd.f32 %v3035, %v2973
      %v3037 = vadd.f32 %v3036, %v2974
      %v3038 = vadd.f32 %v3037, %v2975
      %v3039 = vadd.f32 %v3038, %v2976
      %v3040 = vadd.f32 %v3039, %v2977
      %v3041 = vadd.f32 %v3040, %v2978
      %v3042 = vadd.f32 %v3041, %v2979
      %v3043 = vadd.f32 %v3042, %v2980
      %v3044 = vadd.f32 %v3043, %v2981
      %v3045 = vadd.f32 %v3044, %v2982
      %v3046 = vrot.slane %v3045, 4
      %v3047 = vadd.f32 %v3045, %v3046
      %v3048 = vrot.slane %v3047, 2
      %v3049 = vadd.f32 %v3047, %v3048
      %v3050 = vrot.slane %v3049, 1
      %v3051 = vadd.f32 %v3049, %v3050
      %v3052 = vmul.f32 %v2951, %v2951
      %v3053 = vmul.f32 %v2952, %v2952
      %v3054 = vmul.f32 %v2953, %v2953
      %v3055 = vmul.f32 %v2954, %v2954
      %v3056 = vmul.f32 %v2955, %v2955
      %v3057 = vmul.f32 %v2956, %v2956
      %v3058 = vmul.f32 %v2957, %v2957
      %v3059 = vmul.f32 %v2958, %v2958
      %v3060 = vmul.f32 %v2959, %v2959
      %v3061 = vmul.f32 %v2960, %v2960
      %v3062 = vmul.f32 %v2961, %v2961
      %v3063 = vmul.f32 %v2962, %v2962
      %v3064 = vmul.f32 %v2963, %v2963
      %v3065 = vmul.f32 %v2964, %v2964
      %v3066 = vmul.f32 %v2965, %v2965
      %v3067 = vmul.f32 %v2966, %v2966
      %v3068 = vmul.f32 %v2967, %v2967
      %v3069 = vmul.f32 %v2968, %v2968
      %v3070 = vmul.f32 %v2969, %v2969
      %v3071 = vmul.f32 %v2970, %v2970
      %v3072 = vmul.f32 %v2971, %v2971
      %v3073 = vmul.f32 %v2972, %v2972
      %v3074 = vmul.f32 %v2973, %v2973
      %v3075 = vmul.f32 %v2974, %v2974
      %v3076 = vmul.f32 %v2975, %v2975
      %v3077 = vmul.f32 %v2976, %v2976
      %v3078 = vmul.f32 %v2977, %v2977
      %v3079 = vmul.f32 %v2978, %v2978
      %v3080 = vmul.f32 %v2979, %v2979
      %v3081 = vmul.f32 %v2980, %v2980
      %v3082 = vmul.f32 %v2981, %v2981
      %v3083 = vmul.f32 %v2982, %v2982
      %v3084 = vadd.f32 %v3052, %v3053
      %v3085 = vadd.f32 %v3084, %v3054
      %v3086 = vadd.f32 %v3085, %v3055
      %v3087 = vadd.f32 %v3086, %v3056
      %v3088 = vadd.f32 %v3087, %v3057
      %v3089 = vadd.f32 %v3088, %v3058
      %v3090 = vadd.f32 %v3089, %v3059
      %v3091 = vadd.f32 %v3090, %v3060
      %v3092 = vadd.f32 %v3091, %v3061
      %v3093 = vadd.f32 %v3092, %v3062
      %v3094 = vadd.f32 %v3093, %v3063
      %v3095 = vadd.f32 %v3094, %v3064
      %v3096 = vadd.f32 %v3095, %v3065
      %v3097 = vadd.f32 %v3096, %v3066
      %v3098 = vadd.f32 %v3097, %v3067
      %v3099 = vadd.f32 %v3098, %v3068
      %v3100 = vadd.f32 %v3099, %v3069
      %v3101 = vadd.f32 %v3100, %v3070
      %v3102 = vadd.f32 %v3101, %v3071
      %v3103 = vadd.f32 %v3102, %v3072
      %v3104 = vadd.f32 %v3103, %v3073
      %v3105 = vadd.f32 %v3104, %v3074
      %v3106 = vadd.f32 %v3105, %v3075
      %v3107 = vadd.f32 %v3106, %v3076
      %v3108 = vadd.f32 %v3107, %v3077
      %v3109 = vadd.f32 %v3108, %v3078
      %v3110 = vadd.f32 %v3109, %v3079
      %v3111 = vadd.f32 %v3110, %v3080
      %v3112 = vadd.f32 %v3111, %v3081
      %v3113 = vadd.f32 %v3112, %v3082
      %v3114 = vadd.f32 %v3113, %v3083
      %v3115 = vrot.slane %v3114, 4
      %v3116 = vadd.f32 %v3114, %v3115
      %v3117 = vrot.slane %v3116, 2
      %v3118 = vadd.f32 %v3116, %v3117
      %v3119 = vrot.slane %v3118, 1
      %v3120 = vadd.f32 %v3118, %v3119
      %vm3121 = vcmask 1040384
      %v3122 = vsel %vm3121, %v3051, %v3120
      %3123 = vst [vmem:[%s181] sm:$0x3] %v3122
      %p3124 = scmp.lt.s32.totalorder %s15, 1
      %s3125 = scalar_select %p3124, %s15, 1
      %s3126 = smul.addr %s3125, 32
      %s3127 = smul.addr %s3126, 8
      %s3128 = scalar_lea.vmem %s2, %s3127
      %p3129 = scmp.lt.s32.totalorder %s15, 1
      %s3130 = scalar_select %p3129, %s15, 1
      %s3131 = smul.addr %s3130, 2
      %s3132 = scalar_lea.vmem %s3, %s3131
      // Predicated region
      $region29: #{double_conv.4} parent=27 // pred_check
        %p3133 = pneg %p80
      $region30: #{double_conv.4} parent=27 // pred_check_branch
        %3135 = sbr.rel (%p3133) target = $region32
      $region31: #{double_conv.4} parent=27 // pred_region
        _
      $region32: #{double_conv.4} parent=27 // pred_fallthru
        _
      // Predicated region
      $region33: #{double_conv.4} parent=27 // pred_check
        %p3136 = pneg %p106
      $region34: #{double_conv.4} parent=27 // pred_check_branch
        %3138 = sbr.rel (%p3136) target = $region36
      $region35: #{double_conv.4} parent=27 // pred_region
        _
      $region36: #{double_conv.4} parent=27 // pred_fallthru
        _
    $region28: #{double_conv.4} parent=5 // pred_fallthru
      _
    %p3139 = scmp.le.s32.totalorder 2, %s10
    // Predicated region
    $region37: #{double_conv.4} parent=5 // pred_check
      %p3140 = pneg %p3139
    $region38: #{double_conv.4} parent=5 // pred_check_branch
      %3142 = sbr.rel (%p3140) target = $region40
    $region39: #{double_conv.4} parent=5 // pred_region
      %s3143 = ssub.s32 %s10, 2
      // Predicated region
      $region41: #{double_conv.4} parent=39 // pred_check
        %p3144 = pneg %p86
      $region42: #{double_conv.4} parent=39 // pred_check_branch
        %3146 = sbr.rel (%p3144) target = $region44
      $region43: #{double_conv.4} parent=39 // pred_region
        %p3147 = scmp.lt.s32.totalorder %s16, 1
        %s3148 = scalar_select %p3147, %s16, 1
        %s3149 = smul.addr %s3148, 32
        %s3150 = smul.addr %s3149, 8
        %s3151 = scalar_lea.vmem %s2, %s3150
      $region44: #{double_conv.4} parent=39 // pred_fallthru
        _
      // Predicated region
      $region45: #{double_conv.4} parent=39 // pred_check
        %p3152 = pneg %p112
      $region46: #{double_conv.4} parent=39 // pred_check_branch
        %3154 = sbr.rel (%p3152) target = $region48
      $region47: #{double_conv.4} parent=39 // pred_region
        %p3155 = scmp.lt.s32.totalorder %s16, 1
        %s3156 = scalar_select %p3155, %s16, 1
        %s3157 = smul.addr %s3156, 2
        %s3158 = scalar_lea.vmem %s3, %s3157
      $region48: #{double_conv.4} parent=39 // pred_fallthru
        _
    $region40: #{double_conv.4} parent=5 // pred_fallthru
      _
  $region6: #{double_conv.4} parent=0 // loop_footer
    %s14 = sadd.s32 1, %s10
  $region7: #{double_conv.4} parent=0 // loop_footer_branch
    %9 = sbr.rel target = $region3
  $region8: #{double_conv.4} parent=0 // loop_exit
    _

// kernel: double_conv.6
$region0: #{double_conv.6}
  #allocation0 [shape = 'u32[]', space=smem, size = 0x4, offset = 0x4, fixed_abs, tag = 'smem constant byte address 0x4 - core index']
  #allocation1 [shape = 'u32[144,128]{1,0:T(1,128)}', space=vmem, size = 0x12000, scoped, tag = 'internal scratch']
  %s0 = inlined_call_operand.vmem [shape: f32[2,18,18,8], index: 0, kind: input, shape index: {}]
  %s1 = inlined_call_operand.vmem [shape: f32[3,3,8,128], index: 1, kind: input, shape index: {}]
  %s2 = inlined_call_operand.vmem [shape: f32[2,256,128], index: 2, kind: output, shape index: {0}]
  %s3 = inlined_call_operand.vmem [shape: f32[2,2,128], index: 3, kind: output, shape index: {1}]
  %4 = xla_tuple %s2, %s3
  %s5 = sld [smem:[#allocation0]]
  $region49: #{double_conv.6} parent=0
    _
  %s7 = ssub.s32 1, %s5
  %s8 = scalar_select 0, %s7, %s5
  loop: start=0, step=1, limit=4
  $region2: #{double_conv.6} parent=0 // loop_pre_header
    _
  $region3: #{double_conv.6} parent=0 // loop_header
    %s10 = sphi 0, %s14
    %p11 = scmp.ge.s32.totalorder %s10, 4
    %s20 = sphi 0, %s22
    %s23 = sphi 0, %s20
    %s24 = sphi 0, %s23
    %s40 = sphi 0, %s24
    %s44 = sphi 0, %s44
    %s46 = sphi 0, %s44
    %s47 = sphi 0, %s46
    %s61 = sphi 0, %s47
    %s67 = sphi 0, %s69
    %s70 = sphi 0, %s67
    %s71 = sphi 0, %s70
    %s87 = sphi 0, %s71
    %s93 = sphi 0, %s95
    %s96 = sphi 0, %s93
    %s97 = sphi 0, %s96
    %s113 = sphi 0, %s97
  $region4: #{double_conv.6} parent=0 // loop_header_branch
    %13 = sbr.rel (%p11) target = $region8
  $region5: #{double_conv.6} parent=0 // loop_body
    %s15 = ssub.s32 %s10, 1
    %s16 = ssub.s32 %s10, 2
    %s17 = sadd.s32 %s10, 1
    %s18 = ssub.s32 %s10, %s17
    %p19 = scmp.eq.s32.totalorder %s18, 0
    %s21 = sadd.s32 %s20, 1
    %s22 = scalar_select %p19, %s20, %s21
    %p25 = pneg %p19
    %p26 = scmp.eq.s32.totalorder %s10, 1
    %p27 = por %p25, %p26
    %p28 = scmp.ne.s32.totalorder %s20, %s23
    %p29 = scmp.eq.s32.totalorder %s10, 0
    %p30 = por %p28, %p29
    %p31 = scmp.ne.s32.totalorder %s20, %s23
    %p32 = scmp.eq.s32.totalorder %s15, 1
    %p33 = por %p31, %p32
    %p34 = scmp.ne.s32.totalorder %s23, %s24
    %p35 = scmp.eq.s32.totalorder %s15, 0
    %p36 = por %p34, %p35
    %p37 = scmp.ne.s32.totalorder %s23, %s24
    %p38 = scmp.eq.s32.totalorder %s16, 1
    %p39 = por %p37, %p38
    %p41 = scmp.ne.s32.totalorder %s24, %s40
    %p42 = scmp.eq.s32.totalorder %s16, 0
    %p43 = por %p41, %p42
    %s45 = sadd.s32 %s44, 1
    %p48 = scmp.eq.s32.totalorder %s10, 1
    %p49 = scmp.ne.s32.totalorder %s44, %s46
    %p50 = scmp.eq.s32.totalorder %s10, 0
    %p51 = por %p49, %p50
    %p52 = scmp.ne.s32.totalorder %s44, %s46
    %p53 = scmp.eq.s32.totalorder %s15, 1
    %p54 = por %p52, %p53
    %p55 = scmp.ne.s32.totalorder %s46, %s47
    %p56 = scmp.eq.s32.totalorder %s15, 0
    %p57 = por %p55, %p56
    %p58 = scmp.ne.s32.totalorder %s46, %s47
    %p59 = scmp.eq.s32.totalorder %s16, 1
    %p60 = por %p58, %p59
    %p62 = scmp.ne.s32.totalorder %s47, %s61
    %p63 = scmp.eq.s32.totalorder %s16, 0
    %p64 = por %p62, %p63
    %s65 = ssub.s32 %s10, %s17
    %p66 = scmp.eq.s32.totalorder %s65, 0
    %s68 = sadd.s32 %s67, 1
    %s69 = scalar_select %p66, %s67, %s68
    %p72 = pneg %p66
    %p73 = scmp.eq.s32.totalorder %s10, 1
    %p74 = por %p72, %p73
    %p75 = scmp.ne.s32.totalorder %s67, %s70
    %p76 = scmp.eq.s32.totalorder %s10, 0
    %p77 = por %p75, %p76
    %p78 = scmp.ne.s32.totalorder %s67, %s70
    %p79 = scmp.eq.s32.totalorder %s15, 1
    %p80 = por %p78, %p79
    %p81 = scmp.ne.s32.totalorder %s70, %s71
    %p82 = scmp.eq.s32.totalorder %s15, 0
    %p83 = por %p81, %p82
    %p84 = scmp.ne.s32.totalorder %s70, %s71
    %p85 = scmp.eq.s32.totalorder %s16, 1
    %p86 = por %p84, %p85
    %p88 = scmp.ne.s32.totalorder %s71, %s87
    %p89 = scmp.eq.s32.totalorder %s16, 0
    %p90 = por %p88, %p89
    %s91 = ssub.s32 %s10, %s17
    %p92 = scmp.eq.s32.totalorder %s91, 0
    %s94 = sadd.s32 %s93, 1
    %s95 = scalar_select %p92, %s93, %s94
    %p98 = pneg %p92
    %p99 = scmp.eq.s32.totalorder %s10, 1
    %p100 = por %p98, %p99
    %p101 = scmp.ne.s32.totalorder %s93, %s96
    %p102 = scmp.eq.s32.totalorder %s10, 0
    %p103 = por %p101, %p102
    %p104 = scmp.ne.s32.totalorder %s93, %s96
    %p105 = scmp.eq.s32.totalorder %s15, 1
    %p106 = por %p104, %p105
    %p107 = scmp.ne.s32.totalorder %s96, %s97
    %p108 = scmp.eq.s32.totalorder %s15, 0
    %p109 = por %p107, %p108
    %p110 = scmp.ne.s32.totalorder %s96, %s97
    %p111 = scmp.eq.s32.totalorder %s16, 1
    %p112 = por %p110, %p111
    %p114 = scmp.ne.s32.totalorder %s97, %s113
    %p115 = scmp.eq.s32.totalorder %s16, 0
    %p116 = por %p114, %p115
    %p117 = scmp.le.s32.totalorder 1, %s10
    %p118 = scmp.lt.s32.totalorder %s10, 3
    %p119 = pnand %p117, %p118
    %p120 = pneg %p119
    // Predicated region
    $region9: #{double_conv.6} parent=5 // pred_check
      _
    $region10: #{double_conv.6} parent=5 // pred_check_branch
      %122 = sbr.rel (%p119) target = $region12
    $region11: #{double_conv.6} parent=5 // pred_region
      %s123 = ssub.s32 %s10, 1
      // Predicated region
      $region13: #{double_conv.6} parent=11 // pred_check
        %p124 = pneg %p57
      $region14: #{double_conv.6} parent=11 // pred_check_branch
        %126 = sbr.rel (%p124) target = $region16
      $region15: #{double_conv.6} parent=11 // pred_region
        _
      $region16: #{double_conv.6} parent=11 // pred_fallthru
        _
    $region12: #{double_conv.6} parent=5 // pred_fallthru
      _
    %p127 = scmp.lt.s32.totalorder %s10, 2
    // Predicated region
    $region17: #{double_conv.6} parent=5 // pred_check
      %p128 = pneg %p127
    $region18: #{double_conv.6} parent=5 // pred_check_branch
      %130 = sbr.rel (%p128) target = $region20
    $region19: #{double_conv.6} parent=5 // pred_region
      // Predicated region
      $region21: #{double_conv.6} parent=19 // pred_check
        %p131 = pneg %p30
      $region22: #{double_conv.6} parent=19 // pred_check_branch
        %133 = sbr.rel (%p131) target = $region24
      $region23: #{double_conv.6} parent=19 // pred_region
        %p134 = scmp.lt.s32.totalorder %s10, 1
        %s135 = scalar_select %p134, %s10, 1
        %s136 = smul.addr %s135, 54
        %s137 = smul.addr %s136, 8
        %s138 = scalar_lea.vmem %s0, %s137
      $region24: #{double_conv.6} parent=19 // pred_fallthru
        _
    $region20: #{double_conv.6} parent=5 // pred_fallthru
      _
    %p139 = scmp.le.s32.totalorder 1, %s10
    %p140 = scmp.lt.s32.totalorder %s10, 3
    %p141 = pnand %p139, %p140
    %p142 = pneg %p141
    // Predicated region
    $region25: #{double_conv.6} parent=5 // pred_check
      _
    $region26: #{double_conv.6} parent=5 // pred_check_branch
      %144 = sbr.rel (%p141) target = $region28
    $region27: #{double_conv.6} parent=5 // pred_region
      %s145 = ssub.s32 %s10, 1
      %p146 = scmp.lt.s32.totalorder %s15, 1
      %s147 = scalar_select %p146, %s15, 1
      %s148 = smul.addr %s147, 54
      %s149 = smul.addr %s148, 8
      %s150 = scalar_lea.vmem %s0, %s149
      %p151 = pneg %p36
      %p152 = pneg %p33
      %p153 = pneg %p57
      %p154 = pneg %p54
      %p155 = pneg %p83
      %p156 = pneg %p80
      %p157 = scmp.lt.s32.totalorder %s15, 1
      %s158 = scalar_select %p157, %s15, 1
      %s159 = smul.addr %s158, 32
      %s160 = smul.addr %s159, 8
      %s161 = scalar_lea.vmem %s2, %s160
      %p162 = pneg %p109
      %p163 = pneg %p106
      %p164 = scmp.lt.s32.totalorder %s15, 1
      %s165 = scalar_select %p164, %s15, 1
      %s166 = smul.addr %s165, 2
      %s167 = scalar_lea.vmem %s3, %s166
      %p168 = scmp.lt.s32.totalorder %s15, 1
      %s169 = scalar_select %p168, %s15, 1
      %s170 = smul.addr %s169, 54
      %s171 = smul.addr %s170, 8
      %s172 = scalar_lea.vmem %s0, %s171
      %p173 = scmp.lt.s32.totalorder %s15, 1
      %s174 = scalar_select %p173, %s15, 1
      %s175 = smul.addr %s174, 32
      %s176 = smul.addr %s175, 8
      %s177 = scalar_lea.vmem %s2, %s176
      %p178 = scmp.lt.s32.totalorder %s15, 1
      %s179 = scalar_select %p178, %s15, 1
      %s180 = smul.addr %s179, 2
      %s181 = scalar_lea.vmem %s3, %s180
      %v182 = vld [vmem:[%s172] sm:$0xff]
      %v183 = vld [vmem:[%s172 + $0x8] sm:$0xff]
      %v184 = vld [vmem:[%s172 + $0x10] sm:$0x3]
      %v185 = vld [vmem:[%s172 + $0x18] sm:$0xff]
      %v186 = vld [vmem:[%s172 + $0x20] sm:$0xff]
      %v187 = vld [vmem:[%s172 + $0x28] sm:$0x3]
      %v188 = vld [vmem:[%s172 + $0x30] sm:$0xff]
      %v189 = vld [vmem:[%s172 + $0x38] sm:$0xff]
      %v190 = vld [vmem:[%s172 + $0x40] sm:$0x3]
      %v191 = vld [vmem:[%s172 + $0x48] sm:$0xff]
      %v192 = vld [vmem:[%s172 + $0x50] sm:$0xff]
      %v193 = vld [vmem:[%s172 + $0x58] sm:$0x3]
      %v194 = vld [vmem:[%s172 + $0x60] sm:$0xff]
      %v195 = vld [vmem:[%s172 + $0x68] sm:$0xff]
      %v196 = vld [vmem:[%s172 + $0x70] sm:$0x3]
      %v197 = vld [vmem:[%s172 + $0x78] sm:$0xff]
      %v198 = vld [vmem:[%s172 + $0x80] sm:$0xff]
      %v199 = vld [vmem:[%s172 + $0x88] sm:$0x3]
      %v200 = vld [vmem:[%s172 + $0x90] sm:$0xff]
      %v201 = vld [vmem:[%s172 + $0x98] sm:$0xff]
      %v202 = vld [vmem:[%s172 + $0xa0] sm:$0x3]
      %v203 = vld [vmem:[%s172 + $0xa8] sm:$0xff]
      %v204 = vld [vmem:[%s172 + $0xb0] sm:$0xff]
      %v205 = vld [vmem:[%s172 + $0xb8] sm:$0x3]
      %v206 = vld [vmem:[%s172 + $0xc0] sm:$0xff]
      %v207 = vld [vmem:[%s172 + $0xc8] sm:$0xff]
      %v208 = vld [vmem:[%s172 + $0xd0] sm:$0x3]
      %v209 = vld [vmem:[%s172 + $0xd8] sm:$0xff]
      %v210 = vld [vmem:[%s172 + $0xe0] sm:$0xff]
      %v211 = vld [vmem:[%s172 + $0xe8] sm:$0x3]
      %v212 = vld [vmem:[%s172 + $0xf0] sm:$0xff]
      %v213 = vld [vmem:[%s172 + $0xf8] sm:$0xff]
      %v214 = vld [vmem:[%s172 + $0x100] sm:$0x3]
      %v215 = vld [vmem:[%s172 + $0x108] sm:$0xff]
      %v216 = vld [vmem:[%s172 + $0x110] sm:$0xff]
      %v217 = vld [vmem:[%s172 + $0x118] sm:$0x3]
      %v218 = vld [vmem:[%s172 + $0x120] sm:$0xff]
      %v219 = vld [vmem:[%s172 + $0x128] sm:$0xff]
      %v220 = vld [vmem:[%s172 + $0x130] sm:$0x3]
      %v221 = vld [vmem:[%s172 + $0x138] sm:$0xff]
      %v222 = vld [vmem:[%s172 + $0x140] sm:$0xff]
      %v223 = vld [vmem:[%s172 + $0x148] sm:$0x3]
      %v224 = vld [vmem:[%s172 + $0x150] sm:$0xff]
      %v225 = vld [vmem:[%s172 + $0x158] sm:$0xff]
      %v226 = vld [vmem:[%s172 + $0x160] sm:$0x3]
      %v227 = vld [vmem:[%s172 + $0x168] sm:$0xff]
      %v228 = vld [vmem:[%s172 + $0x170] sm:$0xff]
      %v229 = vld [vmem:[%s172 + $0x178] sm:$0x3]
      %v230 = vld [vmem:[%s172 + $0x180] sm:$0xff]
      %v231 = vld [vmem:[%s172 + $0x188] sm:$0xff]
      %v232 = vld [vmem:[%s172 + $0x190] sm:$0x3]
      %v233 = vld [vmem:[%s172 + $0x198] sm:$0xff]
      %v234 = vld [vmem:[%s172 + $0x1a0] sm:$0xff]
      %v235 = vld [vmem:[%s172 + $0x1a8] sm:$0x3]
      %v236 = vld [vmem:[%s1] sm:$0xff]
      %vm285 = vcmask 1046528
      %v286 = vrot.slane %v182, 1
      %v287 = vrot.slane %v183, 1
      %v288 = vsel %vm285, %v286, %v287
      %v289 = vrot.slane %v184, 1
      %v290 = vsel %vm285, %v287, %v289
      %v291 = vrot.slane %v185, 1
      %v292 = vrot.slane %v186, 1
      %v293 = vsel %vm285, %v291, %v292
      %v294 = vrot.slane %v187, 1
      %v295 = vsel %vm285, %v292, %v294
      %v296 = vrot.slane %v188, 1
      %v297 = vrot.slane %v189, 1
      %v298 = vsel %vm285, %v296, %v297
      %v299 = vrot.slane %v190, 1
      %v300 = vsel %vm285, %v297, %v299
      %v301 = vrot.slane %v191, 1
      %v302 = vrot.slane %v192, 1
      %v303 = vsel %vm285, %v301, %v302
      %v304 = vrot.slane %v193, 1
      %v305 = vsel %vm285, %v302, %v304
      %v306 = vrot.slane %v194, 1
      %v307 = vrot.slane %v195, 1
      %v308 = vsel %vm285, %v306, %v307
      %v309 = vrot.slane %v196, 1
      %v310 = vsel %vm285, %v307, %v309
      %v311 = vrot.slane %v197, 1
      %v312 = vrot.slane %v198, 1
      %v313 = vsel %vm285, %v311, %v312
      %v314 = vrot.slane %v199, 1
      %v315 = vsel %vm285, %v312, %v314
      %v316 = vrot.slane %v200, 1
      %v317 = vrot.slane %v201, 1
      %v318 = vsel %vm285, %v316, %v317
      %v319 = vrot.slane %v202, 1
      %v320 = vsel %vm285, %v317, %v319
      %v321 = vrot.slane %v203, 1
      %v322 = vrot.slane %v204, 1
      %v323 = vsel %vm285, %v321, %v322
      %v324 = vrot.slane %v205, 1
      %v325 = vsel %vm285, %v322, %v324
      %v326 = vrot.slane %v206, 1
      %v327 = vrot.slane %v207, 1
      %v328 = vsel %vm285, %v326, %v327
      %v329 = vrot.slane %v208, 1
      %v330 = vsel %vm285, %v327, %v329
      %v331 = vrot.slane %v209, 1
      %v332 = vrot.slane %v210, 1
      %v333 = vsel %vm285, %v331, %v332
      %v334 = vrot.slane %v211, 1
      %v335 = vsel %vm285, %v332, %v334
      %v336 = vrot.slane %v212, 1
      %v337 = vrot.slane %v213, 1
      %v338 = vsel %vm285, %v336, %v337
      %v339 = vrot.slane %v214, 1
      %v340 = vsel %vm285, %v337, %v339
      %v341 = vrot.slane %v215, 1
      %v342 = vrot.slane %v216, 1
      %v343 = vsel %vm285, %v341, %v342
      %v344 = vrot.slane %v217, 1
      %v345 = vsel %vm285, %v342, %v344
      %v346 = vrot.slane %v218, 1
      %v347 = vrot.slane %v219, 1
      %v348 = vsel %vm285, %v346, %v347
      %v349 = vrot.slane %v220, 1
      %v350 = vsel %vm285, %v347, %v349
      %v351 = vrot.slane %v221, 1
      %v352 = vrot.slane %v222, 1
      %v353 = vsel %vm285, %v351, %v352
      %v354 = vrot.slane %v223, 1
      %v355 = vsel %vm285, %v352, %v354
      %v356 = vrot.slane %v224, 1
      %v357 = vrot.slane %v225, 1
      %v358 = vsel %vm285, %v356, %v357
      %v359 = vrot.slane %v226, 1
      %v360 = vsel %vm285, %v357, %v359
      %v361 = vrot.slane %v227, 1
      %v362 = vrot.slane %v228, 1
      %v363 = vsel %vm285, %v361, %v362
      %v364 = vrot.slane %v229, 1
      %v365 = vsel %vm285, %v362, %v364
      %s366 = scalar_lea.vmem %s1, 8
      %v367 = vld [vmem:[%s366] sm:$0xff]
      %vm368 = vcmask 64512
      %v369 = vsel %vm368, %v288, 0
      %v371 = vsel %vm368, %v290, 0
      %v373 = vsel %vm368, %v293, 0
      %v375 = vsel %vm368, %v295, 0
      %v377 = vsel %vm368, %v298, 0
      %v379 = vsel %vm368, %v300, 0
      %v381 = vsel %vm368, %v303, 0
      %v383 = vsel %vm368, %v305, 0
      %v385 = vsel %vm368, %v308, 0
      %v387 = vsel %vm368, %v310, 0
      %v389 = vsel %vm368, %v313, 0
      %v391 = vsel %vm368, %v315, 0
      %v393 = vsel %vm368, %v318, 0
      %v395 = vsel %vm368, %v320, 0
      %v397 = vsel %vm368, %v323, 0
      %v399 = vsel %vm368, %v325, 0
      %v401 = vsel %vm368, %v328, 0
      %v403 = vsel %vm368, %v330, 0
      %v405 = vsel %vm368, %v333, 0
      %v407 = vsel %vm368, %v335, 0
      %v409 = vsel %vm368, %v338, 0
      %v411 = vsel %vm368, %v340, 0
      %v413 = vsel %vm368, %v343, 0
      %v415 = vsel %vm368, %v345, 0
      %v417 = vsel %vm368, %v348, 0
      %v419 = vsel %vm368, %v350, 0
      %v421 = vsel %vm368, %v353, 0
      %v423 = vsel %vm368, %v355, 0
      %v425 = vsel %vm368, %v358, 0
      %v427 = vsel %vm368, %v360, 0
      %v429 = vsel %vm368, %v363, 0
      %v431 = vsel %vm368, %v365, 0
      %433 = vmatprep.subr.mxu0 0.0
      %434 = vmatpush1.msra.mxu0 0.0
      %435 = vmatprep.subr.mxu0 0.0
      %436 = vmatpush1.msra.mxu0 0.0
      %437 = vmatprep.subr.mxu0 0.0
      %438 = vmatpush1.msra.mxu0 0.0
      %439 = vmatprep.subr.mxu0 0.0
      %440 = vmatpush1.msra.mxu0 0.0
      %441 = vmatprep.subr.mxu0 0.0
      %442 = vmatpush1.msra.mxu0 0.0
      %443 = vmatprep.subr.mxu0 0.0
      %444 = vmatpush1.msra.mxu0 0.0
      %445 = vmatprep.subr.mxu0 0.0
      %446 = vmatpush1.msra.mxu0 0.0
      %447 = vmatprep.subr.mxu0 0.0
      %448 = vmatpush1.msra.mxu0 0.0
      %449 = vmatprep.subr.mxu0 0.0
      %450 = vmatpush1.msra.mxu0 0.0
      %451 = vmatprep.subr.mxu0 0.0
      %452 = vmatpush1.msra.mxu0 0.0
      %453 = vmatprep.subr.mxu0 0.0
      %454 = vmatpush1.msra.mxu0 0.0
      %455 = vmatprep.subr.mxu0 0.0
      %456 = vmatpush1.msra.mxu0 0.0
      %457 = vmatprep.subr.mxu0 0.0
      %458 = vmatpush1.msra.mxu0 0.0
      %459 = vmatprep.subr.mxu0 0.0
      %460 = vmatpush1.msra.mxu0 0.0
      %461 = vmatprep.subr.mxu0 0.0
      %462 = vmatpush1.msra.mxu0 0.0
      %463 = vmatprep.subr.mxu0 0.0
      %464 = vmatpush1.msra.mxu0 %v367
      %465 = vmatprep.subr.mxu0 0.0
      %466 = vmatpush2.msra.mxu0 0.0
      %467 = vmatprep.subr.mxu0 0.0
      %468 = vmatpush2.msra.mxu0 0.0
      %469 = vmatprep.subr.mxu0 0.0
      %470 = vmatpush2.msra.mxu0 0.0
      %471 = vmatprep.subr.mxu0 0.0
      %472 = vmatpush2.msra.mxu0 0.0
      %473 = vmatprep.subr.mxu0 0.0
      %474 = vmatpush2.msra.mxu0 0.0
      %475 = vmatprep.subr.mxu0 0.0
      %476 = vmatpush2.msra.mxu0 0.0
      %477 = vmatprep.subr.mxu0 0.0
      %478 = vmatpush2.msra.mxu0 0.0
      %479 = vmatprep.subr.mxu0 0.0
      %480 = vmatpush2.msra.mxu0 0.0
      %481 = vmatprep.subr.mxu0 0.0
      %482 = vmatpush2.msra.mxu0 0.0
      %483 = vmatprep.subr.mxu0 0.0
      %484 = vmatpush2.msra.mxu0 0.0
      %485 = vmatprep.subr.mxu0 0.0
      %486 = vmatpush2.msra.mxu0 0.0
      %487 = vmatprep.subr.mxu0 0.0
      %488 = vmatpush2.msra.mxu0 0.0
      %489 = vmatprep.subr.mxu0 0.0
      %490 = vmatpush2.msra.mxu0 0.0
      %491 = vmatprep.subr.mxu0 0.0
      %492 = vmatpush2.msra.mxu0 0.0
      %493 = vmatprep.subr.mxu0 0.0
      %494 = vmatpush2.msra.mxu0 0.0
      %495 = vmatprep.subr.mxu0 0.0
      %496 = vmatpush2.msra.mxu0 0.0
      %497 = vmatprep.mubr.f32.mxu0 0.0
      %498 = vmatmul.mubr.f32.gmra.mxu0 %v369
      %v499 = vpop.f32.mrf.mxu0
      %v500 = vadd.f32 0.0, %v499
      %v501 = vpop.f32.mrf.mxu0
      %502 = vmatprep.mubr.f32.mxu0 0.0
      %503 = vmatmul.mubr.f32.gmra.mxu0 %v371
      %v504 = vpop.f32.mrf.mxu0
      %v505 = vadd.f32 0.0, %v504
      %v506 = vpop.f32.mrf.mxu0
      %507 = vmatprep.mubr.f32.mxu0 0.0
      %508 = vmatmul.mubr.f32.gmra.mxu0 %v373
      %v509 = vpop.f32.mrf.mxu0
      %v510 = vadd.f32 0.0, %v509
      %v511 = vpop.f32.mrf.mxu0
      %512 = vmatprep.mubr.f32.mxu0 0.0
      %513 = vmatmul.mubr.f32.gmra.mxu0 %v375
      %v514 = vpop.f32.mrf.mxu0
      %v515 = vadd.f32 0.0, %v514
      %v516 = vpop.f32.mrf.mxu0
      %517 = vmatprep.mubr.f32.mxu0 0.0
      %518 = vmatmul.mubr.f32.gmra.mxu0 %v377
      %v519 = vpop.f32.mrf.mxu0
      %v520 = vadd.f32 0.0, %v519
      %v521 = vpop.f32.mrf.mxu0
      %522 = vmatprep.mubr.f32.mxu0 0.0
      %523 = vmatmul.mubr.f32.gmra.mxu0 %v379
      %v524 = vpop.f32.mrf.mxu0
      %v525 = vadd.f32 0.0, %v524
      %v526 = vpop.f32.mrf.mxu0
      %527 = vmatprep.mubr.f32.mxu0 0.0
      %528 = vmatmul.mubr.f32.gmra.mxu0 %v381
      %v529 = vpop.f32.mrf.mxu0
      %v530 = vadd.f32 0.0, %v529
      %v531 = vpop.f32.mrf.mxu0
      %532 = vmatprep.mubr.f32.mxu0 0.0
      %533 = vmatmul.mubr.f32.gmra.mxu0 %v383
      %v534 = vpop.f32.mrf.mxu0
      %v535 = vadd.f32 0.0, %v534
      %v536 = vpop.f32.mrf.mxu0
      %537 = vmatprep.mubr.f32.mxu0 0.0
      %538 = vmatmul.mubr.f32.gmra.mxu0 %v385
      %v539 = vpop.f32.mrf.mxu0
      %v540 = vadd.f32 0.0, %v539
      %v541 = vpop.f32.mrf.mxu0
      %542 = vmatprep.mubr.f32.mxu0 0.0
      %543 = vmatmul.mubr.f32.gmra.mxu0 %v387
      %v544 = vpop.f32.mrf.mxu0
      %v545 = vadd.f32 0.0, %v544
      %v546 = vpop.f32.mrf.mxu0
      %547 = vmatprep.mubr.f32.mxu0 0.0
      %548 = vmatmul.mubr.f32.gmra.mxu0 %v389
      %v549 = vpop.f32.mrf.mxu0
      %v550 = vadd.f32 0.0, %v549
      %v551 = vpop.f32.mrf.mxu0
      %552 = vmatprep.mubr.f32.mxu0 0.0
      %553 = vmatmul.mubr.f32.gmra.mxu0 %v391
      %v554 = vpop.f32.mrf.mxu0
      %v555 = vadd.f32 0.0, %v554
      %v556 = vpop.f32.mrf.mxu0
      %557 = vmatprep.mubr.f32.mxu0 0.0
      %558 = vmatmul.mubr.f32.gmra.mxu0 %v393
      %v559 = vpop.f32.mrf.mxu0
      %v560 = vadd.f32 0.0, %v559
      %v561 = vpop.f32.mrf.mxu0
      %562 = vmatprep.mubr.f32.mxu0 0.0
      %563 = vmatmul.mubr.f32.gmra.mxu0 %v395
      %v564 = vpop.f32.mrf.mxu0
      %v565 = vadd.f32 0.0, %v564
      %v566 = vpop.f32.mrf.mxu0
      %567 = vmatprep.mubr.f32.mxu0 0.0
      %568 = vmatmul.mubr.f32.gmra.mxu0 %v397
      %v569 = vpop.f32.mrf.mxu0
      %v570 = vadd.f32 0.0, %v569
      %v571 = vpop.f32.mrf.mxu0
      %572 = vmatprep.mubr.f32.mxu0 0.0
      %573 = vmatmul.mubr.f32.gmra.mxu0 %v399
      %v574 = vpop.f32.mrf.mxu0
      %v575 = vadd.f32 0.0, %v574
      %v576 = vpop.f32.mrf.mxu0
      %577 = vmatprep.mubr.f32.mxu0 0.0
      %578 = vmatmul.mubr.f32.gmra.mxu0 %v401
      %v579 = vpop.f32.mrf.mxu0
      %v580 = vadd.f32 0.0, %v579
      %v581 = vpop.f32.mrf.mxu0
      %582 = vmatprep.mubr.f32.mxu0 0.0
      %583 = vmatmul.mubr.f32.gmra.mxu0 %v403
      %v584 = vpop.f32.mrf.mxu0
      %v585 = vadd.f32 0.0, %v584
      %v586 = vpop.f32.mrf.mxu0
      %587 = vmatprep.mubr.f32.mxu0 0.0
      %588 = vmatmul.mubr.f32.gmra.mxu0 %v405
      %v589 = vpop.f32.mrf.mxu0
      %v590 = vadd.f32 0.0, %v589
      %v591 = vpop.f32.mrf.mxu0
      %592 = vmatprep.mubr.f32.mxu0 0.0
      %593 = vmatmul.mubr.f32.gmra.mxu0 %v407
      %v594 = vpop.f32.mrf.mxu0
      %v595 = vadd.f32 0.0, %v594
      %v596 = vpop.f32.mrf.mxu0
      %597 = vmatprep.mubr.f32.mxu0 0.0
      %598 = vmatmul.mubr.f32.gmra.mxu0 %v409
      %v599 = vpop.f32.mrf.mxu0
      %v600 = vadd.f32 0.0, %v599
      %v601 = vpop.f32.mrf.mxu0
      %602 = vmatprep.mubr.f32.mxu0 0.0
      %603 = vmatmul.mubr.f32.gmra.mxu0 %v411
      %v604 = vpop.f32.mrf.mxu0
      %v605 = vadd.f32 0.0, %v604
      %v606 = vpop.f32.mrf.mxu0
      %607 = vmatprep.mubr.f32.mxu0 0.0
      %608 = vmatmul.mubr.f32.gmra.mxu0 %v413
      %v609 = vpop.f32.mrf.mxu0
      %v610 = vadd.f32 0.0, %v609
      %v611 = vpop.f32.mrf.mxu0
      %612 = vmatprep.mubr.f32.mxu0 0.0
      %613 = vmatmul.mubr.f32.gmra.mxu0 %v415
      %v614 = vpop.f32.mrf.mxu0
      %v615 = vadd.f32 0.0, %v614
      %v616 = vpop.f32.mrf.mxu0
      %617 = vmatprep.mubr.f32.mxu0 0.0
      %618 = vmatmul.mubr.f32.gmra.mxu0 %v417
      %v619 = vpop.f32.mrf.mxu0
      %v620 = vadd.f32 0.0, %v619
      %v621 = vpop.f32.mrf.mxu0
      %622 = vmatprep.mubr.f32.mxu0 0.0
      %623 = vmatmul.mubr.f32.gmra.mxu0 %v419
      %v624 = vpop.f32.mrf.mxu0
      %v625 = vadd.f32 0.0, %v624
      %v626 = vpop.f32.mrf.mxu0
      %627 = vmatprep.mubr.f32.mxu0 0.0
      %628 = vmatmul.mubr.f32.gmra.mxu0 %v421
      %v629 = vpop.f32.mrf.mxu0
      %v630 = vadd.f32 0.0, %v629
      %v631 = vpop.f32.mrf.mxu0
      %632 = vmatprep.mubr.f32.mxu0 0.0
      %633 = vmatmul.mubr.f32.gmra.mxu0 %v423
      %v634 = vpop.f32.mrf.mxu0
      %v635 = vadd.f32 0.0, %v634
      %v636 = vpop.f32.mrf.mxu0
      %637 = vmatprep.mubr.f32.mxu0 0.0
      %638 = vmatmul.mubr.f32.gmra.mxu0 %v425
      %v639 = vpop.f32.mrf.mxu0
      %v640 = vadd.f32 0.0, %v639
      %v641 = vpop.f32.mrf.mxu0
      %642 = vmatprep.mubr.f32.mxu0 0.0
      %643 = vmatmul.mubr.f32.gmra.mxu0 %v427
      %v644 = vpop.f32.mrf.mxu0
      %v645 = vadd.f32 0.0, %v644
      %v646 = vpop.f32.mrf.mxu0
      %647 = vmatprep.mubr.f32.mxu0 0.0
      %648 = vmatmul.mubr.f32.gmra.mxu0 %v429
      %v649 = vpop.f32.mrf.mxu0
      %v650 = vadd.f32 0.0, %v649
      %v651 = vpop.f32.mrf.mxu0
      %652 = vmatprep.mubr.f32.mxu0 0.0
      %653 = vmatmul.mubr.f32.gmra.mxu0 %v431
      %v654 = vpop.f32.mrf.mxu0
      %v655 = vadd.f32 0.0, %v654
      %v656 = vpop.f32.mrf.mxu0
      %657 = vdwg.mxu0
      %v658 = vsel %vm368, %v182, 0
      %v660 = vsel %vm368, %v183, 0
      %v662 = vsel %vm368, %v185, 0
      %v664 = vsel %vm368, %v186, 0
      %v666 = vsel %vm368, %v188, 0
      %v668 = vsel %vm368, %v189, 0
      %v670 = vsel %vm368, %v191, 0
      %v672 = vsel %vm368, %v192, 0
      %v674 = vsel %vm368, %v194, 0
      %v676 = vsel %vm368, %v195, 0
      %v678 = vsel %vm368, %v197, 0
      %v680 = vsel %vm368, %v198, 0
      %v682 = vsel %vm368, %v200, 0
      %v684 = vsel %vm368, %v201, 0
      %v686 = vsel %vm368, %v203, 0
      %v688 = vsel %vm368, %v204, 0
      %v690 = vsel %vm368, %v206, 0
      %v692 = vsel %vm368, %v207, 0
      %v694 = vsel %vm368, %v209, 0
      %v696 = vsel %vm368, %v210, 0
      %v698 = vsel %vm368, %v212, 0
      %v700 = vsel %vm368, %v213, 0
      %v702 = vsel %vm368, %v215, 0
      %v704 = vsel %vm368, %v216, 0
      %v706 = vsel %vm368, %v218, 0
      %v708 = vsel %vm368, %v219, 0
      %v710 = vsel %vm368, %v221, 0
      %v712 = vsel %vm368, %v222, 0
      %v714 = vsel %vm368, %v224, 0
      %v716 = vsel %vm368, %v225, 0
      %v718 = vsel %vm368, %v227, 0
      %v720 = vsel %vm368, %v228, 0
      %722 = vmatprep.subr.mxu0 0.0
      %723 = vmatpush1.msra.mxu0 0.0
      %724 = vmatprep.subr.mxu0 0.0
      %725 = vmatpush1.msra.mxu0 0.0
      %726 = vmatprep.subr.mxu0 0.0
      %727 = vmatpush1.msra.mxu0 0.0
      %728 = vmatprep.subr.mxu0 0.0
      %729 = vmatpush1.msra.mxu0 0.0
      %730 = vmatprep.subr.mxu0 0.0
      %731 = vmatpush1.msra.mxu0 0.0
      %732 = vmatprep.subr.mxu0 0.0
      %733 = vmatpush1.msra.mxu0 0.0
      %734 = vmatprep.subr.mxu0 0.0
      %735 = vmatpush1.msra.mxu0 0.0
      %736 = vmatprep.subr.mxu0 0.0
      %737 = vmatpush1.msra.mxu0 0.0
      %738 = vmatprep.subr.mxu0 0.0
      %739 = vmatpush1.msra.mxu0 0.0
      %740 = vmatprep.subr.mxu0 0.0
      %741 = vmatpush1.msra.mxu0 0.0
      %742 = vmatprep.subr.mxu0 0.0
      %743 = vmatpush1.msra.mxu0 0.0
      %744 = vmatprep.subr.mxu0 0.0
      %745 = vmatpush1.msra.mxu0 0.0
      %746 = vmatprep.subr.mxu0 0.0
      %747 = vmatpush1.msra.mxu0 0.0
      %748 = vmatprep.subr.mxu0 0.0
      %749 = vmatpush1.msra.mxu0 0.0
      %750 = vmatprep.subr.mxu0 0.0
      %751 = vmatpush1.msra.mxu0 0.0
      %752 = vmatprep.subr.mxu0 0.0
      %753 = vmatpush1.msra.mxu0 %v236
      %754 = vmatprep.subr.mxu0 0.0
      %755 = vmatpush2.msra.mxu0 0.0
      %756 = vmatprep.subr.mxu0 0.0
      %757 = vmatpush2.msra.mxu0 0.0
      %758 = vmatprep.subr.mxu0 0.0
      %759 = vmatpush2.msra.mxu0 0.0
      %760 = vmatprep.subr.mxu0 0.0
      %761 = vmatpush2.msra.mxu0 0.0
      %762 = vmatprep.subr.mxu0 0.0
      %763 = vmatpush2.msra.mxu0 0.0
      %764 = vmatprep.subr.mxu0 0.0
      %765 = vmatpush2.msra.mxu0 0.0
      %766 = vmatprep.subr.mxu0 0.0
      %767 = vmatpush2.msra.mxu0 0.0
      %768 = vmatprep.subr.mxu0 0.0
      %769 = vmatpush2.msra.mxu0 0.0
      %770 = vmatprep.subr.mxu0 0.0
      %771 = vmatpush2.msra.mxu0 0.0
      %772 = vmatprep.subr.mxu0 0.0
      %773 = vmatpush2.msra.mxu0 0.0
      %774 = vmatprep.subr.mxu0 0.0
      %775 = vmatpush2.msra.mxu0 0.0
      %776 = vmatprep.subr.mxu0 0.0
      %777 = vmatpush2.msra.mxu0 0.0
      %778 = vmatprep.subr.mxu0 0.0
      %779 = vmatpush2.msra.mxu0 0.0
      %780 = vmatprep.subr.mxu0 0.0
      %781 = vmatpush2.msra.mxu0 0.0
      %782 = vmatprep.subr.mxu0 0.0
      %783 = vmatpush2.msra.mxu0 0.0
      %784 = vmatprep.subr.mxu0 0.0
      %785 = vmatpush2.msra.mxu0 0.0
      %786 = vmatprep.mubr.f32.mxu0 0.0
      %787 = vmatmul.mubr.f32.gmra.mxu0 %v658
      %v788 = vpop.f32.mrf.mxu0
      %v789 = vadd.f32 %v500, %v788
      %v790 = vpop.f32.mrf.mxu0
      %791 = vmatprep.mubr.f32.mxu0 0.0
      %792 = vmatmul.mubr.f32.gmra.mxu0 %v660
      %v793 = vpop.f32.mrf.mxu0
      %v794 = vadd.f32 %v505, %v793
      %v795 = vpop.f32.mrf.mxu0
      %796 = vmatprep.mubr.f32.mxu0 0.0
      %797 = vmatmul.mubr.f32.gmra.mxu0 %v662
      %v798 = vpop.f32.mrf.mxu0
      %v799 = vadd.f32 %v510, %v798
      %v800 = vpop.f32.mrf.mxu0
      %801 = vmatprep.mubr.f32.mxu0 0.0
      %802 = vmatmul.mubr.f32.gmra.mxu0 %v664
      %v803 = vpop.f32.mrf.mxu0
      %v804 = vadd.f32 %v515, %v803
      %v805 = vpop.f32.mrf.mxu0
      %806 = vmatprep.mubr.f32.mxu0 0.0
      %807 = vmatmul.mubr.f32.gmra.mxu0 %v666
      %v808 = vpop.f32.mrf.mxu0
      %v809 = vadd.f32 %v520, %v808
      %v810 = vpop.f32.mrf.mxu0
      %811 = vmatprep.mubr.f32.mxu0 0.0
      %812 = vmatmul.mubr.f32.gmra.mxu0 %v668
      %v813 = vpop.f32.mrf.mxu0
      %v814 = vadd.f32 %v525, %v813
      %v815 = vpop.f32.mrf.mxu0
      %816 = vmatprep.mubr.f32.mxu0 0.0
      %817 = vmatmul.mubr.f32.gmra.mxu0 %v670
      %v818 = vpop.f32.mrf.mxu0
      %v819 = vadd.f32 %v530, %v818
      %v820 = vpop.f32.mrf.mxu0
      %821 = vmatprep.mubr.f32.mxu0 0.0
      %822 = vmatmul.mubr.f32.gmra.mxu0 %v672
      %v823 = vpop.f32.mrf.mxu0
      %v824 = vadd.f32 %v535, %v823
      %v825 = vpop.f32.mrf.mxu0
      %826 = vmatprep.mubr.f32.mxu0 0.0
      %827 = vmatmul.mubr.f32.gmra.mxu0 %v674
      %v828 = vpop.f32.mrf.mxu0
      %v829 = vadd.f32 %v540, %v828
      %v830 = vpop.f32.mrf.mxu0
      %831 = vmatprep.mubr.f32.mxu0 0.0
      %832 = vmatmul.mubr.f32.gmra.mxu0 %v676
      %v833 = vpop.f32.mrf.mxu0
      %v834 = vadd.f32 %v545, %v833
      %v835 = vpop.f32.mrf.mxu0
      %836 = vmatprep.mubr.f32.mxu0 0.0
      %837 = vmatmul.mubr.f32.gmra.mxu0 %v678
      %v838 = vpop.f32.mrf.mxu0
      %v839 = vadd.f32 %v550, %v838
      %v840 = vpop.f32.mrf.mxu0
      %841 = vmatprep.mubr.f32.mxu0 0.0
      %842 = vmatmul.mubr.f32.gmra.mxu0 %v680
      %v843 = vpop.f32.mrf.mxu0
      %v844 = vadd.f32 %v555, %v843
      %v845 = vpop.f32.mrf.mxu0
      %846 = vmatprep.mubr.f32.mxu0 0.0
      %847 = vmatmul.mubr.f32.gmra.mxu0 %v682
      %v848 = vpop.f32.mrf.mxu0
      %v849 = vadd.f32 %v560, %v848
      %v850 = vpop.f32.mrf.mxu0
      %851 = vmatprep.mubr.f32.mxu0 0.0
      %852 = vmatmul.mubr.f32.gmra.mxu0 %v684
      %v853 = vpop.f32.mrf.mxu0
      %v854 = vadd.f32 %v565, %v853
      %v855 = vpop.f32.mrf.mxu0
      %856 = vmatprep.mubr.f32.mxu0 0.0
      %857 = vmatmul.mubr.f32.gmra.mxu0 %v686
      %v858 = vpop.f32.mrf.mxu0
      %v859 = vadd.f32 %v570, %v858
      %v860 = vpop.f32.mrf.mxu0
      %861 = vmatprep.mubr.f32.mxu0 0.0
      %862 = vmatmul.mubr.f32.gmra.mxu0 %v688
      %v863 = vpop.f32.mrf.mxu0
      %v864 = vadd.f32 %v575, %v863
      %v865 = vpop.f32.mrf.mxu0
      %866 = vmatprep.mubr.f32.mxu0 0.0
      %867 = vmatmul.mubr.f32.gmra.mxu0 %v690
      %v868 = vpop.f32.mrf.mxu0
      %v869 = vadd.f32 %v580, %v868
      %v870 = vpop.f32.mrf.mxu0
      %871 = vmatprep.mubr.f32.mxu0 0.0
      %872 = vmatmul.mubr.f32.gmra.mxu0 %v692
      %v873 = vpop.f32.mrf.mxu0
      %v874 = vadd.f32 %v585, %v873
      %v875 = vpop.f32.mrf.mxu0
      %876 = vmatprep.mubr.f32.mxu0 0.0
      %877 = vmatmul.mubr.f32.gmra.mxu0 %v694
      %v878 = vpop.f32.mrf.mxu0
      %v879 = vadd.f32 %v590, %v878
      %v880 = vpop.f32.mrf.mxu0
      %881 = vmatprep.mubr.f32.mxu0 0.0
      %882 = vmatmul.mubr.f32.gmra.mxu0 %v696
      %v883 = vpop.f32.mrf.mxu0
      %v884 = vadd.f32 %v595, %v883
      %v885 = vpop.f32.mrf.mxu0
      %886 = vmatprep.mubr.f32.mxu0 0.0
      %887 = vmatmul.mubr.f32.gmra.mxu0 %v698
      %v888 = vpop.f32.mrf.mxu0
      %v889 = vadd.f32 %v600, %v888
      %v890 = vpop.f32.mrf.mxu0
      %891 = vmatprep.mubr.f32.mxu0 0.0
      %892 = vmatmul.mubr.f32.gmra.mxu0 %v700
      %v893 = vpop.f32.mrf.mxu0
      %v894 = vadd.f32 %v605, %v893
      %v895 = vpop.f32.mrf.mxu0
      %896 = vmatprep.mubr.f32.mxu0 0.0
      %897 = vmatmul.mubr.f32.gmra.mxu0 %v702
      %v898 = vpop.f32.mrf.mxu0
      %v899 = vadd.f32 %v610, %v898
      %v900 = vpop.f32.mrf.mxu0
      %901 = vmatprep.mubr.f32.mxu0 0.0
      %902 = vmatmul.mubr.f32.gmra.mxu0 %v704
      %v903 = vpop.f32.mrf.mxu0
      %v904 = vadd.f32 %v615, %v903
      %v905 = vpop.f32.mrf.mxu0
      %906 = vmatprep.mubr.f32.mxu0 0.0
      %907 = vmatmul.mubr.f32.gmra.mxu0 %v706
      %v908 = vpop.f32.mrf.mxu0
      %v909 = vadd.f32 %v620, %v908
      %v910 = vpop.f32.mrf.mxu0
      %911 = vmatprep.mubr.f32.mxu0 0.0
      %912 = vmatmul.mubr.f32.gmra.mxu0 %v708
      %v913 = vpop.f32.mrf.mxu0
      %v914 = vadd.f32 %v625, %v913
      %v915 = vpop.f32.mrf.mxu0
      %916 = vmatprep.mubr.f32.mxu0 0.0
      %917 = vmatmul.mubr.f32.gmra.mxu0 %v710
      %v918 = vpop.f32.mrf.mxu0
      %v919 = vadd.f32 %v630, %v918
      %v920 = vpop.f32.mrf.mxu0
      %921 = vmatprep.mubr.f32.mxu0 0.0
      %922 = vmatmul.mubr.f32.gmra.mxu0 %v712
      %v923 = vpop.f32.mrf.mxu0
      %v924 = vadd.f32 %v635, %v923
      %v925 = vpop.f32.mrf.mxu0
      %926 = vmatprep.mubr.f32.mxu0 0.0
      %927 = vmatmul.mubr.f32.gmra.mxu0 %v714
      %v928 = vpop.f32.mrf.mxu0
      %v929 = vadd.f32 %v640, %v928
      %v930 = vpop.f32.mrf.mxu0
      %931 = vmatprep.mubr.f32.mxu0 0.0
      %932 = vmatmul.mubr.f32.gmra.mxu0 %v716
      %v933 = vpop.f32.mrf.mxu0
      %v934 = vadd.f32 %v645, %v933
      %v935 = vpop.f32.mrf.mxu0
      %936 = vmatprep.mubr.f32.mxu0 0.0
      %937 = vmatmul.mubr.f32.gmra.mxu0 %v718
      %v938 = vpop.f32.mrf.mxu0
      %v939 = vadd.f32 %v650, %v938
      %v940 = vpop.f32.mrf.mxu0
      %941 = vmatprep.mubr.f32.mxu0 0.0
      %942 = vmatmul.mubr.f32.gmra.mxu0 %v720
      %v943 = vpop.f32.mrf.mxu0
      %v944 = vadd.f32 %v655, %v943
      %v945 = vpop.f32.mrf.mxu0
      %946 = vdwg.mxu0
      %vm947 = vcmask 1045504
      %v948 = vrot.slane %v182, 2
      %v949 = vrot.slane %v183, 2
      %v950 = vsel %vm947, %v948, %v949
      %v951 = vrot.slane %v184, 2
      %v952 = vsel %vm947, %v949, %v951
      %v953 = vrot.slane %v185, 2
      %v954 = vrot.slane %v186, 2
      %v955 = vsel %vm947, %v953, %v954
      %v956 = vrot.slane %v187, 2
      %v957 = vsel %vm947, %v954, %v956
      %v958 = vrot.slane %v188, 2
      %v959 = vrot.slane %v189, 2
      %v960 = vsel %vm947, %v958, %v959
      %v961 = vrot.slane %v190, 2
      %v962 = vsel %vm947, %v959, %v961
      %v963 = vrot.slane %v191, 2
      %v964 = vrot.slane %v192, 2
      %v965 = vsel %vm947, %v963, %v964
      %v966 = vrot.slane %v193, 2
      %v967 = vsel %vm947, %v964, %v966
      %v968 = vrot.slane %v194, 2
      %v969 = vrot.slane %v195, 2
      %v970 = vsel %vm947, %v968, %v969
      %v971 = vrot.slane %v196, 2
      %v972 = vsel %vm947, %v969, %v971
      %v973 = vrot.slane %v197, 2
      %v974 = vrot.slane %v198, 2
      %v975 = vsel %vm947, %v973, %v974
      %v976 = vrot.slane %v199, 2
      %v977 = vsel %vm947, %v974, %v976
      %v978 = vrot.slane %v200, 2
      %v979 = vrot.slane %v201, 2
      %v980 = vsel %vm947, %v978, %v979
      %v981 = vrot.slane %v202, 2
      %v982 = vsel %vm947, %v979, %v981
      %v983 = vrot.slane %v203, 2
      %v984 = vrot.slane %v204, 2
      %v985 = vsel %vm947, %v983, %v984
      %v986 = vrot.slane %v205, 2
      %v987 = vsel %vm947, %v984, %v986
      %v988 = vrot.slane %v206, 2
      %v989 = vrot.slane %v207, 2
      %v990 = vsel %vm947, %v988, %v989
      %v991 = vrot.slane %v208, 2
      %v992 = vsel %vm947, %v989, %v991
      %v993 = vrot.slane %v209, 2
      %v994 = vrot.slane %v210, 2
      %v995 = vsel %vm947, %v993, %v994
      %v996 = vrot.slane %v211, 2
      %v997 = vsel %vm947, %v994, %v996
      %v998 = vrot.slane %v212, 2
      %v999 = vrot.slane %v213, 2
      %v1000 = vsel %vm947, %v998, %v999
      %v1001 = vrot.slane %v214, 2
      %v1002 = vsel %vm947, %v999, %v1001
      %v1003 = vrot.slane %v215, 2
      %v1004 = vrot.slane %v216, 2
      %v1005 = vsel %vm947, %v1003, %v1004
      %v1006 = vrot.slane %v217, 2
      %v1007 = vsel %vm947, %v1004, %v1006
      %v1008 = vrot.slane %v218, 2
      %v1009 = vrot.slane %v219, 2
      %v1010 = vsel %vm947, %v1008, %v1009
      %v1011 = vrot.slane %v220, 2
      %v1012 = vsel %vm947, %v1009, %v1011
      %v1013 = vrot.slane %v221, 2
      %v1014 = vrot.slane %v222, 2
      %v1015 = vsel %vm947, %v1013, %v1014
      %v1016 = vrot.slane %v223, 2
      %v1017 = vsel %vm947, %v1014, %v1016
      %v1018 = vrot.slane %v224, 2
      %v1019 = vrot.slane %v225, 2
      %v1020 = vsel %vm947, %v1018, %v1019
      %v1021 = vrot.slane %v226, 2
      %v1022 = vsel %vm947, %v1019, %v1021
      %v1023 = vrot.slane %v227, 2
      %v1024 = vrot.slane %v228, 2
      %v1025 = vsel %vm947, %v1023, %v1024
      %v1026 = vrot.slane %v229, 2
      %v1027 = vsel %vm947, %v1024, %v1026
      %s1028 = scalar_lea.vmem %s1, 16
      %v1029 = vld [vmem:[%s1028] sm:$0xff]
      %v1030 = vsel %vm368, %v950, 0
      %v1032 = vsel %vm368, %v952, 0
      %v1034 = vsel %vm368, %v955, 0
      %v1036 = vsel %vm368, %v957, 0
      %v1038 = vsel %vm368, %v960, 0
      %v1040 = vsel %vm368, %v962, 0
      %v1042 = vsel %vm368, %v965, 0
      %v1044 = vsel %vm368, %v967, 0
      %v1046 = vsel %vm368, %v970, 0
      %v1048 = vsel %vm368, %v972, 0
      %v1050 = vsel %vm368, %v975, 0
      %v1052 = vsel %vm368, %v977, 0
      %v1054 = vsel %vm368, %v980, 0
      %v1056 = vsel %vm368, %v982, 0
      %v1058 = vsel %vm368, %v985, 0
      %v1060 = vsel %vm368, %v987, 0
      %v1062 = vsel %vm368, %v990, 0
      %v1064 = vsel %vm368, %v992, 0
      %v1066 = vsel %vm368, %v995, 0
      %v1068 = vsel %vm368, %v997, 0
      %v1070 = vsel %vm368, %v1000, 0
      %v1072 = vsel %vm368, %v1002, 0
      %v1074 = vsel %vm368, %v1005, 0
      %v1076 = vsel %vm368, %v1007, 0
      %v1078 = vsel %vm368, %v1010, 0
      %v1080 = vsel %vm368, %v1012, 0
      %v1082 = vsel %vm368, %v1015, 0
      %v1084 = vsel %vm368, %v1017, 0
      %v1086 = vsel %vm368, %v1020, 0
      %v1088 = vsel %vm368, %v1022, 0
      %v1090 = vsel %vm368, %v1025, 0
      %v1092 = vsel %vm368, %v1027, 0
      %1094 = vmatprep.subr.mxu0 0.0
      %1095 = vmatpush1.msra.mxu0 0.0
      %1096 = vmatprep.subr.mxu0 0.0
      %1097 = vmatpush1.msra.mxu0 0.0
      %1098 = vmatprep.subr.mxu0 0.0
      %1099 = vmatpush1.msra.mxu0 0.0
      %1100 = vmatprep.subr.mxu0 0.0
      %1101 = vmatpush1.msra.mxu0 0.0
      %1102 = vmatprep.subr.mxu0 0.0
      %1103 = vmatpush1.msra.mxu0 0.0
      %1104 = vmatprep.subr.mxu0 0.0
      %1105 = vmatpush1.msra.mxu0 0.0
      %1106 = vmatprep.subr.mxu0 0.0
      %1107 = vmatpush1.msra.mxu0 0.0
      %1108 = vmatprep.subr.mxu0 0.0
      %1109 = vmatpush1.msra.mxu0 0.0
      %1110 = vmatprep.subr.mxu0 0.0
      %1111 = vmatpush1.msra.mxu0 0.0
      %1112 = vmatprep.subr.mxu0 0.0
      %1113 = vmatpush1.msra.mxu0 0.0
      %1114 = vmatprep.subr.mxu0 0.0
      %1115 = vmatpush1.msra.mxu0 0.0
      %1116 = vmatprep.subr.mxu0 0.0
      %1117 = vmatpush1.msra.mxu0 0.0
      %1118 = vmatprep.subr.mxu0 0.0
      %1119 = vmatpush1.msra.mxu0 0.0
      %1120 = vmatprep.subr.mxu0 0.0
      %1121 = vmatpush1.msra.mxu0 0.0
      %1122 = vmatprep.subr.mxu0 0.0
      %1123 = vmatpush1.msra.mxu0 0.0
      %1124 = vmatprep.subr.mxu0 0.0
      %1125 = vmatpush1.msra.mxu0 %v1029
      %1126 = vmatprep.subr.mxu0 0.0
      %1127 = vmatpush2.msra.mxu0 0.0
      %1128 = vmatprep.subr.mxu0 0.0
      %1129 = vmatpush2.msra.mxu0 0.0
      %1130 = vmatprep.subr.mxu0 0.0
      %1131 = vmatpush2.msra.mxu0 0.0
      %1132 = vmatprep.subr.mxu0 0.0
      %1133 = vmatpush2.msra.mxu0 0.0
      %1134 = vmatprep.subr.mxu0 0.0
      %1135 = vmatpush2.msra.mxu0 0.0
      %1136 = vmatprep.subr.mxu0 0.0
      %1137 = vmatpush2.msra.mxu0 0.0
      %1138 = vmatprep.subr.mxu0 0.0
      %1139 = vmatpush2.msra.mxu0 0.0
      %1140 = vmatprep.subr.mxu0 0.0
      %1141 = vmatpush2.msra.mxu0 0.0
      %1142 = vmatprep.subr.mxu0 0.0
      %1143 = vmatpush2.msra.mxu0 0.0
      %1144 = vmatprep.subr.mxu0 0.0
      %1145 = vmatpush2.msra.mxu0 0.0
      %1146 = vmatprep.subr.mxu0 0.0
      %1147 = vmatpush2.msra.mxu0 0.0
      %1148 = vmatprep.subr.mxu0 0.0
      %1149 = vmatpush2.msra.mxu0 0.0
      %1150 = vmatprep.subr.mxu0 0.0
      %1151 = vmatpush2.msra.mxu0 0.0
      %1152 = vmatprep.subr.mxu0 0.0
      %1153 = vmatpush2.msra.mxu0 0.0
      %1154 = vmatprep.subr.mxu0 0.0
      %1155 = vmatpush2.msra.mxu0 0.0
      %1156 = vmatprep.subr.mxu0 0.0
      %1157 = vmatpush2.msra.mxu0 0.0
      %1158 = vmatprep.mubr.f32.mxu0 0.0
      %1159 = vmatmul.mubr.f32.gmra.mxu0 %v1030
      %v1160 = vpop.f32.mrf.mxu0
      %v1161 = vadd.f32 0.0, %v1160
      %v1162 = vpop.f32.mrf.mxu0
      %1163 = vmatprep.mubr.f32.mxu0 0.0
      %1164 = vmatmul.mubr.f32.gmra.mxu0 %v1032
      %v1165 = vpop.f32.mrf.mxu0
      %v1166 = vadd.f32 0.0, %v1165
      %v1167 = vpop.f32.mrf.mxu0
      %1168 = vmatprep.mubr.f32.mxu0 0.0
      %1169 = vmatmul.mubr.f32.gmra.mxu0 %v1034
      %v1170 = vpop.f32.mrf.mxu0
      %v1171 = vadd.f32 0.0, %v1170
      %v1172 = vpop.f32.mrf.mxu0
      %1173 = vmatprep.mubr.f32.mxu0 0.0
      %1174 = vmatmul.mubr.f32.gmra.mxu0 %v1036
      %v1175 = vpop.f32.mrf.mxu0
      %v1176 = vadd.f32 0.0, %v1175
      %v1177 = vpop.f32.mrf.mxu0
      %1178 = vmatprep.mubr.f32.mxu0 0.0
      %1179 = vmatmul.mubr.f32.gmra.mxu0 %v1038
      %v1180 = vpop.f32.mrf.mxu0
      %v1181 = vadd.f32 0.0, %v1180
      %v1182 = vpop.f32.mrf.mxu0
      %1183 = vmatprep.mubr.f32.mxu0 0.0
      %1184 = vmatmul.mubr.f32.gmra.mxu0 %v1040
      %v1185 = vpop.f32.mrf.mxu0
      %v1186 = vadd.f32 0.0, %v1185
      %v1187 = vpop.f32.mrf.mxu0
      %1188 = vmatprep.mubr.f32.mxu0 0.0
      %1189 = vmatmul.mubr.f32.gmra.mxu0 %v1042
      %v1190 = vpop.f32.mrf.mxu0
      %v1191 = vadd.f32 0.0, %v1190
      %v1192 = vpop.f32.mrf.mxu0
      %1193 = vmatprep.mubr.f32.mxu0 0.0
      %1194 = vmatmul.mubr.f32.gmra.mxu0 %v1044
      %v1195 = vpop.f32.mrf.mxu0
      %v1196 = vadd.f32 0.0, %v1195
      %v1197 = vpop.f32.mrf.mxu0
      %1198 = vmatprep.mubr.f32.mxu0 0.0
      %1199 = vmatmul.mubr.f32.gmra.mxu0 %v1046
      %v1200 = vpop.f32.mrf.mxu0
      %v1201 = vadd.f32 0.0, %v1200
      %v1202 = vpop.f32.mrf.mxu0
      %1203 = vmatprep.mubr.f32.mxu0 0.0
      %1204 = vmatmul.mubr.f32.gmra.mxu0 %v1048
      %v1205 = vpop.f32.mrf.mxu0
      %v1206 = vadd.f32 0.0, %v1205
      %v1207 = vpop.f32.mrf.mxu0
      %1208 = vmatprep.mubr.f32.mxu0 0.0
      %1209 = vmatmul.mubr.f32.gmra.mxu0 %v1050
      %v1210 = vpop.f32.mrf.mxu0
      %v1211 = vadd.f32 0.0, %v1210
      %v1212 = vpop.f32.mrf.mxu0
      %1213 = vmatprep.mubr.f32.mxu0 0.0
      %1214 = vmatmul.mubr.f32.gmra.mxu0 %v1052
      %v1215 = vpop.f32.mrf.mxu0
      %v1216 = vadd.f32 0.0, %v1215
      %v1217 = vpop.f32.mrf.mxu0
      %1218 = vmatprep.mubr.f32.mxu0 0.0
      %1219 = vmatmul.mubr.f32.gmra.mxu0 %v1054
      %v1220 = vpop.f32.mrf.mxu0
      %v1221 = vadd.f32 0.0, %v1220
      %v1222 = vpop.f32.mrf.mxu0
      %1223 = vmatprep.mubr.f32.mxu0 0.0
      %1224 = vmatmul.mubr.f32.gmra.mxu0 %v1056
      %v1225 = vpop.f32.mrf.mxu0
      %v1226 = vadd.f32 0.0, %v1225
      %v1227 = vpop.f32.mrf.mxu0
      %1228 = vmatprep.mubr.f32.mxu0 0.0
      %1229 = vmatmul.mubr.f32.gmra.mxu0 %v1058
      %v1230 = vpop.f32.mrf.mxu0
      %v1231 = vadd.f32 0.0, %v1230
      %v1232 = vpop.f32.mrf.mxu0
      %1233 = vmatprep.mubr.f32.mxu0 0.0
      %1234 = vmatmul.mubr.f32.gmra.mxu0 %v1060
      %v1235 = vpop.f32.mrf.mxu0
      %v1236 = vadd.f32 0.0, %v1235
      %v1237 = vpop.f32.mrf.mxu0
      %1238 = vmatprep.mubr.f32.mxu0 0.0
      %1239 = vmatmul.mubr.f32.gmra.mxu0 %v1062
      %v1240 = vpop.f32.mrf.mxu0
      %v1241 = vadd.f32 0.0, %v1240
      %v1242 = vpop.f32.mrf.mxu0
      %1243 = vmatprep.mubr.f32.mxu0 0.0
      %1244 = vmatmul.mubr.f32.gmra.mxu0 %v1064
      %v1245 = vpop.f32.mrf.mxu0
      %v1246 = vadd.f32 0.0, %v1245
      %v1247 = vpop.f32.mrf.mxu0
      %1248 = vmatprep.mubr.f32.mxu0 0.0
      %1249 = vmatmul.mubr.f32.gmra.mxu0 %v1066
      %v1250 = vpop.f32.mrf.mxu0
      %v1251 = vadd.f32 0.0, %v1250
      %v1252 = vpop.f32.mrf.mxu0
      %1253 = vmatprep.mubr.f32.mxu0 0.0
      %1254 = vmatmul.mubr.f32.gmra.mxu0 %v1068
      %v1255 = vpop.f32.mrf.mxu0
      %v1256 = vadd.f32 0.0, %v1255
      %v1257 = vpop.f32.mrf.mxu0
      %1258 = vmatprep.mubr.f32.mxu0 0.0
      %1259 = vmatmul.mubr.f32.gmra.mxu0 %v1070
      %v1260 = vpop.f32.mrf.mxu0
      %v1261 = vadd.f32 0.0, %v1260
      %v1262 = vpop.f32.mrf.mxu0
      %1263 = vmatprep.mubr.f32.mxu0 0.0
      %1264 = vmatmul.mubr.f32.gmra.mxu0 %v1072
      %v1265 = vpop.f32.mrf.mxu0
      %v1266 = vadd.f32 0.0, %v1265
      %v1267 = vpop.f32.mrf.mxu0
      %1268 = vmatprep.mubr.f32.mxu0 0.0
      %1269 = vmatmul.mubr.f32.gmra.mxu0 %v1074
      %v1270 = vpop.f32.mrf.mxu0
      %v1271 = vadd.f32 0.0, %v1270
      %v1272 = vpop.f32.mrf.mxu0
      %1273 = vmatprep.mubr.f32.mxu0 0.0
      %1274 = vmatmul.mubr.f32.gmra.mxu0 %v1076
      %v1275 = vpop.f32.mrf.mxu0
      %v1276 = vadd.f32 0.0, %v1275
      %v1277 = vpop.f32.mrf.mxu0
      %1278 = vmatprep.mubr.f32.mxu0 0.0
      %1279 = vmatmul.mubr.f32.gmra.mxu0 %v1078
      %v1280 = vpop.f32.mrf.mxu0
      %v1281 = vadd.f32 0.0, %v1280
      %v1282 = vpop.f32.mrf.mxu0
      %1283 = vmatprep.mubr.f32.mxu0 0.0
      %1284 = vmatmul.mubr.f32.gmra.mxu0 %v1080
      %v1285 = vpop.f32.mrf.mxu0
      %v1286 = vadd.f32 0.0, %v1285
      %v1287 = vpop.f32.mrf.mxu0
      %1288 = vmatprep.mubr.f32.mxu0 0.0
      %1289 = vmatmul.mubr.f32.gmra.mxu0 %v1082
      %v1290 = vpop.f32.mrf.mxu0
      %v1291 = vadd.f32 0.0, %v1290
      %v1292 = vpop.f32.mrf.mxu0
      %1293 = vmatprep.mubr.f32.mxu0 0.0
      %1294 = vmatmul.mubr.f32.gmra.mxu0 %v1084
      %v1295 = vpop.f32.mrf.mxu0
      %v1296 = vadd.f32 0.0, %v1295
      %v1297 = vpop.f32.mrf.mxu0
      %1298 = vmatprep.mubr.f32.mxu0 0.0
      %1299 = vmatmul.mubr.f32.gmra.mxu0 %v1086
      %v1300 = vpop.f32.mrf.mxu0
      %v1301 = vadd.f32 0.0, %v1300
      %v1302 = vpop.f32.mrf.mxu0
      %1303 = vmatprep.mubr.f32.mxu0 0.0
      %1304 = vmatmul.mubr.f32.gmra.mxu0 %v1088
      %v1305 = vpop.f32.mrf.mxu0
      %v1306 = vadd.f32 0.0, %v1305
      %v1307 = vpop.f32.mrf.mxu0
      %1308 = vmatprep.mubr.f32.mxu0 0.0
      %1309 = vmatmul.mubr.f32.gmra.mxu0 %v1090
      %v1310 = vpop.f32.mrf.mxu0
      %v1311 = vadd.f32 0.0, %v1310
      %v1312 = vpop.f32.mrf.mxu0
      %1313 = vmatprep.mubr.f32.mxu0 0.0
      %1314 = vmatmul.mubr.f32.gmra.mxu0 %v1092
      %v1315 = vpop.f32.mrf.mxu0
      %v1316 = vadd.f32 0.0, %v1315
      %v1317 = vpop.f32.mrf.mxu0
      %1318 = vdwg.mxu0
      %v1319 = vadd.f32 %v789, %v1161
      %v1320 = vadd.f32 %v794, %v1166
      %v1321 = vadd.f32 %v799, %v1171
      %v1322 = vadd.f32 %v804, %v1176
      %v1323 = vadd.f32 %v809, %v1181
      %v1324 = vadd.f32 %v814, %v1186
      %v1325 = vadd.f32 %v819, %v1191
      %v1326 = vadd.f32 %v824, %v1196
      %v1327 = vadd.f32 %v829, %v1201
      %v1328 = vadd.f32 %v834, %v1206
      %v1329 = vadd.f32 %v839, %v1211
      %v1330 = vadd.f32 %v844, %v1216
      %v1331 = vadd.f32 %v849, %v1221
      %v1332 = vadd.f32 %v854, %v1226
      %v1333 = vadd.f32 %v859, %v1231
      %v1334 = vadd.f32 %v864, %v1236
      %v1335 = vadd.f32 %v869, %v1241
      %v1336 = vadd.f32 %v874, %v1246
      %v1337 = vadd.f32 %v879, %v1251
      %v1338 = vadd.f32 %v884, %v1256
      %v1339 = vadd.f32 %v889, %v1261
      %v1340 = vadd.f32 %v894, %v1266
      %v1341 = vadd.f32 %v899, %v1271
      %v1342 = vadd.f32 %v904, %v1276
      %v1343 = vadd.f32 %v909, %v1281
      %v1344 = vadd.f32 %v914, %v1286
      %v1345 = vadd.f32 %v919, %v1291
      %v1346 = vadd.f32 %v924, %v1296
      %v1347 = vadd.f32 %v929, %v1301
      %v1348 = vadd.f32 %v934, %v1306
      %v1349 = vadd.f32 %v939, %v1311
      %v1350 = vadd.f32 %v944, %v1316
      %s1351 = scalar_lea.vmem %s1, 24
      %v1352 = vld [vmem:[%s1351] sm:$0xff]
      %v1354 = vsel %vm368, %v230, 0
      %v1357 = vsel %vm368, %v231, 0
      %1359 = vmatprep.subr.mxu0 0.0
      %1360 = vmatpush1.msra.mxu0 0.0
      %1361 = vmatprep.subr.mxu0 0.0
      %1362 = vmatpush1.msra.mxu0 0.0
      %1363 = vmatprep.subr.mxu0 0.0
      %1364 = vmatpush1.msra.mxu0 0.0
      %1365 = vmatprep.subr.mxu0 0.0
      %1366 = vmatpush1.msra.mxu0 0.0
      %1367 = vmatprep.subr.mxu0 0.0
      %1368 = vmatpush1.msra.mxu0 0.0
      %1369 = vmatprep.subr.mxu0 0.0
      %1370 = vmatpush1.msra.mxu0 0.0
      %1371 = vmatprep.subr.mxu0 0.0
      %1372 = vmatpush1.msra.mxu0 0.0
      %1373 = vmatprep.subr.mxu0 0.0
      %1374 = vmatpush1.msra.mxu0 0.0
      %1375 = vmatprep.subr.mxu0 0.0
      %1376 = vmatpush1.msra.mxu0 0.0
      %1377 = vmatprep.subr.mxu0 0.0
      %1378 = vmatpush1.msra.mxu0 0.0
      %1379 = vmatprep.subr.mxu0 0.0
      %1380 = vmatpush1.msra.mxu0 0.0
      %1381 = vmatprep.subr.mxu0 0.0
      %1382 = vmatpush1.msra.mxu0 0.0
      %1383 = vmatprep.subr.mxu0 0.0
      %1384 = vmatpush1.msra.mxu0 0.0
      %1385 = vmatprep.subr.mxu0 0.0
      %1386 = vmatpush1.msra.mxu0 0.0
      %1387 = vmatprep.subr.mxu0 0.0
      %1388 = vmatpush1.msra.mxu0 0.0
      %1389 = vmatprep.subr.mxu0 0.0
      %1390 = vmatpush1.msra.mxu0 %v1352
      %1391 = vmatprep.subr.mxu0 0.0
      %1392 = vmatpush2.msra.mxu0 0.0
      %1393 = vmatprep.subr.mxu0 0.0
      %1394 = vmatpush2.msra.mxu0 0.0
      %1395 = vmatprep.subr.mxu0 0.0
      %1396 = vmatpush2.msra.mxu0 0.0
      %1397 = vmatprep.subr.mxu0 0.0
      %1398 = vmatpush2.msra.mxu0 0.0
      %1399 = vmatprep.subr.mxu0 0.0
      %1400 = vmatpush2.msra.mxu0 0.0
      %1401 = vmatprep.subr.mxu0 0.0
      %1402 = vmatpush2.msra.mxu0 0.0
      %1403 = vmatprep.subr.mxu0 0.0
      %1404 = vmatpush2.msra.mxu0 0.0
      %1405 = vmatprep.subr.mxu0 0.0
      %1406 = vmatpush2.msra.mxu0 0.0
      %1407 = vmatprep.subr.mxu0 0.0
      %1408 = vmatpush2.msra.mxu0 0.0
      %1409 = vmatprep.subr.mxu0 0.0
      %1410 = vmatpush2.msra.mxu0 0.0
      %1411 = vmatprep.subr.mxu0 0.0
      %1412 = vmatpush2.msra.mxu0 0.0
      %1413 = vmatprep.subr.mxu0 0.0
      %1414 = vmatpush2.msra.mxu0 0.0
      %1415 = vmatprep.subr.mxu0 0.0
      %1416 = vmatpush2.msra.mxu0 0.0
      %1417 = vmatprep.subr.mxu0 0.0
      %1418 = vmatpush2.msra.mxu0 0.0
      %1419 = vmatprep.subr.mxu0 0.0
      %1420 = vmatpush2.msra.mxu0 0.0
      %1421 = vmatprep.subr.mxu0 0.0
      %1422 = vmatpush2.msra.mxu0 0.0
      %1423 = vmatprep.mubr.f32.mxu0 0.0
      %1424 = vmatmul.mubr.f32.gmra.mxu0 %v662
      %v1425 = vpop.f32.mrf.mxu0
      %v1426 = vadd.f32 0.0, %v1425
      %v1427 = vpop.f32.mrf.mxu0
      %1428 = vmatprep.mubr.f32.mxu0 0.0
      %1429 = vmatmul.mubr.f32.gmra.mxu0 %v664
      %v1430 = vpop.f32.mrf.mxu0
      %v1431 = vadd.f32 0.0, %v1430
      %v1432 = vpop.f32.mrf.mxu0
      %1433 = vmatprep.mubr.f32.mxu0 0.0
      %1434 = vmatmul.mubr.f32.gmra.mxu0 %v666
      %v1435 = vpop.f32.mrf.mxu0
      %v1436 = vadd.f32 0.0, %v1435
      %v1437 = vpop.f32.mrf.mxu0
      %1438 = vmatprep.mubr.f32.mxu0 0.0
      %1439 = vmatmul.mubr.f32.gmra.mxu0 %v668
      %v1440 = vpop.f32.mrf.mxu0
      %v1441 = vadd.f32 0.0, %v1440
      %v1442 = vpop.f32.mrf.mxu0
      %1443 = vmatprep.mubr.f32.mxu0 0.0
      %1444 = vmatmul.mubr.f32.gmra.mxu0 %v670
      %v1445 = vpop.f32.mrf.mxu0
      %v1446 = vadd.f32 0.0, %v1445
      %v1447 = vpop.f32.mrf.mxu0
      %1448 = vmatprep.mubr.f32.mxu0 0.0
      %1449 = vmatmul.mubr.f32.gmra.mxu0 %v672
      %v1450 = vpop.f32.mrf.mxu0
      %v1451 = vadd.f32 0.0, %v1450
      %v1452 = vpop.f32.mrf.mxu0
      %1453 = vmatprep.mubr.f32.mxu0 0.0
      %1454 = vmatmul.mubr.f32.gmra.mxu0 %v674
      %v1455 = vpop.f32.mrf.mxu0
      %v1456 = vadd.f32 0.0, %v1455
      %v1457 = vpop.f32.mrf.mxu0
      %1458 = vmatprep.mubr.f32.mxu0 0.0
      %1459 = vmatmul.mubr.f32.gmra.mxu0 %v676
      %v1460 = vpop.f32.mrf.mxu0
      %v1461 = vadd.f32 0.0, %v1460
      %v1462 = vpop.f32.mrf.mxu0
      %1463 = vmatprep.mubr.f32.mxu0 0.0
      %1464 = vmatmul.mubr.f32.gmra.mxu0 %v678
      %v1465 = vpop.f32.mrf.mxu0
      %v1466 = vadd.f32 0.0, %v1465
      %v1467 = vpop.f32.mrf.mxu0
      %1468 = vmatprep.mubr.f32.mxu0 0.0
      %1469 = vmatmul.mubr.f32.gmra.mxu0 %v680
      %v1470 = vpop.f32.mrf.mxu0
      %v1471 = vadd.f32 0.0, %v1470
      %v1472 = vpop.f32.mrf.mxu0
      %1473 = vmatprep.mubr.f32.mxu0 0.0
      %1474 = vmatmul.mubr.f32.gmra.mxu0 %v682
      %v1475 = vpop.f32.mrf.mxu0
      %v1476 = vadd.f32 0.0, %v1475
      %v1477 = vpop.f32.mrf.mxu0
      %1478 = vmatprep.mubr.f32.mxu0 0.0
      %1479 = vmatmul.mubr.f32.gmra.mxu0 %v684
      %v1480 = vpop.f32.mrf.mxu0
      %v1481 = vadd.f32 0.0, %v1480
      %v1482 = vpop.f32.mrf.mxu0
      %1483 = vmatprep.mubr.f32.mxu0 0.0
      %1484 = vmatmul.mubr.f32.gmra.mxu0 %v686
      %v1485 = vpop.f32.mrf.mxu0
      %v1486 = vadd.f32 0.0, %v1485
      %v1487 = vpop.f32.mrf.mxu0
      %1488 = vmatprep.mubr.f32.mxu0 0.0
      %1489 = vmatmul.mubr.f32.gmra.mxu0 %v688
      %v1490 = vpop.f32.mrf.mxu0
      %v1491 = vadd.f32 0.0, %v1490
      %v1492 = vpop.f32.mrf.mxu0
      %1493 = vmatprep.mubr.f32.mxu0 0.0
      %1494 = vmatmul.mubr.f32.gmra.mxu0 %v690
      %v1495 = vpop.f32.mrf.mxu0
      %v1496 = vadd.f32 0.0, %v1495
      %v1497 = vpop.f32.mrf.mxu0
      %1498 = vmatprep.mubr.f32.mxu0 0.0
      %1499 = vmatmul.mubr.f32.gmra.mxu0 %v692
      %v1500 = vpop.f32.mrf.mxu0
      %v1501 = vadd.f32 0.0, %v1500
      %v1502 = vpop.f32.mrf.mxu0
      %1503 = vmatprep.mubr.f32.mxu0 0.0
      %1504 = vmatmul.mubr.f32.gmra.mxu0 %v694
      %v1505 = vpop.f32.mrf.mxu0
      %v1506 = vadd.f32 0.0, %v1505
      %v1507 = vpop.f32.mrf.mxu0
      %1508 = vmatprep.mubr.f32.mxu0 0.0
      %1509 = vmatmul.mubr.f32.gmra.mxu0 %v696
      %v1510 = vpop.f32.mrf.mxu0
      %v1511 = vadd.f32 0.0, %v1510
      %v1512 = vpop.f32.mrf.mxu0
      %1513 = vmatprep.mubr.f32.mxu0 0.0
      %1514 = vmatmul.mubr.f32.gmra.mxu0 %v698
      %v1515 = vpop.f32.mrf.mxu0
      %v1516 = vadd.f32 0.0, %v1515
      %v1517 = vpop.f32.mrf.mxu0
      %1518 = vmatprep.mubr.f32.mxu0 0.0
      %1519 = vmatmul.mubr.f32.gmra.mxu0 %v700
      %v1520 = vpop.f32.mrf.mxu0
      %v1521 = vadd.f32 0.0, %v1520
      %v1522 = vpop.f32.mrf.mxu0
      %1523 = vmatprep.mubr.f32.mxu0 0.0
      %1524 = vmatmul.mubr.f32.gmra.mxu0 %v702
      %v1525 = vpop.f32.mrf.mxu0
      %v1526 = vadd.f32 0.0, %v1525
      %v1527 = vpop.f32.mrf.mxu0
      %1528 = vmatprep.mubr.f32.mxu0 0.0
      %1529 = vmatmul.mubr.f32.gmra.mxu0 %v704
      %v1530 = vpop.f32.mrf.mxu0
      %v1531 = vadd.f32 0.0, %v1530
      %v1532 = vpop.f32.mrf.mxu0
      %1533 = vmatprep.mubr.f32.mxu0 0.0
      %1534 = vmatmul.mubr.f32.gmra.mxu0 %v706
      %v1535 = vpop.f32.mrf.mxu0
      %v1536 = vadd.f32 0.0, %v1535
      %v1537 = vpop.f32.mrf.mxu0
      %1538 = vmatprep.mubr.f32.mxu0 0.0
      %1539 = vmatmul.mubr.f32.gmra.mxu0 %v708
      %v1540 = vpop.f32.mrf.mxu0
      %v1541 = vadd.f32 0.0, %v1540
      %v1542 = vpop.f32.mrf.mxu0
      %1543 = vmatprep.mubr.f32.mxu0 0.0
      %1544 = vmatmul.mubr.f32.gmra.mxu0 %v710
      %v1545 = vpop.f32.mrf.mxu0
      %v1546 = vadd.f32 0.0, %v1545
      %v1547 = vpop.f32.mrf.mxu0
      %1548 = vmatprep.mubr.f32.mxu0 0.0
      %1549 = vmatmul.mubr.f32.gmra.mxu0 %v712
      %v1550 = vpop.f32.mrf.mxu0
      %v1551 = vadd.f32 0.0, %v1550
      %v1552 = vpop.f32.mrf.mxu0
      %1553 = vmatprep.mubr.f32.mxu0 0.0
      %1554 = vmatmul.mubr.f32.gmra.mxu0 %v714
      %v1555 = vpop.f32.mrf.mxu0
      %v1556 = vadd.f32 0.0, %v1555
      %v1557 = vpop.f32.mrf.mxu0
      %1558 = vmatprep.mubr.f32.mxu0 0.0
      %1559 = vmatmul.mubr.f32.gmra.mxu0 %v716
      %v1560 = vpop.f32.mrf.mxu0
      %v1561 = vadd.f32 0.0, %v1560
      %v1562 = vpop.f32.mrf.mxu0
      %1563 = vmatprep.mubr.f32.mxu0 0.0
      %1564 = vmatmul.mubr.f32.gmra.mxu0 %v718
      %v1565 = vpop.f32.mrf.mxu0
      %v1566 = vadd.f32 0.0, %v1565
      %v1567 = vpop.f32.mrf.mxu0
      %1568 = vmatprep.mubr.f32.mxu0 0.0
      %1569 = vmatmul.mubr.f32.gmra.mxu0 %v720
      %v1570 = vpop.f32.mrf.mxu0
      %v1571 = vadd.f32 0.0, %v1570
      %v1572 = vpop.f32.mrf.mxu0
      %1573 = vmatprep.mubr.f32.mxu0 0.0
      %1574 = vmatmul.mubr.f32.gmra.mxu0 %v1354
      %v1575 = vpop.f32.mrf.mxu0
      %v1576 = vadd.f32 0.0, %v1575
      %v1577 = vpop.f32.mrf.mxu0
      %1578 = vmatprep.mubr.f32.mxu0 0.0
      %1579 = vmatmul.mubr.f32.gmra.mxu0 %v1357
      %v1580 = vpop.f32.mrf.mxu0
      %v1581 = vadd.f32 0.0, %v1580
      %v1582 = vpop.f32.mrf.mxu0
      %1583 = vdwg.mxu0
      %v1584 = vadd.f32 %v1319, %v1426
      %v1585 = vadd.f32 %v1320, %v1431
      %v1586 = vadd.f32 %v1321, %v1436
      %v1587 = vadd.f32 %v1322, %v1441
      %v1588 = vadd.f32 %v1323, %v1446
      %v1589 = vadd.f32 %v1324, %v1451
      %v1590 = vadd.f32 %v1325, %v1456
      %v1591 = vadd.f32 %v1326, %v1461
      %v1592 = vadd.f32 %v1327, %v1466
      %v1593 = vadd.f32 %v1328, %v1471
      %v1594 = vadd.f32 %v1329, %v1476
      %v1595 = vadd.f32 %v1330, %v1481
      %v1596 = vadd.f32 %v1331, %v1486
      %v1597 = vadd.f32 %v1332, %v1491
      %v1598 = vadd.f32 %v1333, %v1496
      %v1599 = vadd.f32 %v1334, %v1501
      %v1600 = vadd.f32 %v1335, %v1506
      %v1601 = vadd.f32 %v1336, %v1511
      %v1602 = vadd.f32 %v1337, %v1516
      %v1603 = vadd.f32 %v1338, %v1521
      %v1604 = vadd.f32 %v1339, %v1526
      %v1605 = vadd.f32 %v1340, %v1531
      %v1606 = vadd.f32 %v1341, %v1536
      %v1607 = vadd.f32 %v1342, %v1541
      %v1608 = vadd.f32 %v1343, %v1546
      %v1609 = vadd.f32 %v1344, %v1551
      %v1610 = vadd.f32 %v1345, %v1556
      %v1611 = vadd.f32 %v1346, %v1561
      %v1612 = vadd.f32 %v1347, %v1566
      %v1613 = vadd.f32 %v1348, %v1571
      %v1614 = vadd.f32 %v1349, %v1576
      %v1615 = vadd.f32 %v1350, %v1581
      %v1617 = vrot.slane %v230, 1
      %v1618 = vrot.slane %v231, 1
      %v1619 = vsel %vm285, %v1617, %v1618
      %v1620 = vrot.slane %v232, 1
      %v1621 = vsel %vm285, %v1618, %v1620
      %s1622 = scalar_lea.vmem %s1, 32
      %v1623 = vld [vmem:[%s1622] sm:$0xff]
      %v1624 = vsel %vm368, %v1619, 0
      %v1626 = vsel %vm368, %v1621, 0
      %1628 = vmatprep.subr.mxu0 0.0
      %1629 = vmatpush1.msra.mxu0 0.0
      %1630 = vmatprep.subr.mxu0 0.0
      %1631 = vmatpush1.msra.mxu0 0.0
      %1632 = vmatprep.subr.mxu0 0.0
      %1633 = vmatpush1.msra.mxu0 0.0
      %1634 = vmatprep.subr.mxu0 0.0
      %1635 = vmatpush1.msra.mxu0 0.0
      %1636 = vmatprep.subr.mxu0 0.0
      %1637 = vmatpush1.msra.mxu0 0.0
      %1638 = vmatprep.subr.mxu0 0.0
      %1639 = vmatpush1.msra.mxu0 0.0
      %1640 = vmatprep.subr.mxu0 0.0
      %1641 = vmatpush1.msra.mxu0 0.0
      %1642 = vmatprep.subr.mxu0 0.0
      %1643 = vmatpush1.msra.mxu0 0.0
      %1644 = vmatprep.subr.mxu0 0.0
      %1645 = vmatpush1.msra.mxu0 0.0
      %1646 = vmatprep.subr.mxu0 0.0
      %1647 = vmatpush1.msra.mxu0 0.0
      %1648 = vmatprep.subr.mxu0 0.0
      %1649 = vmatpush1.msra.mxu0 0.0
      %1650 = vmatprep.subr.mxu0 0.0
      %1651 = vmatpush1.msra.mxu0 0.0
      %1652 = vmatprep.subr.mxu0 0.0
      %1653 = vmatpush1.msra.mxu0 0.0
      %1654 = vmatprep.subr.mxu0 0.0
      %1655 = vmatpush1.msra.mxu0 0.0
      %1656 = vmatprep.subr.mxu0 0.0
      %1657 = vmatpush1.msra.mxu0 0.0
      %1658 = vmatprep.subr.mxu0 0.0
      %1659 = vmatpush1.msra.mxu0 %v1623
      %1660 = vmatprep.subr.mxu0 0.0
      %1661 = vmatpush2.msra.mxu0 0.0
      %1662 = vmatprep.subr.mxu0 0.0
      %1663 = vmatpush2.msra.mxu0 0.0
      %1664 = vmatprep.subr.mxu0 0.0
      %1665 = vmatpush2.msra.mxu0 0.0
      %1666 = vmatprep.subr.mxu0 0.0
      %1667 = vmatpush2.msra.mxu0 0.0
      %1668 = vmatprep.subr.mxu0 0.0
      %1669 = vmatpush2.msra.mxu0 0.0
      %1670 = vmatprep.subr.mxu0 0.0
      %1671 = vmatpush2.msra.mxu0 0.0
      %1672 = vmatprep.subr.mxu0 0.0
      %1673 = vmatpush2.msra.mxu0 0.0
      %1674 = vmatprep.subr.mxu0 0.0
      %1675 = vmatpush2.msra.mxu0 0.0
      %1676 = vmatprep.subr.mxu0 0.0
      %1677 = vmatpush2.msra.mxu0 0.0
      %1678 = vmatprep.subr.mxu0 0.0
      %1679 = vmatpush2.msra.mxu0 0.0
      %1680 = vmatprep.subr.mxu0 0.0
      %1681 = vmatpush2.msra.mxu0 0.0
      %1682 = vmatprep.subr.mxu0 0.0
      %1683 = vmatpush2.msra.mxu0 0.0
      %1684 = vmatprep.subr.mxu0 0.0
      %1685 = vmatpush2.msra.mxu0 0.0
      %1686 = vmatprep.subr.mxu0 0.0
      %1687 = vmatpush2.msra.mxu0 0.0
      %1688 = vmatprep.subr.mxu0 0.0
      %1689 = vmatpush2.msra.mxu0 0.0
      %1690 = vmatprep.subr.mxu0 0.0
      %1691 = vmatpush2.msra.mxu0 0.0
      %1692 = vmatprep.mubr.f32.mxu0 0.0
      %1693 = vmatmul.mubr.f32.gmra.mxu0 %v373
      %v1694 = vpop.f32.mrf.mxu0
      %v1695 = vadd.f32 0.0, %v1694
      %v1696 = vpop.f32.mrf.mxu0
      %1697 = vmatprep.mubr.f32.mxu0 0.0
      %1698 = vmatmul.mubr.f32.gmra.mxu0 %v375
      %v1699 = vpop.f32.mrf.mxu0
      %v1700 = vadd.f32 0.0, %v1699
      %v1701 = vpop.f32.mrf.mxu0
      %1702 = vmatprep.mubr.f32.mxu0 0.0
      %1703 = vmatmul.mubr.f32.gmra.mxu0 %v377
      %v1704 = vpop.f32.mrf.mxu0
      %v1705 = vadd.f32 0.0, %v1704
      %v1706 = vpop.f32.mrf.mxu0
      %1707 = vmatprep.mubr.f32.mxu0 0.0
      %1708 = vmatmul.mubr.f32.gmra.mxu0 %v379
      %v1709 = vpop.f32.mrf.mxu0
      %v1710 = vadd.f32 0.0, %v1709
      %v1711 = vpop.f32.mrf.mxu0
      %1712 = vmatprep.mubr.f32.mxu0 0.0
      %1713 = vmatmul.mubr.f32.gmra.mxu0 %v381
      %v1714 = vpop.f32.mrf.mxu0
      %v1715 = vadd.f32 0.0, %v1714
      %v1716 = vpop.f32.mrf.mxu0
      %1717 = vmatprep.mubr.f32.mxu0 0.0
      %1718 = vmatmul.mubr.f32.gmra.mxu0 %v383
      %v1719 = vpop.f32.mrf.mxu0
      %v1720 = vadd.f32 0.0, %v1719
      %v1721 = vpop.f32.mrf.mxu0
      %1722 = vmatprep.mubr.f32.mxu0 0.0
      %1723 = vmatmul.mubr.f32.gmra.mxu0 %v385
      %v1724 = vpop.f32.mrf.mxu0
      %v1725 = vadd.f32 0.0, %v1724
      %v1726 = vpop.f32.mrf.mxu0
      %1727 = vmatprep.mubr.f32.mxu0 0.0
      %1728 = vmatmul.mubr.f32.gmra.mxu0 %v387
      %v1729 = vpop.f32.mrf.mxu0
      %v1730 = vadd.f32 0.0, %v1729
      %v1731 = vpop.f32.mrf.mxu0
      %1732 = vmatprep.mubr.f32.mxu0 0.0
      %1733 = vmatmul.mubr.f32.gmra.mxu0 %v389
      %v1734 = vpop.f32.mrf.mxu0
      %v1735 = vadd.f32 0.0, %v1734
      %v1736 = vpop.f32.mrf.mxu0
      %1737 = vmatprep.mubr.f32.mxu0 0.0
      %1738 = vmatmul.mubr.f32.gmra.mxu0 %v391
      %v1739 = vpop.f32.mrf.mxu0
      %v1740 = vadd.f32 0.0, %v1739
      %v1741 = vpop.f32.mrf.mxu0
      %1742 = vmatprep.mubr.f32.mxu0 0.0
      %1743 = vmatmul.mubr.f32.gmra.mxu0 %v393
      %v1744 = vpop.f32.mrf.mxu0
      %v1745 = vadd.f32 0.0, %v1744
      %v1746 = vpop.f32.mrf.mxu0
      %1747 = vmatprep.mubr.f32.mxu0 0.0
      %1748 = vmatmul.mubr.f32.gmra.mxu0 %v395
      %v1749 = vpop.f32.mrf.mxu0
      %v1750 = vadd.f32 0.0, %v1749
      %v1751 = vpop.f32.mrf.mxu0
      %1752 = vmatprep.mubr.f32.mxu0 0.0
      %1753 = vmatmul.mubr.f32.gmra.mxu0 %v397
      %v1754 = vpop.f32.mrf.mxu0
      %v1755 = vadd.f32 0.0, %v1754
      %v1756 = vpop.f32.mrf.mxu0
      %1757 = vmatprep.mubr.f32.mxu0 0.0
      %1758 = vmatmul.mubr.f32.gmra.mxu0 %v399
      %v1759 = vpop.f32.mrf.mxu0
      %v1760 = vadd.f32 0.0, %v1759
      %v1761 = vpop.f32.mrf.mxu0
      %1762 = vmatprep.mubr.f32.mxu0 0.0
      %1763 = vmatmul.mubr.f32.gmra.mxu0 %v401
      %v1764 = vpop.f32.mrf.mxu0
      %v1765 = vadd.f32 0.0, %v1764
      %v1766 = vpop.f32.mrf.mxu0
      %1767 = vmatprep.mubr.f32.mxu0 0.0
      %1768 = vmatmul.mubr.f32.gmra.mxu0 %v403
      %v1769 = vpop.f32.mrf.mxu0
      %v1770 = vadd.f32 0.0, %v1769
      %v1771 = vpop.f32.mrf.mxu0
      %1772 = vmatprep.mubr.f32.mxu0 0.0
      %1773 = vmatmul.mubr.f32.gmra.mxu0 %v405
      %v1774 = vpop.f32.mrf.mxu0
      %v1775 = vadd.f32 0.0, %v1774
      %v1776 = vpop.f32.mrf.mxu0
      %1777 = vmatprep.mubr.f32.mxu0 0.0
      %1778 = vmatmul.mubr.f32.gmra.mxu0 %v407
      %v1779 = vpop.f32.mrf.mxu0
      %v1780 = vadd.f32 0.0, %v1779
      %v1781 = vpop.f32.mrf.mxu0
      %1782 = vmatprep.mubr.f32.mxu0 0.0
      %1783 = vmatmul.mubr.f32.gmra.mxu0 %v409
      %v1784 = vpop.f32.mrf.mxu0
      %v1785 = vadd.f32 0.0, %v1784
      %v1786 = vpop.f32.mrf.mxu0
      %1787 = vmatprep.mubr.f32.mxu0 0.0
      %1788 = vmatmul.mubr.f32.gmra.mxu0 %v411
      %v1789 = vpop.f32.mrf.mxu0
      %v1790 = vadd.f32 0.0, %v1789
      %v1791 = vpop.f32.mrf.mxu0
      %1792 = vmatprep.mubr.f32.mxu0 0.0
      %1793 = vmatmul.mubr.f32.gmra.mxu0 %v413
      %v1794 = vpop.f32.mrf.mxu0
      %v1795 = vadd.f32 0.0, %v1794
      %v1796 = vpop.f32.mrf.mxu0
      %1797 = vmatprep.mubr.f32.mxu0 0.0
      %1798 = vmatmul.mubr.f32.gmra.mxu0 %v415
      %v1799 = vpop.f32.mrf.mxu0
      %v1800 = vadd.f32 0.0, %v1799
      %v1801 = vpop.f32.mrf.mxu0
      %1802 = vmatprep.mubr.f32.mxu0 0.0
      %1803 = vmatmul.mubr.f32.gmra.mxu0 %v417
      %v1804 = vpop.f32.mrf.mxu0
      %v1805 = vadd.f32 0.0, %v1804
      %v1806 = vpop.f32.mrf.mxu0
      %1807 = vmatprep.mubr.f32.mxu0 0.0
      %1808 = vmatmul.mubr.f32.gmra.mxu0 %v419
      %v1809 = vpop.f32.mrf.mxu0
      %v1810 = vadd.f32 0.0, %v1809
      %v1811 = vpop.f32.mrf.mxu0
      %1812 = vmatprep.mubr.f32.mxu0 0.0
      %1813 = vmatmul.mubr.f32.gmra.mxu0 %v421
      %v1814 = vpop.f32.mrf.mxu0
      %v1815 = vadd.f32 0.0, %v1814
      %v1816 = vpop.f32.mrf.mxu0
      %1817 = vmatprep.mubr.f32.mxu0 0.0
      %1818 = vmatmul.mubr.f32.gmra.mxu0 %v423
      %v1819 = vpop.f32.mrf.mxu0
      %v1820 = vadd.f32 0.0, %v1819
      %v1821 = vpop.f32.mrf.mxu0
      %1822 = vmatprep.mubr.f32.mxu0 0.0
      %1823 = vmatmul.mubr.f32.gmra.mxu0 %v425
      %v1824 = vpop.f32.mrf.mxu0
      %v1825 = vadd.f32 0.0, %v1824
      %v1826 = vpop.f32.mrf.mxu0
      %1827 = vmatprep.mubr.f32.mxu0 0.0
      %1828 = vmatmul.mubr.f32.gmra.mxu0 %v427
      %v1829 = vpop.f32.mrf.mxu0
      %v1830 = vadd.f32 0.0, %v1829
      %v1831 = vpop.f32.mrf.mxu0
      %1832 = vmatprep.mubr.f32.mxu0 0.0
      %1833 = vmatmul.mubr.f32.gmra.mxu0 %v429
      %v1834 = vpop.f32.mrf.mxu0
      %v1835 = vadd.f32 0.0, %v1834
      %v1836 = vpop.f32.mrf.mxu0
      %1837 = vmatprep.mubr.f32.mxu0 0.0
      %1838 = vmatmul.mubr.f32.gmra.mxu0 %v431
      %v1839 = vpop.f32.mrf.mxu0
      %v1840 = vadd.f32 0.0, %v1839
      %v1841 = vpop.f32.mrf.mxu0
      %1842 = vmatprep.mubr.f32.mxu0 0.0
      %1843 = vmatmul.mubr.f32.gmra.mxu0 %v1624
      %v1844 = vpop.f32.mrf.mxu0
      %v1845 = vadd.f32 0.0, %v1844
      %v1846 = vpop.f32.mrf.mxu0
      %1847 = vmatprep.mubr.f32.mxu0 0.0
      %1848 = vmatmul.mubr.f32.gmra.mxu0 %v1626
      %v1849 = vpop.f32.mrf.mxu0
      %v1850 = vadd.f32 0.0, %v1849
      %v1851 = vpop.f32.mrf.mxu0
      %1852 = vdwg.mxu0
      %v1853 = vadd.f32 %v1584, %v1695
      %v1854 = vadd.f32 %v1585, %v1700
      %v1855 = vadd.f32 %v1586, %v1705
      %v1856 = vadd.f32 %v1587, %v1710
      %v1857 = vadd.f32 %v1588, %v1715
      %v1858 = vadd.f32 %v1589, %v1720
      %v1859 = vadd.f32 %v1590, %v1725
      %v1860 = vadd.f32 %v1591, %v1730
      %v1861 = vadd.f32 %v1592, %v1735
      %v1862 = vadd.f32 %v1593, %v1740
      %v1863 = vadd.f32 %v1594, %v1745
      %v1864 = vadd.f32 %v1595, %v1750
      %v1865 = vadd.f32 %v1596, %v1755
      %v1866 = vadd.f32 %v1597, %v1760
      %v1867 = vadd.f32 %v1598, %v1765
      %v1868 = vadd.f32 %v1599, %v1770
      %v1869 = vadd.f32 %v1600, %v1775
      %v1870 = vadd.f32 %v1601, %v1780
      %v1871 = vadd.f32 %v1602, %v1785
      %v1872 = vadd.f32 %v1603, %v1790
      %v1873 = vadd.f32 %v1604, %v1795
      %v1874 = vadd.f32 %v1605, %v1800
      %v1875 = vadd.f32 %v1606, %v1805
      %v1876 = vadd.f32 %v1607, %v1810
      %v1877 = vadd.f32 %v1608, %v1815
      %v1878 = vadd.f32 %v1609, %v1820
      %v1879 = vadd.f32 %v1610, %v1825
      %v1880 = vadd.f32 %v1611, %v1830
      %v1881 = vadd.f32 %v1612, %v1835
      %v1882 = vadd.f32 %v1613, %v1840
      %v1883 = vadd.f32 %v1614, %v1845
      %v1884 = vadd.f32 %v1615, %v1850
      %v1885 = vrot.slane %v230, 2
      %v1886 = vrot.slane %v231, 2
      %v1887 = vsel %vm947, %v1885, %v1886
      %v1888 = vrot.slane %v232, 2
      %v1889 = vsel %vm947, %v1886, %v1888
      %s1890 = scalar_lea.vmem %s1, 40
      %v1891 = vld [vmem:[%s1890] sm:$0xff]
      %v1892 = vsel %vm368, %v1887, 0
      %v1894 = vsel %vm368, %v1889, 0
      %1896 = vmatprep.subr.mxu0 0.0
      %1897 = vmatpush1.msra.mxu0 0.0
      %1898 = vmatprep.subr.mxu0 0.0
      %1899 = vmatpush1.msra.mxu0 0.0
      %1900 = vmatprep.subr.mxu0 0.0
      %1901 = vmatpush1.msra.mxu0 0.0
      %1902 = vmatprep.subr.mxu0 0.0
      %1903 = vmatpush1.msra.mxu0 0.0
      %1904 = vmatprep.subr.mxu0 0.0
      %1905 = vmatpush1.msra.mxu0 0.0
      %1906 = vmatprep.subr.mxu0 0.0
      %1907 = vmatpush1.msra.mxu0 0.0
      %1908 = vmatprep.subr.mxu0 0.0
      %1909 = vmatpush1.msra.mxu0 0.0
      %1910 = vmatprep.subr.mxu0 0.0
      %1911 = vmatpush1.msra.mxu0 0.0
      %1912 = vmatprep.subr.mxu0 0.0
      %1913 = vmatpush1.msra.mxu0 0.0
      %1914 = vmatprep.subr.mxu0 0.0
      %1915 = vmatpush1.msra.mxu0 0.0
      %1916 = vmatprep.subr.mxu0 0.0
      %1917 = vmatpush1.msra.mxu0 0.0
      %1918 = vmatprep.subr.mxu0 0.0
      %1919 = vmatpush1.msra.mxu0 0.0
      %1920 = vmatprep.subr.mxu0 0.0
      %1921 = vmatpush1.msra.mxu0 0.0
      %1922 = vmatprep.subr.mxu0 0.0
      %1923 = vmatpush1.msra.mxu0 0.0
      %1924 = vmatprep.subr.mxu0 0.0
      %1925 = vmatpush1.msra.mxu0 0.0
      %1926 = vmatprep.subr.mxu0 0.0
      %1927 = vmatpush1.msra.mxu0 %v1891
      %1928 = vmatprep.subr.mxu0 0.0
      %1929 = vmatpush2.msra.mxu0 0.0
      %1930 = vmatprep.subr.mxu0 0.0
      %1931 = vmatpush2.msra.mxu0 0.0
      %1932 = vmatprep.subr.mxu0 0.0
      %1933 = vmatpush2.msra.mxu0 0.0
      %1934 = vmatprep.subr.mxu0 0.0
      %1935 = vmatpush2.msra.mxu0 0.0
      %1936 = vmatprep.subr.mxu0 0.0
      %1937 = vmatpush2.msra.mxu0 0.0
      %1938 = vmatprep.subr.mxu0 0.0
      %1939 = vmatpush2.msra.mxu0 0.0
      %1940 = vmatprep.subr.mxu0 0.0
      %1941 = vmatpush2.msra.mxu0 0.0
      %1942 = vmatprep.subr.mxu0 0.0
      %1943 = vmatpush2.msra.mxu0 0.0
      %1944 = vmatprep.subr.mxu0 0.0
      %1945 = vmatpush2.msra.mxu0 0.0
      %1946 = vmatprep.subr.mxu0 0.0
      %1947 = vmatpush2.msra.mxu0 0.0
      %1948 = vmatprep.subr.mxu0 0.0
      %1949 = vmatpush2.msra.mxu0 0.0
      %1950 = vmatprep.subr.mxu0 0.0
      %1951 = vmatpush2.msra.mxu0 0.0
      %1952 = vmatprep.subr.mxu0 0.0
      %1953 = vmatpush2.msra.mxu0 0.0
      %1954 = vmatprep.subr.mxu0 0.0
      %1955 = vmatpush2.msra.mxu0 0.0
      %1956 = vmatprep.subr.mxu0 0.0
      %1957 = vmatpush2.msra.mxu0 0.0
      %1958 = vmatprep.subr.mxu0 0.0
      %1959 = vmatpush2.msra.mxu0 0.0
      %1960 = vmatprep.mubr.f32.mxu0 0.0
      %1961 = vmatmul.mubr.f32.gmra.mxu0 %v1034
      %v1962 = vpop.f32.mrf.mxu0
      %v1963 = vadd.f32 0.0, %v1962
      %v1964 = vpop.f32.mrf.mxu0
      %1965 = vmatprep.mubr.f32.mxu0 0.0
      %1966 = vmatmul.mubr.f32.gmra.mxu0 %v1036
      %v1967 = vpop.f32.mrf.mxu0
      %v1968 = vadd.f32 0.0, %v1967
      %v1969 = vpop.f32.mrf.mxu0
      %1970 = vmatprep.mubr.f32.mxu0 0.0
      %1971 = vmatmul.mubr.f32.gmra.mxu0 %v1038
      %v1972 = vpop.f32.mrf.mxu0
      %v1973 = vadd.f32 0.0, %v1972
      %v1974 = vpop.f32.mrf.mxu0
      %1975 = vmatprep.mubr.f32.mxu0 0.0
      %1976 = vmatmul.mubr.f32.gmra.mxu0 %v1040
      %v1977 = vpop.f32.mrf.mxu0
      %v1978 = vadd.f32 0.0, %v1977
      %v1979 = vpop.f32.mrf.mxu0
      %1980 = vmatprep.mubr.f32.mxu0 0.0
      %1981 = vmatmul.mubr.f32.gmra.mxu0 %v1042
      %v1982 = vpop.f32.mrf.mxu0
      %v1983 = vadd.f32 0.0, %v1982
      %v1984 = vpop.f32.mrf.mxu0
      %1985 = vmatprep.mubr.f32.mxu0 0.0
      %1986 = vmatmul.mubr.f32.gmra.mxu0 %v1044
      %v1987 = vpop.f32.mrf.mxu0
      %v1988 = vadd.f32 0.0, %v1987
      %v1989 = vpop.f32.mrf.mxu0
      %1990 = vmatprep.mubr.f32.mxu0 0.0
      %1991 = vmatmul.mubr.f32.gmra.mxu0 %v1046
      %v1992 = vpop.f32.mrf.mxu0
      %v1993 = vadd.f32 0.0, %v1992
      %v1994 = vpop.f32.mrf.mxu0
      %1995 = vmatprep.mubr.f32.mxu0 0.0
      %1996 = vmatmul.mubr.f32.gmra.mxu0 %v1048
      %v1997 = vpop.f32.mrf.mxu0
      %v1998 = vadd.f32 0.0, %v1997
      %v1999 = vpop.f32.mrf.mxu0
      %2000 = vmatprep.mubr.f32.mxu0 0.0
      %2001 = vmatmul.mubr.f32.gmra.mxu0 %v1050
      %v2002 = vpop.f32.mrf.mxu0
      %v2003 = vadd.f32 0.0, %v2002
      %v2004 = vpop.f32.mrf.mxu0
      %2005 = vmatprep.mubr.f32.mxu0 0.0
      %2006 = vmatmul.mubr.f32.gmra.mxu0 %v1052
      %v2007 = vpop.f32.mrf.mxu0
      %v2008 = vadd.f32 0.0, %v2007
      %v2009 = vpop.f32.mrf.mxu0
      %2010 = vmatprep.mubr.f32.mxu0 0.0
      %2011 = vmatmul.mubr.f32.gmra.mxu0 %v1054
      %v2012 = vpop.f32.mrf.mxu0
      %v2013 = vadd.f32 0.0, %v2012
      %v2014 = vpop.f32.mrf.mxu0
      %2015 = vmatprep.mubr.f32.mxu0 0.0
      %2016 = vmatmul.mubr.f32.gmra.mxu0 %v1056
      %v2017 = vpop.f32.mrf.mxu0
      %v2018 = vadd.f32 0.0, %v2017
      %v2019 = vpop.f32.mrf.mxu0
      %2020 = vmatprep.mubr.f32.mxu0 0.0
      %2021 = vmatmul.mubr.f32.gmra.mxu0 %v1058
      %v2022 = vpop.f32.mrf.mxu0
      %v2023 = vadd.f32 0.0, %v2022
      %v2024 = vpop.f32.mrf.mxu0
      %2025 = vmatprep.mubr.f32.mxu0 0.0
      %2026 = vmatmul.mubr.f32.gmra.mxu0 %v1060
      %v2027 = vpop.f32.mrf.mxu0
      %v2028 = vadd.f32 0.0, %v2027
      %v2029 = vpop.f32.mrf.mxu0
      %2030 = vmatprep.mubr.f32.mxu0 0.0
      %2031 = vmatmul.mubr.f32.gmra.mxu0 %v1062
      %v2032 = vpop.f32.mrf.mxu0
      %v2033 = vadd.f32 0.0, %v2032
      %v2034 = vpop.f32.mrf.mxu0
      %2035 = vmatprep.mubr.f32.mxu0 0.0
      %2036 = vmatmul.mubr.f32.gmra.mxu0 %v1064
      %v2037 = vpop.f32.mrf.mxu0
      %v2038 = vadd.f32 0.0, %v2037
      %v2039 = vpop.f32.mrf.mxu0
      %2040 = vmatprep.mubr.f32.mxu0 0.0
      %2041 = vmatmul.mubr.f32.gmra.mxu0 %v1066
      %v2042 = vpop.f32.mrf.mxu0
      %v2043 = vadd.f32 0.0, %v2042
      %v2044 = vpop.f32.mrf.mxu0
      %2045 = vmatprep.mubr.f32.mxu0 0.0
      %2046 = vmatmul.mubr.f32.gmra.mxu0 %v1068
      %v2047 = vpop.f32.mrf.mxu0
      %v2048 = vadd.f32 0.0, %v2047
      %v2049 = vpop.f32.mrf.mxu0
      %2050 = vmatprep.mubr.f32.mxu0 0.0
      %2051 = vmatmul.mubr.f32.gmra.mxu0 %v1070
      %v2052 = vpop.f32.mrf.mxu0
      %v2053 = vadd.f32 0.0, %v2052
      %v2054 = vpop.f32.mrf.mxu0
      %2055 = vmatprep.mubr.f32.mxu0 0.0
      %2056 = vmatmul.mubr.f32.gmra.mxu0 %v1072
      %v2057 = vpop.f32.mrf.mxu0
      %v2058 = vadd.f32 0.0, %v2057
      %v2059 = vpop.f32.mrf.mxu0
      %2060 = vmatprep.mubr.f32.mxu0 0.0
      %2061 = vmatmul.mubr.f32.gmra.mxu0 %v1074
      %v2062 = vpop.f32.mrf.mxu0
      %v2063 = vadd.f32 0.0, %v2062
      %v2064 = vpop.f32.mrf.mxu0
      %2065 = vmatprep.mubr.f32.mxu0 0.0
      %2066 = vmatmul.mubr.f32.gmra.mxu0 %v1076
      %v2067 = vpop.f32.mrf.mxu0
      %v2068 = vadd.f32 0.0, %v2067
      %v2069 = vpop.f32.mrf.mxu0
      %2070 = vmatprep.mubr.f32.mxu0 0.0
      %2071 = vmatmul.mubr.f32.gmra.mxu0 %v1078
      %v2072 = vpop.f32.mrf.mxu0
      %v2073 = vadd.f32 0.0, %v2072
      %v2074 = vpop.f32.mrf.mxu0
      %2075 = vmatprep.mubr.f32.mxu0 0.0
      %2076 = vmatmul.mubr.f32.gmra.mxu0 %v1080
      %v2077 = vpop.f32.mrf.mxu0
      %v2078 = vadd.f32 0.0, %v2077
      %v2079 = vpop.f32.mrf.mxu0
      %2080 = vmatprep.mubr.f32.mxu0 0.0
      %2081 = vmatmul.mubr.f32.gmra.mxu0 %v1082
      %v2082 = vpop.f32.mrf.mxu0
      %v2083 = vadd.f32 0.0, %v2082
      %v2084 = vpop.f32.mrf.mxu0
      %2085 = vmatprep.mubr.f32.mxu0 0.0
      %2086 = vmatmul.mubr.f32.gmra.mxu0 %v1084
      %v2087 = vpop.f32.mrf.mxu0
      %v2088 = vadd.f32 0.0, %v2087
      %v2089 = vpop.f32.mrf.mxu0
      %2090 = vmatprep.mubr.f32.mxu0 0.0
      %2091 = vmatmul.mubr.f32.gmra.mxu0 %v1086
      %v2092 = vpop.f32.mrf.mxu0
      %v2093 = vadd.f32 0.0, %v2092
      %v2094 = vpop.f32.mrf.mxu0
      %2095 = vmatprep.mubr.f32.mxu0 0.0
      %2096 = vmatmul.mubr.f32.gmra.mxu0 %v1088
      %v2097 = vpop.f32.mrf.mxu0
      %v2098 = vadd.f32 0.0, %v2097
      %v2099 = vpop.f32.mrf.mxu0
      %2100 = vmatprep.mubr.f32.mxu0 0.0
      %2101 = vmatmul.mubr.f32.gmra.mxu0 %v1090
      %v2102 = vpop.f32.mrf.mxu0
      %v2103 = vadd.f32 0.0, %v2102
      %v2104 = vpop.f32.mrf.mxu0
      %2105 = vmatprep.mubr.f32.mxu0 0.0
      %2106 = vmatmul.mubr.f32.gmra.mxu0 %v1092
      %v2107 = vpop.f32.mrf.mxu0
      %v2108 = vadd.f32 0.0, %v2107
      %v2109 = vpop.f32.mrf.mxu0
      %2110 = vmatprep.mubr.f32.mxu0 0.0
      %2111 = vmatmul.mubr.f32.gmra.mxu0 %v1892
      %v2112 = vpop.f32.mrf.mxu0
      %v2113 = vadd.f32 0.0, %v2112
      %v2114 = vpop.f32.mrf.mxu0
      %2115 = vmatprep.mubr.f32.mxu0 0.0
      %2116 = vmatmul.mubr.f32.gmra.mxu0 %v1894
      %v2117 = vpop.f32.mrf.mxu0
      %v2118 = vadd.f32 0.0, %v2117
      %v2119 = vpop.f32.mrf.mxu0
      %2120 = vdwg.mxu0
      %v2121 = vadd.f32 %v1853, %v1963
      %v2122 = vadd.f32 %v1854, %v1968
      %v2123 = vadd.f32 %v1855, %v1973
      %v2124 = vadd.f32 %v1856, %v1978
      %v2125 = vadd.f32 %v1857, %v1983
      %v2126 = vadd.f32 %v1858, %v1988
      %v2127 = vadd.f32 %v1859, %v1993
      %v2128 = vadd.f32 %v1860, %v1998
      %v2129 = vadd.f32 %v1861, %v2003
      %v2130 = vadd.f32 %v1862, %v2008
      %v2131 = vadd.f32 %v1863, %v2013
      %v2132 = vadd.f32 %v1864, %v2018
      %v2133 = vadd.f32 %v1865, %v2023
      %v2134 = vadd.f32 %v1866, %v2028
      %v2135 = vadd.f32 %v1867, %v2033
      %v2136 = vadd.f32 %v1868, %v2038
      %v2137 = vadd.f32 %v1869, %v2043
      %v2138 = vadd.f32 %v1870, %v2048
      %v2139 = vadd.f32 %v1871, %v2053
      %v2140 = vadd.f32 %v1872, %v2058
      %v2141 = vadd.f32 %v1873, %v2063
      %v2142 = vadd.f32 %v1874, %v2068
      %v2143 = vadd.f32 %v1875, %v2073
      %v2144 = vadd.f32 %v1876, %v2078
      %v2145 = vadd.f32 %v1877, %v2083
      %v2146 = vadd.f32 %v1878, %v2088
      %v2147 = vadd.f32 %v1879, %v2093
      %v2148 = vadd.f32 %v1880, %v2098
      %v2149 = vadd.f32 %v1881, %v2103
      %v2150 = vadd.f32 %v1882, %v2108
      %v2151 = vadd.f32 %v1883, %v2113
      %v2152 = vadd.f32 %v1884, %v2118
      %s2153 = scalar_lea.vmem %s1, 48
      %v2154 = vld [vmem:[%s2153] sm:$0xff]
      %v2156 = vsel %vm368, %v233, 0
      %v2159 = vsel %vm368, %v234, 0
      %2161 = vmatprep.subr.mxu0 0.0
      %2162 = vmatpush1.msra.mxu0 0.0
      %2163 = vmatprep.subr.mxu0 0.0
      %2164 = vmatpush1.msra.mxu0 0.0
      %2165 = vmatprep.subr.mxu0 0.0
      %2166 = vmatpush1.msra.mxu0 0.0
      %2167 = vmatprep.subr.mxu0 0.0
      %2168 = vmatpush1.msra.mxu0 0.0
      %2169 = vmatprep.subr.mxu0 0.0
      %2170 = vmatpush1.msra.mxu0 0.0
      %2171 = vmatprep.subr.mxu0 0.0
      %2172 = vmatpush1.msra.mxu0 0.0
      %2173 = vmatprep.subr.mxu0 0.0
      %2174 = vmatpush1.msra.mxu0 0.0
      %2175 = vmatprep.subr.mxu0 0.0
      %2176 = vmatpush1.msra.mxu0 0.0
      %2177 = vmatprep.subr.mxu0 0.0
      %2178 = vmatpush1.msra.mxu0 0.0
      %2179 = vmatprep.subr.mxu0 0.0
      %2180 = vmatpush1.msra.mxu0 0.0
      %2181 = vmatprep.subr.mxu0 0.0
      %2182 = vmatpush1.msra.mxu0 0.0
      %2183 = vmatprep.subr.mxu0 0.0
      %2184 = vmatpush1.msra.mxu0 0.0
      %2185 = vmatprep.subr.mxu0 0.0
      %2186 = vmatpush1.msra.mxu0 0.0
      %2187 = vmatprep.subr.mxu0 0.0
      %2188 = vmatpush1.msra.mxu0 0.0
      %2189 = vmatprep.subr.mxu0 0.0
      %2190 = vmatpush1.msra.mxu0 0.0
      %2191 = vmatprep.subr.mxu0 0.0
      %2192 = vmatpush1.msra.mxu0 %v2154
      %2193 = vmatprep.subr.mxu0 0.0
      %2194 = vmatpush2.msra.mxu0 0.0
      %2195 = vmatprep.subr.mxu0 0.0
      %2196 = vmatpush2.msra.mxu0 0.0
      %2197 = vmatprep.subr.mxu0 0.0
      %2198 = vmatpush2.msra.mxu0 0.0
      %2199 = vmatprep.subr.mxu0 0.0
      %2200 = vmatpush2.msra.mxu0 0.0
      %2201 = vmatprep.subr.mxu0 0.0
      %2202 = vmatpush2.msra.mxu0 0.0
      %2203 = vmatprep.subr.mxu0 0.0
      %2204 = vmatpush2.msra.mxu0 0.0
      %2205 = vmatprep.subr.mxu0 0.0
      %2206 = vmatpush2.msra.mxu0 0.0
      %2207 = vmatprep.subr.mxu0 0.0
      %2208 = vmatpush2.msra.mxu0 0.0
      %2209 = vmatprep.subr.mxu0 0.0
      %2210 = vmatpush2.msra.mxu0 0.0
      %2211 = vmatprep.subr.mxu0 0.0
      %2212 = vmatpush2.msra.mxu0 0.0
      %2213 = vmatprep.subr.mxu0 0.0
      %2214 = vmatpush2.msra.mxu0 0.0
      %2215 = vmatprep.subr.mxu0 0.0
      %2216 = vmatpush2.msra.mxu0 0.0
      %2217 = vmatprep.subr.mxu0 0.0
      %2218 = vmatpush2.msra.mxu0 0.0
      %2219 = vmatprep.subr.mxu0 0.0
      %2220 = vmatpush2.msra.mxu0 0.0
      %2221 = vmatprep.subr.mxu0 0.0
      %2222 = vmatpush2.msra.mxu0 0.0
      %2223 = vmatprep.subr.mxu0 0.0
      %2224 = vmatpush2.msra.mxu0 0.0
      %2225 = vmatprep.mubr.f32.mxu0 0.0
      %2226 = vmatmul.mubr.f32.gmra.mxu0 %v666
      %v2227 = vpop.f32.mrf.mxu0
      %v2228 = vadd.f32 0.0, %v2227
      %v2229 = vpop.f32.mrf.mxu0
      %2230 = vmatprep.mubr.f32.mxu0 0.0
      %2231 = vmatmul.mubr.f32.gmra.mxu0 %v668
      %v2232 = vpop.f32.mrf.mxu0
      %v2233 = vadd.f32 0.0, %v2232
      %v2234 = vpop.f32.mrf.mxu0
      %2235 = vmatprep.mubr.f32.mxu0 0.0
      %2236 = vmatmul.mubr.f32.gmra.mxu0 %v670
      %v2237 = vpop.f32.mrf.mxu0
      %v2238 = vadd.f32 0.0, %v2237
      %v2239 = vpop.f32.mrf.mxu0
      %2240 = vmatprep.mubr.f32.mxu0 0.0
      %2241 = vmatmul.mubr.f32.gmra.mxu0 %v672
      %v2242 = vpop.f32.mrf.mxu0
      %v2243 = vadd.f32 0.0, %v2242
      %v2244 = vpop.f32.mrf.mxu0
      %2245 = vmatprep.mubr.f32.mxu0 0.0
      %2246 = vmatmul.mubr.f32.gmra.mxu0 %v674
      %v2247 = vpop.f32.mrf.mxu0
      %v2248 = vadd.f32 0.0, %v2247
      %v2249 = vpop.f32.mrf.mxu0
      %2250 = vmatprep.mubr.f32.mxu0 0.0
      %2251 = vmatmul.mubr.f32.gmra.mxu0 %v676
      %v2252 = vpop.f32.mrf.mxu0
      %v2253 = vadd.f32 0.0, %v2252
      %v2254 = vpop.f32.mrf.mxu0
      %2255 = vmatprep.mubr.f32.mxu0 0.0
      %2256 = vmatmul.mubr.f32.gmra.mxu0 %v678
      %v2257 = vpop.f32.mrf.mxu0
      %v2258 = vadd.f32 0.0, %v2257
      %v2259 = vpop.f32.mrf.mxu0
      %2260 = vmatprep.mubr.f32.mxu0 0.0
      %2261 = vmatmul.mubr.f32.gmra.mxu0 %v680
      %v2262 = vpop.f32.mrf.mxu0
      %v2263 = vadd.f32 0.0, %v2262
      %v2264 = vpop.f32.mrf.mxu0
      %2265 = vmatprep.mubr.f32.mxu0 0.0
      %2266 = vmatmul.mubr.f32.gmra.mxu0 %v682
      %v2267 = vpop.f32.mrf.mxu0
      %v2268 = vadd.f32 0.0, %v2267
      %v2269 = vpop.f32.mrf.mxu0
      %2270 = vmatprep.mubr.f32.mxu0 0.0
      %2271 = vmatmul.mubr.f32.gmra.mxu0 %v684
      %v2272 = vpop.f32.mrf.mxu0
      %v2273 = vadd.f32 0.0, %v2272
      %v2274 = vpop.f32.mrf.mxu0
      %2275 = vmatprep.mubr.f32.mxu0 0.0
      %2276 = vmatmul.mubr.f32.gmra.mxu0 %v686
      %v2277 = vpop.f32.mrf.mxu0
      %v2278 = vadd.f32 0.0, %v2277
      %v2279 = vpop.f32.mrf.mxu0
      %2280 = vmatprep.mubr.f32.mxu0 0.0
      %2281 = vmatmul.mubr.f32.gmra.mxu0 %v688
      %v2282 = vpop.f32.mrf.mxu0
      %v2283 = vadd.f32 0.0, %v2282
      %v2284 = vpop.f32.mrf.mxu0
      %2285 = vmatprep.mubr.f32.mxu0 0.0
      %2286 = vmatmul.mubr.f32.gmra.mxu0 %v690
      %v2287 = vpop.f32.mrf.mxu0
      %v2288 = vadd.f32 0.0, %v2287
      %v2289 = vpop.f32.mrf.mxu0
      %2290 = vmatprep.mubr.f32.mxu0 0.0
      %2291 = vmatmul.mubr.f32.gmra.mxu0 %v692
      %v2292 = vpop.f32.mrf.mxu0
      %v2293 = vadd.f32 0.0, %v2292
      %v2294 = vpop.f32.mrf.mxu0
      %2295 = vmatprep.mubr.f32.mxu0 0.0
      %2296 = vmatmul.mubr.f32.gmra.mxu0 %v694
      %v2297 = vpop.f32.mrf.mxu0
      %v2298 = vadd.f32 0.0, %v2297
      %v2299 = vpop.f32.mrf.mxu0
      %2300 = vmatprep.mubr.f32.mxu0 0.0
      %2301 = vmatmul.mubr.f32.gmra.mxu0 %v696
      %v2302 = vpop.f32.mrf.mxu0
      %v2303 = vadd.f32 0.0, %v2302
      %v2304 = vpop.f32.mrf.mxu0
      %2305 = vmatprep.mubr.f32.mxu0 0.0
      %2306 = vmatmul.mubr.f32.gmra.mxu0 %v698
      %v2307 = vpop.f32.mrf.mxu0
      %v2308 = vadd.f32 0.0, %v2307
      %v2309 = vpop.f32.mrf.mxu0
      %2310 = vmatprep.mubr.f32.mxu0 0.0
      %2311 = vmatmul.mubr.f32.gmra.mxu0 %v700
      %v2312 = vpop.f32.mrf.mxu0
      %v2313 = vadd.f32 0.0, %v2312
      %v2314 = vpop.f32.mrf.mxu0
      %2315 = vmatprep.mubr.f32.mxu0 0.0
      %2316 = vmatmul.mubr.f32.gmra.mxu0 %v702
      %v2317 = vpop.f32.mrf.mxu0
      %v2318 = vadd.f32 0.0, %v2317
      %v2319 = vpop.f32.mrf.mxu0
      %2320 = vmatprep.mubr.f32.mxu0 0.0
      %2321 = vmatmul.mubr.f32.gmra.mxu0 %v704
      %v2322 = vpop.f32.mrf.mxu0
      %v2323 = vadd.f32 0.0, %v2322
      %v2324 = vpop.f32.mrf.mxu0
      %2325 = vmatprep.mubr.f32.mxu0 0.0
      %2326 = vmatmul.mubr.f32.gmra.mxu0 %v706
      %v2327 = vpop.f32.mrf.mxu0
      %v2328 = vadd.f32 0.0, %v2327
      %v2329 = vpop.f32.mrf.mxu0
      %2330 = vmatprep.mubr.f32.mxu0 0.0
      %2331 = vmatmul.mubr.f32.gmra.mxu0 %v708
      %v2332 = vpop.f32.mrf.mxu0
      %v2333 = vadd.f32 0.0, %v2332
      %v2334 = vpop.f32.mrf.mxu0
      %2335 = vmatprep.mubr.f32.mxu0 0.0
      %2336 = vmatmul.mubr.f32.gmra.mxu0 %v710
      %v2337 = vpop.f32.mrf.mxu0
      %v2338 = vadd.f32 0.0, %v2337
      %v2339 = vpop.f32.mrf.mxu0
      %2340 = vmatprep.mubr.f32.mxu0 0.0
      %2341 = vmatmul.mubr.f32.gmra.mxu0 %v712
      %v2342 = vpop.f32.mrf.mxu0
      %v2343 = vadd.f32 0.0, %v2342
      %v2344 = vpop.f32.mrf.mxu0
      %2345 = vmatprep.mubr.f32.mxu0 0.0
      %2346 = vmatmul.mubr.f32.gmra.mxu0 %v714
      %v2347 = vpop.f32.mrf.mxu0
      %v2348 = vadd.f32 0.0, %v2347
      %v2349 = vpop.f32.mrf.mxu0
      %2350 = vmatprep.mubr.f32.mxu0 0.0
      %2351 = vmatmul.mubr.f32.gmra.mxu0 %v716
      %v2352 = vpop.f32.mrf.mxu0
      %v2353 = vadd.f32 0.0, %v2352
      %v2354 = vpop.f32.mrf.mxu0
      %2355 = vmatprep.mubr.f32.mxu0 0.0
      %2356 = vmatmul.mubr.f32.gmra.mxu0 %v718
      %v2357 = vpop.f32.mrf.mxu0
      %v2358 = vadd.f32 0.0, %v2357
      %v2359 = vpop.f32.mrf.mxu0
      %2360 = vmatprep.mubr.f32.mxu0 0.0
      %2361 = vmatmul.mubr.f32.gmra.mxu0 %v720
      %v2362 = vpop.f32.mrf.mxu0
      %v2363 = vadd.f32 0.0, %v2362
      %v2364 = vpop.f32.mrf.mxu0
      %2365 = vmatprep.mubr.f32.mxu0 0.0
      %2366 = vmatmul.mubr.f32.gmra.mxu0 %v1354
      %v2367 = vpop.f32.mrf.mxu0
      %v2368 = vadd.f32 0.0, %v2367
      %v2369 = vpop.f32.mrf.mxu0
      %2370 = vmatprep.mubr.f32.mxu0 0.0
      %2371 = vmatmul.mubr.f32.gmra.mxu0 %v1357
      %v2372 = vpop.f32.mrf.mxu0
      %v2373 = vadd.f32 0.0, %v2372
      %v2374 = vpop.f32.mrf.mxu0
      %2375 = vmatprep.mubr.f32.mxu0 0.0
      %2376 = vmatmul.mubr.f32.gmra.mxu0 %v2156
      %v2377 = vpop.f32.mrf.mxu0
      %v2378 = vadd.f32 0.0, %v2377
      %v2379 = vpop.f32.mrf.mxu0
      %2380 = vmatprep.mubr.f32.mxu0 0.0
      %2381 = vmatmul.mubr.f32.gmra.mxu0 %v2159
      %v2382 = vpop.f32.mrf.mxu0
      %v2383 = vadd.f32 0.0, %v2382
      %v2384 = vpop.f32.mrf.mxu0
      %2385 = vdwg.mxu0
      %v2386 = vadd.f32 %v2121, %v2228
      %v2387 = vadd.f32 %v2122, %v2233
      %v2388 = vadd.f32 %v2123, %v2238
      %v2389 = vadd.f32 %v2124, %v2243
      %v2390 = vadd.f32 %v2125, %v2248
      %v2391 = vadd.f32 %v2126, %v2253
      %v2392 = vadd.f32 %v2127, %v2258
      %v2393 = vadd.f32 %v2128, %v2263
      %v2394 = vadd.f32 %v2129, %v2268
      %v2395 = vadd.f32 %v2130, %v2273
      %v2396 = vadd.f32 %v2131, %v2278
      %v2397 = vadd.f32 %v2132, %v2283
      %v2398 = vadd.f32 %v2133, %v2288
      %v2399 = vadd.f32 %v2134, %v2293
      %v2400 = vadd.f32 %v2135, %v2298
      %v2401 = vadd.f32 %v2136, %v2303
      %v2402 = vadd.f32 %v2137, %v2308
      %v2403 = vadd.f32 %v2138, %v2313
      %v2404 = vadd.f32 %v2139, %v2318
      %v2405 = vadd.f32 %v2140, %v2323
      %v2406 = vadd.f32 %v2141, %v2328
      %v2407 = vadd.f32 %v2142, %v2333
      %v2408 = vadd.f32 %v2143, %v2338
      %v2409 = vadd.f32 %v2144, %v2343
      %v2410 = vadd.f32 %v2145, %v2348
      %v2411 = vadd.f32 %v2146, %v2353
      %v2412 = vadd.f32 %v2147, %v2358
      %v2413 = vadd.f32 %v2148, %v2363
      %v2414 = vadd.f32 %v2149, %v2368
      %v2415 = vadd.f32 %v2150, %v2373
      %v2416 = vadd.f32 %v2151, %v2378
      %v2417 = vadd.f32 %v2152, %v2383
      %v2419 = vrot.slane %v233, 1
      %v2420 = vrot.slane %v234, 1
      %v2421 = vsel %vm285, %v2419, %v2420
      %v2422 = vrot.slane %v235, 1
      %v2423 = vsel %vm285, %v2420, %v2422
      %s2424 = scalar_lea.vmem %s1, 56
      %v2425 = vld [vmem:[%s2424] sm:$0xff]
      %v2426 = vsel %vm368, %v2421, 0
      %v2428 = vsel %vm368, %v2423, 0
      %2430 = vmatprep.subr.mxu0 0.0
      %2431 = vmatpush1.msra.mxu0 0.0
      %2432 = vmatprep.subr.mxu0 0.0
      %2433 = vmatpush1.msra.mxu0 0.0
      %2434 = vmatprep.subr.mxu0 0.0
      %2435 = vmatpush1.msra.mxu0 0.0
      %2436 = vmatprep.subr.mxu0 0.0
      %2437 = vmatpush1.msra.mxu0 0.0
      %2438 = vmatprep.subr.mxu0 0.0
      %2439 = vmatpush1.msra.mxu0 0.0
      %2440 = vmatprep.subr.mxu0 0.0
      %2441 = vmatpush1.msra.mxu0 0.0
      %2442 = vmatprep.subr.mxu0 0.0
      %2443 = vmatpush1.msra.mxu0 0.0
      %2444 = vmatprep.subr.mxu0 0.0
      %2445 = vmatpush1.msra.mxu0 0.0
      %2446 = vmatprep.subr.mxu0 0.0
      %2447 = vmatpush1.msra.mxu0 0.0
      %2448 = vmatprep.subr.mxu0 0.0
      %2449 = vmatpush1.msra.mxu0 0.0
      %2450 = vmatprep.subr.mxu0 0.0
      %2451 = vmatpush1.msra.mxu0 0.0
      %2452 = vmatprep.subr.mxu0 0.0
      %2453 = vmatpush1.msra.mxu0 0.0
      %2454 = vmatprep.subr.mxu0 0.0
      %2455 = vmatpush1.msra.mxu0 0.0
      %2456 = vmatprep.subr.mxu0 0.0
      %2457 = vmatpush1.msra.mxu0 0.0
      %2458 = vmatprep.subr.mxu0 0.0
      %2459 = vmatpush1.msra.mxu0 0.0
      %2460 = vmatprep.subr.mxu0 0.0
      %2461 = vmatpush1.msra.mxu0 %v2425
      %2462 = vmatprep.subr.mxu0 0.0
      %2463 = vmatpush2.msra.mxu0 0.0
      %2464 = vmatprep.subr.mxu0 0.0
      %2465 = vmatpush2.msra.mxu0 0.0
      %2466 = vmatprep.subr.mxu0 0.0
      %2467 = vmatpush2.msra.mxu0 0.0
      %2468 = vmatprep.subr.mxu0 0.0
      %2469 = vmatpush2.msra.mxu0 0.0
      %2470 = vmatprep.subr.mxu0 0.0
      %2471 = vmatpush2.msra.mxu0 0.0
      %2472 = vmatprep.subr.mxu0 0.0
      %2473 = vmatpush2.msra.mxu0 0.0
      %2474 = vmatprep.subr.mxu0 0.0
      %2475 = vmatpush2.msra.mxu0 0.0
      %2476 = vmatprep.subr.mxu0 0.0
      %2477 = vmatpush2.msra.mxu0 0.0
      %2478 = vmatprep.subr.mxu0 0.0
      %2479 = vmatpush2.msra.mxu0 0.0
      %2480 = vmatprep.subr.mxu0 0.0
      %2481 = vmatpush2.msra.mxu0 0.0
      %2482 = vmatprep.subr.mxu0 0.0
      %2483 = vmatpush2.msra.mxu0 0.0
      %2484 = vmatprep.subr.mxu0 0.0
      %2485 = vmatpush2.msra.mxu0 0.0
      %2486 = vmatprep.subr.mxu0 0.0
      %2487 = vmatpush2.msra.mxu0 0.0
      %2488 = vmatprep.subr.mxu0 0.0
      %2489 = vmatpush2.msra.mxu0 0.0
      %2490 = vmatprep.subr.mxu0 0.0
      %2491 = vmatpush2.msra.mxu0 0.0
      %2492 = vmatprep.subr.mxu0 0.0
      %2493 = vmatpush2.msra.mxu0 0.0
      %2494 = vmatprep.mubr.f32.mxu0 0.0
      %2495 = vmatmul.mubr.f32.gmra.mxu0 %v377
      %v2496 = vpop.f32.mrf.mxu0
      %v2497 = vadd.f32 0.0, %v2496
      %v2498 = vpop.f32.mrf.mxu0
      %2499 = vmatprep.mubr.f32.mxu0 0.0
      %2500 = vmatmul.mubr.f32.gmra.mxu0 %v379
      %v2501 = vpop.f32.mrf.mxu0
      %v2502 = vadd.f32 0.0, %v2501
      %v2503 = vpop.f32.mrf.mxu0
      %2504 = vmatprep.mubr.f32.mxu0 0.0
      %2505 = vmatmul.mubr.f32.gmra.mxu0 %v381
      %v2506 = vpop.f32.mrf.mxu0
      %v2507 = vadd.f32 0.0, %v2506
      %v2508 = vpop.f32.mrf.mxu0
      %2509 = vmatprep.mubr.f32.mxu0 0.0
      %2510 = vmatmul.mubr.f32.gmra.mxu0 %v383
      %v2511 = vpop.f32.mrf.mxu0
      %v2512 = vadd.f32 0.0, %v2511
      %v2513 = vpop.f32.mrf.mxu0
      %2514 = vmatprep.mubr.f32.mxu0 0.0
      %2515 = vmatmul.mubr.f32.gmra.mxu0 %v385
      %v2516 = vpop.f32.mrf.mxu0
      %v2517 = vadd.f32 0.0, %v2516
      %v2518 = vpop.f32.mrf.mxu0
      %2519 = vmatprep.mubr.f32.mxu0 0.0
      %2520 = vmatmul.mubr.f32.gmra.mxu0 %v387
      %v2521 = vpop.f32.mrf.mxu0
      %v2522 = vadd.f32 0.0, %v2521
      %v2523 = vpop.f32.mrf.mxu0
      %2524 = vmatprep.mubr.f32.mxu0 0.0
      %2525 = vmatmul.mubr.f32.gmra.mxu0 %v389
      %v2526 = vpop.f32.mrf.mxu0
      %v2527 = vadd.f32 0.0, %v2526
      %v2528 = vpop.f32.mrf.mxu0
      %2529 = vmatprep.mubr.f32.mxu0 0.0
      %2530 = vmatmul.mubr.f32.gmra.mxu0 %v391
      %v2531 = vpop.f32.mrf.mxu0
      %v2532 = vadd.f32 0.0, %v2531
      %v2533 = vpop.f32.mrf.mxu0
      %2534 = vmatprep.mubr.f32.mxu0 0.0
      %2535 = vmatmul.mubr.f32.gmra.mxu0 %v393
      %v2536 = vpop.f32.mrf.mxu0
      %v2537 = vadd.f32 0.0, %v2536
      %v2538 = vpop.f32.mrf.mxu0
      %2539 = vmatprep.mubr.f32.mxu0 0.0
      %2540 = vmatmul.mubr.f32.gmra.mxu0 %v395
      %v2541 = vpop.f32.mrf.mxu0
      %v2542 = vadd.f32 0.0, %v2541
      %v2543 = vpop.f32.mrf.mxu0
      %2544 = vmatprep.mubr.f32.mxu0 0.0
      %2545 = vmatmul.mubr.f32.gmra.mxu0 %v397
      %v2546 = vpop.f32.mrf.mxu0
      %v2547 = vadd.f32 0.0, %v2546
      %v2548 = vpop.f32.mrf.mxu0
      %2549 = vmatprep.mubr.f32.mxu0 0.0
      %2550 = vmatmul.mubr.f32.gmra.mxu0 %v399
      %v2551 = vpop.f32.mrf.mxu0
      %v2552 = vadd.f32 0.0, %v2551
      %v2553 = vpop.f32.mrf.mxu0
      %2554 = vmatprep.mubr.f32.mxu0 0.0
      %2555 = vmatmul.mubr.f32.gmra.mxu0 %v401
      %v2556 = vpop.f32.mrf.mxu0
      %v2557 = vadd.f32 0.0, %v2556
      %v2558 = vpop.f32.mrf.mxu0
      %2559 = vmatprep.mubr.f32.mxu0 0.0
      %2560 = vmatmul.mubr.f32.gmra.mxu0 %v403
      %v2561 = vpop.f32.mrf.mxu0
      %v2562 = vadd.f32 0.0, %v2561
      %v2563 = vpop.f32.mrf.mxu0
      %2564 = vmatprep.mubr.f32.mxu0 0.0
      %2565 = vmatmul.mubr.f32.gmra.mxu0 %v405
      %v2566 = vpop.f32.mrf.mxu0
      %v2567 = vadd.f32 0.0, %v2566
      %v2568 = vpop.f32.mrf.mxu0
      %2569 = vmatprep.mubr.f32.mxu0 0.0
      %2570 = vmatmul.mubr.f32.gmra.mxu0 %v407
      %v2571 = vpop.f32.mrf.mxu0
      %v2572 = vadd.f32 0.0, %v2571
      %v2573 = vpop.f32.mrf.mxu0
      %2574 = vmatprep.mubr.f32.mxu0 0.0
      %2575 = vmatmul.mubr.f32.gmra.mxu0 %v409
      %v2576 = vpop.f32.mrf.mxu0
      %v2577 = vadd.f32 0.0, %v2576
      %v2578 = vpop.f32.mrf.mxu0
      %2579 = vmatprep.mubr.f32.mxu0 0.0
      %2580 = vmatmul.mubr.f32.gmra.mxu0 %v411
      %v2581 = vpop.f32.mrf.mxu0
      %v2582 = vadd.f32 0.0, %v2581
      %v2583 = vpop.f32.mrf.mxu0
      %2584 = vmatprep.mubr.f32.mxu0 0.0
      %2585 = vmatmul.mubr.f32.gmra.mxu0 %v413
      %v2586 = vpop.f32.mrf.mxu0
      %v2587 = vadd.f32 0.0, %v2586
      %v2588 = vpop.f32.mrf.mxu0
      %2589 = vmatprep.mubr.f32.mxu0 0.0
      %2590 = vmatmul.mubr.f32.gmra.mxu0 %v415
      %v2591 = vpop.f32.mrf.mxu0
      %v2592 = vadd.f32 0.0, %v2591
      %v2593 = vpop.f32.mrf.mxu0
      %2594 = vmatprep.mubr.f32.mxu0 0.0
      %2595 = vmatmul.mubr.f32.gmra.mxu0 %v417
      %v2596 = vpop.f32.mrf.mxu0
      %v2597 = vadd.f32 0.0, %v2596
      %v2598 = vpop.f32.mrf.mxu0
      %2599 = vmatprep.mubr.f32.mxu0 0.0
      %2600 = vmatmul.mubr.f32.gmra.mxu0 %v419
      %v2601 = vpop.f32.mrf.mxu0
      %v2602 = vadd.f32 0.0, %v2601
      %v2603 = vpop.f32.mrf.mxu0
      %2604 = vmatprep.mubr.f32.mxu0 0.0
      %2605 = vmatmul.mubr.f32.gmra.mxu0 %v421
      %v2606 = vpop.f32.mrf.mxu0
      %v2607 = vadd.f32 0.0, %v2606
      %v2608 = vpop.f32.mrf.mxu0
      %2609 = vmatprep.mubr.f32.mxu0 0.0
      %2610 = vmatmul.mubr.f32.gmra.mxu0 %v423
      %v2611 = vpop.f32.mrf.mxu0
      %v2612 = vadd.f32 0.0, %v2611
      %v2613 = vpop.f32.mrf.mxu0
      %2614 = vmatprep.mubr.f32.mxu0 0.0
      %2615 = vmatmul.mubr.f32.gmra.mxu0 %v425
      %v2616 = vpop.f32.mrf.mxu0
      %v2617 = vadd.f32 0.0, %v2616
      %v2618 = vpop.f32.mrf.mxu0
      %2619 = vmatprep.mubr.f32.mxu0 0.0
      %2620 = vmatmul.mubr.f32.gmra.mxu0 %v427
      %v2621 = vpop.f32.mrf.mxu0
      %v2622 = vadd.f32 0.0, %v2621
      %v2623 = vpop.f32.mrf.mxu0
      %2624 = vmatprep.mubr.f32.mxu0 0.0
      %2625 = vmatmul.mubr.f32.gmra.mxu0 %v429
      %v2626 = vpop.f32.mrf.mxu0
      %v2627 = vadd.f32 0.0, %v2626
      %v2628 = vpop.f32.mrf.mxu0
      %2629 = vmatprep.mubr.f32.mxu0 0.0
      %2630 = vmatmul.mubr.f32.gmra.mxu0 %v431
      %v2631 = vpop.f32.mrf.mxu0
      %v2632 = vadd.f32 0.0, %v2631
      %v2633 = vpop.f32.mrf.mxu0
      %2634 = vmatprep.mubr.f32.mxu0 0.0
      %2635 = vmatmul.mubr.f32.gmra.mxu0 %v1624
      %v2636 = vpop.f32.mrf.mxu0
      %v2637 = vadd.f32 0.0, %v2636
      %v2638 = vpop.f32.mrf.mxu0
      %2639 = vmatprep.mubr.f32.mxu0 0.0
      %2640 = vmatmul.mubr.f32.gmra.mxu0 %v1626
      %v2641 = vpop.f32.mrf.mxu0
      %v2642 = vadd.f32 0.0, %v2641
      %v2643 = vpop.f32.mrf.mxu0
      %2644 = vmatprep.mubr.f32.mxu0 0.0
      %2645 = vmatmul.mubr.f32.gmra.mxu0 %v2426
      %v2646 = vpop.f32.mrf.mxu0
      %v2647 = vadd.f32 0.0, %v2646
      %v2648 = vpop.f32.mrf.mxu0
      %2649 = vmatprep.mubr.f32.mxu0 0.0
      %2650 = vmatmul.mubr.f32.gmra.mxu0 %v2428
      %v2651 = vpop.f32.mrf.mxu0
      %v2652 = vadd.f32 0.0, %v2651
      %v2653 = vpop.f32.mrf.mxu0
      %2654 = vdwg.mxu0
      %v2655 = vadd.f32 %v2386, %v2497
      %v2656 = vadd.f32 %v2387, %v2502
      %v2657 = vadd.f32 %v2388, %v2507
      %v2658 = vadd.f32 %v2389, %v2512
      %v2659 = vadd.f32 %v2390, %v2517
      %v2660 = vadd.f32 %v2391, %v2522
      %v2661 = vadd.f32 %v2392, %v2527
      %v2662 = vadd.f32 %v2393, %v2532
      %v2663 = vadd.f32 %v2394, %v2537
      %v2664 = vadd.f32 %v2395, %v2542
      %v2665 = vadd.f32 %v2396, %v2547
      %v2666 = vadd.f32 %v2397, %v2552
      %v2667 = vadd.f32 %v2398, %v2557
      %v2668 = vadd.f32 %v2399, %v2562
      %v2669 = vadd.f32 %v2400, %v2567
      %v2670 = vadd.f32 %v2401, %v2572
      %v2671 = vadd.f32 %v2402, %v2577
      %v2672 = vadd.f32 %v2403, %v2582
      %v2673 = vadd.f32 %v2404, %v2587
      %v2674 = vadd.f32 %v2405, %v2592
      %v2675 = vadd.f32 %v2406, %v2597
      %v2676 = vadd.f32 %v2407, %v2602
      %v2677 = vadd.f32 %v2408, %v2607
      %v2678 = vadd.f32 %v2409, %v2612
      %v2679 = vadd.f32 %v2410, %v2617
      %v2680 = vadd.f32 %v2411, %v2622
      %v2681 = vadd.f32 %v2412, %v2627
      %v2682 = vadd.f32 %v2413, %v2632
      %v2683 = vadd.f32 %v2414, %v2637
      %v2684 = vadd.f32 %v2415, %v2642
      %v2685 = vadd.f32 %v2416, %v2647
      %v2686 = vadd.f32 %v2417, %v2652
      %v2687 = vrot.slane %v233, 2
      %v2688 = vrot.slane %v234, 2
      %v2689 = vsel %vm947, %v2687, %v2688
      %v2690 = vrot.slane %v235, 2
      %v2691 = vsel %vm947, %v2688, %v2690
      %s2692 = scalar_lea.vmem %s1, 64
      %v2693 = vld [vmem:[%s2692] sm:$0xff]
      %v2694 = vsel %vm368, %v2689, 0
      %v2696 = vsel %vm368, %v2691, 0
      %2698 = vmatprep.subr.mxu0 0.0
      %2699 = vmatpush1.msra.mxu0 0.0
      %2700 = vmatprep.subr.mxu0 0.0
      %2701 = vmatpush1.msra.mxu0 0.0
      %2702 = vmatprep.subr.mxu0 0.0
      %2703 = vmatpush1.msra.mxu0 0.0
      %2704 = vmatprep.subr.mxu0 0.0
      %2705 = vmatpush1.msra.mxu0 0.0
      %2706 = vmatprep.subr.mxu0 0.0
      %2707 = vmatpush1.msra.mxu0 0.0
      %2708 = vmatprep.subr.mxu0 0.0
      %2709 = vmatpush1.msra.mxu0 0.0
      %2710 = vmatprep.subr.mxu0 0.0
      %2711 = vmatpush1.msra.mxu0 0.0
      %2712 = vmatprep.subr.mxu0 0.0
      %2713 = vmatpush1.msra.mxu0 0.0
      %2714 = vmatprep.subr.mxu0 0.0
      %2715 = vmatpush1.msra.mxu0 0.0
      %2716 = vmatprep.subr.mxu0 0.0
      %2717 = vmatpush1.msra.mxu0 0.0
      %2718 = vmatprep.subr.mxu0 0.0
      %2719 = vmatpush1.msra.mxu0 0.0
      %2720 = vmatprep.subr.mxu0 0.0
      %2721 = vmatpush1.msra.mxu0 0.0
      %2722 = vmatprep.subr.mxu0 0.0
      %2723 = vmatpush1.msra.mxu0 0.0
      %2724 = vmatprep.subr.mxu0 0.0
      %2725 = vmatpush1.msra.mxu0 0.0
      %2726 = vmatprep.subr.mxu0 0.0
      %2727 = vmatpush1.msra.mxu0 0.0
      %2728 = vmatprep.subr.mxu0 0.0
      %2729 = vmatpush1.msra.mxu0 %v2693
      %2730 = vmatprep.subr.mxu0 0.0
      %2731 = vmatpush2.msra.mxu0 0.0
      %2732 = vmatprep.subr.mxu0 0.0
      %2733 = vmatpush2.msra.mxu0 0.0
      %2734 = vmatprep.subr.mxu0 0.0
      %2735 = vmatpush2.msra.mxu0 0.0
      %2736 = vmatprep.subr.mxu0 0.0
      %2737 = vmatpush2.msra.mxu0 0.0
      %2738 = vmatprep.subr.mxu0 0.0
      %2739 = vmatpush2.msra.mxu0 0.0
      %2740 = vmatprep.subr.mxu0 0.0
      %2741 = vmatpush2.msra.mxu0 0.0
      %2742 = vmatprep.subr.mxu0 0.0
      %2743 = vmatpush2.msra.mxu0 0.0
      %2744 = vmatprep.subr.mxu0 0.0
      %2745 = vmatpush2.msra.mxu0 0.0
      %2746 = vmatprep.subr.mxu0 0.0
      %2747 = vmatpush2.msra.mxu0 0.0
      %2748 = vmatprep.subr.mxu0 0.0
      %2749 = vmatpush2.msra.mxu0 0.0
      %2750 = vmatprep.subr.mxu0 0.0
      %2751 = vmatpush2.msra.mxu0 0.0
      %2752 = vmatprep.subr.mxu0 0.0
      %2753 = vmatpush2.msra.mxu0 0.0
      %2754 = vmatprep.subr.mxu0 0.0
      %2755 = vmatpush2.msra.mxu0 0.0
      %2756 = vmatprep.subr.mxu0 0.0
      %2757 = vmatpush2.msra.mxu0 0.0
      %2758 = vmatprep.subr.mxu0 0.0
      %2759 = vmatpush2.msra.mxu0 0.0
      %2760 = vmatprep.subr.mxu0 0.0
      %2761 = vmatpush2.msra.mxu0 0.0
      %2762 = vmatprep.mubr.f32.mxu0 0.0
      %2763 = vmatmul.mubr.f32.gmra.mxu0 %v1038
      %v2764 = vpop.f32.mrf.mxu0
      %v2765 = vadd.f32 0.0, %v2764
      %v2766 = vpop.f32.mrf.mxu0
      %2767 = vmatprep.mubr.f32.mxu0 0.0
      %2768 = vmatmul.mubr.f32.gmra.mxu0 %v1040
      %v2769 = vpop.f32.mrf.mxu0
      %v2770 = vadd.f32 0.0, %v2769
      %v2771 = vpop.f32.mrf.mxu0
      %2772 = vmatprep.mubr.f32.mxu0 0.0
      %2773 = vmatmul.mubr.f32.gmra.mxu0 %v1042
      %v2774 = vpop.f32.mrf.mxu0
      %v2775 = vadd.f32 0.0, %v2774
      %v2776 = vpop.f32.mrf.mxu0
      %2777 = vmatprep.mubr.f32.mxu0 0.0
      %2778 = vmatmul.mubr.f32.gmra.mxu0 %v1044
      %v2779 = vpop.f32.mrf.mxu0
      %v2780 = vadd.f32 0.0, %v2779
      %v2781 = vpop.f32.mrf.mxu0
      %2782 = vmatprep.mubr.f32.mxu0 0.0
      %2783 = vmatmul.mubr.f32.gmra.mxu0 %v1046
      %v2784 = vpop.f32.mrf.mxu0
      %v2785 = vadd.f32 0.0, %v2784
      %v2786 = vpop.f32.mrf.mxu0
      %2787 = vmatprep.mubr.f32.mxu0 0.0
      %2788 = vmatmul.mubr.f32.gmra.mxu0 %v1048
      %v2789 = vpop.f32.mrf.mxu0
      %v2790 = vadd.f32 0.0, %v2789
      %v2791 = vpop.f32.mrf.mxu0
      %2792 = vmatprep.mubr.f32.mxu0 0.0
      %2793 = vmatmul.mubr.f32.gmra.mxu0 %v1050
      %v2794 = vpop.f32.mrf.mxu0
      %v2795 = vadd.f32 0.0, %v2794
      %v2796 = vpop.f32.mrf.mxu0
      %2797 = vmatprep.mubr.f32.mxu0 0.0
      %2798 = vmatmul.mubr.f32.gmra.mxu0 %v1052
      %v2799 = vpop.f32.mrf.mxu0
      %v2800 = vadd.f32 0.0, %v2799
      %v2801 = vpop.f32.mrf.mxu0
      %2802 = vmatprep.mubr.f32.mxu0 0.0
      %2803 = vmatmul.mubr.f32.gmra.mxu0 %v1054
      %v2804 = vpop.f32.mrf.mxu0
      %v2805 = vadd.f32 0.0, %v2804
      %v2806 = vpop.f32.mrf.mxu0
      %2807 = vmatprep.mubr.f32.mxu0 0.0
      %2808 = vmatmul.mubr.f32.gmra.mxu0 %v1056
      %v2809 = vpop.f32.mrf.mxu0
      %v2810 = vadd.f32 0.0, %v2809
      %v2811 = vpop.f32.mrf.mxu0
      %2812 = vmatprep.mubr.f32.mxu0 0.0
      %2813 = vmatmul.mubr.f32.gmra.mxu0 %v1058
      %v2814 = vpop.f32.mrf.mxu0
      %v2815 = vadd.f32 0.0, %v2814
      %v2816 = vpop.f32.mrf.mxu0
      %2817 = vmatprep.mubr.f32.mxu0 0.0
      %2818 = vmatmul.mubr.f32.gmra.mxu0 %v1060
      %v2819 = vpop.f32.mrf.mxu0
      %v2820 = vadd.f32 0.0, %v2819
      %v2821 = vpop.f32.mrf.mxu0
      %2822 = vmatprep.mubr.f32.mxu0 0.0
      %2823 = vmatmul.mubr.f32.gmra.mxu0 %v1062
      %v2824 = vpop.f32.mrf.mxu0
      %v2825 = vadd.f32 0.0, %v2824
      %v2826 = vpop.f32.mrf.mxu0
      %2827 = vmatprep.mubr.f32.mxu0 0.0
      %2828 = vmatmul.mubr.f32.gmra.mxu0 %v1064
      %v2829 = vpop.f32.mrf.mxu0
      %v2830 = vadd.f32 0.0, %v2829
      %v2831 = vpop.f32.mrf.mxu0
      %2832 = vmatprep.mubr.f32.mxu0 0.0
      %2833 = vmatmul.mubr.f32.gmra.mxu0 %v1066
      %v2834 = vpop.f32.mrf.mxu0
      %v2835 = vadd.f32 0.0, %v2834
      %v2836 = vpop.f32.mrf.mxu0
      %2837 = vmatprep.mubr.f32.mxu0 0.0
      %2838 = vmatmul.mubr.f32.gmra.mxu0 %v1068
      %v2839 = vpop.f32.mrf.mxu0
      %v2840 = vadd.f32 0.0, %v2839
      %v2841 = vpop.f32.mrf.mxu0
      %2842 = vmatprep.mubr.f32.mxu0 0.0
      %2843 = vmatmul.mubr.f32.gmra.mxu0 %v1070
      %v2844 = vpop.f32.mrf.mxu0
      %v2845 = vadd.f32 0.0, %v2844
      %v2846 = vpop.f32.mrf.mxu0
      %2847 = vmatprep.mubr.f32.mxu0 0.0
      %2848 = vmatmul.mubr.f32.gmra.mxu0 %v1072
      %v2849 = vpop.f32.mrf.mxu0
      %v2850 = vadd.f32 0.0, %v2849
      %v2851 = vpop.f32.mrf.mxu0
      %2852 = vmatprep.mubr.f32.mxu0 0.0
      %2853 = vmatmul.mubr.f32.gmra.mxu0 %v1074
      %v2854 = vpop.f32.mrf.mxu0
      %v2855 = vadd.f32 0.0, %v2854
      %v2856 = vpop.f32.mrf.mxu0
      %2857 = vmatprep.mubr.f32.mxu0 0.0
      %2858 = vmatmul.mubr.f32.gmra.mxu0 %v1076
      %v2859 = vpop.f32.mrf.mxu0
      %v2860 = vadd.f32 0.0, %v2859
      %v2861 = vpop.f32.mrf.mxu0
      %2862 = vmatprep.mubr.f32.mxu0 0.0
      %2863 = vmatmul.mubr.f32.gmra.mxu0 %v1078
      %v2864 = vpop.f32.mrf.mxu0
      %v2865 = vadd.f32 0.0, %v2864
      %v2866 = vpop.f32.mrf.mxu0
      %2867 = vmatprep.mubr.f32.mxu0 0.0
      %2868 = vmatmul.mubr.f32.gmra.mxu0 %v1080
      %v2869 = vpop.f32.mrf.mxu0
      %v2870 = vadd.f32 0.0, %v2869
      %v2871 = vpop.f32.mrf.mxu0
      %2872 = vmatprep.mubr.f32.mxu0 0.0
      %2873 = vmatmul.mubr.f32.gmra.mxu0 %v1082
      %v2874 = vpop.f32.mrf.mxu0
      %v2875 = vadd.f32 0.0, %v2874
      %v2876 = vpop.f32.mrf.mxu0
      %2877 = vmatprep.mubr.f32.mxu0 0.0
      %2878 = vmatmul.mubr.f32.gmra.mxu0 %v1084
      %v2879 = vpop.f32.mrf.mxu0
      %v2880 = vadd.f32 0.0, %v2879
      %v2881 = vpop.f32.mrf.mxu0
      %2882 = vmatprep.mubr.f32.mxu0 0.0
      %2883 = vmatmul.mubr.f32.gmra.mxu0 %v1086
      %v2884 = vpop.f32.mrf.mxu0
      %v2885 = vadd.f32 0.0, %v2884
      %v2886 = vpop.f32.mrf.mxu0
      %2887 = vmatprep.mubr.f32.mxu0 0.0
      %2888 = vmatmul.mubr.f32.gmra.mxu0 %v1088
      %v2889 = vpop.f32.mrf.mxu0
      %v2890 = vadd.f32 0.0, %v2889
      %v2891 = vpop.f32.mrf.mxu0
      %2892 = vmatprep.mubr.f32.mxu0 0.0
      %2893 = vmatmul.mubr.f32.gmra.mxu0 %v1090
      %v2894 = vpop.f32.mrf.mxu0
      %v2895 = vadd.f32 0.0, %v2894
      %v2896 = vpop.f32.mrf.mxu0
      %2897 = vmatprep.mubr.f32.mxu0 0.0
      %2898 = vmatmul.mubr.f32.gmra.mxu0 %v1092
      %v2899 = vpop.f32.mrf.mxu0
      %v2900 = vadd.f32 0.0, %v2899
      %v2901 = vpop.f32.mrf.mxu0
      %2902 = vmatprep.mubr.f32.mxu0 0.0
      %2903 = vmatmul.mubr.f32.gmra.mxu0 %v1892
      %v2904 = vpop.f32.mrf.mxu0
      %v2905 = vadd.f32 0.0, %v2904
      %v2906 = vpop.f32.mrf.mxu0
      %2907 = vmatprep.mubr.f32.mxu0 0.0
      %2908 = vmatmul.mubr.f32.gmra.mxu0 %v1894
      %v2909 = vpop.f32.mrf.mxu0
      %v2910 = vadd.f32 0.0, %v2909
      %v2911 = vpop.f32.mrf.mxu0
      %2912 = vmatprep.mubr.f32.mxu0 0.0
      %2913 = vmatmul.mubr.f32.gmra.mxu0 %v2694
      %v2914 = vpop.f32.mrf.mxu0
      %v2915 = vadd.f32 0.0, %v2914
      %v2916 = vpop.f32.mrf.mxu0
      %2917 = vmatprep.mubr.f32.mxu0 0.0
      %2918 = vmatmul.mubr.f32.gmra.mxu0 %v2696
      %v2919 = vpop.f32.mrf.mxu0
      %v2920 = vadd.f32 0.0, %v2919
      %v2921 = vpop.f32.mrf.mxu0
      %2922 = vdwg.mxu0
      %v2923 = vadd.f32 %v2655, %v2765
      %v2924 = vadd.f32 %v2656, %v2770
      %v2925 = vadd.f32 %v2657, %v2775
      %v2926 = vadd.f32 %v2658, %v2780
      %v2927 = vadd.f32 %v2659, %v2785
      %v2928 = vadd.f32 %v2660, %v2790
      %v2929 = vadd.f32 %v2661, %v2795
      %v2930 = vadd.f32 %v2662, %v2800
      %v2931 = vadd.f32 %v2663, %v2805
      %v2932 = vadd.f32 %v2664, %v2810
      %v2933 = vadd.f32 %v2665, %v2815
      %v2934 = vadd.f32 %v2666, %v2820
      %v2935 = vadd.f32 %v2667, %v2825
      %v2936 = vadd.f32 %v2668, %v2830
      %v2937 = vadd.f32 %v2669, %v2835
      %v2938 = vadd.f32 %v2670, %v2840
      %v2939 = vadd.f32 %v2671, %v2845
      %v2940 = vadd.f32 %v2672, %v2850
      %v2941 = vadd.f32 %v2673, %v2855
      %v2942 = vadd.f32 %v2674, %v2860
      %v2943 = vadd.f32 %v2675, %v2865
      %v2944 = vadd.f32 %v2676, %v2870
      %v2945 = vadd.f32 %v2677, %v2875
      %v2946 = vadd.f32 %v2678, %v2880
      %v2947 = vadd.f32 %v2679, %v2885
      %v2948 = vadd.f32 %v2680, %v2890
      %v2949 = vadd.f32 %v2681, %v2895
      %v2950 = vadd.f32 %v2682, %v2900
      %v2951 = vadd.f32 %v2683, %v2905
      %v2952 = vadd.f32 %v2684, %v2910
      %v2953 = vadd.f32 %v2685, %v2915
      %v2954 = vadd.f32 %v2686, %v2920
      %2955 = vst [vmem:[%s177] sm:$0xff] %v2923
      %2956 = vst [vmem:[%s177 + $0x8] sm:$0xff] %v2924
      %2957 = vst [vmem:[%s177 + $0x10] sm:$0xff] %v2925
      %2958 = vst [vmem:[%s177 + $0x18] sm:$0xff] %v2926
      %2959 = vst [vmem:[%s177 + $0x20] sm:$0xff] %v2927
      %2960 = vst [vmem:[%s177 + $0x28] sm:$0xff] %v2928
      %2961 = vst [vmem:[%s177 + $0x30] sm:$0xff] %v2929
      %2962 = vst [vmem:[%s177 + $0x38] sm:$0xff] %v2930
      %2963 = vst [vmem:[%s177 + $0x40] sm:$0xff] %v2931
      %2964 = vst [vmem:[%s177 + $0x48] sm:$0xff] %v2932
      %2965 = vst [vmem:[%s177 + $0x50] sm:$0xff] %v2933
      %2966 = vst [vmem:[%s177 + $0x58] sm:$0xff] %v2934
      %2967 = vst [vmem:[%s177 + $0x60] sm:$0xff] %v2935
      %2968 = vst [vmem:[%s177 + $0x68] sm:$0xff] %v2936
      %2969 = vst [vmem:[%s177 + $0x70] sm:$0xff] %v2937
      %2970 = vst [vmem:[%s177 + $0x78] sm:$0xff] %v2938
      %2971 = vst [vmem:[%s177 + $0x80] sm:$0xff] %v2939
      %2972 = vst [vmem:[%s177 + $0x88] sm:$0xff] %v2940
      %2973 = vst [vmem:[%s177 + $0x90] sm:$0xff] %v2941
      %2974 = vst [vmem:[%s177 + $0x98] sm:$0xff] %v2942
      %2975 = vst [vmem:[%s177 + $0xa0] sm:$0xff] %v2943
      %2976 = vst [vmem:[%s177 + $0xa8] sm:$0xff] %v2944
      %2977 = vst [vmem:[%s177 + $0xb0] sm:$0xff] %v2945
      %2978 = vst [vmem:[%s177 + $0xb8] sm:$0xff] %v2946
      %2979 = vst [vmem:[%s177 + $0xc0] sm:$0xff] %v2947
      %2980 = vst [vmem:[%s177 + $0xc8] sm:$0xff] %v2948
      %2981 = vst [vmem:[%s177 + $0xd0] sm:$0xff] %v2949
      %2982 = vst [vmem:[%s177 + $0xd8] sm:$0xff] %v2950
      %2983 = vst [vmem:[%s177 + $0xe0] sm:$0xff] %v2951
      %2984 = vst [vmem:[%s177 + $0xe8] sm:$0xff] %v2952
      %2985 = vst [vmem:[%s177 + $0xf0] sm:$0xff] %v2953
      %2986 = vst [vmem:[%s177 + $0xf8] sm:$0xff] %v2954
      %v2987 = vadd.f32 %v2923, %v2924
      %v2988 = vadd.f32 %v2987, %v2925
      %v2989 = vadd.f32 %v2988, %v2926
      %v2990 = vadd.f32 %v2989, %v2927
      %v2991 = vadd.f32 %v2990, %v2928
      %v2992 = vadd.f32 %v2991, %v2929
      %v2993 = vadd.f32 %v2992, %v2930
      %v2994 = vadd.f32 %v2993, %v2931
      %v2995 = vadd.f32 %v2994, %v2932
      %v2996 = vadd.f32 %v2995, %v2933
      %v2997 = vadd.f32 %v2996, %v2934
      %v2998 = vadd.f32 %v2997, %v2935
      %v2999 = vadd.f32 %v2998, %v2936
      %v3000 = vadd.f32 %v2999, %v2937
      %v3001 = vadd.f32 %v3000, %v2938
      %v3002 = vadd.f32 %v3001, %v2939
      %v3003 = vadd.f32 %v3002, %v2940
      %v3004 = vadd.f32 %v3003, %v2941
      %v3005 = vadd.f32 %v3004, %v2942
      %v3006 = vadd.f32 %v3005, %v2943
      %v3007 = vadd.f32 %v3006, %v2944
      %v3008 = vadd.f32 %v3007, %v2945
      %v3009 = vadd.f32 %v3008, %v2946
      %v3010 = vadd.f32 %v3009, %v2947
      %v3011 = vadd.f32 %v3010, %v2948
      %v3012 = vadd.f32 %v3011, %v2949
      %v3013 = vadd.f32 %v3012, %v2950
      %v3014 = vadd.f32 %v3013, %v2951
      %v3015 = vadd.f32 %v3014, %v2952
      %v3016 = vadd.f32 %v3015, %v2953
      %v3017 = vadd.f32 %v3016, %v2954
      %v3018 = vrot.slane %v3017, 4
      %v3019 = vadd.f32 %v3017, %v3018
      %v3020 = vrot.slane %v3019, 2
      %v3021 = vadd.f32 %v3019, %v3020
      %v3022 = vrot.slane %v3021, 1
      %v3023 = vadd.f32 %v3021, %v3022
      %v3024 = vmul.f32 %v2923, %v2923
      %v3025 = vmul.f32 %v2924, %v2924
      %v3026 = vmul.f32 %v2925, %v2925
      %v3027 = vmul.f32 %v2926, %v2926
      %v3028 = vmul.f32 %v2927, %v2927
      %v3029 = vmul.f32 %v2928, %v2928
      %v3030 = vmul.f32 %v2929, %v2929
      %v3031 = vmul.f32 %v2930, %v2930
      %v3032 = vmul.f32 %v2931, %v2931
      %v3033 = vmul.f32 %v2932, %v2932
      %v3034 = vmul.f32 %v2933, %v2933
      %v3035 = vmul.f32 %v2934, %v2934
      %v3036 = vmul.f32 %v2935, %v2935
      %v3037 = vmul.f32 %v2936, %v2936
      %v3038 = vmul.f32 %v2937, %v2937
      %v3039 = vmul.f32 %v2938, %v2938
      %v3040 = vmul.f32 %v2939, %v2939
      %v3041 = vmul.f32 %v2940, %v2940
      %v3042 = vmul.f32 %v2941, %v2941
      %v3043 = vmul.f32 %v2942, %v2942
      %v3044 = vmul.f32 %v2943, %v2943
      %v3045 = vmul.f32 %v2944, %v2944
      %v3046 = vmul.f32 %v2945, %v2945
      %v3047 = vmul.f32 %v2946, %v2946
      %v3048 = vmul.f32 %v2947, %v2947
      %v3049 = vmul.f32 %v2948, %v2948
      %v3050 = vmul.f32 %v2949, %v2949
      %v3051 = vmul.f32 %v2950, %v2950
      %v3052 = vmul.f32 %v2951, %v2951
      %v3053 = vmul.f32 %v2952, %v2952
      %v3054 = vmul.f32 %v2953, %v2953
      %v3055 = vmul.f32 %v2954, %v2954
      %v3056 = vadd.f32 %v3024, %v3025
      %v3057 = vadd.f32 %v3056, %v3026
      %v3058 = vadd.f32 %v3057, %v3027
      %v3059 = vadd.f32 %v3058, %v3028
      %v3060 = vadd.f32 %v3059, %v3029
      %v3061 = vadd.f32 %v3060, %v3030
      %v3062 = vadd.f32 %v3061, %v3031
      %v3063 = vadd.f32 %v3062, %v3032
      %v3064 = vadd.f32 %v3063, %v3033
      %v3065 = vadd.f32 %v3064, %v3034
      %v3066 = vadd.f32 %v3065, %v3035
      %v3067 = vadd.f32 %v3066, %v3036
      %v3068 = vadd.f32 %v3067, %v3037
      %v3069 = vadd.f32 %v3068, %v3038
      %v3070 = vadd.f32 %v3069, %v3039
      %v3071 = vadd.f32 %v3070, %v3040
      %v3072 = vadd.f32 %v3071, %v3041
      %v3073 = vadd.f32 %v3072, %v3042
      %v3074 = vadd.f32 %v3073, %v3043
      %v3075 = vadd.f32 %v3074, %v3044
      %v3076 = vadd.f32 %v3075, %v3045
      %v3077 = vadd.f32 %v3076, %v3046
      %v3078 = vadd.f32 %v3077, %v3047
      %v3079 = vadd.f32 %v3078, %v3048
      %v3080 = vadd.f32 %v3079, %v3049
      %v3081 = vadd.f32 %v3080, %v3050
      %v3082 = vadd.f32 %v3081, %v3051
      %v3083 = vadd.f32 %v3082, %v3052
      %v3084 = vadd.f32 %v3083, %v3053
      %v3085 = vadd.f32 %v3084, %v3054
      %v3086 = vadd.f32 %v3085, %v3055
      %v3087 = vrot.slane %v3086, 4
      %v3088 = vadd.f32 %v3086, %v3087
      %v3089 = vrot.slane %v3088, 2
      %v3090 = vadd.f32 %v3088, %v3089
      %v3091 = vrot.slane %v3090, 1
      %v3092 = vadd.f32 %v3090, %v3091
      %vm3093 = vcmask 1040384
      %v3094 = vsel %vm3093, %v3023, %v3092
      %3095 = vst [vmem:[%s181] sm:$0x3] %v3094
      %p3096 = scmp.lt.s32.totalorder %s15, 1
      %s3097 = scalar_select %p3096, %s15, 1
      %s3098 = smul.addr %s3097, 32
      %s3099 = smul.addr %s3098, 8
      %s3100 = scalar_lea.vmem %s2, %s3099
      %p3101 = scmp.lt.s32.totalorder %s15, 1
      %s3102 = scalar_select %p3101, %s15, 1
      %s3103 = smul.addr %s3102, 2
      %s3104 = scalar_lea.vmem %s3, %s3103
      // Predicated region
      $region29: #{double_conv.6} parent=27 // pred_check
        %p3105 = pneg %p80
      $region30: #{double_conv.6} parent=27 // pred_check_branch
        %3107 = sbr.rel (%p3105) target = $region32
      $region31: #{double_conv.6} parent=27 // pred_region
        _
      $region32: #{double_conv.6} parent=27 // pred_fallthru
        _
      // Predicated region
      $region33: #{double_conv.6} parent=27 // pred_check
        %p3108 = pneg %p106
      $region34: #{double_conv.6} parent=27 // pred_check_branch
        %3110 = sbr.rel (%p3108) target = $region36
      $region35: #{double_conv.6} parent=27 // pred_region
        _
      $region36: #{double_conv.6} parent=27 // pred_fallthru
        _
    $region28: #{double_conv.6} parent=5 // pred_fallthru
      _
    %p3111 = scmp.le.s32.totalorder 2, %s10
    // Predicated region
    $region37: #{double_conv.6} parent=5 // pred_check
      %p3112 = pneg %p3111
    $region38: #{double_conv.6} parent=5 // pred_check_branch
      %3114 = sbr.rel (%p3112) target = $region40
    $region39: #{double_conv.6} parent=5 // pred_region
      %s3115 = ssub.s32 %s10, 2
      // Predicated region
      $region41: #{double_conv.6} parent=39 // pred_check
        %p3116 = pneg %p86
      $region42: #{double_conv.6} parent=39 // pred_check_branch
        %3118 = sbr.rel (%p3116) target = $region44
      $region43: #{double_conv.6} parent=39 // pred_region
        %p3119 = scmp.lt.s32.totalorder %s16, 1
        %s3120 = scalar_select %p3119, %s16, 1
        %s3121 = smul.addr %s3120, 32
        %s3122 = smul.addr %s3121, 8
        %s3123 = scalar_lea.vmem %s2, %s3122
      $region44: #{double_conv.6} parent=39 // pred_fallthru
        _
      // Predicated region
      $region45: #{double_conv.6} parent=39 // pred_check
        %p3124 = pneg %p112
      $region46: #{double_conv.6} parent=39 // pred_check_branch
        %3126 = sbr.rel (%p3124) target = $region48
      $region47: #{double_conv.6} parent=39 // pred_region
        %p3127 = scmp.lt.s32.totalorder %s16, 1
        %s3128 = scalar_select %p3127, %s16, 1
        %s3129 = smul.addr %s3128, 2
        %s3130 = scalar_lea.vmem %s3, %s3129
      $region48: #{double_conv.6} parent=39 // pred_fallthru
        _
    $region40: #{double_conv.6} parent=5 // pred_fallthru
      _
  $region6: #{double_conv.6} parent=0 // loop_footer
    %s14 = sadd.s32 1, %s10
  $region7: #{double_conv.6} parent=0 // loop_footer_branch
    %9 = sbr.rel target = $region3
  $region8: #{double_conv.6} parent=0 // loop_exit
    _

</llo_original>
